<compile_context>
chip_gen: v7x
topology: tpu7x:2x2x1
jax: 0.10.0
libtpu: 0.0.40
codegen_flags: <defaults>
</compile_context>

<pallas_src>
import jax
import jax.numpy as jnp
from jax.experimental import pallas as pl
from jax.experimental.pallas import tpu as pltpu

# ----------------------------- config (PyTorch defaults) -----------------------------
IN_CH   = 13            # Encoder(in_channels=13)
CH      = 96            # channel_size
NLAYERS = 2             # num_layers (residual blocks)
H = W   = 16            # spatial size of the example input
HW      = H * W
B       = 2
CHP     = 128           # hidden channels lane-padded 96 -> 128
K0      = 128           # init-layer im2col features: 9*13 = 117 -> padded to 128
NREST   = 2 * NLAYERS + 1   # res-block convs + final conv (all CH -> CH)


# ----------------------------- fused Pallas kernel ------------------------------------
def _encoder_kernel(x_ref, w0_ref, wr_ref, b_ref, a_ref, o_ref):
    """One image per grid step. Entire Encoder forward stays resident in VMEM."""
    f32, bf16 = jnp.float32, jnp.bfloat16

    # Border-validity masks, hoisted ONCE per kernel invocation (JAX does not CSE these).
    ridx = jax.lax.broadcasted_iota(jnp.int32, (HW, CHP), 0)   # flat row index h*W + w
    col  = jnp.bitwise_and(ridx, W - 1)                        # w index (W is a power of 2)
    h_ok = {-1: ridx >= W, 0: None, 1: ridx < (H - 1) * W}     # valid rows for dh = -1/0/+1
    w_ok = {-1: col >= 1, 0: None, 1: col <= W - 2}            # valid cols for dw = -1/0/+1

    def im2col(x):
        """(HW, CHP) f32 -> (HW, 9*CHP) bf16 patch matrix, taps in (dh, dw) row-major order."""
        cols = []
        for dh in (-1, 0, 1):
            for dw in (-1, 0, 1):
                shift = (-(dh * W + dw)) % HW                   # patch[p] = x[p + dh*W + dw]
                t = pltpu.roll(x, shift=shift, axis=0) if shift else x
                m = h_ok[dh]
                if w_ok[dw] is not None:
                    m = w_ok[dw] if m is None else jnp.logical_and(m, w_ok[dw])
                if m is not None:
                    t = jnp.where(m, t, 0.0)                    # zero the 'same' padding border
                cols.append(t.astype(bf16))
        return jnp.concatenate(cols, axis=1)                    # lane-axis concat: tile-aligned

    def conv(x, widx):
        # single deep-K im2col matmul per 3x3 conv; bf16 operands, f32 accumulation
        return jnp.dot(im2col(x), wr_ref[widx],
                       preferred_element_type=f32) + b_ref[1 + widx]

    def prelu(x, aidx):
        a_row = a_ref[aidx]
        return jnp.where(x >= 0.0, x, x * a_row)

    # init layer: im2col was done on the host -> one (HW, K0) x (K0, CHP) matmul + PReLU
    h = prelu(jnp.dot(x_ref[0].astype(bf16), w0_ref[...],
                      preferred_element_type=f32) + b_ref[0], 0)
    # residual blocks: x + PReLU(conv(PReLU(conv(x))))
    for r in range(NLAYERS):
        c1, c2 = 2 * r, 2 * r + 1
        t = prelu(conv(h, c1), 1 + c1)
        t = prelu(conv(t, c2), 1 + c2)
        h = h + t
    # final conv (no activation) — (HW, 128) lane-dense store
    o_ref[0] = conv(h, NREST - 1)


# ----------------------------- host wrapper -------------------------------------------
def encoder_forward(x_nchw, packed):
    Bn = x_nchw.shape[0]
    # Host-side im2col for the 13-channel init layer: (B, HW, 9*13) -> lane-pad to 128.
    x = jnp.transpose(x_nchw, (0, 2, 3, 1))                                # NHWC
    xp = jnp.pad(x, ((0, 0), (1, 1), (1, 1), (0, 0)))                      # 'same' zero pad
    taps = [xp[:, i:i + H, j:j + W, :] for i in range(3) for j in range(3)]
    xim = jnp.concatenate(taps, axis=-1).reshape(Bn, HW, 9 * IN_CH)
    xim = jnp.pad(xim, ((0, 0), (0, 0), (0, K0 - 9 * IN_CH)))              # (B, HW, 128)

    out = pl.pallas_call(
        _encoder_kernel,
        out_shape=jax.ShapeDtypeStruct((Bn, HW, CHP), jnp.float32),
        grid=(Bn,),
        in_specs=[
            pl.BlockSpec((1, HW, K0), lambda b: (b, 0, 0)),          # init-layer patches
            pl.BlockSpec((K0, CHP), lambda b: (0, 0)),               # init conv weights (bf16)
            pl.BlockSpec((NREST, 9 * CHP, CHP), lambda b: (0, 0, 0)),# remaining conv weights
            pl.BlockSpec((8, CHP), lambda b: (0, 0)),                # biases (row per conv)
            pl.BlockSpec((8, CHP), lambda b: (0, 0)),                # PReLU alphas
        ],
        out_specs=pl.BlockSpec((1, HW, CHP), lambda b: (b, 0, 0)),
        compiler_params=pltpu.CompilerParams(dimension_semantics=("parallel",)),
    )(xim, packed["w0"], packed["wr"], packed["b"], packed["a"])

    out = out[:, :, :CH]                                                    # drop lane padding
    return jnp.transpose(out.reshape(Bn, H, W, CH), (0, 3, 1, 2))           # back to NCHW


# ----------------------------- params -------------------------------------------------
def init_params(key):
    ks = iter(jax.random.split(key, 32))
    nrm = lambda shape, std=0.02: std * jax.random.normal(next(ks), shape, jnp.float32)
    p = {
        "w_init": nrm((3, 3, IN_CH, CH)), "b_init": nrm((CH,)),
        "a_init": jnp.float32(0.25) + nrm((), 0.05),
    }
    for r in range(NLAYERS):
        for c in range(2):
            p[f"w_r{r}{c}"] = nrm((3, 3, CH, CH))
            p[f"b_r{r}{c}"] = nrm((CH,))
            p[f"a_r{r}{c}"] = jnp.float32(0.25) + nrm((), 0.05)
    p["w_final"] = nrm((3, 3, CH, CH))
    p["b_final"] = nrm((CH,))
    return p


def pack_params(p):
    # init conv as one (K0, CHP) matrix: tap-major rows (matches host im2col), bf16
    w0 = p["w_init"].reshape(9 * IN_CH, CH)
    w0 = jnp.zeros((K0, CHP), jnp.float32).at[:9 * IN_CH, :CH].set(w0).astype(jnp.bfloat16)
    # remaining convs: per-tap in/out channels zero-padded 96 -> 128, stacked (5, 9*128, 128)
    wr = []
    for w in (p["w_r00"], p["w_r01"], p["w_r10"], p["w_r11"], p["w_final"]):
        wp = jnp.zeros((3, 3, CHP, CHP), jnp.float32).at[:, :, :CH, :CH].set(w)
        wr.append(wp.reshape(9 * CHP, CHP))
    wr = jnp.stack(wr, 0).astype(jnp.bfloat16)
    # biases / PReLU alphas: one row per conv / per PReLU, zero in the padded lanes
    b = jnp.zeros((8, CHP), jnp.float32)
    for i, k in enumerate(("b_init", "b_r00", "b_r01", "b_r10", "b_r11", "b_final")):
        b = b.at[i, :CH].set(p[k])
    a = jnp.zeros((8, CHP), jnp.float32)
    for i, k in enumerate(("a_init", "a_r00", "a_r01", "a_r10", "a_r11")):
        a = a.at[i, :CH].set(p[k])
    return {"w0": w0, "wr": wr, "b": b, "a": a}


# ----------------------------- pure-JAX reference (for validation) --------------------
def _conv_ref(x, w, b):          # x: (B,H,W,Cin) NHWC, w: (3,3,Cin,Cout)
    xp = jnp.pad(x, ((0, 0), (1, 1), (1, 1), (0, 0)))
    out = jnp.zeros(x.shape[:3] + (w.shape[-1],), jnp.float32) + b
    for i in range(3):
        for j in range(3):
            out = out + jnp.einsum("bhwc,cd->bhwd", xp[:, i:i + H, j:j + W, :], w[i, j],
                                   precision=jax.lax.Precision.HIGHEST)
    return out


def _prelu_ref(x, a):
    return jnp.where(x >= 0, x, a * x)


def encoder_reference(x_nchw, p):
    x = jnp.transpose(x_nchw, (0, 2, 3, 1))
    h = _prelu_ref(_conv_ref(x, p["w_init"], p["b_init"]), p["a_init"])
    for r in range(NLAYERS):
        t = _prelu_ref(_conv_ref(h, p[f"w_r{r}0"], p[f"b_r{r}0"]), p[f"a_r{r}0"])
        t = _prelu_ref(_conv_ref(t, p[f"w_r{r}1"], p[f"b_r{r}1"]), p[f"a_r{r}1"])
        h = h + t
    out = _conv_ref(h, p["w_final"], p["b_final"])
    return jnp.transpose(out, (0, 3, 1, 2))


# ----------------------------- main ----------------------------------------------------
if __name__ == "__main__":
    key = jax.random.PRNGKey(0)
    kx, kp = jax.random.split(key)
    x = jax.random.normal(kx, (B, IN_CH, H, W), jnp.float32)       # (B, C_in, H, W) like PyTorch
    raw = init_params(kp)
    packed = pack_params(raw)

    fwd = jax.jit(encoder_forward)
    out = fwd(x, packed)
    jax.block_until_ready(out)

    assert out.shape == (B, CH, H, W) and out.dtype == jnp.float32
    assert bool(jnp.all(jnp.isfinite(out)))

    ref = encoder_reference(x, raw)
    rel = float(jnp.max(jnp.abs(out - ref)) / (jnp.max(jnp.abs(ref)) + 1e-8))
    assert rel < 2e-2, f"mismatch vs reference: relative max error = {rel}"

    print("KERNEL_OK")
</pallas_src>

<mosaic_0001>
module attributes {stable_mosaic.version = 11 : i64} {
  func.func @_encoder_kernel(%arg0: i32, %arg1: memref<1x256x128xf32, #tpu.memory_space<vmem>>, %arg2: memref<128x128xbf16, #tpu.memory_space<vmem>>, %arg3: memref<5x1152x128xbf16, #tpu.memory_space<vmem>>, %arg4: memref<8x128xf32, #tpu.memory_space<vmem>>, %arg5: memref<8x128xf32, #tpu.memory_space<vmem>>, %arg6: memref<1x256x128xf32, #tpu.memory_space<vmem>>) attributes {dimension_semantics = [#tpu.dimension_semantics<parallel>], iteration_bounds = array<i64: 2>, scalar_prefetch = 0 : i64, scratch_operands = 0 : i64, tpu.core_type = #tpu.core_type<tc>, window_params = [{transform_indices = @transform_0, window_bounds = array<i64: 1, 256, 128>}, {pipeline_mode = #tpu.pipeline_mode<synchronous>, transform_indices = @transform_1, window_bounds = array<i64: 128, 128>}, {pipeline_mode = #tpu.pipeline_mode<synchronous>, transform_indices = @transform_2, window_bounds = array<i64: 5, 1152, 128>}, {pipeline_mode = #tpu.pipeline_mode<synchronous>, transform_indices = @transform_3, window_bounds = array<i64: 8, 128>}, {pipeline_mode = #tpu.pipeline_mode<synchronous>, transform_indices = @transform_4, window_bounds = array<i64: 8, 128>}, {transform_indices = @transform_5, window_bounds = array<i64: 1, 256, 128>}]} {
    %0 = tpu.iota {dimensions = array<i32: 0>} : vector<256x128xi32>
    %c15_i32 = arith.constant 15 : i32
    %1 = vector.broadcast %c15_i32 : i32 to vector<256x128xi32>
    %2 = arith.andi %0, %1 : vector<256x128xi32>
    %c16_i32 = arith.constant 16 : i32
    %3 = vector.broadcast %c16_i32 : i32 to vector<256x128xi32>
    %4 = arith.cmpi sge, %0, %3 : vector<256x128xi32>
    %c240_i32 = arith.constant 240 : i32
    %5 = vector.broadcast %c240_i32 : i32 to vector<256x128xi32>
    %6 = arith.cmpi slt, %0, %5 : vector<256x128xi32>
    %c1_i32 = arith.constant 1 : i32
    %7 = vector.broadcast %c1_i32 : i32 to vector<256x128xi32>
    %8 = arith.cmpi sge, %2, %7 : vector<256x128xi32>
    %c14_i32 = arith.constant 14 : i32
    %9 = vector.broadcast %c14_i32 : i32 to vector<256x128xi32>
    %10 = arith.cmpi sle, %2, %9 : vector<256x128xi32>
    %c0 = arith.constant 0 : index
    %c0_0 = arith.constant 0 : index
    %c0_1 = arith.constant 0 : index
    %11 = vector.load %arg1[%c0, %c0_0, %c0_1] : memref<1x256x128xf32, #tpu.memory_space<vmem>>, vector<1x256x128xf32>
    %12 = vector.shape_cast %11 : vector<1x256x128xf32> to vector<256x128xf32>
    %13 = arith.truncf %12 : vector<256x128xf32> to vector<256x128xbf16>
    %c0_2 = arith.constant 0 : index
    %c0_3 = arith.constant 0 : index
    %14 = vector.load %arg2[%c0_2, %c0_3] : memref<128x128xbf16, #tpu.memory_space<vmem>>, vector<128x128xbf16>
    %cst = arith.constant dense<0.000000e+00> : vector<256x128xf32>
    %15 = tpu.matmul %13, %14, %cst {dimension_numbers = #tpu.dot_dimension_numbers<[1], [0], [0], [1], [0, 0, 1, 1], [], []>} : vector<256x128xbf16>, vector<128x128xbf16>, vector<256x128xf32> -> vector<256x128xf32>
    %c0_4 = arith.constant 0 : index
    %c0_5 = arith.constant 0 : index
    %16 = vector.load %arg4[%c0_4, %c0_5] : memref<8x128xf32, #tpu.memory_space<vmem>>, vector<1x128xf32>
    %17 = vector.shape_cast %16 : vector<1x128xf32> to vector<128xf32>
    %18 = vector.shape_cast %17 : vector<128xf32> to vector<1x128xf32>
    %19 = vector.broadcast %18 : vector<1x128xf32> to vector<256x128xf32>
    %20 = arith.addf %15, %19 : vector<256x128xf32>
    %c0_6 = arith.constant 0 : index
    %c0_7 = arith.constant 0 : index
    %21 = vector.load %arg5[%c0_6, %c0_7] : memref<8x128xf32, #tpu.memory_space<vmem>>, vector<1x128xf32>
    %22 = vector.shape_cast %21 : vector<1x128xf32> to vector<128xf32>
    %cst_8 = arith.constant 0.000000e+00 : f32
    %23 = vector.broadcast %cst_8 : f32 to vector<256x128xf32>
    %24 = arith.cmpf oge, %20, %23 : vector<256x128xf32>
    %25 = vector.shape_cast %22 : vector<128xf32> to vector<1x128xf32>
    %26 = vector.broadcast %25 : vector<1x128xf32> to vector<256x128xf32>
    %27 = arith.mulf %20, %26 : vector<256x128xf32>
    %28 = arith.select %24, %20, %27 : vector<256x128xi1>, vector<256x128xf32>
    %c17_i32 = arith.constant 17 : i32
    %29 = tpu.dynamic_rotate %28 by %c17_i32 dim 0 : vector<256x128xf32>, i32 -> vector<256x128xf32>
    %30 = arith.andi %4, %8 : vector<256x128xi1>
    %cst_9 = arith.constant 0.000000e+00 : f32
    %31 = vector.broadcast %cst_9 : f32 to vector<256x128xf32>
    %32 = arith.select %30, %29, %31 : vector<256x128xi1>, vector<256x128xf32>
    %33 = arith.truncf %32 : vector<256x128xf32> to vector<256x128xbf16>
    %c16_i32_10 = arith.constant 16 : i32
    %34 = tpu.dynamic_rotate %28 by %c16_i32_10 dim 0 : vector<256x128xf32>, i32 -> vector<256x128xf32>
    %cst_11 = arith.constant 0.000000e+00 : f32
    %35 = vector.broadcast %cst_11 : f32 to vector<256x128xf32>
    %36 = arith.select %4, %34, %35 : vector<256x128xi1>, vector<256x128xf32>
    %37 = arith.truncf %36 : vector<256x128xf32> to vector<256x128xbf16>
    %c15_i32_12 = arith.constant 15 : i32
    %38 = tpu.dynamic_rotate %28 by %c15_i32_12 dim 0 : vector<256x128xf32>, i32 -> vector<256x128xf32>
    %39 = arith.andi %4, %10 : vector<256x128xi1>
    %cst_13 = arith.constant 0.000000e+00 : f32
    %40 = vector.broadcast %cst_13 : f32 to vector<256x128xf32>
    %41 = arith.select %39, %38, %40 : vector<256x128xi1>, vector<256x128xf32>
    %42 = arith.truncf %41 : vector<256x128xf32> to vector<256x128xbf16>
    %c1_i32_14 = arith.constant 1 : i32
    %43 = tpu.dynamic_rotate %28 by %c1_i32_14 dim 0 : vector<256x128xf32>, i32 -> vector<256x128xf32>
    %cst_15 = arith.constant 0.000000e+00 : f32
    %44 = vector.broadcast %cst_15 : f32 to vector<256x128xf32>
    %45 = arith.select %8, %43, %44 : vector<256x128xi1>, vector<256x128xf32>
    %46 = arith.truncf %45 : vector<256x128xf32> to vector<256x128xbf16>
    %47 = arith.truncf %28 : vector<256x128xf32> to vector<256x128xbf16>
    %c255_i32 = arith.constant 255 : i32
    %48 = tpu.dynamic_rotate %28 by %c255_i32 dim 0 : vector<256x128xf32>, i32 -> vector<256x128xf32>
    %cst_16 = arith.constant 0.000000e+00 : f32
    %49 = vector.broadcast %cst_16 : f32 to vector<256x128xf32>
    %50 = arith.select %10, %48, %49 : vector<256x128xi1>, vector<256x128xf32>
    %51 = arith.truncf %50 : vector<256x128xf32> to vector<256x128xbf16>
    %c241_i32 = arith.constant 241 : i32
    %52 = tpu.dynamic_rotate %28 by %c241_i32 dim 0 : vector<256x128xf32>, i32 -> vector<256x128xf32>
    %53 = arith.andi %6, %8 : vector<256x128xi1>
    %cst_17 = arith.constant 0.000000e+00 : f32
    %54 = vector.broadcast %cst_17 : f32 to vector<256x128xf32>
    %55 = arith.select %53, %52, %54 : vector<256x128xi1>, vector<256x128xf32>
    %56 = arith.truncf %55 : vector<256x128xf32> to vector<256x128xbf16>
    %c240_i32_18 = arith.constant 240 : i32
    %57 = tpu.dynamic_rotate %28 by %c240_i32_18 dim 0 : vector<256x128xf32>, i32 -> vector<256x128xf32>
    %cst_19 = arith.constant 0.000000e+00 : f32
    %58 = vector.broadcast %cst_19 : f32 to vector<256x128xf32>
    %59 = arith.select %6, %57, %58 : vector<256x128xi1>, vector<256x128xf32>
    %60 = arith.truncf %59 : vector<256x128xf32> to vector<256x128xbf16>
    %c239_i32 = arith.constant 239 : i32
    %61 = tpu.dynamic_rotate %28 by %c239_i32 dim 0 : vector<256x128xf32>, i32 -> vector<256x128xf32>
    %62 = arith.andi %6, %10 : vector<256x128xi1>
    %cst_20 = arith.constant 0.000000e+00 : f32
    %63 = vector.broadcast %cst_20 : f32 to vector<256x128xf32>
    %64 = arith.select %62, %61, %63 : vector<256x128xi1>, vector<256x128xf32>
    %65 = arith.truncf %64 : vector<256x128xf32> to vector<256x128xbf16>
    %66 = tpu.concatenate %33, %37, %42, %46, %47, %51, %56, %60, %65 in 1 : vector<256x128xbf16>, vector<256x128xbf16>, vector<256x128xbf16>, vector<256x128xbf16>, vector<256x128xbf16>, vector<256x128xbf16>, vector<256x128xbf16>, vector<256x128xbf16>, vector<256x128xbf16> -> vector<256x1152xbf16>
    %c0_21 = arith.constant 0 : index
    %c0_22 = arith.constant 0 : index
    %c0_23 = arith.constant 0 : index
    %67 = vector.load %arg3[%c0_21, %c0_22, %c0_23] : memref<5x1152x128xbf16, #tpu.memory_space<vmem>>, vector<1x1152x128xbf16>
    %68 = vector.shape_cast %67 : vector<1x1152x128xbf16> to vector<1152x128xbf16>
    %cst_24 = arith.constant dense<0.000000e+00> : vector<256x128xf32>
    %69 = tpu.matmul %66, %68, %cst_24 {dimension_numbers = #tpu.dot_dimension_numbers<[1], [0], [0], [1], [0, 0, 1, 1], [], []>} : vector<256x1152xbf16>, vector<1152x128xbf16>, vector<256x128xf32> -> vector<256x128xf32>
    %c1 = arith.constant 1 : index
    %c0_25 = arith.constant 0 : index
    %70 = vector.load %arg4[%c1, %c0_25] : memref<8x128xf32, #tpu.memory_space<vmem>>, vector<1x128xf32>
    %71 = vector.shape_cast %70 : vector<1x128xf32> to vector<128xf32>
    %72 = vector.shape_cast %71 : vector<128xf32> to vector<1x128xf32>
    %73 = vector.broadcast %72 : vector<1x128xf32> to vector<256x128xf32>
    %74 = arith.addf %69, %73 : vector<256x128xf32>
    %c1_26 = arith.constant 1 : index
    %c0_27 = arith.constant 0 : index
    %75 = vector.load %arg5[%c1_26, %c0_27] : memref<8x128xf32, #tpu.memory_space<vmem>>, vector<1x128xf32>
    %76 = vector.shape_cast %75 : vector<1x128xf32> to vector<128xf32>
    %cst_28 = arith.constant 0.000000e+00 : f32
    %77 = vector.broadcast %cst_28 : f32 to vector<256x128xf32>
    %78 = arith.cmpf oge, %74, %77 : vector<256x128xf32>
    %79 = vector.shape_cast %76 : vector<128xf32> to vector<1x128xf32>
    %80 = vector.broadcast %79 : vector<1x128xf32> to vector<256x128xf32>
    %81 = arith.mulf %74, %80 : vector<256x128xf32>
    %82 = arith.select %78, %74, %81 : vector<256x128xi1>, vector<256x128xf32>
    %c17_i32_29 = arith.constant 17 : i32
    %83 = tpu.dynamic_rotate %82 by %c17_i32_29 dim 0 : vector<256x128xf32>, i32 -> vector<256x128xf32>
    %84 = arith.andi %4, %8 : vector<256x128xi1>
    %cst_30 = arith.constant 0.000000e+00 : f32
    %85 = vector.broadcast %cst_30 : f32 to vector<256x128xf32>
    %86 = arith.select %84, %83, %85 : vector<256x128xi1>, vector<256x128xf32>
    %87 = arith.truncf %86 : vector<256x128xf32> to vector<256x128xbf16>
    %c16_i32_31 = arith.constant 16 : i32
    %88 = tpu.dynamic_rotate %82 by %c16_i32_31 dim 0 : vector<256x128xf32>, i32 -> vector<256x128xf32>
    %cst_32 = arith.constant 0.000000e+00 : f32
    %89 = vector.broadcast %cst_32 : f32 to vector<256x128xf32>
    %90 = arith.select %4, %88, %89 : vector<256x128xi1>, vector<256x128xf32>
    %91 = arith.truncf %90 : vector<256x128xf32> to vector<256x128xbf16>
    %c15_i32_33 = arith.constant 15 : i32
    %92 = tpu.dynamic_rotate %82 by %c15_i32_33 dim 0 : vector<256x128xf32>, i32 -> vector<256x128xf32>
    %93 = arith.andi %4, %10 : vector<256x128xi1>
    %cst_34 = arith.constant 0.000000e+00 : f32
    %94 = vector.broadcast %cst_34 : f32 to vector<256x128xf32>
    %95 = arith.select %93, %92, %94 : vector<256x128xi1>, vector<256x128xf32>
    %96 = arith.truncf %95 : vector<256x128xf32> to vector<256x128xbf16>
    %c1_i32_35 = arith.constant 1 : i32
    %97 = tpu.dynamic_rotate %82 by %c1_i32_35 dim 0 : vector<256x128xf32>, i32 -> vector<256x128xf32>
    %cst_36 = arith.constant 0.000000e+00 : f32
    %98 = vector.broadcast %cst_36 : f32 to vector<256x128xf32>
    %99 = arith.select %8, %97, %98 : vector<256x128xi1>, vector<256x128xf32>
    %100 = arith.truncf %99 : vector<256x128xf32> to vector<256x128xbf16>
    %101 = arith.truncf %82 : vector<256x128xf32> to vector<256x128xbf16>
    %c255_i32_37 = arith.constant 255 : i32
    %102 = tpu.dynamic_rotate %82 by %c255_i32_37 dim 0 : vector<256x128xf32>, i32 -> vector<256x128xf32>
    %cst_38 = arith.constant 0.000000e+00 : f32
    %103 = vector.broadcast %cst_38 : f32 to vector<256x128xf32>
    %104 = arith.select %10, %102, %103 : vector<256x128xi1>, vector<256x128xf32>
    %105 = arith.truncf %104 : vector<256x128xf32> to vector<256x128xbf16>
    %c241_i32_39 = arith.constant 241 : i32
    %106 = tpu.dynamic_rotate %82 by %c241_i32_39 dim 0 : vector<256x128xf32>, i32 -> vector<256x128xf32>
    %107 = arith.andi %6, %8 : vector<256x128xi1>
    %cst_40 = arith.constant 0.000000e+00 : f32
    %108 = vector.broadcast %cst_40 : f32 to vector<256x128xf32>
    %109 = arith.select %107, %106, %108 : vector<256x128xi1>, vector<256x128xf32>
    %110 = arith.truncf %109 : vector<256x128xf32> to vector<256x128xbf16>
    %c240_i32_41 = arith.constant 240 : i32
    %111 = tpu.dynamic_rotate %82 by %c240_i32_41 dim 0 : vector<256x128xf32>, i32 -> vector<256x128xf32>
    %cst_42 = arith.constant 0.000000e+00 : f32
    %112 = vector.broadcast %cst_42 : f32 to vector<256x128xf32>
    %113 = arith.select %6, %111, %112 : vector<256x128xi1>, vector<256x128xf32>
    %114 = arith.truncf %113 : vector<256x128xf32> to vector<256x128xbf16>
    %c239_i32_43 = arith.constant 239 : i32
    %115 = tpu.dynamic_rotate %82 by %c239_i32_43 dim 0 : vector<256x128xf32>, i32 -> vector<256x128xf32>
    %116 = arith.andi %6, %10 : vector<256x128xi1>
    %cst_44 = arith.constant 0.000000e+00 : f32
    %117 = vector.broadcast %cst_44 : f32 to vector<256x128xf32>
    %118 = arith.select %116, %115, %117 : vector<256x128xi1>, vector<256x128xf32>
    %119 = arith.truncf %118 : vector<256x128xf32> to vector<256x128xbf16>
    %120 = tpu.concatenate %87, %91, %96, %100, %101, %105, %110, %114, %119 in 1 : vector<256x128xbf16>, vector<256x128xbf16>, vector<256x128xbf16>, vector<256x128xbf16>, vector<256x128xbf16>, vector<256x128xbf16>, vector<256x128xbf16>, vector<256x128xbf16>, vector<256x128xbf16> -> vector<256x1152xbf16>
    %c1_45 = arith.constant 1 : index
    %c0_46 = arith.constant 0 : index
    %c0_47 = arith.constant 0 : index
    %121 = vector.load %arg3[%c1_45, %c0_46, %c0_47] : memref<5x1152x128xbf16, #tpu.memory_space<vmem>>, vector<1x1152x128xbf16>
    %122 = vector.shape_cast %121 : vector<1x1152x128xbf16> to vector<1152x128xbf16>
    %cst_48 = arith.constant dense<0.000000e+00> : vector<256x128xf32>
    %123 = tpu.matmul %120, %122, %cst_48 {dimension_numbers = #tpu.dot_dimension_numbers<[1], [0], [0], [1], [0, 0, 1, 1], [], []>} : vector<256x1152xbf16>, vector<1152x128xbf16>, vector<256x128xf32> -> vector<256x128xf32>
    %c2 = arith.constant 2 : index
    %c0_49 = arith.constant 0 : index
    %124 = vector.load %arg4[%c2, %c0_49] : memref<8x128xf32, #tpu.memory_space<vmem>>, vector<1x128xf32>
    %125 = vector.shape_cast %124 : vector<1x128xf32> to vector<128xf32>
    %126 = vector.shape_cast %125 : vector<128xf32> to vector<1x128xf32>
    %127 = vector.broadcast %126 : vector<1x128xf32> to vector<256x128xf32>
    %128 = arith.addf %123, %127 : vector<256x128xf32>
    %c2_50 = arith.constant 2 : index
    %c0_51 = arith.constant 0 : index
    %129 = vector.load %arg5[%c2_50, %c0_51] : memref<8x128xf32, #tpu.memory_space<vmem>>, vector<1x128xf32>
    %130 = vector.shape_cast %129 : vector<1x128xf32> to vector<128xf32>
    %cst_52 = arith.constant 0.000000e+00 : f32
    %131 = vector.broadcast %cst_52 : f32 to vector<256x128xf32>
    %132 = arith.cmpf oge, %128, %131 : vector<256x128xf32>
    %133 = vector.shape_cast %130 : vector<128xf32> to vector<1x128xf32>
    %134 = vector.broadcast %133 : vector<1x128xf32> to vector<256x128xf32>
    %135 = arith.mulf %128, %134 : vector<256x128xf32>
    %136 = arith.select %132, %128, %135 : vector<256x128xi1>, vector<256x128xf32>
    %137 = arith.addf %28, %136 : vector<256x128xf32>
    %c17_i32_53 = arith.constant 17 : i32
    %138 = tpu.dynamic_rotate %137 by %c17_i32_53 dim 0 : vector<256x128xf32>, i32 -> vector<256x128xf32>
    %139 = arith.andi %4, %8 : vector<256x128xi1>
    %cst_54 = arith.constant 0.000000e+00 : f32
    %140 = vector.broadcast %cst_54 : f32 to vector<256x128xf32>
    %141 = arith.select %139, %138, %140 : vector<256x128xi1>, vector<256x128xf32>
    %142 = arith.truncf %141 : vector<256x128xf32> to vector<256x128xbf16>
    %c16_i32_55 = arith.constant 16 : i32
    %143 = tpu.dynamic_rotate %137 by %c16_i32_55 dim 0 : vector<256x128xf32>, i32 -> vector<256x128xf32>
    %cst_56 = arith.constant 0.000000e+00 : f32
    %144 = vector.broadcast %cst_56 : f32 to vector<256x128xf32>
    %145 = arith.select %4, %143, %144 : vector<256x128xi1>, vector<256x128xf32>
    %146 = arith.truncf %145 : vector<256x128xf32> to vector<256x128xbf16>
    %c15_i32_57 = arith.constant 15 : i32
    %147 = tpu.dynamic_rotate %137 by %c15_i32_57 dim 0 : vector<256x128xf32>, i32 -> vector<256x128xf32>
    %148 = arith.andi %4, %10 : vector<256x128xi1>
    %cst_58 = arith.constant 0.000000e+00 : f32
    %149 = vector.broadcast %cst_58 : f32 to vector<256x128xf32>
    %150 = arith.select %148, %147, %149 : vector<256x128xi1>, vector<256x128xf32>
    %151 = arith.truncf %150 : vector<256x128xf32> to vector<256x128xbf16>
    %c1_i32_59 = arith.constant 1 : i32
    %152 = tpu.dynamic_rotate %137 by %c1_i32_59 dim 0 : vector<256x128xf32>, i32 -> vector<256x128xf32>
    %cst_60 = arith.constant 0.000000e+00 : f32
    %153 = vector.broadcast %cst_60 : f32 to vector<256x128xf32>
    %154 = arith.select %8, %152, %153 : vector<256x128xi1>, vector<256x128xf32>
    %155 = arith.truncf %154 : vector<256x128xf32> to vector<256x128xbf16>
    %156 = arith.truncf %137 : vector<256x128xf32> to vector<256x128xbf16>
    %c255_i32_61 = arith.constant 255 : i32
    %157 = tpu.dynamic_rotate %137 by %c255_i32_61 dim 0 : vector<256x128xf32>, i32 -> vector<256x128xf32>
    %cst_62 = arith.constant 0.000000e+00 : f32
    %158 = vector.broadcast %cst_62 : f32 to vector<256x128xf32>
    %159 = arith.select %10, %157, %158 : vector<256x128xi1>, vector<256x128xf32>
    %160 = arith.truncf %159 : vector<256x128xf32> to vector<256x128xbf16>
    %c241_i32_63 = arith.constant 241 : i32
    %161 = tpu.dynamic_rotate %137 by %c241_i32_63 dim 0 : vector<256x128xf32>, i32 -> vector<256x128xf32>
    %162 = arith.andi %6, %8 : vector<256x128xi1>
    %cst_64 = arith.constant 0.000000e+00 : f32
    %163 = vector.broadcast %cst_64 : f32 to vector<256x128xf32>
    %164 = arith.select %162, %161, %163 : vector<256x128xi1>, vector<256x128xf32>
    %165 = arith.truncf %164 : vector<256x128xf32> to vector<256x128xbf16>
    %c240_i32_65 = arith.constant 240 : i32
    %166 = tpu.dynamic_rotate %137 by %c240_i32_65 dim 0 : vector<256x128xf32>, i32 -> vector<256x128xf32>
    %cst_66 = arith.constant 0.000000e+00 : f32
    %167 = vector.broadcast %cst_66 : f32 to vector<256x128xf32>
    %168 = arith.select %6, %166, %167 : vector<256x128xi1>, vector<256x128xf32>
    %169 = arith.truncf %168 : vector<256x128xf32> to vector<256x128xbf16>
    %c239_i32_67 = arith.constant 239 : i32
    %170 = tpu.dynamic_rotate %137 by %c239_i32_67 dim 0 : vector<256x128xf32>, i32 -> vector<256x128xf32>
    %171 = arith.andi %6, %10 : vector<256x128xi1>
    %cst_68 = arith.constant 0.000000e+00 : f32
    %172 = vector.broadcast %cst_68 : f32 to vector<256x128xf32>
    %173 = arith.select %171, %170, %172 : vector<256x128xi1>, vector<256x128xf32>
    %174 = arith.truncf %173 : vector<256x128xf32> to vector<256x128xbf16>
    %175 = tpu.concatenate %142, %146, %151, %155, %156, %160, %165, %169, %174 in 1 : vector<256x128xbf16>, vector<256x128xbf16>, vector<256x128xbf16>, vector<256x128xbf16>, vector<256x128xbf16>, vector<256x128xbf16>, vector<256x128xbf16>, vector<256x128xbf16>, vector<256x128xbf16> -> vector<256x1152xbf16>
    %c2_69 = arith.constant 2 : index
    %c0_70 = arith.constant 0 : index
    %c0_71 = arith.constant 0 : index
    %176 = vector.load %arg3[%c2_69, %c0_70, %c0_71] : memref<5x1152x128xbf16, #tpu.memory_space<vmem>>, vector<1x1152x128xbf16>
    %177 = vector.shape_cast %176 : vector<1x1152x128xbf16> to vector<1152x128xbf16>
    %cst_72 = arith.constant dense<0.000000e+00> : vector<256x128xf32>
    %178 = tpu.matmul %175, %177, %cst_72 {dimension_numbers = #tpu.dot_dimension_numbers<[1], [0], [0], [1], [0, 0, 1, 1], [], []>} : vector<256x1152xbf16>, vector<1152x128xbf16>, vector<256x128xf32> -> vector<256x128xf32>
    %c3 = arith.constant 3 : index
    %c0_73 = arith.constant 0 : index
    %179 = vector.load %arg4[%c3, %c0_73] : memref<8x128xf32, #tpu.memory_space<vmem>>, vector<1x128xf32>
    %180 = vector.shape_cast %179 : vector<1x128xf32> to vector<128xf32>
    %181 = vector.shape_cast %180 : vector<128xf32> to vector<1x128xf32>
    %182 = vector.broadcast %181 : vector<1x128xf32> to vector<256x128xf32>
    %183 = arith.addf %178, %182 : vector<256x128xf32>
    %c3_74 = arith.constant 3 : index
    %c0_75 = arith.constant 0 : index
    %184 = vector.load %arg5[%c3_74, %c0_75] : memref<8x128xf32, #tpu.memory_space<vmem>>, vector<1x128xf32>
    %185 = vector.shape_cast %184 : vector<1x128xf32> to vector<128xf32>
    %cst_76 = arith.constant 0.000000e+00 : f32
    %186 = vector.broadcast %cst_76 : f32 to vector<256x128xf32>
    %187 = arith.cmpf oge, %183, %186 : vector<256x128xf32>
    %188 = vector.shape_cast %185 : vector<128xf32> to vector<1x128xf32>
    %189 = vector.broadcast %188 : vector<1x128xf32> to vector<256x128xf32>
    %190 = arith.mulf %183, %189 : vector<256x128xf32>
    %191 = arith.select %187, %183, %190 : vector<256x128xi1>, vector<256x128xf32>
    %c17_i32_77 = arith.constant 17 : i32
    %192 = tpu.dynamic_rotate %191 by %c17_i32_77 dim 0 : vector<256x128xf32>, i32 -> vector<256x128xf32>
    %193 = arith.andi %4, %8 : vector<256x128xi1>
    %cst_78 = arith.constant 0.000000e+00 : f32
    %194 = vector.broadcast %cst_78 : f32 to vector<256x128xf32>
    %195 = arith.select %193, %192, %194 : vector<256x128xi1>, vector<256x128xf32>
    %196 = arith.truncf %195 : vector<256x128xf32> to vector<256x128xbf16>
    %c16_i32_79 = arith.constant 16 : i32
    %197 = tpu.dynamic_rotate %191 by %c16_i32_79 dim 0 : vector<256x128xf32>, i32 -> vector<256x128xf32>
    %cst_80 = arith.constant 0.000000e+00 : f32
    %198 = vector.broadcast %cst_80 : f32 to vector<256x128xf32>
    %199 = arith.select %4, %197, %198 : vector<256x128xi1>, vector<256x128xf32>
    %200 = arith.truncf %199 : vector<256x128xf32> to vector<256x128xbf16>
    %c15_i32_81 = arith.constant 15 : i32
    %201 = tpu.dynamic_rotate %191 by %c15_i32_81 dim 0 : vector<256x128xf32>, i32 -> vector<256x128xf32>
    %202 = arith.andi %4, %10 : vector<256x128xi1>
    %cst_82 = arith.constant 0.000000e+00 : f32
    %203 = vector.broadcast %cst_82 : f32 to vector<256x128xf32>
    %204 = arith.select %202, %201, %203 : vector<256x128xi1>, vector<256x128xf32>
    %205 = arith.truncf %204 : vector<256x128xf32> to vector<256x128xbf16>
    %c1_i32_83 = arith.constant 1 : i32
    %206 = tpu.dynamic_rotate %191 by %c1_i32_83 dim 0 : vector<256x128xf32>, i32 -> vector<256x128xf32>
    %cst_84 = arith.constant 0.000000e+00 : f32
    %207 = vector.broadcast %cst_84 : f32 to vector<256x128xf32>
    %208 = arith.select %8, %206, %207 : vector<256x128xi1>, vector<256x128xf32>
    %209 = arith.truncf %208 : vector<256x128xf32> to vector<256x128xbf16>
    %210 = arith.truncf %191 : vector<256x128xf32> to vector<256x128xbf16>
    %c255_i32_85 = arith.constant 255 : i32
    %211 = tpu.dynamic_rotate %191 by %c255_i32_85 dim 0 : vector<256x128xf32>, i32 -> vector<256x128xf32>
    %cst_86 = arith.constant 0.000000e+00 : f32
    %212 = vector.broadcast %cst_86 : f32 to vector<256x128xf32>
    %213 = arith.select %10, %211, %212 : vector<256x128xi1>, vector<256x128xf32>
    %214 = arith.truncf %213 : vector<256x128xf32> to vector<256x128xbf16>
    %c241_i32_87 = arith.constant 241 : i32
    %215 = tpu.dynamic_rotate %191 by %c241_i32_87 dim 0 : vector<256x128xf32>, i32 -> vector<256x128xf32>
    %216 = arith.andi %6, %8 : vector<256x128xi1>
    %cst_88 = arith.constant 0.000000e+00 : f32
    %217 = vector.broadcast %cst_88 : f32 to vector<256x128xf32>
    %218 = arith.select %216, %215, %217 : vector<256x128xi1>, vector<256x128xf32>
    %219 = arith.truncf %218 : vector<256x128xf32> to vector<256x128xbf16>
    %c240_i32_89 = arith.constant 240 : i32
    %220 = tpu.dynamic_rotate %191 by %c240_i32_89 dim 0 : vector<256x128xf32>, i32 -> vector<256x128xf32>
    %cst_90 = arith.constant 0.000000e+00 : f32
    %221 = vector.broadcast %cst_90 : f32 to vector<256x128xf32>
    %222 = arith.select %6, %220, %221 : vector<256x128xi1>, vector<256x128xf32>
    %223 = arith.truncf %222 : vector<256x128xf32> to vector<256x128xbf16>
    %c239_i32_91 = arith.constant 239 : i32
    %224 = tpu.dynamic_rotate %191 by %c239_i32_91 dim 0 : vector<256x128xf32>, i32 -> vector<256x128xf32>
    %225 = arith.andi %6, %10 : vector<256x128xi1>
    %cst_92 = arith.constant 0.000000e+00 : f32
    %226 = vector.broadcast %cst_92 : f32 to vector<256x128xf32>
    %227 = arith.select %225, %224, %226 : vector<256x128xi1>, vector<256x128xf32>
    %228 = arith.truncf %227 : vector<256x128xf32> to vector<256x128xbf16>
    %229 = tpu.concatenate %196, %200, %205, %209, %210, %214, %219, %223, %228 in 1 : vector<256x128xbf16>, vector<256x128xbf16>, vector<256x128xbf16>, vector<256x128xbf16>, vector<256x128xbf16>, vector<256x128xbf16>, vector<256x128xbf16>, vector<256x128xbf16>, vector<256x128xbf16> -> vector<256x1152xbf16>
    %c3_93 = arith.constant 3 : index
    %c0_94 = arith.constant 0 : index
    %c0_95 = arith.constant 0 : index
    %230 = vector.load %arg3[%c3_93, %c0_94, %c0_95] : memref<5x1152x128xbf16, #tpu.memory_space<vmem>>, vector<1x1152x128xbf16>
    %231 = vector.shape_cast %230 : vector<1x1152x128xbf16> to vector<1152x128xbf16>
    %cst_96 = arith.constant dense<0.000000e+00> : vector<256x128xf32>
    %232 = tpu.matmul %229, %231, %cst_96 {dimension_numbers = #tpu.dot_dimension_numbers<[1], [0], [0], [1], [0, 0, 1, 1], [], []>} : vector<256x1152xbf16>, vector<1152x128xbf16>, vector<256x128xf32> -> vector<256x128xf32>
    %c4 = arith.constant 4 : index
    %c0_97 = arith.constant 0 : index
    %233 = vector.load %arg4[%c4, %c0_97] : memref<8x128xf32, #tpu.memory_space<vmem>>, vector<1x128xf32>
    %234 = vector.shape_cast %233 : vector<1x128xf32> to vector<128xf32>
    %235 = vector.shape_cast %234 : vector<128xf32> to vector<1x128xf32>
    %236 = vector.broadcast %235 : vector<1x128xf32> to vector<256x128xf32>
    %237 = arith.addf %232, %236 : vector<256x128xf32>
    %c4_98 = arith.constant 4 : index
    %c0_99 = arith.constant 0 : index
    %238 = vector.load %arg5[%c4_98, %c0_99] : memref<8x128xf32, #tpu.memory_space<vmem>>, vector<1x128xf32>
    %239 = vector.shape_cast %238 : vector<1x128xf32> to vector<128xf32>
    %cst_100 = arith.constant 0.000000e+00 : f32
    %240 = vector.broadcast %cst_100 : f32 to vector<256x128xf32>
    %241 = arith.cmpf oge, %237, %240 : vector<256x128xf32>
    %242 = vector.shape_cast %239 : vector<128xf32> to vector<1x128xf32>
    %243 = vector.broadcast %242 : vector<1x128xf32> to vector<256x128xf32>
    %244 = arith.mulf %237, %243 : vector<256x128xf32>
    %245 = arith.select %241, %237, %244 : vector<256x128xi1>, vector<256x128xf32>
    %246 = arith.addf %137, %245 : vector<256x128xf32>
    %c17_i32_101 = arith.constant 17 : i32
    %247 = tpu.dynamic_rotate %246 by %c17_i32_101 dim 0 : vector<256x128xf32>, i32 -> vector<256x128xf32>
    %248 = arith.andi %4, %8 : vector<256x128xi1>
    %cst_102 = arith.constant 0.000000e+00 : f32
    %249 = vector.broadcast %cst_102 : f32 to vector<256x128xf32>
    %250 = arith.select %248, %247, %249 : vector<256x128xi1>, vector<256x128xf32>
    %251 = arith.truncf %250 : vector<256x128xf32> to vector<256x128xbf16>
    %c16_i32_103 = arith.constant 16 : i32
    %252 = tpu.dynamic_rotate %246 by %c16_i32_103 dim 0 : vector<256x128xf32>, i32 -> vector<256x128xf32>
    %cst_104 = arith.constant 0.000000e+00 : f32
    %253 = vector.broadcast %cst_104 : f32 to vector<256x128xf32>
    %254 = arith.select %4, %252, %253 : vector<256x128xi1>, vector<256x128xf32>
    %255 = arith.truncf %254 : vector<256x128xf32> to vector<256x128xbf16>
    %c15_i32_105 = arith.constant 15 : i32
    %256 = tpu.dynamic_rotate %246 by %c15_i32_105 dim 0 : vector<256x128xf32>, i32 -> vector<256x128xf32>
    %257 = arith.andi %4, %10 : vector<256x128xi1>
    %cst_106 = arith.constant 0.000000e+00 : f32
    %258 = vector.broadcast %cst_106 : f32 to vector<256x128xf32>
    %259 = arith.select %257, %256, %258 : vector<256x128xi1>, vector<256x128xf32>
    %260 = arith.truncf %259 : vector<256x128xf32> to vector<256x128xbf16>
    %c1_i32_107 = arith.constant 1 : i32
    %261 = tpu.dynamic_rotate %246 by %c1_i32_107 dim 0 : vector<256x128xf32>, i32 -> vector<256x128xf32>
    %cst_108 = arith.constant 0.000000e+00 : f32
    %262 = vector.broadcast %cst_108 : f32 to vector<256x128xf32>
    %263 = arith.select %8, %261, %262 : vector<256x128xi1>, vector<256x128xf32>
    %264 = arith.truncf %263 : vector<256x128xf32> to vector<256x128xbf16>
    %265 = arith.truncf %246 : vector<256x128xf32> to vector<256x128xbf16>
    %c255_i32_109 = arith.constant 255 : i32
    %266 = tpu.dynamic_rotate %246 by %c255_i32_109 dim 0 : vector<256x128xf32>, i32 -> vector<256x128xf32>
    %cst_110 = arith.constant 0.000000e+00 : f32
    %267 = vector.broadcast %cst_110 : f32 to vector<256x128xf32>
    %268 = arith.select %10, %266, %267 : vector<256x128xi1>, vector<256x128xf32>
    %269 = arith.truncf %268 : vector<256x128xf32> to vector<256x128xbf16>
    %c241_i32_111 = arith.constant 241 : i32
    %270 = tpu.dynamic_rotate %246 by %c241_i32_111 dim 0 : vector<256x128xf32>, i32 -> vector<256x128xf32>
    %271 = arith.andi %6, %8 : vector<256x128xi1>
    %cst_112 = arith.constant 0.000000e+00 : f32
    %272 = vector.broadcast %cst_112 : f32 to vector<256x128xf32>
    %273 = arith.select %271, %270, %272 : vector<256x128xi1>, vector<256x128xf32>
    %274 = arith.truncf %273 : vector<256x128xf32> to vector<256x128xbf16>
    %c240_i32_113 = arith.constant 240 : i32
    %275 = tpu.dynamic_rotate %246 by %c240_i32_113 dim 0 : vector<256x128xf32>, i32 -> vector<256x128xf32>
    %cst_114 = arith.constant 0.000000e+00 : f32
    %276 = vector.broadcast %cst_114 : f32 to vector<256x128xf32>
    %277 = arith.select %6, %275, %276 : vector<256x128xi1>, vector<256x128xf32>
    %278 = arith.truncf %277 : vector<256x128xf32> to vector<256x128xbf16>
    %c239_i32_115 = arith.constant 239 : i32
    %279 = tpu.dynamic_rotate %246 by %c239_i32_115 dim 0 : vector<256x128xf32>, i32 -> vector<256x128xf32>
    %280 = arith.andi %6, %10 : vector<256x128xi1>
    %cst_116 = arith.constant 0.000000e+00 : f32
    %281 = vector.broadcast %cst_116 : f32 to vector<256x128xf32>
    %282 = arith.select %280, %279, %281 : vector<256x128xi1>, vector<256x128xf32>
    %283 = arith.truncf %282 : vector<256x128xf32> to vector<256x128xbf16>
    %284 = tpu.concatenate %251, %255, %260, %264, %265, %269, %274, %278, %283 in 1 : vector<256x128xbf16>, vector<256x128xbf16>, vector<256x128xbf16>, vector<256x128xbf16>, vector<256x128xbf16>, vector<256x128xbf16>, vector<256x128xbf16>, vector<256x128xbf16>, vector<256x128xbf16> -> vector<256x1152xbf16>
    %c4_117 = arith.constant 4 : index
    %c0_118 = arith.constant 0 : index
    %c0_119 = arith.constant 0 : index
    %285 = vector.load %arg3[%c4_117, %c0_118, %c0_119] : memref<5x1152x128xbf16, #tpu.memory_space<vmem>>, vector<1x1152x128xbf16>
    %286 = vector.shape_cast %285 : vector<1x1152x128xbf16> to vector<1152x128xbf16>
    %cst_120 = arith.constant dense<0.000000e+00> : vector<256x128xf32>
    %287 = tpu.matmul %284, %286, %cst_120 {dimension_numbers = #tpu.dot_dimension_numbers<[1], [0], [0], [1], [0, 0, 1, 1], [], []>} : vector<256x1152xbf16>, vector<1152x128xbf16>, vector<256x128xf32> -> vector<256x128xf32>
    %c5 = arith.constant 5 : index
    %c0_121 = arith.constant 0 : index
    %288 = vector.load %arg4[%c5, %c0_121] : memref<8x128xf32, #tpu.memory_space<vmem>>, vector<1x128xf32>
    %289 = vector.shape_cast %288 : vector<1x128xf32> to vector<128xf32>
    %290 = vector.shape_cast %289 : vector<128xf32> to vector<1x128xf32>
    %291 = vector.broadcast %290 : vector<1x128xf32> to vector<256x128xf32>
    %292 = arith.addf %287, %291 : vector<256x128xf32>
    %c0_122 = arith.constant 0 : index
    %c0_123 = arith.constant 0 : index
    %c0_124 = arith.constant 0 : index
    %293 = vector.load %arg6[%c0_122, %c0_123, %c0_124] : memref<1x256x128xf32, #tpu.memory_space<vmem>>, vector<1x256x128xf32>
    %294 = vector.shape_cast %293 : vector<1x256x128xf32> to vector<256x128xf32>
    %295 = vector.shape_cast %292 : vector<256x128xf32> to vector<1x256x128xf32>
    tpu.vector_store %arg6[%c0_122, %c0_123, %c0_124], %295 {strides = array<i32>} : memref<1x256x128xf32, #tpu.memory_space<vmem>>, vector<1x256x128xf32>,
    return
  }
  func.func @transform_0(%arg0: i32) -> (i32, i32, i32) {
    %c0_i32 = arith.constant 0 : i32
    %c0_i32_0 = arith.constant 0 : i32
    %c0_i32_1 = arith.constant 0 : i32
    return %arg0, %c0_i32, %c0_i32_0 : i32, i32, i32
  }
  func.func @transform_1(%arg0: i32) -> (i32, i32) {
    %c0_i32 = arith.constant 0 : i32
    %c0_i32_0 = arith.constant 0 : i32
    %c0_i32_1 = arith.constant 0 : i32
    return %c0_i32, %c0_i32_0 : i32, i32
  }
  func.func @transform_2(%arg0: i32) -> (i32, i32, i32) {
    %c0_i32 = arith.constant 0 : i32
    %c0_i32_0 = arith.constant 0 : i32
    %c0_i32_1 = arith.constant 0 : i32
    %c0_i32_2 = arith.constant 0 : i32
    return %c0_i32, %c0_i32_0, %c0_i32_1 : i32, i32, i32
  }
  func.func @transform_3(%arg0: i32) -> (i32, i32) {
    %c0_i32 = arith.constant 0 : i32
    %c0_i32_0 = arith.constant 0 : i32
    %c0_i32_1 = arith.constant 0 : i32
    return %c0_i32, %c0_i32_0 : i32, i32
  }
  func.func @transform_4(%arg0: i32) -> (i32, i32) {
    %c0_i32 = arith.constant 0 : i32
    %c0_i32_0 = arith.constant 0 : i32
    %c0_i32_1 = arith.constant 0 : i32
    return %c0_i32, %c0_i32_0 : i32, i32
  }
  func.func @transform_5(%arg0: i32) -> (i32, i32, i32) {
    %c0_i32 = arith.constant 0 : i32
    %c0_i32_0 = arith.constant 0 : i32
    %c0_i32_1 = arith.constant 0 : i32
    return %arg0, %c0_i32, %c0_i32_0 : i32, i32, i32
  }
}

</mosaic_0001>

<llo_original>
// kernel: encoder_forward.1
$region0: #{encoder_forward.1}
  #allocation0 [shape = 'u32[]', space=smem, size = 0x4, offset = 0x4, fixed_abs, tag = 'smem constant byte address 0x4 - core index']
  #allocation1 [shape = 'u32[144,128]{1,0:T(1,128)}', space=vmem, size = 0x12000, scoped, tag = 'internal scratch']
  %s0 = inlined_call_operand.vmem [shape: f32[2,256,128], index: 0, kind: input, shape index: {}]
  %s1 = inlined_call_operand.vmem [shape: bf16[128,128], index: 1, kind: input, shape index: {}]
  %s2 = inlined_call_operand.vmem [shape: bf16[5,1152,128], index: 2, kind: input, shape index: {}]
  %s3 = inlined_call_operand.vmem [shape: f32[8,128], index: 3, kind: input, shape index: {}]
  %s4 = inlined_call_operand.vmem [shape: f32[8,128], index: 4, kind: input, shape index: {}]
  %s5 = inlined_call_operand.hbm [shape: f32[2,256,128], index: 5, kind: output, shape index: {}]
  %s6 = sld [smem:[#allocation0]]
  $region53: #{encoder_forward.1} parent=0
    _
  %s8 = ssub.s32 1, %s6
  %s9 = scalar_select 0, %s8, %s6
  $region1: #{encoder_forward.1} parent=0
    #allocation2 [shape = 'u8[262144]{0}', space=vmem, size = 0x40000, scoped, tag = 'output window, operand 0']
    #allocation3 [shape = 's32[2]{0}', space=sflag, size = 0x8, scoped, tag = 'scoped memory for encoder_forward.1']
    %10 = vsyncpa [#allocation3], 0
    %s11 = scalar_lea.sflag [#allocation3], 1
    %12 = vsyncpa %s11, 0
    loop: start=0, step=1, limit=4
    $region2: #{encoder_forward.1} parent=1 // loop_pre_header
      _
    $region3: #{encoder_forward.1} parent=1 // loop_header
      %s14 = sphi 0, %s18
      %p15 = scmp.ge.s32.totalorder %s14, 4
      %s24 = sphi 0, %s26
      %s27 = sphi 0, %s24
      %s28 = sphi 0, %s27
      %s44 = sphi 0, %s28
      %s48 = sphi 0, %s48
      %s50 = sphi 0, %s48
      %s51 = sphi 0, %s50
      %s65 = sphi 0, %s51
      %s69 = sphi 0, %s69
      %s71 = sphi 0, %s69
      %s72 = sphi 0, %s71
      %s86 = sphi 0, %s72
      %s90 = sphi 0, %s90
      %s92 = sphi 0, %s90
      %s93 = sphi 0, %s92
      %s107 = sphi 0, %s93
      %s111 = sphi 0, %s111
      %s113 = sphi 0, %s111
      %s114 = sphi 0, %s113
      %s128 = sphi 0, %s114
      %s134 = sphi 0, %s136
      %s137 = sphi 0, %s134
      %s138 = sphi 0, %s137
      %s154 = sphi 0, %s138
    $region4: #{encoder_forward.1} parent=1 // loop_header_branch
      %17 = sbr.rel (%p15) target = $region8
    $region5: #{encoder_forward.1} parent=1 // loop_body
      %s19 = ssub.s32 %s14, 1
      %s20 = ssub.s32 %s14, 2
      %s21 = sadd.s32 %s14, 1
      %s22 = ssub.s32 %s14, %s21
      %p23 = scmp.eq.s32.totalorder %s22, 0
      %s25 = sadd.s32 %s24, 1
      %s26 = scalar_select %p23, %s24, %s25
      %p29 = pneg %p23
      %p30 = scmp.eq.s32.totalorder %s14, 1
      %p31 = por %p29, %p30
      %p32 = scmp.ne.s32.totalorder %s24, %s27
      %p33 = scmp.eq.s32.totalorder %s14, 0
      %p34 = por %p32, %p33
      %p35 = scmp.ne.s32.totalorder %s24, %s27
      %p36 = scmp.eq.s32.totalorder %s19, 1
      %p37 = por %p35, %p36
      %p38 = scmp.ne.s32.totalorder %s27, %s28
      %p39 = scmp.eq.s32.totalorder %s19, 0
      %p40 = por %p38, %p39
      %p41 = scmp.ne.s32.totalorder %s27, %s28
      %p42 = scmp.eq.s32.totalorder %s20, 1
      %p43 = por %p41, %p42
      %p45 = scmp.ne.s32.totalorder %s28, %s44
      %p46 = scmp.eq.s32.totalorder %s20, 0
      %p47 = por %p45, %p46
      %s49 = sadd.s32 %s48, 1
      %p52 = scmp.eq.s32.totalorder %s14, 1
      %p53 = scmp.ne.s32.totalorder %s48, %s50
      %p54 = scmp.eq.s32.totalorder %s14, 0
      %p55 = por %p53, %p54
      %p56 = scmp.ne.s32.totalorder %s48, %s50
      %p57 = scmp.eq.s32.totalorder %s19, 1
      %p58 = por %p56, %p57
      %p59 = scmp.ne.s32.totalorder %s50, %s51
      %p60 = scmp.eq.s32.totalorder %s19, 0
      %p61 = por %p59, %p60
      %p62 = scmp.ne.s32.totalorder %s50, %s51
      %p63 = scmp.eq.s32.totalorder %s20, 1
      %p64 = por %p62, %p63
      %p66 = scmp.ne.s32.totalorder %s51, %s65
      %p67 = scmp.eq.s32.totalorder %s20, 0
      %p68 = por %p66, %p67
      %s70 = sadd.s32 %s69, 1
      %p73 = scmp.eq.s32.totalorder %s14, 1
      %p74 = scmp.ne.s32.totalorder %s69, %s71
      %p75 = scmp.eq.s32.totalorder %s14, 0
      %p76 = por %p74, %p75
      %p77 = scmp.ne.s32.totalorder %s69, %s71
      %p78 = scmp.eq.s32.totalorder %s19, 1
      %p79 = por %p77, %p78
      %p80 = scmp.ne.s32.totalorder %s71, %s72
      %p81 = scmp.eq.s32.totalorder %s19, 0
      %p82 = por %p80, %p81
      %p83 = scmp.ne.s32.totalorder %s71, %s72
      %p84 = scmp.eq.s32.totalorder %s20, 1
      %p85 = por %p83, %p84
      %p87 = scmp.ne.s32.totalorder %s72, %s86
      %p88 = scmp.eq.s32.totalorder %s20, 0
      %p89 = por %p87, %p88
      %s91 = sadd.s32 %s90, 1
      %p94 = scmp.eq.s32.totalorder %s14, 1
      %p95 = scmp.ne.s32.totalorder %s90, %s92
      %p96 = scmp.eq.s32.totalorder %s14, 0
      %p97 = por %p95, %p96
      %p98 = scmp.ne.s32.totalorder %s90, %s92
      %p99 = scmp.eq.s32.totalorder %s19, 1
      %p100 = por %p98, %p99
      %p101 = scmp.ne.s32.totalorder %s92, %s93
      %p102 = scmp.eq.s32.totalorder %s19, 0
      %p103 = por %p101, %p102
      %p104 = scmp.ne.s32.totalorder %s92, %s93
      %p105 = scmp.eq.s32.totalorder %s20, 1
      %p106 = por %p104, %p105
      %p108 = scmp.ne.s32.totalorder %s93, %s107
      %p109 = scmp.eq.s32.totalorder %s20, 0
      %p110 = por %p108, %p109
      %s112 = sadd.s32 %s111, 1
      %p115 = scmp.eq.s32.totalorder %s14, 1
      %p116 = scmp.ne.s32.totalorder %s111, %s113
      %p117 = scmp.eq.s32.totalorder %s14, 0
      %p118 = por %p116, %p117
      %p119 = scmp.ne.s32.totalorder %s111, %s113
      %p120 = scmp.eq.s32.totalorder %s19, 1
      %p121 = por %p119, %p120
      %p122 = scmp.ne.s32.totalorder %s113, %s114
      %p123 = scmp.eq.s32.totalorder %s19, 0
      %p124 = por %p122, %p123
      %p125 = scmp.ne.s32.totalorder %s113, %s114
      %p126 = scmp.eq.s32.totalorder %s20, 1
      %p127 = por %p125, %p126
      %p129 = scmp.ne.s32.totalorder %s114, %s128
      %p130 = scmp.eq.s32.totalorder %s20, 0
      %p131 = por %p129, %p130
      %s132 = ssub.s32 %s14, %s21
      %p133 = scmp.eq.s32.totalorder %s132, 0
      %s135 = sadd.s32 %s134, 1
      %s136 = scalar_select %p133, %s134, %s135
      %p139 = pneg %p133
      %p140 = scmp.eq.s32.totalorder %s14, 1
      %p141 = por %p139, %p140
      %p142 = scmp.ne.s32.totalorder %s134, %s137
      %p143 = scmp.eq.s32.totalorder %s14, 0
      %p144 = por %p142, %p143
      %p145 = scmp.ne.s32.totalorder %s134, %s137
      %p146 = scmp.eq.s32.totalorder %s19, 1
      %p147 = por %p145, %p146
      %p148 = scmp.ne.s32.totalorder %s137, %s138
      %p149 = scmp.eq.s32.totalorder %s19, 0
      %p150 = por %p148, %p149
      %p151 = scmp.ne.s32.totalorder %s137, %s138
      %p152 = scmp.eq.s32.totalorder %s20, 1
      %p153 = por %p151, %p152
      %p155 = scmp.ne.s32.totalorder %s138, %s154
      %p156 = scmp.eq.s32.totalorder %s20, 0
      %p157 = por %p155, %p156
      %p158 = scmp.le.s32.totalorder 1, %s14
      %p159 = scmp.lt.s32.totalorder %s14, 3
      %p160 = pnand %p158, %p159
      %p161 = pneg %p160
      // Predicated region
      $region9: #{encoder_forward.1} parent=5 // pred_check
        _
      $region10: #{encoder_forward.1} parent=5 // pred_check_branch
        %163 = sbr.rel (%p160) target = $region12
      $region11: #{encoder_forward.1} parent=5 // pred_region
        %s164 = ssub.s32 %s14, 1
        // Predicated region
        $region13: #{encoder_forward.1} parent=11 // pred_check
          %p165 = pneg %p61
        $region14: #{encoder_forward.1} parent=11 // pred_check_branch
          %167 = sbr.rel (%p165) target = $region16
        $region15: #{encoder_forward.1} parent=11 // pred_region
          _
        $region16: #{encoder_forward.1} parent=11 // pred_fallthru
          _
        // Predicated region
        $region17: #{encoder_forward.1} parent=11 // pred_check
          %p168 = pneg %p82
        $region18: #{encoder_forward.1} parent=11 // pred_check_branch
          %170 = sbr.rel (%p168) target = $region20
        $region19: #{encoder_forward.1} parent=11 // pred_region
          _
        $region20: #{encoder_forward.1} parent=11 // pred_fallthru
          _
        // Predicated region
        $region21: #{encoder_forward.1} parent=11 // pred_check
          %p171 = pneg %p103
        $region22: #{encoder_forward.1} parent=11 // pred_check_branch
          %173 = sbr.rel (%p171) target = $region24
        $region23: #{encoder_forward.1} parent=11 // pred_region
          _
        $region24: #{encoder_forward.1} parent=11 // pred_fallthru
          _
        // Predicated region
        $region25: #{encoder_forward.1} parent=11 // pred_check
          %p174 = pneg %p124
        $region26: #{encoder_forward.1} parent=11 // pred_check_branch
          %176 = sbr.rel (%p174) target = $region28
        $region27: #{encoder_forward.1} parent=11 // pred_region
          _
        $region28: #{encoder_forward.1} parent=11 // pred_fallthru
          _
      $region12: #{encoder_forward.1} parent=5 // pred_fallthru
        _
      %p177 = scmp.lt.s32.totalorder %s14, 2
      // Predicated region
      $region29: #{encoder_forward.1} parent=5 // pred_check
        %p178 = pneg %p177
      $region30: #{encoder_forward.1} parent=5 // pred_check_branch
        %180 = sbr.rel (%p178) target = $region32
      $region31: #{encoder_forward.1} parent=5 // pred_region
        // Predicated region
        $region33: #{encoder_forward.1} parent=31 // pred_check
          %p181 = pneg %p34
        $region34: #{encoder_forward.1} parent=31 // pred_check_branch
          %183 = sbr.rel (%p181) target = $region36
        $region35: #{encoder_forward.1} parent=31 // pred_region
          %p184 = scmp.lt.s32.totalorder %s14, 1
          %s185 = scalar_select %p184, %s14, 1
          %s186 = smul.addr %s185, 32
          %s187 = smul.addr %s186, 8
          %s188 = scalar_lea.vmem %s0, %s187
        $region36: #{encoder_forward.1} parent=31 // pred_fallthru
          _
      $region32: #{encoder_forward.1} parent=5 // pred_fallthru
        _
      %p189 = scmp.le.s32.totalorder 1, %s14
      %p190 = scmp.lt.s32.totalorder %s14, 3
      %p191 = pnand %p189, %p190
      %p192 = pneg %p191
      // Predicated region
      $region37: #{encoder_forward.1} parent=5 // pred_check
        _
      $region38: #{encoder_forward.1} parent=5 // pred_check_branch
        %194 = sbr.rel (%p191) target = $region40
      $region39: #{encoder_forward.1} parent=5 // pred_region
        %s195 = ssub.s32 %s14, 1
        %p196 = scmp.lt.s32.totalorder %s19, 1
        %s197 = scalar_select %p196, %s19, 1
        %s198 = smul.addr %s197, 32
        %s199 = smul.addr %s198, 8
        %s200 = scalar_lea.vmem %s0, %s199
        %p201 = pneg %p40
        %p202 = pneg %p37
        %p203 = pneg %p61
        %p204 = pneg %p58
        %p205 = pneg %p82
        %p206 = pneg %p79
        %p207 = pneg %p103
        %p208 = pneg %p100
        %p209 = pneg %p124
        %p210 = pneg %p121
        %p211 = pneg %p150
        %p212 = pneg %p147
        %s213 = sand.u32 %s137, 1
        %s214 = scalar_lea.sflag [#allocation3], %s213
        %s215 = sand.u32 %s137, 1
        %s216 = smul.addr %s215, 256
        %s217 = scalar_lea.vmem [#allocation2], %s216
        %p218 = scmp.lt.s32.totalorder %s19, 1
        %s219 = scalar_select %p218, %s19, 1
        %s220 = smul.addr %s219, 32
        %s221 = smul.addr %s220, 8
        %s222 = scalar_lea.vmem %s0, %s221
        %v224 = vlaneseq
        %v225 = vshrl.u32 %v224, 7
        %v226 = vadd.s32 %v225, 8
        %v227 = vadd.s32 %v225, 16
        %v228 = vadd.s32 %v225, 24
        %v229 = vadd.s32 %v225, 32
        %v230 = vadd.s32 %v225, 40
        %v231 = vadd.s32 %v225, 48
        %v232 = vadd.s32 %v225, 56
        %v233 = vadd.s32 %v225, 64
        %v234 = vadd.s32 %v225, 72
        %v235 = vadd.s32 %v225, 80
        %v236 = vadd.s32 %v225, 88
        %v237 = vadd.s32 %v225, 96
        %v238 = vadd.s32 %v225, 104
        %v239 = vadd.s32 %v225, 112
        %v240 = vadd.s32 %v225, 120
        %v241 = vadd.s32 %v225, 128
        %v242 = vadd.s32 %v225, 136
        %v243 = vadd.s32 %v225, 144
        %v244 = vadd.s32 %v225, 152
        %v245 = vadd.s32 %v225, 160
        %v246 = vadd.s32 %v225, 168
        %v247 = vadd.s32 %v225, 176
        %v248 = vadd.s32 %v225, 184
        %v249 = vadd.s32 %v225, 192
        %v250 = vadd.s32 %v225, 200
        %v251 = vadd.s32 %v225, 208
        %v252 = vadd.s32 %v225, 216
        %v253 = vadd.s32 %v225, 224
        %v254 = vadd.s32 %v225, 232
        %v255 = vadd.s32 %v225, 240
        %v256 = vadd.s32 %v225, 248
        %v257 = vand.u32 %v225, 15
        %v258 = vand.u32 %v226, 15
        %v259 = vand.u32 %v227, 15
        %v260 = vand.u32 %v228, 15
        %v261 = vand.u32 %v229, 15
        %v262 = vand.u32 %v230, 15
        %v263 = vand.u32 %v231, 15
        %v264 = vand.u32 %v232, 15
        %v265 = vand.u32 %v233, 15
        %v266 = vand.u32 %v234, 15
        %v267 = vand.u32 %v235, 15
        %v268 = vand.u32 %v236, 15
        %v269 = vand.u32 %v237, 15
        %v270 = vand.u32 %v238, 15
        %v271 = vand.u32 %v239, 15
        %v272 = vand.u32 %v240, 15
        %v273 = vand.u32 %v241, 15
        %v274 = vand.u32 %v242, 15
        %v275 = vand.u32 %v243, 15
        %v276 = vand.u32 %v244, 15
        %v277 = vand.u32 %v245, 15
        %v278 = vand.u32 %v246, 15
        %v279 = vand.u32 %v247, 15
        %v280 = vand.u32 %v248, 15
        %v281 = vand.u32 %v249, 15
        %v282 = vand.u32 %v250, 15
        %v283 = vand.u32 %v251, 15
        %v284 = vand.u32 %v252, 15
        %v285 = vand.u32 %v253, 15
        %v286 = vand.u32 %v254, 15
        %v287 = vand.u32 %v255, 15
        %v288 = vand.u32 %v256, 15
        %vm289 = vcmp.ge.s32.totalorder %v225, 16
        %vm290 = vcmp.ge.s32.totalorder %v226, 16
        %vm291 = vcmp.ge.s32.totalorder %v227, 16
        %vm292 = vcmp.ge.s32.totalorder %v228, 16
        %vm293 = vcmp.ge.s32.totalorder %v229, 16
        %vm294 = vcmp.ge.s32.totalorder %v230, 16
        %vm295 = vcmp.ge.s32.totalorder %v231, 16
        %vm296 = vcmp.ge.s32.totalorder %v232, 16
        %vm297 = vcmp.ge.s32.totalorder %v233, 16
        %vm298 = vcmp.ge.s32.totalorder %v234, 16
        %vm299 = vcmp.ge.s32.totalorder %v235, 16
        %vm300 = vcmp.ge.s32.totalorder %v236, 16
        %vm301 = vcmp.ge.s32.totalorder %v237, 16
        %vm302 = vcmp.ge.s32.totalorder %v238, 16
        %vm303 = vcmp.ge.s32.totalorder %v239, 16
        %vm304 = vcmp.ge.s32.totalorder %v240, 16
        %vm305 = vcmp.ge.s32.totalorder %v241, 16
        %vm306 = vcmp.ge.s32.totalorder %v242, 16
        %vm307 = vcmp.ge.s32.totalorder %v243, 16
        %vm308 = vcmp.ge.s32.totalorder %v244, 16
        %vm309 = vcmp.ge.s32.totalorder %v245, 16
        %vm310 = vcmp.ge.s32.totalorder %v246, 16
        %vm311 = vcmp.ge.s32.totalorder %v247, 16
        %vm312 = vcmp.ge.s32.totalorder %v248, 16
        %vm313 = vcmp.ge.s32.totalorder %v249, 16
        %vm314 = vcmp.ge.s32.totalorder %v250, 16
        %vm315 = vcmp.ge.s32.totalorder %v251, 16
        %vm316 = vcmp.ge.s32.totalorder %v252, 16
        %vm317 = vcmp.ge.s32.totalorder %v253, 16
        %vm318 = vcmp.ge.s32.totalorder %v254, 16
        %vm319 = vcmp.ge.s32.totalorder %v255, 16
        %vm320 = vcmp.ge.s32.totalorder %v256, 16
        %vm321 = vcmp.lt.s32.totalorder %v225, 240
        %vm322 = vcmp.lt.s32.totalorder %v226, 240
        %vm323 = vcmp.lt.s32.totalorder %v227, 240
        %vm324 = vcmp.lt.s32.totalorder %v228, 240
        %vm325 = vcmp.lt.s32.totalorder %v229, 240
        %vm326 = vcmp.lt.s32.totalorder %v230, 240
        %vm327 = vcmp.lt.s32.totalorder %v231, 240
        %vm328 = vcmp.lt.s32.totalorder %v232, 240
        %vm329 = vcmp.lt.s32.totalorder %v233, 240
        %vm330 = vcmp.lt.s32.totalorder %v234, 240
        %vm331 = vcmp.lt.s32.totalorder %v235, 240
        %vm332 = vcmp.lt.s32.totalorder %v236, 240
        %vm333 = vcmp.lt.s32.totalorder %v237, 240
        %vm334 = vcmp.lt.s32.totalorder %v238, 240
        %vm335 = vcmp.lt.s32.totalorder %v239, 240
        %vm336 = vcmp.lt.s32.totalorder %v240, 240
        %vm337 = vcmp.lt.s32.totalorder %v241, 240
        %vm338 = vcmp.lt.s32.totalorder %v242, 240
        %vm339 = vcmp.lt.s32.totalorder %v243, 240
        %vm340 = vcmp.lt.s32.totalorder %v244, 240
        %vm341 = vcmp.lt.s32.totalorder %v245, 240
        %vm342 = vcmp.lt.s32.totalorder %v246, 240
        %vm343 = vcmp.lt.s32.totalorder %v247, 240
        %vm344 = vcmp.lt.s32.totalorder %v248, 240
        %vm345 = vcmp.lt.s32.totalorder %v249, 240
        %vm346 = vcmp.lt.s32.totalorder %v250, 240
        %vm347 = vcmp.lt.s32.totalorder %v251, 240
        %vm348 = vcmp.lt.s32.totalorder %v252, 240
        %vm349 = vcmp.lt.s32.totalorder %v253, 240
        %vm350 = vcmp.lt.s32.totalorder %v254, 240
        %vm351 = vcmp.lt.s32.totalorder %v255, 240
        %vm352 = vcmp.lt.s32.totalorder %v256, 240
        %vm353 = vcmp.ge.s32.totalorder %v257, 1
        %vm354 = vcmp.ge.s32.totalorder %v258, 1
        %vm355 = vcmp.ge.s32.totalorder %v259, 1
        %vm356 = vcmp.ge.s32.totalorder %v260, 1
        %vm357 = vcmp.ge.s32.totalorder %v261, 1
        %vm358 = vcmp.ge.s32.totalorder %v262, 1
        %vm359 = vcmp.ge.s32.totalorder %v263, 1
        %vm360 = vcmp.ge.s32.totalorder %v264, 1
        %vm361 = vcmp.ge.s32.totalorder %v265, 1
        %vm362 = vcmp.ge.s32.totalorder %v266, 1
        %vm363 = vcmp.ge.s32.totalorder %v267, 1
        %vm364 = vcmp.ge.s32.totalorder %v268, 1
        %vm365 = vcmp.ge.s32.totalorder %v269, 1
        %vm366 = vcmp.ge.s32.totalorder %v270, 1
        %vm367 = vcmp.ge.s32.totalorder %v271, 1
        %vm368 = vcmp.ge.s32.totalorder %v272, 1
        %vm369 = vcmp.ge.s32.totalorder %v273, 1
        %vm370 = vcmp.ge.s32.totalorder %v274, 1
        %vm371 = vcmp.ge.s32.totalorder %v275, 1
        %vm372 = vcmp.ge.s32.totalorder %v276, 1
        %vm373 = vcmp.ge.s32.totalorder %v277, 1
        %vm374 = vcmp.ge.s32.totalorder %v278, 1
        %vm375 = vcmp.ge.s32.totalorder %v279, 1
        %vm376 = vcmp.ge.s32.totalorder %v280, 1
        %vm377 = vcmp.ge.s32.totalorder %v281, 1
        %vm378 = vcmp.ge.s32.totalorder %v282, 1
        %vm379 = vcmp.ge.s32.totalorder %v283, 1
        %vm380 = vcmp.ge.s32.totalorder %v284, 1
        %vm381 = vcmp.ge.s32.totalorder %v285, 1
        %vm382 = vcmp.ge.s32.totalorder %v286, 1
        %vm383 = vcmp.ge.s32.totalorder %v287, 1
        %vm384 = vcmp.ge.s32.totalorder %v288, 1
        %vm385 = vcmp.le.s32.totalorder %v257, 14
        %vm386 = vcmp.le.s32.totalorder %v258, 14
        %vm387 = vcmp.le.s32.totalorder %v259, 14
        %vm388 = vcmp.le.s32.totalorder %v260, 14
        %vm389 = vcmp.le.s32.totalorder %v261, 14
        %vm390 = vcmp.le.s32.totalorder %v262, 14
        %vm391 = vcmp.le.s32.totalorder %v263, 14
        %vm392 = vcmp.le.s32.totalorder %v264, 14
        %vm393 = vcmp.le.s32.totalorder %v265, 14
        %vm394 = vcmp.le.s32.totalorder %v266, 14
        %vm395 = vcmp.le.s32.totalorder %v267, 14
        %vm396 = vcmp.le.s32.totalorder %v268, 14
        %vm397 = vcmp.le.s32.totalorder %v269, 14
        %vm398 = vcmp.le.s32.totalorder %v270, 14
        %vm399 = vcmp.le.s32.totalorder %v271, 14
        %vm400 = vcmp.le.s32.totalorder %v272, 14
        %vm401 = vcmp.le.s32.totalorder %v273, 14
        %vm402 = vcmp.le.s32.totalorder %v274, 14
        %vm403 = vcmp.le.s32.totalorder %v275, 14
        %vm404 = vcmp.le.s32.totalorder %v276, 14
        %vm405 = vcmp.le.s32.totalorder %v277, 14
        %vm406 = vcmp.le.s32.totalorder %v278, 14
        %vm407 = vcmp.le.s32.totalorder %v279, 14
        %vm408 = vcmp.le.s32.totalorder %v280, 14
        %vm409 = vcmp.le.s32.totalorder %v281, 14
        %vm410 = vcmp.le.s32.totalorder %v282, 14
        %vm411 = vcmp.le.s32.totalorder %v283, 14
        %vm412 = vcmp.le.s32.totalorder %v284, 14
        %vm413 = vcmp.le.s32.totalorder %v285, 14
        %vm414 = vcmp.le.s32.totalorder %v286, 14
        %vm415 = vcmp.le.s32.totalorder %v287, 14
        %vm416 = vcmp.le.s32.totalorder %v288, 14
        %v417 = vld [vmem:[%s222] sm:$0xff]
        %v418 = vld [vmem:[%s222 + $0x8] sm:$0xff]
        %v419 = vld [vmem:[%s222 + $0x10] sm:$0xff]
        %v420 = vld [vmem:[%s222 + $0x18] sm:$0xff]
        %v421 = vld [vmem:[%s222 + $0x20] sm:$0xff]
        %v422 = vld [vmem:[%s222 + $0x28] sm:$0xff]
        %v423 = vld [vmem:[%s222 + $0x30] sm:$0xff]
        %v424 = vld [vmem:[%s222 + $0x38] sm:$0xff]
        %v425 = vld [vmem:[%s222 + $0x40] sm:$0xff]
        %v426 = vld [vmem:[%s222 + $0x48] sm:$0xff]
        %v427 = vld [vmem:[%s222 + $0x50] sm:$0xff]
        %v428 = vld [vmem:[%s222 + $0x58] sm:$0xff]
        %v429 = vld [vmem:[%s222 + $0x60] sm:$0xff]
        %v430 = vld [vmem:[%s222 + $0x68] sm:$0xff]
        %v431 = vld [vmem:[%s222 + $0x70] sm:$0xff]
        %v432 = vld [vmem:[%s222 + $0x78] sm:$0xff]
        %v433 = vld [vmem:[%s222 + $0x80] sm:$0xff]
        %v434 = vld [vmem:[%s222 + $0x88] sm:$0xff]
        %v435 = vld [vmem:[%s222 + $0x90] sm:$0xff]
        %v436 = vld [vmem:[%s222 + $0x98] sm:$0xff]
        %v437 = vld [vmem:[%s222 + $0xa0] sm:$0xff]
        %v438 = vld [vmem:[%s222 + $0xa8] sm:$0xff]
        %v439 = vld [vmem:[%s222 + $0xb0] sm:$0xff]
        %v440 = vld [vmem:[%s222 + $0xb8] sm:$0xff]
        %v441 = vld [vmem:[%s222 + $0xc0] sm:$0xff]
        %v442 = vld [vmem:[%s222 + $0xc8] sm:$0xff]
        %v443 = vld [vmem:[%s222 + $0xd0] sm:$0xff]
        %v444 = vld [vmem:[%s222 + $0xd8] sm:$0xff]
        %v445 = vld [vmem:[%s222 + $0xe0] sm:$0xff]
        %v446 = vld [vmem:[%s222 + $0xe8] sm:$0xff]
        %v447 = vld [vmem:[%s222 + $0xf0] sm:$0xff]
        %v448 = vld [vmem:[%s222 + $0xf8] sm:$0xff]
        %v449 = vpack.c.bf16 %v418, %v417
        %v450 = vpack.c.bf16 %v420, %v419
        %v451 = vpack.c.bf16 %v422, %v421
        %v452 = vpack.c.bf16 %v424, %v423
        %v453 = vpack.c.bf16 %v426, %v425
        %v454 = vpack.c.bf16 %v428, %v427
        %v455 = vpack.c.bf16 %v430, %v429
        %v456 = vpack.c.bf16 %v432, %v431
        %v457 = vpack.c.bf16 %v434, %v433
        %v458 = vpack.c.bf16 %v436, %v435
        %v459 = vpack.c.bf16 %v438, %v437
        %v460 = vpack.c.bf16 %v440, %v439
        %v461 = vpack.c.bf16 %v442, %v441
        %v462 = vpack.c.bf16 %v444, %v443
        %v463 = vpack.c.bf16 %v446, %v445
        %v464 = vpack.c.bf16 %v448, %v447
        %v465 = vld [vmem:[%s1] sm:$0xf]
        %v466 = vld [vmem:[%s1 + $0x4] sm:$0xf]
        %v467 = vld [vmem:[%s1 + $0x8] sm:$0xf]
        %v468 = vld [vmem:[%s1 + $0xc] sm:$0xf]
        %v469 = vld [vmem:[%s1 + $0x10] sm:$0xf]
        %v470 = vld [vmem:[%s1 + $0x14] sm:$0xf]
        %v471 = vld [vmem:[%s1 + $0x18] sm:$0xf]
        %v472 = vld [vmem:[%s1 + $0x1c] sm:$0xf]
        %v473 = vld [vmem:[%s1 + $0x20] sm:$0xf]
        %v474 = vld [vmem:[%s1 + $0x24] sm:$0xf]
        %v475 = vld [vmem:[%s1 + $0x28] sm:$0xf]
        %v476 = vld [vmem:[%s1 + $0x2c] sm:$0xf]
        %v477 = vld [vmem:[%s1 + $0x30] sm:$0xf]
        %v478 = vld [vmem:[%s1 + $0x34] sm:$0xf]
        %v479 = vld [vmem:[%s1 + $0x38] sm:$0xf]
        %v480 = vld [vmem:[%s1 + $0x3c] sm:$0xf]
        %v481 = vld [vmem:[%s3] sm:$0x1]
        %v482 = vlaneseq
        %v483 = vshrl.u32 %v482, 7
        %v484 = vsub.s32 0, %v483
        %v485 = vrot.slane %v481, %v484
        %v502 = vunpack.c.l.b16 %v465
        %v503 = vunpack.c.l.b16 %v466
        %v504 = vunpack.c.l.b16 %v467
        %v505 = vunpack.c.l.b16 %v468
        %v506 = vunpack.c.l.b16 %v469
        %v507 = vunpack.c.l.b16 %v470
        %v508 = vunpack.c.l.b16 %v471
        %v509 = vunpack.c.l.b16 %v472
        %v510 = vunpack.c.l.b16 %v473
        %v511 = vunpack.c.l.b16 %v474
        %v512 = vunpack.c.l.b16 %v475
        %v513 = vunpack.c.l.b16 %v476
        %v514 = vunpack.c.l.b16 %v477
        %v515 = vunpack.c.l.b16 %v478
        %v516 = vunpack.c.l.b16 %v479
        %v517 = vunpack.c.l.b16 %v480
        %v518 = vpack.c.b16 %v503, %v502
        %v519 = vpack.c.b16 %v505, %v504
        %v520 = vpack.c.b16 %v507, %v506
        %v521 = vpack.c.b16 %v509, %v508
        %v522 = vpack.c.b16 %v511, %v510
        %v523 = vpack.c.b16 %v513, %v512
        %v524 = vpack.c.b16 %v515, %v514
        %v525 = vpack.c.b16 %v517, %v516
        %534 = vmatprep.subr.bf16.mxu0 0
        %535 = vmatpush1.bf16.msra.mxu0 %v518
        %536 = vmatprep.subr.bf16.mxu0 0
        %537 = vmatpush1.bf16.msra.mxu0 %v519
        %538 = vmatprep.subr.bf16.mxu0 0
        %539 = vmatpush1.bf16.msra.mxu0 %v520
        %540 = vmatprep.subr.bf16.mxu0 0
        %541 = vmatpush1.bf16.msra.mxu0 %v521
        %542 = vmatprep.subr.bf16.mxu0 0
        %543 = vmatpush1.bf16.msra.mxu0 %v522
        %544 = vmatprep.subr.bf16.mxu0 0
        %545 = vmatpush1.bf16.msra.mxu0 %v523
        %546 = vmatprep.subr.bf16.mxu0 0
        %547 = vmatpush1.bf16.msra.mxu0 %v524
        %548 = vmatprep.subr.bf16.mxu0 0
        %549 = vmatpush1.bf16.msra.mxu0 %v525
        %550 = vmatprep.subr.bf16.mxu0 0
        %551 = vmatpush1.bf16.msra.mxu0 0
        %552 = vmatprep.subr.bf16.mxu0 0
        %553 = vmatpush1.bf16.msra.mxu0 0
        %554 = vmatprep.subr.bf16.mxu0 0
        %555 = vmatpush1.bf16.msra.mxu0 0
        %556 = vmatprep.subr.bf16.mxu0 0
        %557 = vmatpush1.bf16.msra.mxu0 0
        %558 = vmatprep.subr.bf16.mxu0 0
        %559 = vmatpush1.bf16.msra.mxu0 0
        %560 = vmatprep.subr.bf16.mxu0 0
        %561 = vmatpush1.bf16.msra.mxu0 0
        %562 = vmatprep.subr.bf16.mxu0 0
        %563 = vmatpush1.bf16.msra.mxu0 0
        %564 = vmatprep.subr.bf16.mxu0 0
        %565 = vmatpush1.bf16.msra.mxu0 0
        %566 = vmatprep.mubr.bf16.mxu0 0
        %567 = vmatmul.mubr.bf16.gmra.mrb[0].mxu0 %v449
        %v568 = vpop.f32.mrb[0].mxu0
        %v569 = vadd.f32 %v485, %v568
        %v570 = vpop.f32.mrb[0].mxu0
        %v571 = vpop.f32.mrb[0].mxu0
        %v572 = vadd.f32 %v485, %v571
        %v573 = vpop.f32.mrb[0].mxu0
        %574 = vmatprep.mubr.bf16.mxu0 0
        %575 = vmatmul.mubr.bf16.gmra.mrb[0].mxu0 %v450
        %v576 = vpop.f32.mrb[0].mxu0
        %v577 = vadd.f32 %v485, %v576
        %v578 = vpop.f32.mrb[0].mxu0
        %v579 = vpop.f32.mrb[0].mxu0
        %v580 = vadd.f32 %v485, %v579
        %v581 = vpop.f32.mrb[0].mxu0
        %582 = vmatprep.mubr.bf16.mxu0 0
        %583 = vmatmul.mubr.bf16.gmra.mrb[0].mxu0 %v451
        %v584 = vpop.f32.mrb[0].mxu0
        %v585 = vadd.f32 %v485, %v584
        %v586 = vpop.f32.mrb[0].mxu0
        %v587 = vpop.f32.mrb[0].mxu0
        %v588 = vadd.f32 %v485, %v587
        %v589 = vpop.f32.mrb[0].mxu0
        %590 = vmatprep.mubr.bf16.mxu0 0
        %591 = vmatmul.mubr.bf16.gmra.mrb[0].mxu0 %v452
        %v592 = vpop.f32.mrb[0].mxu0
        %v593 = vadd.f32 %v485, %v592
        %v594 = vpop.f32.mrb[0].mxu0
        %v595 = vpop.f32.mrb[0].mxu0
        %v596 = vadd.f32 %v485, %v595
        %v597 = vpop.f32.mrb[0].mxu0
        %598 = vmatprep.mubr.bf16.mxu0 0
        %599 = vmatmul.mubr.bf16.gmra.mrb[0].mxu0 %v453
        %v600 = vpop.f32.mrb[0].mxu0
        %v601 = vadd.f32 %v485, %v600
        %v602 = vpop.f32.mrb[0].mxu0
        %v603 = vpop.f32.mrb[0].mxu0
        %v604 = vadd.f32 %v485, %v603
        %v605 = vpop.f32.mrb[0].mxu0
        %606 = vmatprep.mubr.bf16.mxu0 0
        %607 = vmatmul.mubr.bf16.gmra.mrb[0].mxu0 %v454
        %v608 = vpop.f32.mrb[0].mxu0
        %v609 = vadd.f32 %v485, %v608
        %v610 = vpop.f32.mrb[0].mxu0
        %v611 = vpop.f32.mrb[0].mxu0
        %v612 = vadd.f32 %v485, %v611
        %v613 = vpop.f32.mrb[0].mxu0
        %614 = vmatprep.mubr.bf16.mxu0 0
        %615 = vmatmul.mubr.bf16.gmra.mrb[0].mxu0 %v455
        %v616 = vpop.f32.mrb[0].mxu0
        %v617 = vadd.f32 %v485, %v616
        %v618 = vpop.f32.mrb[0].mxu0
        %v619 = vpop.f32.mrb[0].mxu0
        %v620 = vadd.f32 %v485, %v619
        %v621 = vpop.f32.mrb[0].mxu0
        %622 = vmatprep.mubr.bf16.mxu0 0
        %623 = vmatmul.mubr.bf16.gmra.mrb[0].mxu0 %v456
        %v624 = vpop.f32.mrb[0].mxu0
        %v625 = vadd.f32 %v485, %v624
        %v626 = vpop.f32.mrb[0].mxu0
        %v627 = vpop.f32.mrb[0].mxu0
        %v628 = vadd.f32 %v485, %v627
        %v629 = vpop.f32.mrb[0].mxu0
        %630 = vmatprep.mubr.bf16.mxu0 0
        %631 = vmatmul.mubr.bf16.gmra.mrb[0].mxu0 %v457
        %v632 = vpop.f32.mrb[0].mxu0
        %v633 = vadd.f32 %v485, %v632
        %v634 = vpop.f32.mrb[0].mxu0
        %v635 = vpop.f32.mrb[0].mxu0
        %v636 = vadd.f32 %v485, %v635
        %v637 = vpop.f32.mrb[0].mxu0
        %638 = vmatprep.mubr.bf16.mxu0 0
        %639 = vmatmul.mubr.bf16.gmra.mrb[0].mxu0 %v458
        %v640 = vpop.f32.mrb[0].mxu0
        %v641 = vadd.f32 %v485, %v640
        %v642 = vpop.f32.mrb[0].mxu0
        %v643 = vpop.f32.mrb[0].mxu0
        %v644 = vadd.f32 %v485, %v643
        %v645 = vpop.f32.mrb[0].mxu0
        %646 = vmatprep.mubr.bf16.mxu0 0
        %647 = vmatmul.mubr.bf16.gmra.mrb[0].mxu0 %v459
        %v648 = vpop.f32.mrb[0].mxu0
        %v649 = vadd.f32 %v485, %v648
        %v650 = vpop.f32.mrb[0].mxu0
        %v651 = vpop.f32.mrb[0].mxu0
        %v652 = vadd.f32 %v485, %v651
        %v653 = vpop.f32.mrb[0].mxu0
        %654 = vmatprep.mubr.bf16.mxu0 0
        %655 = vmatmul.mubr.bf16.gmra.mrb[0].mxu0 %v460
        %v656 = vpop.f32.mrb[0].mxu0
        %v657 = vadd.f32 %v485, %v656
        %v658 = vpop.f32.mrb[0].mxu0
        %v659 = vpop.f32.mrb[0].mxu0
        %v660 = vadd.f32 %v485, %v659
        %v661 = vpop.f32.mrb[0].mxu0
        %662 = vmatprep.mubr.bf16.mxu0 0
        %663 = vmatmul.mubr.bf16.gmra.mrb[0].mxu0 %v461
        %v664 = vpop.f32.mrb[0].mxu0
        %v665 = vadd.f32 %v485, %v664
        %v666 = vpop.f32.mrb[0].mxu0
        %v667 = vpop.f32.mrb[0].mxu0
        %v668 = vadd.f32 %v485, %v667
        %v669 = vpop.f32.mrb[0].mxu0
        %670 = vmatprep.mubr.bf16.mxu0 0
        %671 = vmatmul.mubr.bf16.gmra.mrb[0].mxu0 %v462
        %v672 = vpop.f32.mrb[0].mxu0
        %v673 = vadd.f32 %v485, %v672
        %v674 = vpop.f32.mrb[0].mxu0
        %v675 = vpop.f32.mrb[0].mxu0
        %v676 = vadd.f32 %v485, %v675
        %v677 = vpop.f32.mrb[0].mxu0
        %678 = vmatprep.mubr.bf16.mxu0 0
        %679 = vmatmul.mubr.bf16.gmra.mrb[0].mxu0 %v463
        %v680 = vpop.f32.mrb[0].mxu0
        %v681 = vadd.f32 %v485, %v680
        %v682 = vpop.f32.mrb[0].mxu0
        %v683 = vpop.f32.mrb[0].mxu0
        %v684 = vadd.f32 %v485, %v683
        %v685 = vpop.f32.mrb[0].mxu0
        %686 = vmatprep.mubr.bf16.mxu0 0
        %687 = vmatmul.mubr.bf16.gmra.mrb[0].mxu0 %v464
        %v688 = vpop.f32.mrb[0].mxu0
        %v689 = vadd.f32 %v485, %v688
        %v690 = vpop.f32.mrb[0].mxu0
        %v691 = vpop.f32.mrb[0].mxu0
        %v692 = vadd.f32 %v485, %v691
        %v693 = vpop.f32.mrb[0].mxu0
        %694 = vdwg.mxu0
        %v695 = vld [vmem:[%s4] sm:$0x1]
        %vm696 = vcmp.ge.f32.partialorder %v569, 0.0
        %vm697 = vcmp.ge.f32.partialorder %v572, 0.0
        %vm698 = vcmp.ge.f32.partialorder %v577, 0.0
        %vm699 = vcmp.ge.f32.partialorder %v580, 0.0
        %vm700 = vcmp.ge.f32.partialorder %v585, 0.0
        %vm701 = vcmp.ge.f32.partialorder %v588, 0.0
        %vm702 = vcmp.ge.f32.partialorder %v593, 0.0
        %vm703 = vcmp.ge.f32.partialorder %v596, 0.0
        %vm704 = vcmp.ge.f32.partialorder %v601, 0.0
        %vm705 = vcmp.ge.f32.partialorder %v604, 0.0
        %vm706 = vcmp.ge.f32.partialorder %v609, 0.0
        %vm707 = vcmp.ge.f32.partialorder %v612, 0.0
        %vm708 = vcmp.ge.f32.partialorder %v617, 0.0
        %vm709 = vcmp.ge.f32.partialorder %v620, 0.0
        %vm710 = vcmp.ge.f32.partialorder %v625, 0.0
        %vm711 = vcmp.ge.f32.partialorder %v628, 0.0
        %vm712 = vcmp.ge.f32.partialorder %v633, 0.0
        %vm713 = vcmp.ge.f32.partialorder %v636, 0.0
        %vm714 = vcmp.ge.f32.partialorder %v641, 0.0
        %vm715 = vcmp.ge.f32.partialorder %v644, 0.0
        %vm716 = vcmp.ge.f32.partialorder %v649, 0.0
        %vm717 = vcmp.ge.f32.partialorder %v652, 0.0
        %vm718 = vcmp.ge.f32.partialorder %v657, 0.0
        %vm719 = vcmp.ge.f32.partialorder %v660, 0.0
        %vm720 = vcmp.ge.f32.partialorder %v665, 0.0
        %vm721 = vcmp.ge.f32.partialorder %v668, 0.0
        %vm722 = vcmp.ge.f32.partialorder %v673, 0.0
        %vm723 = vcmp.ge.f32.partialorder %v676, 0.0
        %vm724 = vcmp.ge.f32.partialorder %v681, 0.0
        %vm725 = vcmp.ge.f32.partialorder %v684, 0.0
        %vm726 = vcmp.ge.f32.partialorder %v689, 0.0
        %vm727 = vcmp.ge.f32.partialorder %v692, 0.0
        %v728 = vlaneseq
        %v729 = vshrl.u32 %v728, 7
        %v730 = vsub.s32 0, %v729
        %v731 = vrot.slane %v695, %v730
        %v732 = vmul.f32 %v569, %v731
        %v733 = vmul.f32 %v572, %v731
        %v734 = vmul.f32 %v577, %v731
        %v735 = vmul.f32 %v580, %v731
        %v736 = vmul.f32 %v585, %v731
        %v737 = vmul.f32 %v588, %v731
        %v738 = vmul.f32 %v593, %v731
        %v739 = vmul.f32 %v596, %v731
        %v740 = vmul.f32 %v601, %v731
        %v741 = vmul.f32 %v604, %v731
        %v742 = vmul.f32 %v609, %v731
        %v743 = vmul.f32 %v612, %v731
        %v744 = vmul.f32 %v617, %v731
        %v745 = vmul.f32 %v620, %v731
        %v746 = vmul.f32 %v625, %v731
        %v747 = vmul.f32 %v628, %v731
        %v748 = vmul.f32 %v633, %v731
        %v749 = vmul.f32 %v636, %v731
        %v750 = vmul.f32 %v641, %v731
        %v751 = vmul.f32 %v644, %v731
        %v752 = vmul.f32 %v649, %v731
        %v753 = vmul.f32 %v652, %v731
        %v754 = vmul.f32 %v657, %v731
        %v755 = vmul.f32 %v660, %v731
        %v756 = vmul.f32 %v665, %v731
        %v757 = vmul.f32 %v668, %v731
        %v758 = vmul.f32 %v673, %v731
        %v759 = vmul.f32 %v676, %v731
        %v760 = vmul.f32 %v681, %v731
        %v761 = vmul.f32 %v684, %v731
        %v762 = vmul.f32 %v689, %v731
        %v763 = vmul.f32 %v692, %v731
        %v764 = vsel %vm696, %v569, %v732
        %v765 = vsel %vm697, %v572, %v733
        %v766 = vsel %vm698, %v577, %v734
        %v767 = vsel %vm699, %v580, %v735
        %v768 = vsel %vm700, %v585, %v736
        %v769 = vsel %vm701, %v588, %v737
        %v770 = vsel %vm702, %v593, %v738
        %v771 = vsel %vm703, %v596, %v739
        %v772 = vsel %vm704, %v601, %v740
        %v773 = vsel %vm705, %v604, %v741
        %v774 = vsel %vm706, %v609, %v742
        %v775 = vsel %vm707, %v612, %v743
        %v776 = vsel %vm708, %v617, %v744
        %v777 = vsel %vm709, %v620, %v745
        %v778 = vsel %vm710, %v625, %v746
        %v779 = vsel %vm711, %v628, %v747
        %v780 = vsel %vm712, %v633, %v748
        %v781 = vsel %vm713, %v636, %v749
        %v782 = vsel %vm714, %v641, %v750
        %v783 = vsel %vm715, %v644, %v751
        %v784 = vsel %vm716, %v649, %v752
        %v785 = vsel %vm717, %v652, %v753
        %v786 = vsel %vm718, %v657, %v754
        %v787 = vsel %vm719, %v660, %v755
        %v788 = vsel %vm720, %v665, %v756
        %v789 = vsel %vm721, %v668, %v757
        %v790 = vsel %vm722, %v673, %v758
        %v791 = vsel %vm723, %v676, %v759
        %v792 = vsel %vm724, %v681, %v760
        %v793 = vsel %vm725, %v684, %v761
        %v794 = vsel %vm726, %v689, %v762
        %v795 = vsel %vm727, %v692, %v763
        %v796 = vrot.slane %v764, 7
        %v797 = vrot.slane %v765, 7
        %v798 = vrot.slane %v766, 7
        %v799 = vrot.slane %v767, 7
        %v800 = vrot.slane %v768, 7
        %v801 = vrot.slane %v769, 7
        %v802 = vrot.slane %v770, 7
        %v803 = vrot.slane %v771, 7
        %v804 = vrot.slane %v772, 7
        %v805 = vrot.slane %v773, 7
        %v806 = vrot.slane %v774, 7
        %v807 = vrot.slane %v775, 7
        %v808 = vrot.slane %v776, 7
        %v809 = vrot.slane %v777, 7
        %v810 = vrot.slane %v778, 7
        %v811 = vrot.slane %v779, 7
        %v812 = vrot.slane %v780, 7
        %v813 = vrot.slane %v781, 7
        %v814 = vrot.slane %v782, 7
        %v815 = vrot.slane %v783, 7
        %v816 = vrot.slane %v784, 7
        %v817 = vrot.slane %v785, 7
        %v818 = vrot.slane %v786, 7
        %v819 = vrot.slane %v787, 7
        %v820 = vrot.slane %v788, 7
        %v821 = vrot.slane %v789, 7
        %v822 = vrot.slane %v790, 7
        %v823 = vrot.slane %v791, 7
        %v824 = vrot.slane %v792, 7
        %v825 = vrot.slane %v793, 7
        %v826 = vrot.slane %v794, 7
        %v827 = vrot.slane %v795, 7
        %vm828 = vcmp.lt.s32.totalorder %v225, 1
        %v829 = vsel %vm828, %v826, %v827
        %v830 = vsel %vm828, %v825, %v826
        %v831 = vsel %vm828, %v824, %v825
        %v832 = vsel %vm828, %v823, %v824
        %v833 = vsel %vm828, %v822, %v823
        %v834 = vsel %vm828, %v821, %v822
        %v835 = vsel %vm828, %v820, %v821
        %v836 = vsel %vm828, %v819, %v820
        %v837 = vsel %vm828, %v818, %v819
        %v838 = vsel %vm828, %v817, %v818
        %v839 = vsel %vm828, %v816, %v817
        %v840 = vsel %vm828, %v815, %v816
        %v841 = vsel %vm828, %v814, %v815
        %v842 = vsel %vm828, %v813, %v814
        %v843 = vsel %vm828, %v812, %v813
        %v844 = vsel %vm828, %v811, %v812
        %v845 = vsel %vm828, %v810, %v811
        %v846 = vsel %vm828, %v809, %v810
        %v847 = vsel %vm828, %v808, %v809
        %v848 = vsel %vm828, %v807, %v808
        %v849 = vsel %vm828, %v806, %v807
        %v850 = vsel %vm828, %v805, %v806
        %v851 = vsel %vm828, %v804, %v805
        %v852 = vsel %vm828, %v803, %v804
        %v853 = vsel %vm828, %v802, %v803
        %v854 = vsel %vm828, %v801, %v802
        %v855 = vsel %vm828, %v800, %v801
        %v856 = vsel %vm828, %v799, %v800
        %v857 = vsel %vm828, %v798, %v799
        %v858 = vsel %vm828, %v797, %v798
        %v859 = vsel %vm828, %v796, %v797
        %v860 = vsel %vm828, %v827, %v796
        %vm861 = vmand %vm289, %vm353
        %vm862 = vmand %vm290, %vm354
        %vm863 = vmand %vm291, %vm355
        %vm864 = vmand %vm292, %vm356
        %vm865 = vmand %vm293, %vm357
        %vm866 = vmand %vm294, %vm358
        %vm867 = vmand %vm295, %vm359
        %vm868 = vmand %vm296, %vm360
        %vm869 = vmand %vm297, %vm361
        %vm870 = vmand %vm298, %vm362
        %vm871 = vmand %vm299, %vm363
        %vm872 = vmand %vm300, %vm364
        %vm873 = vmand %vm301, %vm365
        %vm874 = vmand %vm302, %vm366
        %vm875 = vmand %vm303, %vm367
        %vm876 = vmand %vm304, %vm368
        %vm877 = vmand %vm305, %vm369
        %vm878 = vmand %vm306, %vm370
        %vm879 = vmand %vm307, %vm371
        %vm880 = vmand %vm308, %vm372
        %vm881 = vmand %vm309, %vm373
        %vm882 = vmand %vm310, %vm374
        %vm883 = vmand %vm311, %vm375
        %vm884 = vmand %vm312, %vm376
        %vm885 = vmand %vm313, %vm377
        %vm886 = vmand %vm314, %vm378
        %vm887 = vmand %vm315, %vm379
        %vm888 = vmand %vm316, %vm380
        %vm889 = vmand %vm317, %vm381
        %vm890 = vmand %vm318, %vm382
        %vm891 = vmand %vm319, %vm383
        %vm892 = vmand %vm320, %vm384
        %v893 = vsel %vm861, %v830, 0.0
        %v894 = vsel %vm862, %v829, 0.0
        %v895 = vsel %vm863, %v860, 0.0
        %v896 = vsel %vm864, %v859, 0.0
        %v897 = vsel %vm865, %v858, 0.0
        %v898 = vsel %vm866, %v857, 0.0
        %v899 = vsel %vm867, %v856, 0.0
        %v900 = vsel %vm868, %v855, 0.0
        %v901 = vsel %vm869, %v854, 0.0
        %v902 = vsel %vm870, %v853, 0.0
        %v903 = vsel %vm871, %v852, 0.0
        %v904 = vsel %vm872, %v851, 0.0
        %v905 = vsel %vm873, %v850, 0.0
        %v906 = vsel %vm874, %v849, 0.0
        %v907 = vsel %vm875, %v848, 0.0
        %v908 = vsel %vm876, %v847, 0.0
        %v909 = vsel %vm877, %v846, 0.0
        %v910 = vsel %vm878, %v845, 0.0
        %v911 = vsel %vm879, %v844, 0.0
        %v912 = vsel %vm880, %v843, 0.0
        %v913 = vsel %vm881, %v842, 0.0
        %v914 = vsel %vm882, %v841, 0.0
        %v915 = vsel %vm883, %v840, 0.0
        %v916 = vsel %vm884, %v839, 0.0
        %v917 = vsel %vm885, %v838, 0.0
        %v918 = vsel %vm886, %v837, 0.0
        %v919 = vsel %vm887, %v836, 0.0
        %v920 = vsel %vm888, %v835, 0.0
        %v921 = vsel %vm889, %v834, 0.0
        %v922 = vsel %vm890, %v833, 0.0
        %v923 = vsel %vm891, %v832, 0.0
        %v924 = vsel %vm892, %v831, 0.0
        %v925 = vpack.c.bf16 %v894, %v893
        %v926 = vpack.c.bf16 %v896, %v895
        %v927 = vpack.c.bf16 %v898, %v897
        %v928 = vpack.c.bf16 %v900, %v899
        %v929 = vpack.c.bf16 %v902, %v901
        %v930 = vpack.c.bf16 %v904, %v903
        %v931 = vpack.c.bf16 %v906, %v905
        %v932 = vpack.c.bf16 %v908, %v907
        %v933 = vpack.c.bf16 %v910, %v909
        %v934 = vpack.c.bf16 %v912, %v911
        %v935 = vpack.c.bf16 %v914, %v913
        %v936 = vpack.c.bf16 %v916, %v915
        %v937 = vpack.c.bf16 %v918, %v917
        %v938 = vpack.c.bf16 %v920, %v919
        %v939 = vpack.c.bf16 %v922, %v921
        %v940 = vpack.c.bf16 %v924, %v923
        %v941 = vsel %vm289, %v794, 0.0
        %v942 = vsel %vm290, %v795, 0.0
        %v943 = vsel %vm291, %v764, 0.0
        %v944 = vsel %vm292, %v765, 0.0
        %v945 = vsel %vm293, %v766, 0.0
        %v946 = vsel %vm294, %v767, 0.0
        %v947 = vsel %vm295, %v768, 0.0
        %v948 = vsel %vm296, %v769, 0.0
        %v949 = vsel %vm297, %v770, 0.0
        %v950 = vsel %vm298, %v771, 0.0
        %v951 = vsel %vm299, %v772, 0.0
        %v952 = vsel %vm300, %v773, 0.0
        %v953 = vsel %vm301, %v774, 0.0
        %v954 = vsel %vm302, %v775, 0.0
        %v955 = vsel %vm303, %v776, 0.0
        %v956 = vsel %vm304, %v777, 0.0
        %v957 = vsel %vm305, %v778, 0.0
        %v958 = vsel %vm306, %v779, 0.0
        %v959 = vsel %vm307, %v780, 0.0
        %v960 = vsel %vm308, %v781, 0.0
        %v961 = vsel %vm309, %v782, 0.0
        %v962 = vsel %vm310, %v783, 0.0
        %v963 = vsel %vm311, %v784, 0.0
        %v964 = vsel %vm312, %v785, 0.0
        %v965 = vsel %vm313, %v786, 0.0
        %v966 = vsel %vm314, %v787, 0.0
        %v967 = vsel %vm315, %v788, 0.0
        %v968 = vsel %vm316, %v789, 0.0
        %v969 = vsel %vm317, %v790, 0.0
        %v970 = vsel %vm318, %v791, 0.0
        %v971 = vsel %vm319, %v792, 0.0
        %v972 = vsel %vm320, %v793, 0.0
        %v973 = vpack.c.bf16 %v942, %v941
        %v974 = vpack.c.bf16 %v944, %v943
        %v975 = vpack.c.bf16 %v946, %v945
        %v976 = vpack.c.bf16 %v948, %v947
        %v977 = vpack.c.bf16 %v950, %v949
        %v978 = vpack.c.bf16 %v952, %v951
        %v979 = vpack.c.bf16 %v954, %v953
        %v980 = vpack.c.bf16 %v956, %v955
        %v981 = vpack.c.bf16 %v958, %v957
        %v982 = vpack.c.bf16 %v960, %v959
        %v983 = vpack.c.bf16 %v962, %v961
        %v984 = vpack.c.bf16 %v964, %v963
        %v985 = vpack.c.bf16 %v966, %v965
        %v986 = vpack.c.bf16 %v968, %v967
        %v987 = vpack.c.bf16 %v970, %v969
        %v988 = vpack.c.bf16 %v972, %v971
        %v989 = vrot.slane %v764, 1
        %v990 = vrot.slane %v765, 1
        %v991 = vrot.slane %v766, 1
        %v992 = vrot.slane %v767, 1
        %v993 = vrot.slane %v768, 1
        %v994 = vrot.slane %v769, 1
        %v995 = vrot.slane %v770, 1
        %v996 = vrot.slane %v771, 1
        %v997 = vrot.slane %v772, 1
        %v998 = vrot.slane %v773, 1
        %v999 = vrot.slane %v774, 1
        %v1000 = vrot.slane %v775, 1
        %v1001 = vrot.slane %v776, 1
        %v1002 = vrot.slane %v777, 1
        %v1003 = vrot.slane %v778, 1
        %v1004 = vrot.slane %v779, 1
        %v1005 = vrot.slane %v780, 1
        %v1006 = vrot.slane %v781, 1
        %v1007 = vrot.slane %v782, 1
        %v1008 = vrot.slane %v783, 1
        %v1009 = vrot.slane %v784, 1
        %v1010 = vrot.slane %v785, 1
        %v1011 = vrot.slane %v786, 1
        %v1012 = vrot.slane %v787, 1
        %v1013 = vrot.slane %v788, 1
        %v1014 = vrot.slane %v789, 1
        %v1015 = vrot.slane %v790, 1
        %v1016 = vrot.slane %v791, 1
        %v1017 = vrot.slane %v792, 1
        %v1018 = vrot.slane %v793, 1
        %v1019 = vrot.slane %v794, 1
        %v1020 = vrot.slane %v795, 1
        %vm1021 = vcmp.lt.s32.totalorder %v225, 7
        %v1022 = vsel %vm1021, %v1019, %v1020
        %v1023 = vsel %vm1021, %v1018, %v1019
        %v1024 = vsel %vm1021, %v1017, %v1018
        %v1025 = vsel %vm1021, %v1016, %v1017
        %v1026 = vsel %vm1021, %v1015, %v1016
        %v1027 = vsel %vm1021, %v1014, %v1015
        %v1028 = vsel %vm1021, %v1013, %v1014
        %v1029 = vsel %vm1021, %v1012, %v1013
        %v1030 = vsel %vm1021, %v1011, %v1012
        %v1031 = vsel %vm1021, %v1010, %v1011
        %v1032 = vsel %vm1021, %v1009, %v1010
        %v1033 = vsel %vm1021, %v1008, %v1009
        %v1034 = vsel %vm1021, %v1007, %v1008
        %v1035 = vsel %vm1021, %v1006, %v1007
        %v1036 = vsel %vm1021, %v1005, %v1006
        %v1037 = vsel %vm1021, %v1004, %v1005
        %v1038 = vsel %vm1021, %v1003, %v1004
        %v1039 = vsel %vm1021, %v1002, %v1003
        %v1040 = vsel %vm1021, %v1001, %v1002
        %v1041 = vsel %vm1021, %v1000, %v1001
        %v1042 = vsel %vm1021, %v999, %v1000
        %v1043 = vsel %vm1021, %v998, %v999
        %v1044 = vsel %vm1021, %v997, %v998
        %v1045 = vsel %vm1021, %v996, %v997
        %v1046 = vsel %vm1021, %v995, %v996
        %v1047 = vsel %vm1021, %v994, %v995
        %v1048 = vsel %vm1021, %v993, %v994
        %v1049 = vsel %vm1021, %v992, %v993
        %v1050 = vsel %vm1021, %v991, %v992
        %v1051 = vsel %vm1021, %v990, %v991
        %v1052 = vsel %vm1021, %v989, %v990
        %v1053 = vsel %vm1021, %v1020, %v989
        %vm1054 = vmand %vm289, %vm385
        %vm1055 = vmand %vm290, %vm386
        %vm1056 = vmand %vm291, %vm387
        %vm1057 = vmand %vm292, %vm388
        %vm1058 = vmand %vm293, %vm389
        %vm1059 = vmand %vm294, %vm390
        %vm1060 = vmand %vm295, %vm391
        %vm1061 = vmand %vm296, %vm392
        %vm1062 = vmand %vm297, %vm393
        %vm1063 = vmand %vm298, %vm394
        %vm1064 = vmand %vm299, %vm395
        %vm1065 = vmand %vm300, %vm396
        %vm1066 = vmand %vm301, %vm397
        %vm1067 = vmand %vm302, %vm398
        %vm1068 = vmand %vm303, %vm399
        %vm1069 = vmand %vm304, %vm400
        %vm1070 = vmand %vm305, %vm401
        %vm1071 = vmand %vm306, %vm402
        %vm1072 = vmand %vm307, %vm403
        %vm1073 = vmand %vm308, %vm404
        %vm1074 = vmand %vm309, %vm405
        %vm1075 = vmand %vm310, %vm406
        %vm1076 = vmand %vm311, %vm407
        %vm1077 = vmand %vm312, %vm408
        %vm1078 = vmand %vm313, %vm409
        %vm1079 = vmand %vm314, %vm410
        %vm1080 = vmand %vm315, %vm411
        %vm1081 = vmand %vm316, %vm412
        %vm1082 = vmand %vm317, %vm413
        %vm1083 = vmand %vm318, %vm414
        %vm1084 = vmand %vm319, %vm415
        %vm1085 = vmand %vm320, %vm416
        %v1086 = vsel %vm1054, %v1022, 0.0
        %v1087 = vsel %vm1055, %v1053, 0.0
        %v1088 = vsel %vm1056, %v1052, 0.0
        %v1089 = vsel %vm1057, %v1051, 0.0
        %v1090 = vsel %vm1058, %v1050, 0.0
        %v1091 = vsel %vm1059, %v1049, 0.0
        %v1092 = vsel %vm1060, %v1048, 0.0
        %v1093 = vsel %vm1061, %v1047, 0.0
        %v1094 = vsel %vm1062, %v1046, 0.0
        %v1095 = vsel %vm1063, %v1045, 0.0
        %v1096 = vsel %vm1064, %v1044, 0.0
        %v1097 = vsel %vm1065, %v1043, 0.0
        %v1098 = vsel %vm1066, %v1042, 0.0
        %v1099 = vsel %vm1067, %v1041, 0.0
        %v1100 = vsel %vm1068, %v1040, 0.0
        %v1101 = vsel %vm1069, %v1039, 0.0
        %v1102 = vsel %vm1070, %v1038, 0.0
        %v1103 = vsel %vm1071, %v1037, 0.0
        %v1104 = vsel %vm1072, %v1036, 0.0
        %v1105 = vsel %vm1073, %v1035, 0.0
        %v1106 = vsel %vm1074, %v1034, 0.0
        %v1107 = vsel %vm1075, %v1033, 0.0
        %v1108 = vsel %vm1076, %v1032, 0.0
        %v1109 = vsel %vm1077, %v1031, 0.0
        %v1110 = vsel %vm1078, %v1030, 0.0
        %v1111 = vsel %vm1079, %v1029, 0.0
        %v1112 = vsel %vm1080, %v1028, 0.0
        %v1113 = vsel %vm1081, %v1027, 0.0
        %v1114 = vsel %vm1082, %v1026, 0.0
        %v1115 = vsel %vm1083, %v1025, 0.0
        %v1116 = vsel %vm1084, %v1024, 0.0
        %v1117 = vsel %vm1085, %v1023, 0.0
        %v1118 = vpack.c.bf16 %v1087, %v1086
        %v1119 = vpack.c.bf16 %v1089, %v1088
        %v1120 = vpack.c.bf16 %v1091, %v1090
        %v1121 = vpack.c.bf16 %v1093, %v1092
        %v1122 = vpack.c.bf16 %v1095, %v1094
        %v1123 = vpack.c.bf16 %v1097, %v1096
        %v1124 = vpack.c.bf16 %v1099, %v1098
        %v1125 = vpack.c.bf16 %v1101, %v1100
        %v1126 = vpack.c.bf16 %v1103, %v1102
        %v1127 = vpack.c.bf16 %v1105, %v1104
        %v1128 = vpack.c.bf16 %v1107, %v1106
        %v1129 = vpack.c.bf16 %v1109, %v1108
        %v1130 = vpack.c.bf16 %v1111, %v1110
        %v1131 = vpack.c.bf16 %v1113, %v1112
        %v1132 = vpack.c.bf16 %v1115, %v1114
        %v1133 = vpack.c.bf16 %v1117, %v1116
        %v1134 = vsel %vm353, %v860, 0.0
        %v1135 = vsel %vm354, %v859, 0.0
        %v1136 = vsel %vm355, %v858, 0.0
        %v1137 = vsel %vm356, %v857, 0.0
        %v1138 = vsel %vm357, %v856, 0.0
        %v1139 = vsel %vm358, %v855, 0.0
        %v1140 = vsel %vm359, %v854, 0.0
        %v1141 = vsel %vm360, %v853, 0.0
        %v1142 = vsel %vm361, %v852, 0.0
        %v1143 = vsel %vm362, %v851, 0.0
        %v1144 = vsel %vm363, %v850, 0.0
        %v1145 = vsel %vm364, %v849, 0.0
        %v1146 = vsel %vm365, %v848, 0.0
        %v1147 = vsel %vm366, %v847, 0.0
        %v1148 = vsel %vm367, %v846, 0.0
        %v1149 = vsel %vm368, %v845, 0.0
        %v1150 = vsel %vm369, %v844, 0.0
        %v1151 = vsel %vm370, %v843, 0.0
        %v1152 = vsel %vm371, %v842, 0.0
        %v1153 = vsel %vm372, %v841, 0.0
        %v1154 = vsel %vm373, %v840, 0.0
        %v1155 = vsel %vm374, %v839, 0.0
        %v1156 = vsel %vm375, %v838, 0.0
        %v1157 = vsel %vm376, %v837, 0.0
        %v1158 = vsel %vm377, %v836, 0.0
        %v1159 = vsel %vm378, %v835, 0.0
        %v1160 = vsel %vm379, %v834, 0.0
        %v1161 = vsel %vm380, %v833, 0.0
        %v1162 = vsel %vm381, %v832, 0.0
        %v1163 = vsel %vm382, %v831, 0.0
        %v1164 = vsel %vm383, %v830, 0.0
        %v1165 = vsel %vm384, %v829, 0.0
        %v1166 = vpack.c.bf16 %v1135, %v1134
        %v1167 = vpack.c.bf16 %v1137, %v1136
        %v1168 = vpack.c.bf16 %v1139, %v1138
        %v1169 = vpack.c.bf16 %v1141, %v1140
        %v1170 = vpack.c.bf16 %v1143, %v1142
        %v1171 = vpack.c.bf16 %v1145, %v1144
        %v1172 = vpack.c.bf16 %v1147, %v1146
        %v1173 = vpack.c.bf16 %v1149, %v1148
        %v1174 = vpack.c.bf16 %v1151, %v1150
        %v1175 = vpack.c.bf16 %v1153, %v1152
        %v1176 = vpack.c.bf16 %v1155, %v1154
        %v1177 = vpack.c.bf16 %v1157, %v1156
        %v1178 = vpack.c.bf16 %v1159, %v1158
        %v1179 = vpack.c.bf16 %v1161, %v1160
        %v1180 = vpack.c.bf16 %v1163, %v1162
        %v1181 = vpack.c.bf16 %v1165, %v1164
        %v1182 = vpack.c.bf16 %v765, %v764
        %v1183 = vpack.c.bf16 %v767, %v766
        %v1184 = vpack.c.bf16 %v769, %v768
        %v1185 = vpack.c.bf16 %v771, %v770
        %v1186 = vpack.c.bf16 %v773, %v772
        %v1187 = vpack.c.bf16 %v775, %v774
        %v1188 = vpack.c.bf16 %v777, %v776
        %v1189 = vpack.c.bf16 %v779, %v778
        %v1190 = vpack.c.bf16 %v781, %v780
        %v1191 = vpack.c.bf16 %v783, %v782
        %v1192 = vpack.c.bf16 %v785, %v784
        %v1193 = vpack.c.bf16 %v787, %v786
        %v1194 = vpack.c.bf16 %v789, %v788
        %v1195 = vpack.c.bf16 %v791, %v790
        %v1196 = vpack.c.bf16 %v793, %v792
        %v1197 = vpack.c.bf16 %v795, %v794
        %v1198 = vsel %vm385, %v1052, 0.0
        %v1199 = vsel %vm386, %v1051, 0.0
        %v1200 = vsel %vm387, %v1050, 0.0
        %v1201 = vsel %vm388, %v1049, 0.0
        %v1202 = vsel %vm389, %v1048, 0.0
        %v1203 = vsel %vm390, %v1047, 0.0
        %v1204 = vsel %vm391, %v1046, 0.0
        %v1205 = vsel %vm392, %v1045, 0.0
        %v1206 = vsel %vm393, %v1044, 0.0
        %v1207 = vsel %vm394, %v1043, 0.0
        %v1208 = vsel %vm395, %v1042, 0.0
        %v1209 = vsel %vm396, %v1041, 0.0
        %v1210 = vsel %vm397, %v1040, 0.0
        %v1211 = vsel %vm398, %v1039, 0.0
        %v1212 = vsel %vm399, %v1038, 0.0
        %v1213 = vsel %vm400, %v1037, 0.0
        %v1214 = vsel %vm401, %v1036, 0.0
        %v1215 = vsel %vm402, %v1035, 0.0
        %v1216 = vsel %vm403, %v1034, 0.0
        %v1217 = vsel %vm404, %v1033, 0.0
        %v1218 = vsel %vm405, %v1032, 0.0
        %v1219 = vsel %vm406, %v1031, 0.0
        %v1220 = vsel %vm407, %v1030, 0.0
        %v1221 = vsel %vm408, %v1029, 0.0
        %v1222 = vsel %vm409, %v1028, 0.0
        %v1223 = vsel %vm410, %v1027, 0.0
        %v1224 = vsel %vm411, %v1026, 0.0
        %v1225 = vsel %vm412, %v1025, 0.0
        %v1226 = vsel %vm413, %v1024, 0.0
        %v1227 = vsel %vm414, %v1023, 0.0
        %v1228 = vsel %vm415, %v1022, 0.0
        %v1229 = vsel %vm416, %v1053, 0.0
        %v1230 = vpack.c.bf16 %v1199, %v1198
        %v1231 = vpack.c.bf16 %v1201, %v1200
        %v1232 = vpack.c.bf16 %v1203, %v1202
        %v1233 = vpack.c.bf16 %v1205, %v1204
        %v1234 = vpack.c.bf16 %v1207, %v1206
        %v1235 = vpack.c.bf16 %v1209, %v1208
        %v1236 = vpack.c.bf16 %v1211, %v1210
        %v1237 = vpack.c.bf16 %v1213, %v1212
        %v1238 = vpack.c.bf16 %v1215, %v1214
        %v1239 = vpack.c.bf16 %v1217, %v1216
        %v1240 = vpack.c.bf16 %v1219, %v1218
        %v1241 = vpack.c.bf16 %v1221, %v1220
        %v1242 = vpack.c.bf16 %v1223, %v1222
        %v1243 = vpack.c.bf16 %v1225, %v1224
        %v1244 = vpack.c.bf16 %v1227, %v1226
        %v1245 = vpack.c.bf16 %v1229, %v1228
        %vm1246 = vmand %vm321, %vm353
        %vm1247 = vmand %vm322, %vm354
        %vm1248 = vmand %vm323, %vm355
        %vm1249 = vmand %vm324, %vm356
        %vm1250 = vmand %vm325, %vm357
        %vm1251 = vmand %vm326, %vm358
        %vm1252 = vmand %vm327, %vm359
        %vm1253 = vmand %vm328, %vm360
        %vm1254 = vmand %vm329, %vm361
        %vm1255 = vmand %vm330, %vm362
        %vm1256 = vmand %vm331, %vm363
        %vm1257 = vmand %vm332, %vm364
        %vm1258 = vmand %vm333, %vm365
        %vm1259 = vmand %vm334, %vm366
        %vm1260 = vmand %vm335, %vm367
        %vm1261 = vmand %vm336, %vm368
        %vm1262 = vmand %vm337, %vm369
        %vm1263 = vmand %vm338, %vm370
        %vm1264 = vmand %vm339, %vm371
        %vm1265 = vmand %vm340, %vm372
        %vm1266 = vmand %vm341, %vm373
        %vm1267 = vmand %vm342, %vm374
        %vm1268 = vmand %vm343, %vm375
        %vm1269 = vmand %vm344, %vm376
        %vm1270 = vmand %vm345, %vm377
        %vm1271 = vmand %vm346, %vm378
        %vm1272 = vmand %vm347, %vm379
        %vm1273 = vmand %vm348, %vm380
        %vm1274 = vmand %vm349, %vm381
        %vm1275 = vmand %vm350, %vm382
        %vm1276 = vmand %vm351, %vm383
        %vm1277 = vmand %vm352, %vm384
        %v1278 = vsel %vm1246, %v858, 0.0
        %v1279 = vsel %vm1247, %v857, 0.0
        %v1280 = vsel %vm1248, %v856, 0.0
        %v1281 = vsel %vm1249, %v855, 0.0
        %v1282 = vsel %vm1250, %v854, 0.0
        %v1283 = vsel %vm1251, %v853, 0.0
        %v1284 = vsel %vm1252, %v852, 0.0
        %v1285 = vsel %vm1253, %v851, 0.0
        %v1286 = vsel %vm1254, %v850, 0.0
        %v1287 = vsel %vm1255, %v849, 0.0
        %v1288 = vsel %vm1256, %v848, 0.0
        %v1289 = vsel %vm1257, %v847, 0.0
        %v1290 = vsel %vm1258, %v846, 0.0
        %v1291 = vsel %vm1259, %v845, 0.0
        %v1292 = vsel %vm1260, %v844, 0.0
        %v1293 = vsel %vm1261, %v843, 0.0
        %v1294 = vsel %vm1262, %v842, 0.0
        %v1295 = vsel %vm1263, %v841, 0.0
        %v1296 = vsel %vm1264, %v840, 0.0
        %v1297 = vsel %vm1265, %v839, 0.0
        %v1298 = vsel %vm1266, %v838, 0.0
        %v1299 = vsel %vm1267, %v837, 0.0
        %v1300 = vsel %vm1268, %v836, 0.0
        %v1301 = vsel %vm1269, %v835, 0.0
        %v1302 = vsel %vm1270, %v834, 0.0
        %v1303 = vsel %vm1271, %v833, 0.0
        %v1304 = vsel %vm1272, %v832, 0.0
        %v1305 = vsel %vm1273, %v831, 0.0
        %v1306 = vsel %vm1274, %v830, 0.0
        %v1307 = vsel %vm1275, %v829, 0.0
        %v1308 = vsel %vm1276, %v860, 0.0
        %v1309 = vsel %vm1277, %v859, 0.0
        %v1310 = vpack.c.bf16 %v1279, %v1278
        %v1311 = vpack.c.bf16 %v1281, %v1280
        %v1312 = vpack.c.bf16 %v1283, %v1282
        %v1313 = vpack.c.bf16 %v1285, %v1284
        %v1314 = vpack.c.bf16 %v1287, %v1286
        %v1315 = vpack.c.bf16 %v1289, %v1288
        %v1316 = vpack.c.bf16 %v1291, %v1290
        %v1317 = vpack.c.bf16 %v1293, %v1292
        %v1318 = vpack.c.bf16 %v1295, %v1294
        %v1319 = vpack.c.bf16 %v1297, %v1296
        %v1320 = vpack.c.bf16 %v1299, %v1298
        %v1321 = vpack.c.bf16 %v1301, %v1300
        %v1322 = vpack.c.bf16 %v1303, %v1302
        %v1323 = vpack.c.bf16 %v1305, %v1304
        %v1324 = vpack.c.bf16 %v1307, %v1306
        %v1325 = vpack.c.bf16 %v1309, %v1308
        %v1326 = vsel %vm321, %v766, 0.0
        %v1327 = vsel %vm322, %v767, 0.0
        %v1328 = vsel %vm323, %v768, 0.0
        %v1329 = vsel %vm324, %v769, 0.0
        %v1330 = vsel %vm325, %v770, 0.0
        %v1331 = vsel %vm326, %v771, 0.0
        %v1332 = vsel %vm327, %v772, 0.0
        %v1333 = vsel %vm328, %v773, 0.0
        %v1334 = vsel %vm329, %v774, 0.0
        %v1335 = vsel %vm330, %v775, 0.0
        %v1336 = vsel %vm331, %v776, 0.0
        %v1337 = vsel %vm332, %v777, 0.0
        %v1338 = vsel %vm333, %v778, 0.0
        %v1339 = vsel %vm334, %v779, 0.0
        %v1340 = vsel %vm335, %v780, 0.0
        %v1341 = vsel %vm336, %v781, 0.0
        %v1342 = vsel %vm337, %v782, 0.0
        %v1343 = vsel %vm338, %v783, 0.0
        %v1344 = vsel %vm339, %v784, 0.0
        %v1345 = vsel %vm340, %v785, 0.0
        %v1346 = vsel %vm341, %v786, 0.0
        %v1347 = vsel %vm342, %v787, 0.0
        %v1348 = vsel %vm343, %v788, 0.0
        %v1349 = vsel %vm344, %v789, 0.0
        %v1350 = vsel %vm345, %v790, 0.0
        %v1351 = vsel %vm346, %v791, 0.0
        %v1352 = vsel %vm347, %v792, 0.0
        %v1353 = vsel %vm348, %v793, 0.0
        %v1354 = vsel %vm349, %v794, 0.0
        %v1355 = vsel %vm350, %v795, 0.0
        %v1356 = vsel %vm351, %v764, 0.0
        %v1357 = vsel %vm352, %v765, 0.0
        %v1358 = vpack.c.bf16 %v1327, %v1326
        %v1359 = vpack.c.bf16 %v1329, %v1328
        %v1360 = vpack.c.bf16 %v1331, %v1330
        %v1361 = vpack.c.bf16 %v1333, %v1332
        %v1362 = vpack.c.bf16 %v1335, %v1334
        %v1363 = vpack.c.bf16 %v1337, %v1336
        %v1364 = vpack.c.bf16 %v1339, %v1338
        %v1365 = vpack.c.bf16 %v1341, %v1340
        %v1366 = vpack.c.bf16 %v1343, %v1342
        %v1367 = vpack.c.bf16 %v1345, %v1344
        %v1368 = vpack.c.bf16 %v1347, %v1346
        %v1369 = vpack.c.bf16 %v1349, %v1348
        %v1370 = vpack.c.bf16 %v1351, %v1350
        %v1371 = vpack.c.bf16 %v1353, %v1352
        %v1372 = vpack.c.bf16 %v1355, %v1354
        %v1373 = vpack.c.bf16 %v1357, %v1356
        %vm1374 = vmand %vm321, %vm385
        %vm1375 = vmand %vm322, %vm386
        %vm1376 = vmand %vm323, %vm387
        %vm1377 = vmand %vm324, %vm388
        %vm1378 = vmand %vm325, %vm389
        %vm1379 = vmand %vm326, %vm390
        %vm1380 = vmand %vm327, %vm391
        %vm1381 = vmand %vm328, %vm392
        %vm1382 = vmand %vm329, %vm393
        %vm1383 = vmand %vm330, %vm394
        %vm1384 = vmand %vm331, %vm395
        %vm1385 = vmand %vm332, %vm396
        %vm1386 = vmand %vm333, %vm397
        %vm1387 = vmand %vm334, %vm398
        %vm1388 = vmand %vm335, %vm399
        %vm1389 = vmand %vm336, %vm400
        %vm1390 = vmand %vm337, %vm401
        %vm1391 = vmand %vm338, %vm402
        %vm1392 = vmand %vm339, %vm403
        %vm1393 = vmand %vm340, %vm404
        %vm1394 = vmand %vm341, %vm405
        %vm1395 = vmand %vm342, %vm406
        %vm1396 = vmand %vm343, %vm407
        %vm1397 = vmand %vm344, %vm408
        %vm1398 = vmand %vm345, %vm409
        %vm1399 = vmand %vm346, %vm410
        %vm1400 = vmand %vm347, %vm411
        %vm1401 = vmand %vm348, %vm412
        %vm1402 = vmand %vm349, %vm413
        %vm1403 = vmand %vm350, %vm414
        %vm1404 = vmand %vm351, %vm415
        %vm1405 = vmand %vm352, %vm416
        %v1406 = vsel %vm1374, %v1050, 0.0
        %v1407 = vsel %vm1375, %v1049, 0.0
        %v1408 = vsel %vm1376, %v1048, 0.0
        %v1409 = vsel %vm1377, %v1047, 0.0
        %v1410 = vsel %vm1378, %v1046, 0.0
        %v1411 = vsel %vm1379, %v1045, 0.0
        %v1412 = vsel %vm1380, %v1044, 0.0
        %v1413 = vsel %vm1381, %v1043, 0.0
        %v1414 = vsel %vm1382, %v1042, 0.0
        %v1415 = vsel %vm1383, %v1041, 0.0
        %v1416 = vsel %vm1384, %v1040, 0.0
        %v1417 = vsel %vm1385, %v1039, 0.0
        %v1418 = vsel %vm1386, %v1038, 0.0
        %v1419 = vsel %vm1387, %v1037, 0.0
        %v1420 = vsel %vm1388, %v1036, 0.0
        %v1421 = vsel %vm1389, %v1035, 0.0
        %v1422 = vsel %vm1390, %v1034, 0.0
        %v1423 = vsel %vm1391, %v1033, 0.0
        %v1424 = vsel %vm1392, %v1032, 0.0
        %v1425 = vsel %vm1393, %v1031, 0.0
        %v1426 = vsel %vm1394, %v1030, 0.0
        %v1427 = vsel %vm1395, %v1029, 0.0
        %v1428 = vsel %vm1396, %v1028, 0.0
        %v1429 = vsel %vm1397, %v1027, 0.0
        %v1430 = vsel %vm1398, %v1026, 0.0
        %v1431 = vsel %vm1399, %v1025, 0.0
        %v1432 = vsel %vm1400, %v1024, 0.0
        %v1433 = vsel %vm1401, %v1023, 0.0
        %v1434 = vsel %vm1402, %v1022, 0.0
        %v1435 = vsel %vm1403, %v1053, 0.0
        %v1436 = vsel %vm1404, %v1052, 0.0
        %v1437 = vsel %vm1405, %v1051, 0.0
        %v1438 = vpack.c.bf16 %v1407, %v1406
        %v1439 = vpack.c.bf16 %v1409, %v1408
        %v1440 = vpack.c.bf16 %v1411, %v1410
        %v1441 = vpack.c.bf16 %v1413, %v1412
        %v1442 = vpack.c.bf16 %v1415, %v1414
        %v1443 = vpack.c.bf16 %v1417, %v1416
        %v1444 = vpack.c.bf16 %v1419, %v1418
        %v1445 = vpack.c.bf16 %v1421, %v1420
        %v1446 = vpack.c.bf16 %v1423, %v1422
        %v1447 = vpack.c.bf16 %v1425, %v1424
        %v1448 = vpack.c.bf16 %v1427, %v1426
        %v1449 = vpack.c.bf16 %v1429, %v1428
        %v1450 = vpack.c.bf16 %v1431, %v1430
        %v1451 = vpack.c.bf16 %v1433, %v1432
        %v1452 = vpack.c.bf16 %v1435, %v1434
        %v1453 = vpack.c.bf16 %v1437, %v1436
        %v1454 = vld [vmem:[%s2] sm:$0xf]
        %v1455 = vld [vmem:[%s2 + $0x4] sm:$0xf]
        %v1456 = vld [vmem:[%s2 + $0x8] sm:$0xf]
        %v1457 = vld [vmem:[%s2 + $0xc] sm:$0xf]
        %v1458 = vld [vmem:[%s2 + $0x10] sm:$0xf]
        %v1459 = vld [vmem:[%s2 + $0x14] sm:$0xf]
        %v1460 = vld [vmem:[%s2 + $0x18] sm:$0xf]
        %v1461 = vld [vmem:[%s2 + $0x1c] sm:$0xf]
        %v1462 = vld [vmem:[%s2 + $0x20] sm:$0xf]
        %v1463 = vld [vmem:[%s2 + $0x24] sm:$0xf]
        %v1464 = vld [vmem:[%s2 + $0x28] sm:$0xf]
        %v1465 = vld [vmem:[%s2 + $0x2c] sm:$0xf]
        %v1466 = vld [vmem:[%s2 + $0x30] sm:$0xf]
        %v1467 = vld [vmem:[%s2 + $0x34] sm:$0xf]
        %v1468 = vld [vmem:[%s2 + $0x38] sm:$0xf]
        %v1469 = vld [vmem:[%s2 + $0x3c] sm:$0xf]
        %v1470 = vld [vmem:[%s2 + $0x40] sm:$0xf]
        %v1471 = vld [vmem:[%s2 + $0x44] sm:$0xf]
        %v1472 = vld [vmem:[%s2 + $0x48] sm:$0xf]
        %v1473 = vld [vmem:[%s2 + $0x4c] sm:$0xf]
        %v1474 = vld [vmem:[%s2 + $0x50] sm:$0xf]
        %v1475 = vld [vmem:[%s2 + $0x54] sm:$0xf]
        %v1476 = vld [vmem:[%s2 + $0x58] sm:$0xf]
        %v1477 = vld [vmem:[%s2 + $0x5c] sm:$0xf]
        %v1478 = vld [vmem:[%s2 + $0x60] sm:$0xf]
        %v1479 = vld [vmem:[%s2 + $0x64] sm:$0xf]
        %v1480 = vld [vmem:[%s2 + $0x68] sm:$0xf]
        %v1481 = vld [vmem:[%s2 + $0x6c] sm:$0xf]
        %v1482 = vld [vmem:[%s2 + $0x70] sm:$0xf]
        %v1483 = vld [vmem:[%s2 + $0x74] sm:$0xf]
        %v1484 = vld [vmem:[%s2 + $0x78] sm:$0xf]
        %v1485 = vld [vmem:[%s2 + $0x7c] sm:$0xf]
        %v1486 = vld [vmem:[%s2 + $0x80] sm:$0xf]
        %v1487 = vld [vmem:[%s2 + $0x84] sm:$0xf]
        %v1488 = vld [vmem:[%s2 + $0x88] sm:$0xf]
        %v1489 = vld [vmem:[%s2 + $0x8c] sm:$0xf]
        %v1490 = vld [vmem:[%s2 + $0x90] sm:$0xf]
        %v1491 = vld [vmem:[%s2 + $0x94] sm:$0xf]
        %v1492 = vld [vmem:[%s2 + $0x98] sm:$0xf]
        %v1493 = vld [vmem:[%s2 + $0x9c] sm:$0xf]
        %v1494 = vld [vmem:[%s2 + $0xa0] sm:$0xf]
        %v1495 = vld [vmem:[%s2 + $0xa4] sm:$0xf]
        %v1496 = vld [vmem:[%s2 + $0xa8] sm:$0xf]
        %v1497 = vld [vmem:[%s2 + $0xac] sm:$0xf]
        %v1498 = vld [vmem:[%s2 + $0xb0] sm:$0xf]
        %v1499 = vld [vmem:[%s2 + $0xb4] sm:$0xf]
        %v1500 = vld [vmem:[%s2 + $0xb8] sm:$0xf]
        %v1501 = vld [vmem:[%s2 + $0xbc] sm:$0xf]
        %v1502 = vld [vmem:[%s2 + $0xc0] sm:$0xf]
        %v1503 = vld [vmem:[%s2 + $0xc4] sm:$0xf]
        %v1504 = vld [vmem:[%s2 + $0xc8] sm:$0xf]
        %v1505 = vld [vmem:[%s2 + $0xcc] sm:$0xf]
        %v1506 = vld [vmem:[%s2 + $0xd0] sm:$0xf]
        %v1507 = vld [vmem:[%s2 + $0xd4] sm:$0xf]
        %v1508 = vld [vmem:[%s2 + $0xd8] sm:$0xf]
        %v1509 = vld [vmem:[%s2 + $0xdc] sm:$0xf]
        %v1510 = vld [vmem:[%s2 + $0xe0] sm:$0xf]
        %v1511 = vld [vmem:[%s2 + $0xe4] sm:$0xf]
        %v1512 = vld [vmem:[%s2 + $0xe8] sm:$0xf]
        %v1513 = vld [vmem:[%s2 + $0xec] sm:$0xf]
        %v1514 = vld [vmem:[%s2 + $0xf0] sm:$0xf]
        %v1515 = vld [vmem:[%s2 + $0xf4] sm:$0xf]
        %v1516 = vld [vmem:[%s2 + $0xf8] sm:$0xf]
        %v1517 = vld [vmem:[%s2 + $0xfc] sm:$0xf]
        %v1518 = vld [vmem:[%s2 + $0x100] sm:$0xf]
        %v1519 = vld [vmem:[%s2 + $0x104] sm:$0xf]
        %v1520 = vld [vmem:[%s2 + $0x108] sm:$0xf]
        %v1521 = vld [vmem:[%s2 + $0x10c] sm:$0xf]
        %v1522 = vld [vmem:[%s2 + $0x110] sm:$0xf]
        %v1523 = vld [vmem:[%s2 + $0x114] sm:$0xf]
        %v1524 = vld [vmem:[%s2 + $0x118] sm:$0xf]
        %v1525 = vld [vmem:[%s2 + $0x11c] sm:$0xf]
        %v1526 = vld [vmem:[%s2 + $0x120] sm:$0xf]
        %v1527 = vld [vmem:[%s2 + $0x124] sm:$0xf]
        %v1528 = vld [vmem:[%s2 + $0x128] sm:$0xf]
        %v1529 = vld [vmem:[%s2 + $0x12c] sm:$0xf]
        %v1530 = vld [vmem:[%s2 + $0x130] sm:$0xf]
        %v1531 = vld [vmem:[%s2 + $0x134] sm:$0xf]
        %v1532 = vld [vmem:[%s2 + $0x138] sm:$0xf]
        %v1533 = vld [vmem:[%s2 + $0x13c] sm:$0xf]
        %v1534 = vld [vmem:[%s2 + $0x140] sm:$0xf]
        %v1535 = vld [vmem:[%s2 + $0x144] sm:$0xf]
        %v1536 = vld [vmem:[%s2 + $0x148] sm:$0xf]
        %v1537 = vld [vmem:[%s2 + $0x14c] sm:$0xf]
        %v1538 = vld [vmem:[%s2 + $0x150] sm:$0xf]
        %v1539 = vld [vmem:[%s2 + $0x154] sm:$0xf]
        %v1540 = vld [vmem:[%s2 + $0x158] sm:$0xf]
        %v1541 = vld [vmem:[%s2 + $0x15c] sm:$0xf]
        %v1542 = vld [vmem:[%s2 + $0x160] sm:$0xf]
        %v1543 = vld [vmem:[%s2 + $0x164] sm:$0xf]
        %v1544 = vld [vmem:[%s2 + $0x168] sm:$0xf]
        %v1545 = vld [vmem:[%s2 + $0x16c] sm:$0xf]
        %v1546 = vld [vmem:[%s2 + $0x170] sm:$0xf]
        %v1547 = vld [vmem:[%s2 + $0x174] sm:$0xf]
        %v1548 = vld [vmem:[%s2 + $0x178] sm:$0xf]
        %v1549 = vld [vmem:[%s2 + $0x17c] sm:$0xf]
        %v1550 = vld [vmem:[%s2 + $0x180] sm:$0xf]
        %v1551 = vld [vmem:[%s2 + $0x184] sm:$0xf]
        %v1552 = vld [vmem:[%s2 + $0x188] sm:$0xf]
        %v1553 = vld [vmem:[%s2 + $0x18c] sm:$0xf]
        %v1554 = vld [vmem:[%s2 + $0x190] sm:$0xf]
        %v1555 = vld [vmem:[%s2 + $0x194] sm:$0xf]
        %v1556 = vld [vmem:[%s2 + $0x198] sm:$0xf]
        %v1557 = vld [vmem:[%s2 + $0x19c] sm:$0xf]
        %v1558 = vld [vmem:[%s2 + $0x1a0] sm:$0xf]
        %v1559 = vld [vmem:[%s2 + $0x1a4] sm:$0xf]
        %v1560 = vld [vmem:[%s2 + $0x1a8] sm:$0xf]
        %v1561 = vld [vmem:[%s2 + $0x1ac] sm:$0xf]
        %v1562 = vld [vmem:[%s2 + $0x1b0] sm:$0xf]
        %v1563 = vld [vmem:[%s2 + $0x1b4] sm:$0xf]
        %v1564 = vld [vmem:[%s2 + $0x1b8] sm:$0xf]
        %v1565 = vld [vmem:[%s2 + $0x1bc] sm:$0xf]
        %v1566 = vld [vmem:[%s2 + $0x1c0] sm:$0xf]
        %v1567 = vld [vmem:[%s2 + $0x1c4] sm:$0xf]
        %v1568 = vld [vmem:[%s2 + $0x1c8] sm:$0xf]
        %v1569 = vld [vmem:[%s2 + $0x1cc] sm:$0xf]
        %v1570 = vld [vmem:[%s2 + $0x1d0] sm:$0xf]
        %v1571 = vld [vmem:[%s2 + $0x1d4] sm:$0xf]
        %v1572 = vld [vmem:[%s2 + $0x1d8] sm:$0xf]
        %v1573 = vld [vmem:[%s2 + $0x1dc] sm:$0xf]
        %v1574 = vld [vmem:[%s2 + $0x1e0] sm:$0xf]
        %v1575 = vld [vmem:[%s2 + $0x1e4] sm:$0xf]
        %v1576 = vld [vmem:[%s2 + $0x1e8] sm:$0xf]
        %v1577 = vld [vmem:[%s2 + $0x1ec] sm:$0xf]
        %v1578 = vld [vmem:[%s2 + $0x1f0] sm:$0xf]
        %v1579 = vld [vmem:[%s2 + $0x1f4] sm:$0xf]
        %v1580 = vld [vmem:[%s2 + $0x1f8] sm:$0xf]
        %v1581 = vld [vmem:[%s2 + $0x1fc] sm:$0xf]
        %v1582 = vld [vmem:[%s2 + $0x200] sm:$0xf]
        %v1583 = vld [vmem:[%s2 + $0x204] sm:$0xf]
        %v1584 = vld [vmem:[%s2 + $0x208] sm:$0xf]
        %v1585 = vld [vmem:[%s2 + $0x20c] sm:$0xf]
        %v1586 = vld [vmem:[%s2 + $0x210] sm:$0xf]
        %v1587 = vld [vmem:[%s2 + $0x214] sm:$0xf]
        %v1588 = vld [vmem:[%s2 + $0x218] sm:$0xf]
        %v1589 = vld [vmem:[%s2 + $0x21c] sm:$0xf]
        %v1590 = vld [vmem:[%s2 + $0x220] sm:$0xf]
        %v1591 = vld [vmem:[%s2 + $0x224] sm:$0xf]
        %v1592 = vld [vmem:[%s2 + $0x228] sm:$0xf]
        %v1593 = vld [vmem:[%s2 + $0x22c] sm:$0xf]
        %v1594 = vld [vmem:[%s2 + $0x230] sm:$0xf]
        %v1595 = vld [vmem:[%s2 + $0x234] sm:$0xf]
        %v1596 = vld [vmem:[%s2 + $0x238] sm:$0xf]
        %v1597 = vld [vmem:[%s2 + $0x23c] sm:$0xf]
        %v1598 = vld [vmem:[%s3 + $0x1] sm:$0x1]
        %v1599 = vlaneseq
        %v1600 = vshrl.u32 %v1599, 7
        %v1601 = vsub.s32 0, %v1600
        %v1602 = vrot.slane %v1598, %v1601
        %v1747 = vunpack.c.l.b16 %v1454
        %v1748 = vunpack.c.l.b16 %v1455
        %v1749 = vunpack.c.l.b16 %v1456
        %v1750 = vunpack.c.l.b16 %v1457
        %v1751 = vunpack.c.l.b16 %v1458
        %v1752 = vunpack.c.l.b16 %v1459
        %v1753 = vunpack.c.l.b16 %v1460
        %v1754 = vunpack.c.l.b16 %v1461
        %v1755 = vunpack.c.l.b16 %v1462
        %v1756 = vunpack.c.l.b16 %v1463
        %v1757 = vunpack.c.l.b16 %v1464
        %v1758 = vunpack.c.l.b16 %v1465
        %v1759 = vunpack.c.l.b16 %v1466
        %v1760 = vunpack.c.l.b16 %v1467
        %v1761 = vunpack.c.l.b16 %v1468
        %v1762 = vunpack.c.l.b16 %v1469
        %v1763 = vunpack.c.l.b16 %v1470
        %v1764 = vunpack.c.l.b16 %v1471
        %v1765 = vunpack.c.l.b16 %v1472
        %v1766 = vunpack.c.l.b16 %v1473
        %v1767 = vunpack.c.l.b16 %v1474
        %v1768 = vunpack.c.l.b16 %v1475
        %v1769 = vunpack.c.l.b16 %v1476
        %v1770 = vunpack.c.l.b16 %v1477
        %v1771 = vunpack.c.l.b16 %v1478
        %v1772 = vunpack.c.l.b16 %v1479
        %v1773 = vunpack.c.l.b16 %v1480
        %v1774 = vunpack.c.l.b16 %v1481
        %v1775 = vunpack.c.l.b16 %v1482
        %v1776 = vunpack.c.l.b16 %v1483
        %v1777 = vunpack.c.l.b16 %v1484
        %v1778 = vunpack.c.l.b16 %v1485
        %v1779 = vunpack.c.l.b16 %v1486
        %v1780 = vunpack.c.l.b16 %v1487
        %v1781 = vunpack.c.l.b16 %v1488
        %v1782 = vunpack.c.l.b16 %v1489
        %v1783 = vunpack.c.l.b16 %v1490
        %v1784 = vunpack.c.l.b16 %v1491
        %v1785 = vunpack.c.l.b16 %v1492
        %v1786 = vunpack.c.l.b16 %v1493
        %v1787 = vunpack.c.l.b16 %v1494
        %v1788 = vunpack.c.l.b16 %v1495
        %v1789 = vunpack.c.l.b16 %v1496
        %v1790 = vunpack.c.l.b16 %v1497
        %v1791 = vunpack.c.l.b16 %v1498
        %v1792 = vunpack.c.l.b16 %v1499
        %v1793 = vunpack.c.l.b16 %v1500
        %v1794 = vunpack.c.l.b16 %v1501
        %v1795 = vunpack.c.l.b16 %v1502
        %v1796 = vunpack.c.l.b16 %v1503
        %v1797 = vunpack.c.l.b16 %v1504
        %v1798 = vunpack.c.l.b16 %v1505
        %v1799 = vunpack.c.l.b16 %v1506
        %v1800 = vunpack.c.l.b16 %v1507
        %v1801 = vunpack.c.l.b16 %v1508
        %v1802 = vunpack.c.l.b16 %v1509
        %v1803 = vunpack.c.l.b16 %v1510
        %v1804 = vunpack.c.l.b16 %v1511
        %v1805 = vunpack.c.l.b16 %v1512
        %v1806 = vunpack.c.l.b16 %v1513
        %v1807 = vunpack.c.l.b16 %v1514
        %v1808 = vunpack.c.l.b16 %v1515
        %v1809 = vunpack.c.l.b16 %v1516
        %v1810 = vunpack.c.l.b16 %v1517
        %v1811 = vunpack.c.l.b16 %v1518
        %v1812 = vunpack.c.l.b16 %v1519
        %v1813 = vunpack.c.l.b16 %v1520
        %v1814 = vunpack.c.l.b16 %v1521
        %v1815 = vunpack.c.l.b16 %v1522
        %v1816 = vunpack.c.l.b16 %v1523
        %v1817 = vunpack.c.l.b16 %v1524
        %v1818 = vunpack.c.l.b16 %v1525
        %v1819 = vunpack.c.l.b16 %v1526
        %v1820 = vunpack.c.l.b16 %v1527
        %v1821 = vunpack.c.l.b16 %v1528
        %v1822 = vunpack.c.l.b16 %v1529
        %v1823 = vunpack.c.l.b16 %v1530
        %v1824 = vunpack.c.l.b16 %v1531
        %v1825 = vunpack.c.l.b16 %v1532
        %v1826 = vunpack.c.l.b16 %v1533
        %v1827 = vunpack.c.l.b16 %v1534
        %v1828 = vunpack.c.l.b16 %v1535
        %v1829 = vunpack.c.l.b16 %v1536
        %v1830 = vunpack.c.l.b16 %v1537
        %v1831 = vunpack.c.l.b16 %v1538
        %v1832 = vunpack.c.l.b16 %v1539
        %v1833 = vunpack.c.l.b16 %v1540
        %v1834 = vunpack.c.l.b16 %v1541
        %v1835 = vunpack.c.l.b16 %v1542
        %v1836 = vunpack.c.l.b16 %v1543
        %v1837 = vunpack.c.l.b16 %v1544
        %v1838 = vunpack.c.l.b16 %v1545
        %v1839 = vunpack.c.l.b16 %v1546
        %v1840 = vunpack.c.l.b16 %v1547
        %v1841 = vunpack.c.l.b16 %v1548
        %v1842 = vunpack.c.l.b16 %v1549
        %v1843 = vunpack.c.l.b16 %v1550
        %v1844 = vunpack.c.l.b16 %v1551
        %v1845 = vunpack.c.l.b16 %v1552
        %v1846 = vunpack.c.l.b16 %v1553
        %v1847 = vunpack.c.l.b16 %v1554
        %v1848 = vunpack.c.l.b16 %v1555
        %v1849 = vunpack.c.l.b16 %v1556
        %v1850 = vunpack.c.l.b16 %v1557
        %v1851 = vunpack.c.l.b16 %v1558
        %v1852 = vunpack.c.l.b16 %v1559
        %v1853 = vunpack.c.l.b16 %v1560
        %v1854 = vunpack.c.l.b16 %v1561
        %v1855 = vunpack.c.l.b16 %v1562
        %v1856 = vunpack.c.l.b16 %v1563
        %v1857 = vunpack.c.l.b16 %v1564
        %v1858 = vunpack.c.l.b16 %v1565
        %v1859 = vunpack.c.l.b16 %v1566
        %v1860 = vunpack.c.l.b16 %v1567
        %v1861 = vunpack.c.l.b16 %v1568
        %v1862 = vunpack.c.l.b16 %v1569
        %v1863 = vunpack.c.l.b16 %v1570
        %v1864 = vunpack.c.l.b16 %v1571
        %v1865 = vunpack.c.l.b16 %v1572
        %v1866 = vunpack.c.l.b16 %v1573
        %v1867 = vunpack.c.l.b16 %v1574
        %v1868 = vunpack.c.l.b16 %v1575
        %v1869 = vunpack.c.l.b16 %v1576
        %v1870 = vunpack.c.l.b16 %v1577
        %v1871 = vunpack.c.l.b16 %v1578
        %v1872 = vunpack.c.l.b16 %v1579
        %v1873 = vunpack.c.l.b16 %v1580
        %v1874 = vunpack.c.l.b16 %v1581
        %v1875 = vunpack.c.l.b16 %v1582
        %v1876 = vunpack.c.l.b16 %v1583
        %v1877 = vunpack.c.l.b16 %v1584
        %v1878 = vunpack.c.l.b16 %v1585
        %v1879 = vunpack.c.l.b16 %v1586
        %v1880 = vunpack.c.l.b16 %v1587
        %v1881 = vunpack.c.l.b16 %v1588
        %v1882 = vunpack.c.l.b16 %v1589
        %v1883 = vunpack.c.l.b16 %v1590
        %v1884 = vunpack.c.l.b16 %v1591
        %v1885 = vunpack.c.l.b16 %v1592
        %v1886 = vunpack.c.l.b16 %v1593
        %v1887 = vunpack.c.l.b16 %v1594
        %v1888 = vunpack.c.l.b16 %v1595
        %v1889 = vunpack.c.l.b16 %v1596
        %v1890 = vunpack.c.l.b16 %v1597
        %v1891 = vpack.c.b16 %v1748, %v1747
        %v1892 = vpack.c.b16 %v1750, %v1749
        %v1893 = vpack.c.b16 %v1752, %v1751
        %v1894 = vpack.c.b16 %v1754, %v1753
        %v1895 = vpack.c.b16 %v1756, %v1755
        %v1896 = vpack.c.b16 %v1758, %v1757
        %v1897 = vpack.c.b16 %v1760, %v1759
        %v1898 = vpack.c.b16 %v1762, %v1761
        %v1899 = vpack.c.b16 %v1764, %v1763
        %v1900 = vpack.c.b16 %v1766, %v1765
        %v1901 = vpack.c.b16 %v1768, %v1767
        %v1902 = vpack.c.b16 %v1770, %v1769
        %v1903 = vpack.c.b16 %v1772, %v1771
        %v1904 = vpack.c.b16 %v1774, %v1773
        %v1905 = vpack.c.b16 %v1776, %v1775
        %v1906 = vpack.c.b16 %v1778, %v1777
        %v1907 = vpack.c.b16 %v1780, %v1779
        %v1908 = vpack.c.b16 %v1782, %v1781
        %v1909 = vpack.c.b16 %v1784, %v1783
        %v1910 = vpack.c.b16 %v1786, %v1785
        %v1911 = vpack.c.b16 %v1788, %v1787
        %v1912 = vpack.c.b16 %v1790, %v1789
        %v1913 = vpack.c.b16 %v1792, %v1791
        %v1914 = vpack.c.b16 %v1794, %v1793
        %v1915 = vpack.c.b16 %v1796, %v1795
        %v1916 = vpack.c.b16 %v1798, %v1797
        %v1917 = vpack.c.b16 %v1800, %v1799
        %v1918 = vpack.c.b16 %v1802, %v1801
        %v1919 = vpack.c.b16 %v1804, %v1803
        %v1920 = vpack.c.b16 %v1806, %v1805
        %v1921 = vpack.c.b16 %v1808, %v1807
        %v1922 = vpack.c.b16 %v1810, %v1809
        %v1923 = vpack.c.b16 %v1812, %v1811
        %v1924 = vpack.c.b16 %v1814, %v1813
        %v1925 = vpack.c.b16 %v1816, %v1815
        %v1926 = vpack.c.b16 %v1818, %v1817
        %v1927 = vpack.c.b16 %v1820, %v1819
        %v1928 = vpack.c.b16 %v1822, %v1821
        %v1929 = vpack.c.b16 %v1824, %v1823
        %v1930 = vpack.c.b16 %v1826, %v1825
        %v1931 = vpack.c.b16 %v1828, %v1827
        %v1932 = vpack.c.b16 %v1830, %v1829
        %v1933 = vpack.c.b16 %v1832, %v1831
        %v1934 = vpack.c.b16 %v1834, %v1833
        %v1935 = vpack.c.b16 %v1836, %v1835
        %v1936 = vpack.c.b16 %v1838, %v1837
        %v1937 = vpack.c.b16 %v1840, %v1839
        %v1938 = vpack.c.b16 %v1842, %v1841
        %v1939 = vpack.c.b16 %v1844, %v1843
        %v1940 = vpack.c.b16 %v1846, %v1845
        %v1941 = vpack.c.b16 %v1848, %v1847
        %v1942 = vpack.c.b16 %v1850, %v1849
        %v1943 = vpack.c.b16 %v1852, %v1851
        %v1944 = vpack.c.b16 %v1854, %v1853
        %v1945 = vpack.c.b16 %v1856, %v1855
        %v1946 = vpack.c.b16 %v1858, %v1857
        %v1947 = vpack.c.b16 %v1860, %v1859
        %v1948 = vpack.c.b16 %v1862, %v1861
        %v1949 = vpack.c.b16 %v1864, %v1863
        %v1950 = vpack.c.b16 %v1866, %v1865
        %v1951 = vpack.c.b16 %v1868, %v1867
        %v1952 = vpack.c.b16 %v1870, %v1869
        %v1953 = vpack.c.b16 %v1872, %v1871
        %v1954 = vpack.c.b16 %v1874, %v1873
        %v1955 = vpack.c.b16 %v1876, %v1875
        %v1956 = vpack.c.b16 %v1878, %v1877
        %v1957 = vpack.c.b16 %v1880, %v1879
        %v1958 = vpack.c.b16 %v1882, %v1881
        %v1959 = vpack.c.b16 %v1884, %v1883
        %v1960 = vpack.c.b16 %v1886, %v1885
        %v1961 = vpack.c.b16 %v1888, %v1887
        %v1962 = vpack.c.b16 %v1890, %v1889
        %2035 = vmatprep.subr.bf16.mxu0 0
        %2036 = vmatpush1.bf16.msra.mxu0 %v1891
        %2037 = vmatprep.subr.bf16.mxu0 0
        %2038 = vmatpush1.bf16.msra.mxu0 %v1892
        %2039 = vmatprep.subr.bf16.mxu0 0
        %2040 = vmatpush1.bf16.msra.mxu0 %v1893
        %2041 = vmatprep.subr.bf16.mxu0 0
        %2042 = vmatpush1.bf16.msra.mxu0 %v1894
        %2043 = vmatprep.subr.bf16.mxu0 0
        %2044 = vmatpush1.bf16.msra.mxu0 %v1895
        %2045 = vmatprep.subr.bf16.mxu0 0
        %2046 = vmatpush1.bf16.msra.mxu0 %v1896
        %2047 = vmatprep.subr.bf16.mxu0 0
        %2048 = vmatpush1.bf16.msra.mxu0 %v1897
        %2049 = vmatprep.subr.bf16.mxu0 0
        %2050 = vmatpush1.bf16.msra.mxu0 %v1898
        %2051 = vmatprep.subr.bf16.mxu0 0
        %2052 = vmatpush1.bf16.msra.mxu0 %v1899
        %2053 = vmatprep.subr.bf16.mxu0 0
        %2054 = vmatpush1.bf16.msra.mxu0 %v1900
        %2055 = vmatprep.subr.bf16.mxu0 0
        %2056 = vmatpush1.bf16.msra.mxu0 %v1901
        %2057 = vmatprep.subr.bf16.mxu0 0
        %2058 = vmatpush1.bf16.msra.mxu0 %v1902
        %2059 = vmatprep.subr.bf16.mxu0 0
        %2060 = vmatpush1.bf16.msra.mxu0 %v1903
        %2061 = vmatprep.subr.bf16.mxu0 0
        %2062 = vmatpush1.bf16.msra.mxu0 %v1904
        %2063 = vmatprep.subr.bf16.mxu0 0
        %2064 = vmatpush1.bf16.msra.mxu0 %v1905
        %2065 = vmatprep.subr.bf16.mxu0 0
        %2066 = vmatpush1.bf16.msra.mxu0 %v1906
        %2067 = vmatprep.mubr.bf16.mxu0 %v973
        %2068 = vmatmul.mubr.bf16.gmra.mrb[0].mxu0 %v925
        %v2069 = vpop.f32.mrb[0].mxu0
        %v2070 = vadd.f32 %v1602, %v2069
        %v2071 = vpop.f32.mrb[0].mxu0
        %v2072 = vpop.f32.mrb[0].mxu0
        %v2073 = vadd.f32 %v1602, %v2072
        %v2074 = vpop.f32.mrb[0].mxu0
        %2075 = vmatprep.mubr.bf16.mxu0 %v974
        %2076 = vmatmul.mubr.bf16.gmra.mrb[0].mxu0 %v926
        %v2077 = vpop.f32.mrb[0].mxu0
        %v2078 = vadd.f32 %v1602, %v2077
        %v2079 = vpop.f32.mrb[0].mxu0
        %v2080 = vpop.f32.mrb[0].mxu0
        %v2081 = vadd.f32 %v1602, %v2080
        %v2082 = vpop.f32.mrb[0].mxu0
        %2083 = vmatprep.mubr.bf16.mxu0 %v975
        %2084 = vmatmul.mubr.bf16.gmra.mrb[0].mxu0 %v927
        %v2085 = vpop.f32.mrb[0].mxu0
        %v2086 = vadd.f32 %v1602, %v2085
        %v2087 = vpop.f32.mrb[0].mxu0
        %v2088 = vpop.f32.mrb[0].mxu0
        %v2089 = vadd.f32 %v1602, %v2088
        %v2090 = vpop.f32.mrb[0].mxu0
        %2091 = vmatprep.mubr.bf16.mxu0 %v976
        %2092 = vmatmul.mubr.bf16.gmra.mrb[0].mxu0 %v928
        %v2093 = vpop.f32.mrb[0].mxu0
        %v2094 = vadd.f32 %v1602, %v2093
        %v2095 = vpop.f32.mrb[0].mxu0
        %v2096 = vpop.f32.mrb[0].mxu0
        %v2097 = vadd.f32 %v1602, %v2096
        %v2098 = vpop.f32.mrb[0].mxu0
        %2099 = vmatprep.mubr.bf16.mxu0 %v977
        %2100 = vmatmul.mubr.bf16.gmra.mrb[0].mxu0 %v929
        %v2101 = vpop.f32.mrb[0].mxu0
        %v2102 = vadd.f32 %v1602, %v2101
        %v2103 = vpop.f32.mrb[0].mxu0
        %v2104 = vpop.f32.mrb[0].mxu0
        %v2105 = vadd.f32 %v1602, %v2104
        %v2106 = vpop.f32.mrb[0].mxu0
        %2107 = vmatprep.mubr.bf16.mxu0 %v978
        %2108 = vmatmul.mubr.bf16.gmra.mrb[0].mxu0 %v930
        %v2109 = vpop.f32.mrb[0].mxu0
        %v2110 = vadd.f32 %v1602, %v2109
        %v2111 = vpop.f32.mrb[0].mxu0
        %v2112 = vpop.f32.mrb[0].mxu0
        %v2113 = vadd.f32 %v1602, %v2112
        %v2114 = vpop.f32.mrb[0].mxu0
        %2115 = vmatprep.mubr.bf16.mxu0 %v979
        %2116 = vmatmul.mubr.bf16.gmra.mrb[0].mxu0 %v931
        %v2117 = vpop.f32.mrb[0].mxu0
        %v2118 = vadd.f32 %v1602, %v2117
        %v2119 = vpop.f32.mrb[0].mxu0
        %v2120 = vpop.f32.mrb[0].mxu0
        %v2121 = vadd.f32 %v1602, %v2120
        %v2122 = vpop.f32.mrb[0].mxu0
        %2123 = vmatprep.mubr.bf16.mxu0 %v980
        %2124 = vmatmul.mubr.bf16.gmra.mrb[0].mxu0 %v932
        %v2125 = vpop.f32.mrb[0].mxu0
        %v2126 = vadd.f32 %v1602, %v2125
        %v2127 = vpop.f32.mrb[0].mxu0
        %v2128 = vpop.f32.mrb[0].mxu0
        %v2129 = vadd.f32 %v1602, %v2128
        %v2130 = vpop.f32.mrb[0].mxu0
        %2131 = vmatprep.mubr.bf16.mxu0 %v981
        %2132 = vmatmul.mubr.bf16.gmra.mrb[0].mxu0 %v933
        %v2133 = vpop.f32.mrb[0].mxu0
        %v2134 = vadd.f32 %v1602, %v2133
        %v2135 = vpop.f32.mrb[0].mxu0
        %v2136 = vpop.f32.mrb[0].mxu0
        %v2137 = vadd.f32 %v1602, %v2136
        %v2138 = vpop.f32.mrb[0].mxu0
        %2139 = vmatprep.mubr.bf16.mxu0 %v982
        %2140 = vmatmul.mubr.bf16.gmra.mrb[0].mxu0 %v934
        %v2141 = vpop.f32.mrb[0].mxu0
        %v2142 = vadd.f32 %v1602, %v2141
        %v2143 = vpop.f32.mrb[0].mxu0
        %v2144 = vpop.f32.mrb[0].mxu0
        %v2145 = vadd.f32 %v1602, %v2144
        %v2146 = vpop.f32.mrb[0].mxu0
        %2147 = vmatprep.mubr.bf16.mxu0 %v983
        %2148 = vmatmul.mubr.bf16.gmra.mrb[0].mxu0 %v935
        %v2149 = vpop.f32.mrb[0].mxu0
        %v2150 = vadd.f32 %v1602, %v2149
        %v2151 = vpop.f32.mrb[0].mxu0
        %v2152 = vpop.f32.mrb[0].mxu0
        %v2153 = vadd.f32 %v1602, %v2152
        %v2154 = vpop.f32.mrb[0].mxu0
        %2155 = vmatprep.mubr.bf16.mxu0 %v984
        %2156 = vmatmul.mubr.bf16.gmra.mrb[0].mxu0 %v936
        %v2157 = vpop.f32.mrb[0].mxu0
        %v2158 = vadd.f32 %v1602, %v2157
        %v2159 = vpop.f32.mrb[0].mxu0
        %v2160 = vpop.f32.mrb[0].mxu0
        %v2161 = vadd.f32 %v1602, %v2160
        %v2162 = vpop.f32.mrb[0].mxu0
        %2163 = vmatprep.mubr.bf16.mxu0 %v985
        %2164 = vmatmul.mubr.bf16.gmra.mrb[0].mxu0 %v937
        %v2165 = vpop.f32.mrb[0].mxu0
        %v2166 = vadd.f32 %v1602, %v2165
        %v2167 = vpop.f32.mrb[0].mxu0
        %v2168 = vpop.f32.mrb[0].mxu0
        %v2169 = vadd.f32 %v1602, %v2168
        %v2170 = vpop.f32.mrb[0].mxu0
        %2171 = vmatprep.mubr.bf16.mxu0 %v986
        %2172 = vmatmul.mubr.bf16.gmra.mrb[0].mxu0 %v938
        %v2173 = vpop.f32.mrb[0].mxu0
        %v2174 = vadd.f32 %v1602, %v2173
        %v2175 = vpop.f32.mrb[0].mxu0
        %v2176 = vpop.f32.mrb[0].mxu0
        %v2177 = vadd.f32 %v1602, %v2176
        %v2178 = vpop.f32.mrb[0].mxu0
        %2179 = vmatprep.mubr.bf16.mxu0 %v987
        %2180 = vmatmul.mubr.bf16.gmra.mrb[0].mxu0 %v939
        %v2181 = vpop.f32.mrb[0].mxu0
        %v2182 = vadd.f32 %v1602, %v2181
        %v2183 = vpop.f32.mrb[0].mxu0
        %v2184 = vpop.f32.mrb[0].mxu0
        %v2185 = vadd.f32 %v1602, %v2184
        %v2186 = vpop.f32.mrb[0].mxu0
        %2187 = vmatprep.mubr.bf16.mxu0 %v988
        %2188 = vmatmul.mubr.bf16.gmra.mrb[0].mxu0 %v940
        %v2189 = vpop.f32.mrb[0].mxu0
        %v2190 = vadd.f32 %v1602, %v2189
        %v2191 = vpop.f32.mrb[0].mxu0
        %v2192 = vpop.f32.mrb[0].mxu0
        %v2193 = vadd.f32 %v1602, %v2192
        %v2194 = vpop.f32.mrb[0].mxu0
        %2195 = vdwg.mxu0
        %2196 = vmatprep.subr.bf16.mxu0 0
        %2197 = vmatpush1.bf16.msra.mxu0 %v1907
        %2198 = vmatprep.subr.bf16.mxu0 0
        %2199 = vmatpush1.bf16.msra.mxu0 %v1908
        %2200 = vmatprep.subr.bf16.mxu0 0
        %2201 = vmatpush1.bf16.msra.mxu0 %v1909
        %2202 = vmatprep.subr.bf16.mxu0 0
        %2203 = vmatpush1.bf16.msra.mxu0 %v1910
        %2204 = vmatprep.subr.bf16.mxu0 0
        %2205 = vmatpush1.bf16.msra.mxu0 %v1911
        %2206 = vmatprep.subr.bf16.mxu0 0
        %2207 = vmatpush1.bf16.msra.mxu0 %v1912
        %2208 = vmatprep.subr.bf16.mxu0 0
        %2209 = vmatpush1.bf16.msra.mxu0 %v1913
        %2210 = vmatprep.subr.bf16.mxu0 0
        %2211 = vmatpush1.bf16.msra.mxu0 %v1914
        %2212 = vmatprep.subr.bf16.mxu0 0
        %2213 = vmatpush1.bf16.msra.mxu0 %v1915
        %2214 = vmatprep.subr.bf16.mxu0 0
        %2215 = vmatpush1.bf16.msra.mxu0 %v1916
        %2216 = vmatprep.subr.bf16.mxu0 0
        %2217 = vmatpush1.bf16.msra.mxu0 %v1917
        %2218 = vmatprep.subr.bf16.mxu0 0
        %2219 = vmatpush1.bf16.msra.mxu0 %v1918
        %2220 = vmatprep.subr.bf16.mxu0 0
        %2221 = vmatpush1.bf16.msra.mxu0 %v1919
        %2222 = vmatprep.subr.bf16.mxu0 0
        %2223 = vmatpush1.bf16.msra.mxu0 %v1920
        %2224 = vmatprep.subr.bf16.mxu0 0
        %2225 = vmatpush1.bf16.msra.mxu0 %v1921
        %2226 = vmatprep.subr.bf16.mxu0 0
        %2227 = vmatpush1.bf16.msra.mxu0 %v1922
        %2228 = vmatprep.mubr.bf16.mxu0 %v1166
        %2229 = vmatmul.mubr.bf16.gmra.mrb[0].mxu0 %v1118
        %v2230 = vpop.f32.mrb[0].mxu0
        %v2231 = vadd.f32 %v2070, %v2230
        %v2232 = vpop.f32.mrb[0].mxu0
        %v2233 = vpop.f32.mrb[0].mxu0
        %v2234 = vadd.f32 %v2073, %v2233
        %v2235 = vpop.f32.mrb[0].mxu0
        %2236 = vmatprep.mubr.bf16.mxu0 %v1167
        %2237 = vmatmul.mubr.bf16.gmra.mrb[0].mxu0 %v1119
        %v2238 = vpop.f32.mrb[0].mxu0
        %v2239 = vadd.f32 %v2078, %v2238
        %v2240 = vpop.f32.mrb[0].mxu0
        %v2241 = vpop.f32.mrb[0].mxu0
        %v2242 = vadd.f32 %v2081, %v2241
        %v2243 = vpop.f32.mrb[0].mxu0
        %2244 = vmatprep.mubr.bf16.mxu0 %v1168
        %2245 = vmatmul.mubr.bf16.gmra.mrb[0].mxu0 %v1120
        %v2246 = vpop.f32.mrb[0].mxu0
        %v2247 = vadd.f32 %v2086, %v2246
        %v2248 = vpop.f32.mrb[0].mxu0
        %v2249 = vpop.f32.mrb[0].mxu0
        %v2250 = vadd.f32 %v2089, %v2249
        %v2251 = vpop.f32.mrb[0].mxu0
        %2252 = vmatprep.mubr.bf16.mxu0 %v1169
        %2253 = vmatmul.mubr.bf16.gmra.mrb[0].mxu0 %v1121
        %v2254 = vpop.f32.mrb[0].mxu0
        %v2255 = vadd.f32 %v2094, %v2254
        %v2256 = vpop.f32.mrb[0].mxu0
        %v2257 = vpop.f32.mrb[0].mxu0
        %v2258 = vadd.f32 %v2097, %v2257
        %v2259 = vpop.f32.mrb[0].mxu0
        %2260 = vmatprep.mubr.bf16.mxu0 %v1170
        %2261 = vmatmul.mubr.bf16.gmra.mrb[0].mxu0 %v1122
        %v2262 = vpop.f32.mrb[0].mxu0
        %v2263 = vadd.f32 %v2102, %v2262
        %v2264 = vpop.f32.mrb[0].mxu0
        %v2265 = vpop.f32.mrb[0].mxu0
        %v2266 = vadd.f32 %v2105, %v2265
        %v2267 = vpop.f32.mrb[0].mxu0
        %2268 = vmatprep.mubr.bf16.mxu0 %v1171
        %2269 = vmatmul.mubr.bf16.gmra.mrb[0].mxu0 %v1123
        %v2270 = vpop.f32.mrb[0].mxu0
        %v2271 = vadd.f32 %v2110, %v2270
        %v2272 = vpop.f32.mrb[0].mxu0
        %v2273 = vpop.f32.mrb[0].mxu0
        %v2274 = vadd.f32 %v2113, %v2273
        %v2275 = vpop.f32.mrb[0].mxu0
        %2276 = vmatprep.mubr.bf16.mxu0 %v1172
        %2277 = vmatmul.mubr.bf16.gmra.mrb[0].mxu0 %v1124
        %v2278 = vpop.f32.mrb[0].mxu0
        %v2279 = vadd.f32 %v2118, %v2278
        %v2280 = vpop.f32.mrb[0].mxu0
        %v2281 = vpop.f32.mrb[0].mxu0
        %v2282 = vadd.f32 %v2121, %v2281
        %v2283 = vpop.f32.mrb[0].mxu0
        %2284 = vmatprep.mubr.bf16.mxu0 %v1173
        %2285 = vmatmul.mubr.bf16.gmra.mrb[0].mxu0 %v1125
        %v2286 = vpop.f32.mrb[0].mxu0
        %v2287 = vadd.f32 %v2126, %v2286
        %v2288 = vpop.f32.mrb[0].mxu0
        %v2289 = vpop.f32.mrb[0].mxu0
        %v2290 = vadd.f32 %v2129, %v2289
        %v2291 = vpop.f32.mrb[0].mxu0
        %2292 = vmatprep.mubr.bf16.mxu0 %v1174
        %2293 = vmatmul.mubr.bf16.gmra.mrb[0].mxu0 %v1126
        %v2294 = vpop.f32.mrb[0].mxu0
        %v2295 = vadd.f32 %v2134, %v2294
        %v2296 = vpop.f32.mrb[0].mxu0
        %v2297 = vpop.f32.mrb[0].mxu0
        %v2298 = vadd.f32 %v2137, %v2297
        %v2299 = vpop.f32.mrb[0].mxu0
        %2300 = vmatprep.mubr.bf16.mxu0 %v1175
        %2301 = vmatmul.mubr.bf16.gmra.mrb[0].mxu0 %v1127
        %v2302 = vpop.f32.mrb[0].mxu0
        %v2303 = vadd.f32 %v2142, %v2302
        %v2304 = vpop.f32.mrb[0].mxu0
        %v2305 = vpop.f32.mrb[0].mxu0
        %v2306 = vadd.f32 %v2145, %v2305
        %v2307 = vpop.f32.mrb[0].mxu0
        %2308 = vmatprep.mubr.bf16.mxu0 %v1176
        %2309 = vmatmul.mubr.bf16.gmra.mrb[0].mxu0 %v1128
        %v2310 = vpop.f32.mrb[0].mxu0
        %v2311 = vadd.f32 %v2150, %v2310
        %v2312 = vpop.f32.mrb[0].mxu0
        %v2313 = vpop.f32.mrb[0].mxu0
        %v2314 = vadd.f32 %v2153, %v2313
        %v2315 = vpop.f32.mrb[0].mxu0
        %2316 = vmatprep.mubr.bf16.mxu0 %v1177
        %2317 = vmatmul.mubr.bf16.gmra.mrb[0].mxu0 %v1129
        %v2318 = vpop.f32.mrb[0].mxu0
        %v2319 = vadd.f32 %v2158, %v2318
        %v2320 = vpop.f32.mrb[0].mxu0
        %v2321 = vpop.f32.mrb[0].mxu0
        %v2322 = vadd.f32 %v2161, %v2321
        %v2323 = vpop.f32.mrb[0].mxu0
        %2324 = vmatprep.mubr.bf16.mxu0 %v1178
        %2325 = vmatmul.mubr.bf16.gmra.mrb[0].mxu0 %v1130
        %v2326 = vpop.f32.mrb[0].mxu0
        %v2327 = vadd.f32 %v2166, %v2326
        %v2328 = vpop.f32.mrb[0].mxu0
        %v2329 = vpop.f32.mrb[0].mxu0
        %v2330 = vadd.f32 %v2169, %v2329
        %v2331 = vpop.f32.mrb[0].mxu0
        %2332 = vmatprep.mubr.bf16.mxu0 %v1179
        %2333 = vmatmul.mubr.bf16.gmra.mrb[0].mxu0 %v1131
        %v2334 = vpop.f32.mrb[0].mxu0
        %v2335 = vadd.f32 %v2174, %v2334
        %v2336 = vpop.f32.mrb[0].mxu0
        %v2337 = vpop.f32.mrb[0].mxu0
        %v2338 = vadd.f32 %v2177, %v2337
        %v2339 = vpop.f32.mrb[0].mxu0
        %2340 = vmatprep.mubr.bf16.mxu0 %v1180
        %2341 = vmatmul.mubr.bf16.gmra.mrb[0].mxu0 %v1132
        %v2342 = vpop.f32.mrb[0].mxu0
        %v2343 = vadd.f32 %v2182, %v2342
        %v2344 = vpop.f32.mrb[0].mxu0
        %v2345 = vpop.f32.mrb[0].mxu0
        %v2346 = vadd.f32 %v2185, %v2345
        %v2347 = vpop.f32.mrb[0].mxu0
        %2348 = vmatprep.mubr.bf16.mxu0 %v1181
        %2349 = vmatmul.mubr.bf16.gmra.mrb[0].mxu0 %v1133
        %v2350 = vpop.f32.mrb[0].mxu0
        %v2351 = vadd.f32 %v2190, %v2350
        %v2352 = vpop.f32.mrb[0].mxu0
        %v2353 = vpop.f32.mrb[0].mxu0
        %v2354 = vadd.f32 %v2193, %v2353
        %v2355 = vpop.f32.mrb[0].mxu0
        %2356 = vdwg.mxu0
        %2357 = vmatprep.subr.bf16.mxu0 0
        %2358 = vmatpush1.bf16.msra.mxu0 %v1923
        %2359 = vmatprep.subr.bf16.mxu0 0
        %2360 = vmatpush1.bf16.msra.mxu0 %v1924
        %2361 = vmatprep.subr.bf16.mxu0 0
        %2362 = vmatpush1.bf16.msra.mxu0 %v1925
        %2363 = vmatprep.subr.bf16.mxu0 0
        %2364 = vmatpush1.bf16.msra.mxu0 %v1926
        %2365 = vmatprep.subr.bf16.mxu0 0
        %2366 = vmatpush1.bf16.msra.mxu0 %v1927
        %2367 = vmatprep.subr.bf16.mxu0 0
        %2368 = vmatpush1.bf16.msra.mxu0 %v1928
        %2369 = vmatprep.subr.bf16.mxu0 0
        %2370 = vmatpush1.bf16.msra.mxu0 %v1929
        %2371 = vmatprep.subr.bf16.mxu0 0
        %2372 = vmatpush1.bf16.msra.mxu0 %v1930
        %2373 = vmatprep.subr.bf16.mxu0 0
        %2374 = vmatpush1.bf16.msra.mxu0 %v1931
        %2375 = vmatprep.subr.bf16.mxu0 0
        %2376 = vmatpush1.bf16.msra.mxu0 %v1932
        %2377 = vmatprep.subr.bf16.mxu0 0
        %2378 = vmatpush1.bf16.msra.mxu0 %v1933
        %2379 = vmatprep.subr.bf16.mxu0 0
        %2380 = vmatpush1.bf16.msra.mxu0 %v1934
        %2381 = vmatprep.subr.bf16.mxu0 0
        %2382 = vmatpush1.bf16.msra.mxu0 %v1935
        %2383 = vmatprep.subr.bf16.mxu0 0
        %2384 = vmatpush1.bf16.msra.mxu0 %v1936
        %2385 = vmatprep.subr.bf16.mxu0 0
        %2386 = vmatpush1.bf16.msra.mxu0 %v1937
        %2387 = vmatprep.subr.bf16.mxu0 0
        %2388 = vmatpush1.bf16.msra.mxu0 %v1938
        %2389 = vmatprep.mubr.bf16.mxu0 %v1230
        %2390 = vmatmul.mubr.bf16.gmra.mrb[0].mxu0 %v1182
        %v2391 = vpop.f32.mrb[0].mxu0
        %v2392 = vadd.f32 %v2231, %v2391
        %v2393 = vpop.f32.mrb[0].mxu0
        %v2394 = vpop.f32.mrb[0].mxu0
        %v2395 = vadd.f32 %v2234, %v2394
        %v2396 = vpop.f32.mrb[0].mxu0
        %2397 = vmatprep.mubr.bf16.mxu0 %v1231
        %2398 = vmatmul.mubr.bf16.gmra.mrb[0].mxu0 %v1183
        %v2399 = vpop.f32.mrb[0].mxu0
        %v2400 = vadd.f32 %v2239, %v2399
        %v2401 = vpop.f32.mrb[0].mxu0
        %v2402 = vpop.f32.mrb[0].mxu0
        %v2403 = vadd.f32 %v2242, %v2402
        %v2404 = vpop.f32.mrb[0].mxu0
        %2405 = vmatprep.mubr.bf16.mxu0 %v1232
        %2406 = vmatmul.mubr.bf16.gmra.mrb[0].mxu0 %v1184
        %v2407 = vpop.f32.mrb[0].mxu0
        %v2408 = vadd.f32 %v2247, %v2407
        %v2409 = vpop.f32.mrb[0].mxu0
        %v2410 = vpop.f32.mrb[0].mxu0
        %v2411 = vadd.f32 %v2250, %v2410
        %v2412 = vpop.f32.mrb[0].mxu0
        %2413 = vmatprep.mubr.bf16.mxu0 %v1233
        %2414 = vmatmul.mubr.bf16.gmra.mrb[0].mxu0 %v1185
        %v2415 = vpop.f32.mrb[0].mxu0
        %v2416 = vadd.f32 %v2255, %v2415
        %v2417 = vpop.f32.mrb[0].mxu0
        %v2418 = vpop.f32.mrb[0].mxu0
        %v2419 = vadd.f32 %v2258, %v2418
        %v2420 = vpop.f32.mrb[0].mxu0
        %2421 = vmatprep.mubr.bf16.mxu0 %v1234
        %2422 = vmatmul.mubr.bf16.gmra.mrb[0].mxu0 %v1186
        %v2423 = vpop.f32.mrb[0].mxu0
        %v2424 = vadd.f32 %v2263, %v2423
        %v2425 = vpop.f32.mrb[0].mxu0
        %v2426 = vpop.f32.mrb[0].mxu0
        %v2427 = vadd.f32 %v2266, %v2426
        %v2428 = vpop.f32.mrb[0].mxu0
        %2429 = vmatprep.mubr.bf16.mxu0 %v1235
        %2430 = vmatmul.mubr.bf16.gmra.mrb[0].mxu0 %v1187
        %v2431 = vpop.f32.mrb[0].mxu0
        %v2432 = vadd.f32 %v2271, %v2431
        %v2433 = vpop.f32.mrb[0].mxu0
        %v2434 = vpop.f32.mrb[0].mxu0
        %v2435 = vadd.f32 %v2274, %v2434
        %v2436 = vpop.f32.mrb[0].mxu0
        %2437 = vmatprep.mubr.bf16.mxu0 %v1236
        %2438 = vmatmul.mubr.bf16.gmra.mrb[0].mxu0 %v1188
        %v2439 = vpop.f32.mrb[0].mxu0
        %v2440 = vadd.f32 %v2279, %v2439
        %v2441 = vpop.f32.mrb[0].mxu0
        %v2442 = vpop.f32.mrb[0].mxu0
        %v2443 = vadd.f32 %v2282, %v2442
        %v2444 = vpop.f32.mrb[0].mxu0
        %2445 = vmatprep.mubr.bf16.mxu0 %v1237
        %2446 = vmatmul.mubr.bf16.gmra.mrb[0].mxu0 %v1189
        %v2447 = vpop.f32.mrb[0].mxu0
        %v2448 = vadd.f32 %v2287, %v2447
        %v2449 = vpop.f32.mrb[0].mxu0
        %v2450 = vpop.f32.mrb[0].mxu0
        %v2451 = vadd.f32 %v2290, %v2450
        %v2452 = vpop.f32.mrb[0].mxu0
        %2453 = vmatprep.mubr.bf16.mxu0 %v1238
        %2454 = vmatmul.mubr.bf16.gmra.mrb[0].mxu0 %v1190
        %v2455 = vpop.f32.mrb[0].mxu0
        %v2456 = vadd.f32 %v2295, %v2455
        %v2457 = vpop.f32.mrb[0].mxu0
        %v2458 = vpop.f32.mrb[0].mxu0
        %v2459 = vadd.f32 %v2298, %v2458
        %v2460 = vpop.f32.mrb[0].mxu0
        %2461 = vmatprep.mubr.bf16.mxu0 %v1239
        %2462 = vmatmul.mubr.bf16.gmra.mrb[0].mxu0 %v1191
        %v2463 = vpop.f32.mrb[0].mxu0
        %v2464 = vadd.f32 %v2303, %v2463
        %v2465 = vpop.f32.mrb[0].mxu0
        %v2466 = vpop.f32.mrb[0].mxu0
        %v2467 = vadd.f32 %v2306, %v2466
        %v2468 = vpop.f32.mrb[0].mxu0
        %2469 = vmatprep.mubr.bf16.mxu0 %v1240
        %2470 = vmatmul.mubr.bf16.gmra.mrb[0].mxu0 %v1192
        %v2471 = vpop.f32.mrb[0].mxu0
        %v2472 = vadd.f32 %v2311, %v2471
        %v2473 = vpop.f32.mrb[0].mxu0
        %v2474 = vpop.f32.mrb[0].mxu0
        %v2475 = vadd.f32 %v2314, %v2474
        %v2476 = vpop.f32.mrb[0].mxu0
        %2477 = vmatprep.mubr.bf16.mxu0 %v1241
        %2478 = vmatmul.mubr.bf16.gmra.mrb[0].mxu0 %v1193
        %v2479 = vpop.f32.mrb[0].mxu0
        %v2480 = vadd.f32 %v2319, %v2479
        %v2481 = vpop.f32.mrb[0].mxu0
        %v2482 = vpop.f32.mrb[0].mxu0
        %v2483 = vadd.f32 %v2322, %v2482
        %v2484 = vpop.f32.mrb[0].mxu0
        %2485 = vmatprep.mubr.bf16.mxu0 %v1242
        %2486 = vmatmul.mubr.bf16.gmra.mrb[0].mxu0 %v1194
        %v2487 = vpop.f32.mrb[0].mxu0
        %v2488 = vadd.f32 %v2327, %v2487
        %v2489 = vpop.f32.mrb[0].mxu0
        %v2490 = vpop.f32.mrb[0].mxu0
        %v2491 = vadd.f32 %v2330, %v2490
        %v2492 = vpop.f32.mrb[0].mxu0
        %2493 = vmatprep.mubr.bf16.mxu0 %v1243
        %2494 = vmatmul.mubr.bf16.gmra.mrb[0].mxu0 %v1195
        %v2495 = vpop.f32.mrb[0].mxu0
        %v2496 = vadd.f32 %v2335, %v2495
        %v2497 = vpop.f32.mrb[0].mxu0
        %v2498 = vpop.f32.mrb[0].mxu0
        %v2499 = vadd.f32 %v2338, %v2498
        %v2500 = vpop.f32.mrb[0].mxu0
        %2501 = vmatprep.mubr.bf16.mxu0 %v1244
        %2502 = vmatmul.mubr.bf16.gmra.mrb[0].mxu0 %v1196
        %v2503 = vpop.f32.mrb[0].mxu0
        %v2504 = vadd.f32 %v2343, %v2503
        %v2505 = vpop.f32.mrb[0].mxu0
        %v2506 = vpop.f32.mrb[0].mxu0
        %v2507 = vadd.f32 %v2346, %v2506
        %v2508 = vpop.f32.mrb[0].mxu0
        %2509 = vmatprep.mubr.bf16.mxu0 %v1245
        %2510 = vmatmul.mubr.bf16.gmra.mrb[0].mxu0 %v1197
        %v2511 = vpop.f32.mrb[0].mxu0
        %v2512 = vadd.f32 %v2351, %v2511
        %v2513 = vpop.f32.mrb[0].mxu0
        %v2514 = vpop.f32.mrb[0].mxu0
        %v2515 = vadd.f32 %v2354, %v2514
        %v2516 = vpop.f32.mrb[0].mxu0
        %2517 = vdwg.mxu0
        %2518 = vmatprep.subr.bf16.mxu0 0
        %2519 = vmatpush1.bf16.msra.mxu0 %v1939
        %2520 = vmatprep.subr.bf16.mxu0 0
        %2521 = vmatpush1.bf16.msra.mxu0 %v1940
        %2522 = vmatprep.subr.bf16.mxu0 0
        %2523 = vmatpush1.bf16.msra.mxu0 %v1941
        %2524 = vmatprep.subr.bf16.mxu0 0
        %2525 = vmatpush1.bf16.msra.mxu0 %v1942
        %2526 = vmatprep.subr.bf16.mxu0 0
        %2527 = vmatpush1.bf16.msra.mxu0 %v1943
        %2528 = vmatprep.subr.bf16.mxu0 0
        %2529 = vmatpush1.bf16.msra.mxu0 %v1944
        %2530 = vmatprep.subr.bf16.mxu0 0
        %2531 = vmatpush1.bf16.msra.mxu0 %v1945
        %2532 = vmatprep.subr.bf16.mxu0 0
        %2533 = vmatpush1.bf16.msra.mxu0 %v1946
        %2534 = vmatprep.subr.bf16.mxu0 0
        %2535 = vmatpush1.bf16.msra.mxu0 %v1947
        %2536 = vmatprep.subr.bf16.mxu0 0
        %2537 = vmatpush1.bf16.msra.mxu0 %v1948
        %2538 = vmatprep.subr.bf16.mxu0 0
        %2539 = vmatpush1.bf16.msra.mxu0 %v1949
        %2540 = vmatprep.subr.bf16.mxu0 0
        %2541 = vmatpush1.bf16.msra.mxu0 %v1950
        %2542 = vmatprep.subr.bf16.mxu0 0
        %2543 = vmatpush1.bf16.msra.mxu0 %v1951
        %2544 = vmatprep.subr.bf16.mxu0 0
        %2545 = vmatpush1.bf16.msra.mxu0 %v1952
        %2546 = vmatprep.subr.bf16.mxu0 0
        %2547 = vmatpush1.bf16.msra.mxu0 %v1953
        %2548 = vmatprep.subr.bf16.mxu0 0
        %2549 = vmatpush1.bf16.msra.mxu0 %v1954
        %2550 = vmatprep.mubr.bf16.mxu0 %v1358
        %2551 = vmatmul.mubr.bf16.gmra.mrb[0].mxu0 %v1310
        %v2552 = vpop.f32.mrb[0].mxu0
        %v2553 = vadd.f32 %v2392, %v2552
        %v2554 = vpop.f32.mrb[0].mxu0
        %v2555 = vpop.f32.mrb[0].mxu0
        %v2556 = vadd.f32 %v2395, %v2555
        %v2557 = vpop.f32.mrb[0].mxu0
        %2558 = vmatprep.mubr.bf16.mxu0 %v1359
        %2559 = vmatmul.mubr.bf16.gmra.mrb[0].mxu0 %v1311
        %v2560 = vpop.f32.mrb[0].mxu0
        %v2561 = vadd.f32 %v2400, %v2560
        %v2562 = vpop.f32.mrb[0].mxu0
        %v2563 = vpop.f32.mrb[0].mxu0
        %v2564 = vadd.f32 %v2403, %v2563
        %v2565 = vpop.f32.mrb[0].mxu0
        %2566 = vmatprep.mubr.bf16.mxu0 %v1360
        %2567 = vmatmul.mubr.bf16.gmra.mrb[0].mxu0 %v1312
        %v2568 = vpop.f32.mrb[0].mxu0
        %v2569 = vadd.f32 %v2408, %v2568
        %v2570 = vpop.f32.mrb[0].mxu0
        %v2571 = vpop.f32.mrb[0].mxu0
        %v2572 = vadd.f32 %v2411, %v2571
        %v2573 = vpop.f32.mrb[0].mxu0
        %2574 = vmatprep.mubr.bf16.mxu0 %v1361
        %2575 = vmatmul.mubr.bf16.gmra.mrb[0].mxu0 %v1313
        %v2576 = vpop.f32.mrb[0].mxu0
        %v2577 = vadd.f32 %v2416, %v2576
        %v2578 = vpop.f32.mrb[0].mxu0
        %v2579 = vpop.f32.mrb[0].mxu0
        %v2580 = vadd.f32 %v2419, %v2579
        %v2581 = vpop.f32.mrb[0].mxu0
        %2582 = vmatprep.mubr.bf16.mxu0 %v1362
        %2583 = vmatmul.mubr.bf16.gmra.mrb[0].mxu0 %v1314
        %v2584 = vpop.f32.mrb[0].mxu0
        %v2585 = vadd.f32 %v2424, %v2584
        %v2586 = vpop.f32.mrb[0].mxu0
        %v2587 = vpop.f32.mrb[0].mxu0
        %v2588 = vadd.f32 %v2427, %v2587
        %v2589 = vpop.f32.mrb[0].mxu0
        %2590 = vmatprep.mubr.bf16.mxu0 %v1363
        %2591 = vmatmul.mubr.bf16.gmra.mrb[0].mxu0 %v1315
        %v2592 = vpop.f32.mrb[0].mxu0
        %v2593 = vadd.f32 %v2432, %v2592
        %v2594 = vpop.f32.mrb[0].mxu0
        %v2595 = vpop.f32.mrb[0].mxu0
        %v2596 = vadd.f32 %v2435, %v2595
        %v2597 = vpop.f32.mrb[0].mxu0
        %2598 = vmatprep.mubr.bf16.mxu0 %v1364
        %2599 = vmatmul.mubr.bf16.gmra.mrb[0].mxu0 %v1316
        %v2600 = vpop.f32.mrb[0].mxu0
        %v2601 = vadd.f32 %v2440, %v2600
        %v2602 = vpop.f32.mrb[0].mxu0
        %v2603 = vpop.f32.mrb[0].mxu0
        %v2604 = vadd.f32 %v2443, %v2603
        %v2605 = vpop.f32.mrb[0].mxu0
        %2606 = vmatprep.mubr.bf16.mxu0 %v1365
        %2607 = vmatmul.mubr.bf16.gmra.mrb[0].mxu0 %v1317
        %v2608 = vpop.f32.mrb[0].mxu0
        %v2609 = vadd.f32 %v2448, %v2608
        %v2610 = vpop.f32.mrb[0].mxu0
        %v2611 = vpop.f32.mrb[0].mxu0
        %v2612 = vadd.f32 %v2451, %v2611
        %v2613 = vpop.f32.mrb[0].mxu0
        %2614 = vmatprep.mubr.bf16.mxu0 %v1366
        %2615 = vmatmul.mubr.bf16.gmra.mrb[0].mxu0 %v1318
        %v2616 = vpop.f32.mrb[0].mxu0
        %v2617 = vadd.f32 %v2456, %v2616
        %v2618 = vpop.f32.mrb[0].mxu0
        %v2619 = vpop.f32.mrb[0].mxu0
        %v2620 = vadd.f32 %v2459, %v2619
        %v2621 = vpop.f32.mrb[0].mxu0
        %2622 = vmatprep.mubr.bf16.mxu0 %v1367
        %2623 = vmatmul.mubr.bf16.gmra.mrb[0].mxu0 %v1319
        %v2624 = vpop.f32.mrb[0].mxu0
        %v2625 = vadd.f32 %v2464, %v2624
        %v2626 = vpop.f32.mrb[0].mxu0
        %v2627 = vpop.f32.mrb[0].mxu0
        %v2628 = vadd.f32 %v2467, %v2627
        %v2629 = vpop.f32.mrb[0].mxu0
        %2630 = vmatprep.mubr.bf16.mxu0 %v1368
        %2631 = vmatmul.mubr.bf16.gmra.mrb[0].mxu0 %v1320
        %v2632 = vpop.f32.mrb[0].mxu0
        %v2633 = vadd.f32 %v2472, %v2632
        %v2634 = vpop.f32.mrb[0].mxu0
        %v2635 = vpop.f32.mrb[0].mxu0
        %v2636 = vadd.f32 %v2475, %v2635
        %v2637 = vpop.f32.mrb[0].mxu0
        %2638 = vmatprep.mubr.bf16.mxu0 %v1369
        %2639 = vmatmul.mubr.bf16.gmra.mrb[0].mxu0 %v1321
        %v2640 = vpop.f32.mrb[0].mxu0
        %v2641 = vadd.f32 %v2480, %v2640
        %v2642 = vpop.f32.mrb[0].mxu0
        %v2643 = vpop.f32.mrb[0].mxu0
        %v2644 = vadd.f32 %v2483, %v2643
        %v2645 = vpop.f32.mrb[0].mxu0
        %2646 = vmatprep.mubr.bf16.mxu0 %v1370
        %2647 = vmatmul.mubr.bf16.gmra.mrb[0].mxu0 %v1322
        %v2648 = vpop.f32.mrb[0].mxu0
        %v2649 = vadd.f32 %v2488, %v2648
        %v2650 = vpop.f32.mrb[0].mxu0
        %v2651 = vpop.f32.mrb[0].mxu0
        %v2652 = vadd.f32 %v2491, %v2651
        %v2653 = vpop.f32.mrb[0].mxu0
        %2654 = vmatprep.mubr.bf16.mxu0 %v1371
        %2655 = vmatmul.mubr.bf16.gmra.mrb[0].mxu0 %v1323
        %v2656 = vpop.f32.mrb[0].mxu0
        %v2657 = vadd.f32 %v2496, %v2656
        %v2658 = vpop.f32.mrb[0].mxu0
        %v2659 = vpop.f32.mrb[0].mxu0
        %v2660 = vadd.f32 %v2499, %v2659
        %v2661 = vpop.f32.mrb[0].mxu0
        %2662 = vmatprep.mubr.bf16.mxu0 %v1372
        %2663 = vmatmul.mubr.bf16.gmra.mrb[0].mxu0 %v1324
        %v2664 = vpop.f32.mrb[0].mxu0
        %v2665 = vadd.f32 %v2504, %v2664
        %v2666 = vpop.f32.mrb[0].mxu0
        %v2667 = vpop.f32.mrb[0].mxu0
        %v2668 = vadd.f32 %v2507, %v2667
        %v2669 = vpop.f32.mrb[0].mxu0
        %2670 = vmatprep.mubr.bf16.mxu0 %v1373
        %2671 = vmatmul.mubr.bf16.gmra.mrb[0].mxu0 %v1325
        %v2672 = vpop.f32.mrb[0].mxu0
        %v2673 = vadd.f32 %v2512, %v2672
        %v2674 = vpop.f32.mrb[0].mxu0
        %v2675 = vpop.f32.mrb[0].mxu0
        %v2676 = vadd.f32 %v2515, %v2675
        %v2677 = vpop.f32.mrb[0].mxu0
        %2678 = vdwg.mxu0
        %2679 = vmatprep.subr.bf16.mxu0 0
        %2680 = vmatpush1.bf16.msra.mxu0 %v1955
        %2681 = vmatprep.subr.bf16.mxu0 0
        %2682 = vmatpush1.bf16.msra.mxu0 %v1956
        %2683 = vmatprep.subr.bf16.mxu0 0
        %2684 = vmatpush1.bf16.msra.mxu0 %v1957
        %2685 = vmatprep.subr.bf16.mxu0 0
        %2686 = vmatpush1.bf16.msra.mxu0 %v1958
        %2687 = vmatprep.subr.bf16.mxu0 0
        %2688 = vmatpush1.bf16.msra.mxu0 %v1959
        %2689 = vmatprep.subr.bf16.mxu0 0
        %2690 = vmatpush1.bf16.msra.mxu0 %v1960
        %2691 = vmatprep.subr.bf16.mxu0 0
        %2692 = vmatpush1.bf16.msra.mxu0 %v1961
        %2693 = vmatprep.subr.bf16.mxu0 0
        %2694 = vmatpush1.bf16.msra.mxu0 %v1962
        %2695 = vmatprep.subr.bf16.mxu0 0
        %2696 = vmatpush1.bf16.msra.mxu0 0
        %2697 = vmatprep.subr.bf16.mxu0 0
        %2698 = vmatpush1.bf16.msra.mxu0 0
        %2699 = vmatprep.subr.bf16.mxu0 0
        %2700 = vmatpush1.bf16.msra.mxu0 0
        %2701 = vmatprep.subr.bf16.mxu0 0
        %2702 = vmatpush1.bf16.msra.mxu0 0
        %2703 = vmatprep.subr.bf16.mxu0 0
        %2704 = vmatpush1.bf16.msra.mxu0 0
        %2705 = vmatprep.subr.bf16.mxu0 0
        %2706 = vmatpush1.bf16.msra.mxu0 0
        %2707 = vmatprep.subr.bf16.mxu0 0
        %2708 = vmatpush1.bf16.msra.mxu0 0
        %2709 = vmatprep.subr.bf16.mxu0 0
        %2710 = vmatpush1.bf16.msra.mxu0 0
        %2711 = vmatprep.mubr.bf16.mxu0 0
        %2712 = vmatmul.mubr.bf16.gmra.mrb[0].mxu0 %v1438
        %v2713 = vpop.f32.mrb[0].mxu0
        %v2714 = vadd.f32 %v2553, %v2713
        %v2715 = vpop.f32.mrb[0].mxu0
        %v2716 = vpop.f32.mrb[0].mxu0
        %v2717 = vadd.f32 %v2556, %v2716
        %v2718 = vpop.f32.mrb[0].mxu0
        %2719 = vmatprep.mubr.bf16.mxu0 0
        %2720 = vmatmul.mubr.bf16.gmra.mrb[0].mxu0 %v1439
        %v2721 = vpop.f32.mrb[0].mxu0
        %v2722 = vadd.f32 %v2561, %v2721
        %v2723 = vpop.f32.mrb[0].mxu0
        %v2724 = vpop.f32.mrb[0].mxu0
        %v2725 = vadd.f32 %v2564, %v2724
        %v2726 = vpop.f32.mrb[0].mxu0
        %2727 = vmatprep.mubr.bf16.mxu0 0
        %2728 = vmatmul.mubr.bf16.gmra.mrb[0].mxu0 %v1440
        %v2729 = vpop.f32.mrb[0].mxu0
        %v2730 = vadd.f32 %v2569, %v2729
        %v2731 = vpop.f32.mrb[0].mxu0
        %v2732 = vpop.f32.mrb[0].mxu0
        %v2733 = vadd.f32 %v2572, %v2732
        %v2734 = vpop.f32.mrb[0].mxu0
        %2735 = vmatprep.mubr.bf16.mxu0 0
        %2736 = vmatmul.mubr.bf16.gmra.mrb[0].mxu0 %v1441
        %v2737 = vpop.f32.mrb[0].mxu0
        %v2738 = vadd.f32 %v2577, %v2737
        %v2739 = vpop.f32.mrb[0].mxu0
        %v2740 = vpop.f32.mrb[0].mxu0
        %v2741 = vadd.f32 %v2580, %v2740
        %v2742 = vpop.f32.mrb[0].mxu0
        %2743 = vmatprep.mubr.bf16.mxu0 0
        %2744 = vmatmul.mubr.bf16.gmra.mrb[0].mxu0 %v1442
        %v2745 = vpop.f32.mrb[0].mxu0
        %v2746 = vadd.f32 %v2585, %v2745
        %v2747 = vpop.f32.mrb[0].mxu0
        %v2748 = vpop.f32.mrb[0].mxu0
        %v2749 = vadd.f32 %v2588, %v2748
        %v2750 = vpop.f32.mrb[0].mxu0
        %2751 = vmatprep.mubr.bf16.mxu0 0
        %2752 = vmatmul.mubr.bf16.gmra.mrb[0].mxu0 %v1443
        %v2753 = vpop.f32.mrb[0].mxu0
        %v2754 = vadd.f32 %v2593, %v2753
        %v2755 = vpop.f32.mrb[0].mxu0
        %v2756 = vpop.f32.mrb[0].mxu0
        %v2757 = vadd.f32 %v2596, %v2756
        %v2758 = vpop.f32.mrb[0].mxu0
        %2759 = vmatprep.mubr.bf16.mxu0 0
        %2760 = vmatmul.mubr.bf16.gmra.mrb[0].mxu0 %v1444
        %v2761 = vpop.f32.mrb[0].mxu0
        %v2762 = vadd.f32 %v2601, %v2761
        %v2763 = vpop.f32.mrb[0].mxu0
        %v2764 = vpop.f32.mrb[0].mxu0
        %v2765 = vadd.f32 %v2604, %v2764
        %v2766 = vpop.f32.mrb[0].mxu0
        %2767 = vmatprep.mubr.bf16.mxu0 0
        %2768 = vmatmul.mubr.bf16.gmra.mrb[0].mxu0 %v1445
        %v2769 = vpop.f32.mrb[0].mxu0
        %v2770 = vadd.f32 %v2609, %v2769
        %v2771 = vpop.f32.mrb[0].mxu0
        %v2772 = vpop.f32.mrb[0].mxu0
        %v2773 = vadd.f32 %v2612, %v2772
        %v2774 = vpop.f32.mrb[0].mxu0
        %2775 = vmatprep.mubr.bf16.mxu0 0
        %2776 = vmatmul.mubr.bf16.gmra.mrb[0].mxu0 %v1446
        %v2777 = vpop.f32.mrb[0].mxu0
        %v2778 = vadd.f32 %v2617, %v2777
        %v2779 = vpop.f32.mrb[0].mxu0
        %v2780 = vpop.f32.mrb[0].mxu0
        %v2781 = vadd.f32 %v2620, %v2780
        %v2782 = vpop.f32.mrb[0].mxu0
        %2783 = vmatprep.mubr.bf16.mxu0 0
        %2784 = vmatmul.mubr.bf16.gmra.mrb[0].mxu0 %v1447
        %v2785 = vpop.f32.mrb[0].mxu0
        %v2786 = vadd.f32 %v2625, %v2785
        %v2787 = vpop.f32.mrb[0].mxu0
        %v2788 = vpop.f32.mrb[0].mxu0
        %v2789 = vadd.f32 %v2628, %v2788
        %v2790 = vpop.f32.mrb[0].mxu0
        %2791 = vmatprep.mubr.bf16.mxu0 0
        %2792 = vmatmul.mubr.bf16.gmra.mrb[0].mxu0 %v1448
        %v2793 = vpop.f32.mrb[0].mxu0
        %v2794 = vadd.f32 %v2633, %v2793
        %v2795 = vpop.f32.mrb[0].mxu0
        %v2796 = vpop.f32.mrb[0].mxu0
        %v2797 = vadd.f32 %v2636, %v2796
        %v2798 = vpop.f32.mrb[0].mxu0
        %2799 = vmatprep.mubr.bf16.mxu0 0
        %2800 = vmatmul.mubr.bf16.gmra.mrb[0].mxu0 %v1449
        %v2801 = vpop.f32.mrb[0].mxu0
        %v2802 = vadd.f32 %v2641, %v2801
        %v2803 = vpop.f32.mrb[0].mxu0
        %v2804 = vpop.f32.mrb[0].mxu0
        %v2805 = vadd.f32 %v2644, %v2804
        %v2806 = vpop.f32.mrb[0].mxu0
        %2807 = vmatprep.mubr.bf16.mxu0 0
        %2808 = vmatmul.mubr.bf16.gmra.mrb[0].mxu0 %v1450
        %v2809 = vpop.f32.mrb[0].mxu0
        %v2810 = vadd.f32 %v2649, %v2809
        %v2811 = vpop.f32.mrb[0].mxu0
        %v2812 = vpop.f32.mrb[0].mxu0
        %v2813 = vadd.f32 %v2652, %v2812
        %v2814 = vpop.f32.mrb[0].mxu0
        %2815 = vmatprep.mubr.bf16.mxu0 0
        %2816 = vmatmul.mubr.bf16.gmra.mrb[0].mxu0 %v1451
        %v2817 = vpop.f32.mrb[0].mxu0
        %v2818 = vadd.f32 %v2657, %v2817
        %v2819 = vpop.f32.mrb[0].mxu0
        %v2820 = vpop.f32.mrb[0].mxu0
        %v2821 = vadd.f32 %v2660, %v2820
        %v2822 = vpop.f32.mrb[0].mxu0
        %2823 = vmatprep.mubr.bf16.mxu0 0
        %2824 = vmatmul.mubr.bf16.gmra.mrb[0].mxu0 %v1452
        %v2825 = vpop.f32.mrb[0].mxu0
        %v2826 = vadd.f32 %v2665, %v2825
        %v2827 = vpop.f32.mrb[0].mxu0
        %v2828 = vpop.f32.mrb[0].mxu0
        %v2829 = vadd.f32 %v2668, %v2828
        %v2830 = vpop.f32.mrb[0].mxu0
        %2831 = vmatprep.mubr.bf16.mxu0 0
        %2832 = vmatmul.mubr.bf16.gmra.mrb[0].mxu0 %v1453
        %v2833 = vpop.f32.mrb[0].mxu0
        %v2834 = vadd.f32 %v2673, %v2833
        %v2835 = vpop.f32.mrb[0].mxu0
        %v2836 = vpop.f32.mrb[0].mxu0
        %v2837 = vadd.f32 %v2676, %v2836
        %v2838 = vpop.f32.mrb[0].mxu0
        %2839 = vdwg.mxu0
        %v2840 = vld [vmem:[%s4 + $0x1] sm:$0x1]
        %vm2841 = vcmp.ge.f32.partialorder %v2714, 0.0
        %vm2842 = vcmp.ge.f32.partialorder %v2717, 0.0
        %vm2843 = vcmp.ge.f32.partialorder %v2722, 0.0
        %vm2844 = vcmp.ge.f32.partialorder %v2725, 0.0
        %vm2845 = vcmp.ge.f32.partialorder %v2730, 0.0
        %vm2846 = vcmp.ge.f32.partialorder %v2733, 0.0
        %vm2847 = vcmp.ge.f32.partialorder %v2738, 0.0
        %vm2848 = vcmp.ge.f32.partialorder %v2741, 0.0
        %vm2849 = vcmp.ge.f32.partialorder %v2746, 0.0
        %vm2850 = vcmp.ge.f32.partialorder %v2749, 0.0
        %vm2851 = vcmp.ge.f32.partialorder %v2754, 0.0
        %vm2852 = vcmp.ge.f32.partialorder %v2757, 0.0
        %vm2853 = vcmp.ge.f32.partialorder %v2762, 0.0
        %vm2854 = vcmp.ge.f32.partialorder %v2765, 0.0
        %vm2855 = vcmp.ge.f32.partialorder %v2770, 0.0
        %vm2856 = vcmp.ge.f32.partialorder %v2773, 0.0
        %vm2857 = vcmp.ge.f32.partialorder %v2778, 0.0
        %vm2858 = vcmp.ge.f32.partialorder %v2781, 0.0
        %vm2859 = vcmp.ge.f32.partialorder %v2786, 0.0
        %vm2860 = vcmp.ge.f32.partialorder %v2789, 0.0
        %vm2861 = vcmp.ge.f32.partialorder %v2794, 0.0
        %vm2862 = vcmp.ge.f32.partialorder %v2797, 0.0
        %vm2863 = vcmp.ge.f32.partialorder %v2802, 0.0
        %vm2864 = vcmp.ge.f32.partialorder %v2805, 0.0
        %vm2865 = vcmp.ge.f32.partialorder %v2810, 0.0
        %vm2866 = vcmp.ge.f32.partialorder %v2813, 0.0
        %vm2867 = vcmp.ge.f32.partialorder %v2818, 0.0
        %vm2868 = vcmp.ge.f32.partialorder %v2821, 0.0
        %vm2869 = vcmp.ge.f32.partialorder %v2826, 0.0
        %vm2870 = vcmp.ge.f32.partialorder %v2829, 0.0
        %vm2871 = vcmp.ge.f32.partialorder %v2834, 0.0
        %vm2872 = vcmp.ge.f32.partialorder %v2837, 0.0
        %v2873 = vlaneseq
        %v2874 = vshrl.u32 %v2873, 7
        %v2875 = vsub.s32 0, %v2874
        %v2876 = vrot.slane %v2840, %v2875
        %v2877 = vmul.f32 %v2714, %v2876
        %v2878 = vmul.f32 %v2717, %v2876
        %v2879 = vmul.f32 %v2722, %v2876
        %v2880 = vmul.f32 %v2725, %v2876
        %v2881 = vmul.f32 %v2730, %v2876
        %v2882 = vmul.f32 %v2733, %v2876
        %v2883 = vmul.f32 %v2738, %v2876
        %v2884 = vmul.f32 %v2741, %v2876
        %v2885 = vmul.f32 %v2746, %v2876
        %v2886 = vmul.f32 %v2749, %v2876
        %v2887 = vmul.f32 %v2754, %v2876
        %v2888 = vmul.f32 %v2757, %v2876
        %v2889 = vmul.f32 %v2762, %v2876
        %v2890 = vmul.f32 %v2765, %v2876
        %v2891 = vmul.f32 %v2770, %v2876
        %v2892 = vmul.f32 %v2773, %v2876
        %v2893 = vmul.f32 %v2778, %v2876
        %v2894 = vmul.f32 %v2781, %v2876
        %v2895 = vmul.f32 %v2786, %v2876
        %v2896 = vmul.f32 %v2789, %v2876
        %v2897 = vmul.f32 %v2794, %v2876
        %v2898 = vmul.f32 %v2797, %v2876
        %v2899 = vmul.f32 %v2802, %v2876
        %v2900 = vmul.f32 %v2805, %v2876
        %v2901 = vmul.f32 %v2810, %v2876
        %v2902 = vmul.f32 %v2813, %v2876
        %v2903 = vmul.f32 %v2818, %v2876
        %v2904 = vmul.f32 %v2821, %v2876
        %v2905 = vmul.f32 %v2826, %v2876
        %v2906 = vmul.f32 %v2829, %v2876
        %v2907 = vmul.f32 %v2834, %v2876
        %v2908 = vmul.f32 %v2837, %v2876
        %v2909 = vsel %vm2841, %v2714, %v2877
        %v2910 = vsel %vm2842, %v2717, %v2878
        %v2911 = vsel %vm2843, %v2722, %v2879
        %v2912 = vsel %vm2844, %v2725, %v2880
        %v2913 = vsel %vm2845, %v2730, %v2881
        %v2914 = vsel %vm2846, %v2733, %v2882
        %v2915 = vsel %vm2847, %v2738, %v2883
        %v2916 = vsel %vm2848, %v2741, %v2884
        %v2917 = vsel %vm2849, %v2746, %v2885
        %v2918 = vsel %vm2850, %v2749, %v2886
        %v2919 = vsel %vm2851, %v2754, %v2887
        %v2920 = vsel %vm2852, %v2757, %v2888
        %v2921 = vsel %vm2853, %v2762, %v2889
        %v2922 = vsel %vm2854, %v2765, %v2890
        %v2923 = vsel %vm2855, %v2770, %v2891
        %v2924 = vsel %vm2856, %v2773, %v2892
        %v2925 = vsel %vm2857, %v2778, %v2893
        %v2926 = vsel %vm2858, %v2781, %v2894
        %v2927 = vsel %vm2859, %v2786, %v2895
        %v2928 = vsel %vm2860, %v2789, %v2896
        %v2929 = vsel %vm2861, %v2794, %v2897
        %v2930 = vsel %vm2862, %v2797, %v2898
        %v2931 = vsel %vm2863, %v2802, %v2899
        %v2932 = vsel %vm2864, %v2805, %v2900
        %v2933 = vsel %vm2865, %v2810, %v2901
        %v2934 = vsel %vm2866, %v2813, %v2902
        %v2935 = vsel %vm2867, %v2818, %v2903
        %v2936 = vsel %vm2868, %v2821, %v2904
        %v2937 = vsel %vm2869, %v2826, %v2905
        %v2938 = vsel %vm2870, %v2829, %v2906
        %v2939 = vsel %vm2871, %v2834, %v2907
        %v2940 = vsel %vm2872, %v2837, %v2908
        %v2941 = vrot.slane %v2909, 7
        %v2942 = vrot.slane %v2910, 7
        %v2943 = vrot.slane %v2911, 7
        %v2944 = vrot.slane %v2912, 7
        %v2945 = vrot.slane %v2913, 7
        %v2946 = vrot.slane %v2914, 7
        %v2947 = vrot.slane %v2915, 7
        %v2948 = vrot.slane %v2916, 7
        %v2949 = vrot.slane %v2917, 7
        %v2950 = vrot.slane %v2918, 7
        %v2951 = vrot.slane %v2919, 7
        %v2952 = vrot.slane %v2920, 7
        %v2953 = vrot.slane %v2921, 7
        %v2954 = vrot.slane %v2922, 7
        %v2955 = vrot.slane %v2923, 7
        %v2956 = vrot.slane %v2924, 7
        %v2957 = vrot.slane %v2925, 7
        %v2958 = vrot.slane %v2926, 7
        %v2959 = vrot.slane %v2927, 7
        %v2960 = vrot.slane %v2928, 7
        %v2961 = vrot.slane %v2929, 7
        %v2962 = vrot.slane %v2930, 7
        %v2963 = vrot.slane %v2931, 7
        %v2964 = vrot.slane %v2932, 7
        %v2965 = vrot.slane %v2933, 7
        %v2966 = vrot.slane %v2934, 7
        %v2967 = vrot.slane %v2935, 7
        %v2968 = vrot.slane %v2936, 7
        %v2969 = vrot.slane %v2937, 7
        %v2970 = vrot.slane %v2938, 7
        %v2971 = vrot.slane %v2939, 7
        %v2972 = vrot.slane %v2940, 7
        %v2973 = vsel %vm828, %v2971, %v2972
        %v2974 = vsel %vm828, %v2970, %v2971
        %v2975 = vsel %vm828, %v2969, %v2970
        %v2976 = vsel %vm828, %v2968, %v2969
        %v2977 = vsel %vm828, %v2967, %v2968
        %v2978 = vsel %vm828, %v2966, %v2967
        %v2979 = vsel %vm828, %v2965, %v2966
        %v2980 = vsel %vm828, %v2964, %v2965
        %v2981 = vsel %vm828, %v2963, %v2964
        %v2982 = vsel %vm828, %v2962, %v2963
        %v2983 = vsel %vm828, %v2961, %v2962
        %v2984 = vsel %vm828, %v2960, %v2961
        %v2985 = vsel %vm828, %v2959, %v2960
        %v2986 = vsel %vm828, %v2958, %v2959
        %v2987 = vsel %vm828, %v2957, %v2958
        %v2988 = vsel %vm828, %v2956, %v2957
        %v2989 = vsel %vm828, %v2955, %v2956
        %v2990 = vsel %vm828, %v2954, %v2955
        %v2991 = vsel %vm828, %v2953, %v2954
        %v2992 = vsel %vm828, %v2952, %v2953
        %v2993 = vsel %vm828, %v2951, %v2952
        %v2994 = vsel %vm828, %v2950, %v2951
        %v2995 = vsel %vm828, %v2949, %v2950
        %v2996 = vsel %vm828, %v2948, %v2949
        %v2997 = vsel %vm828, %v2947, %v2948
        %v2998 = vsel %vm828, %v2946, %v2947
        %v2999 = vsel %vm828, %v2945, %v2946
        %v3000 = vsel %vm828, %v2944, %v2945
        %v3001 = vsel %vm828, %v2943, %v2944
        %v3002 = vsel %vm828, %v2942, %v2943
        %v3003 = vsel %vm828, %v2941, %v2942
        %v3004 = vsel %vm828, %v2972, %v2941
        %v3005 = vsel %vm861, %v2974, 0.0
        %v3006 = vsel %vm862, %v2973, 0.0
        %v3007 = vsel %vm863, %v3004, 0.0
        %v3008 = vsel %vm864, %v3003, 0.0
        %v3009 = vsel %vm865, %v3002, 0.0
        %v3010 = vsel %vm866, %v3001, 0.0
        %v3011 = vsel %vm867, %v3000, 0.0
        %v3012 = vsel %vm868, %v2999, 0.0
        %v3013 = vsel %vm869, %v2998, 0.0
        %v3014 = vsel %vm870, %v2997, 0.0
        %v3015 = vsel %vm871, %v2996, 0.0
        %v3016 = vsel %vm872, %v2995, 0.0
        %v3017 = vsel %vm873, %v2994, 0.0
        %v3018 = vsel %vm874, %v2993, 0.0
        %v3019 = vsel %vm875, %v2992, 0.0
        %v3020 = vsel %vm876, %v2991, 0.0
        %v3021 = vsel %vm877, %v2990, 0.0
        %v3022 = vsel %vm878, %v2989, 0.0
        %v3023 = vsel %vm879, %v2988, 0.0
        %v3024 = vsel %vm880, %v2987, 0.0
        %v3025 = vsel %vm881, %v2986, 0.0
        %v3026 = vsel %vm882, %v2985, 0.0
        %v3027 = vsel %vm883, %v2984, 0.0
        %v3028 = vsel %vm884, %v2983, 0.0
        %v3029 = vsel %vm885, %v2982, 0.0
        %v3030 = vsel %vm886, %v2981, 0.0
        %v3031 = vsel %vm887, %v2980, 0.0
        %v3032 = vsel %vm888, %v2979, 0.0
        %v3033 = vsel %vm889, %v2978, 0.0
        %v3034 = vsel %vm890, %v2977, 0.0
        %v3035 = vsel %vm891, %v2976, 0.0
        %v3036 = vsel %vm892, %v2975, 0.0
        %v3037 = vpack.c.bf16 %v3006, %v3005
        %v3038 = vpack.c.bf16 %v3008, %v3007
        %v3039 = vpack.c.bf16 %v3010, %v3009
        %v3040 = vpack.c.bf16 %v3012, %v3011
        %v3041 = vpack.c.bf16 %v3014, %v3013
        %v3042 = vpack.c.bf16 %v3016, %v3015
        %v3043 = vpack.c.bf16 %v3018, %v3017
        %v3044 = vpack.c.bf16 %v3020, %v3019
        %v3045 = vpack.c.bf16 %v3022, %v3021
        %v3046 = vpack.c.bf16 %v3024, %v3023
        %v3047 = vpack.c.bf16 %v3026, %v3025
        %v3048 = vpack.c.bf16 %v3028, %v3027
        %v3049 = vpack.c.bf16 %v3030, %v3029
        %v3050 = vpack.c.bf16 %v3032, %v3031
        %v3051 = vpack.c.bf16 %v3034, %v3033
        %v3052 = vpack.c.bf16 %v3036, %v3035
        %v3053 = vsel %vm289, %v2939, 0.0
        %v3054 = vsel %vm290, %v2940, 0.0
        %v3055 = vsel %vm291, %v2909, 0.0
        %v3056 = vsel %vm292, %v2910, 0.0
        %v3057 = vsel %vm293, %v2911, 0.0
        %v3058 = vsel %vm294, %v2912, 0.0
        %v3059 = vsel %vm295, %v2913, 0.0
        %v3060 = vsel %vm296, %v2914, 0.0
        %v3061 = vsel %vm297, %v2915, 0.0
        %v3062 = vsel %vm298, %v2916, 0.0
        %v3063 = vsel %vm299, %v2917, 0.0
        %v3064 = vsel %vm300, %v2918, 0.0
        %v3065 = vsel %vm301, %v2919, 0.0
        %v3066 = vsel %vm302, %v2920, 0.0
        %v3067 = vsel %vm303, %v2921, 0.0
        %v3068 = vsel %vm304, %v2922, 0.0
        %v3069 = vsel %vm305, %v2923, 0.0
        %v3070 = vsel %vm306, %v2924, 0.0
        %v3071 = vsel %vm307, %v2925, 0.0
        %v3072 = vsel %vm308, %v2926, 0.0
        %v3073 = vsel %vm309, %v2927, 0.0
        %v3074 = vsel %vm310, %v2928, 0.0
        %v3075 = vsel %vm311, %v2929, 0.0
        %v3076 = vsel %vm312, %v2930, 0.0
        %v3077 = vsel %vm313, %v2931, 0.0
        %v3078 = vsel %vm314, %v2932, 0.0
        %v3079 = vsel %vm315, %v2933, 0.0
        %v3080 = vsel %vm316, %v2934, 0.0
        %v3081 = vsel %vm317, %v2935, 0.0
        %v3082 = vsel %vm318, %v2936, 0.0
        %v3083 = vsel %vm319, %v2937, 0.0
        %v3084 = vsel %vm320, %v2938, 0.0
        %v3085 = vpack.c.bf16 %v3054, %v3053
        %v3086 = vpack.c.bf16 %v3056, %v3055
        %v3087 = vpack.c.bf16 %v3058, %v3057
        %v3088 = vpack.c.bf16 %v3060, %v3059
        %v3089 = vpack.c.bf16 %v3062, %v3061
        %v3090 = vpack.c.bf16 %v3064, %v3063
        %v3091 = vpack.c.bf16 %v3066, %v3065
        %v3092 = vpack.c.bf16 %v3068, %v3067
        %v3093 = vpack.c.bf16 %v3070, %v3069
        %v3094 = vpack.c.bf16 %v3072, %v3071
        %v3095 = vpack.c.bf16 %v3074, %v3073
        %v3096 = vpack.c.bf16 %v3076, %v3075
        %v3097 = vpack.c.bf16 %v3078, %v3077
        %v3098 = vpack.c.bf16 %v3080, %v3079
        %v3099 = vpack.c.bf16 %v3082, %v3081
        %v3100 = vpack.c.bf16 %v3084, %v3083
        %v3101 = vrot.slane %v2909, 1
        %v3102 = vrot.slane %v2910, 1
        %v3103 = vrot.slane %v2911, 1
        %v3104 = vrot.slane %v2912, 1
        %v3105 = vrot.slane %v2913, 1
        %v3106 = vrot.slane %v2914, 1
        %v3107 = vrot.slane %v2915, 1
        %v3108 = vrot.slane %v2916, 1
        %v3109 = vrot.slane %v2917, 1
        %v3110 = vrot.slane %v2918, 1
        %v3111 = vrot.slane %v2919, 1
        %v3112 = vrot.slane %v2920, 1
        %v3113 = vrot.slane %v2921, 1
        %v3114 = vrot.slane %v2922, 1
        %v3115 = vrot.slane %v2923, 1
        %v3116 = vrot.slane %v2924, 1
        %v3117 = vrot.slane %v2925, 1
        %v3118 = vrot.slane %v2926, 1
        %v3119 = vrot.slane %v2927, 1
        %v3120 = vrot.slane %v2928, 1
        %v3121 = vrot.slane %v2929, 1
        %v3122 = vrot.slane %v2930, 1
        %v3123 = vrot.slane %v2931, 1
        %v3124 = vrot.slane %v2932, 1
        %v3125 = vrot.slane %v2933, 1
        %v3126 = vrot.slane %v2934, 1
        %v3127 = vrot.slane %v2935, 1
        %v3128 = vrot.slane %v2936, 1
        %v3129 = vrot.slane %v2937, 1
        %v3130 = vrot.slane %v2938, 1
        %v3131 = vrot.slane %v2939, 1
        %v3132 = vrot.slane %v2940, 1
        %v3133 = vsel %vm1021, %v3131, %v3132
        %v3134 = vsel %vm1021, %v3130, %v3131
        %v3135 = vsel %vm1021, %v3129, %v3130
        %v3136 = vsel %vm1021, %v3128, %v3129
        %v3137 = vsel %vm1021, %v3127, %v3128
        %v3138 = vsel %vm1021, %v3126, %v3127
        %v3139 = vsel %vm1021, %v3125, %v3126
        %v3140 = vsel %vm1021, %v3124, %v3125
        %v3141 = vsel %vm1021, %v3123, %v3124
        %v3142 = vsel %vm1021, %v3122, %v3123
        %v3143 = vsel %vm1021, %v3121, %v3122
        %v3144 = vsel %vm1021, %v3120, %v3121
        %v3145 = vsel %vm1021, %v3119, %v3120
        %v3146 = vsel %vm1021, %v3118, %v3119
        %v3147 = vsel %vm1021, %v3117, %v3118
        %v3148 = vsel %vm1021, %v3116, %v3117
        %v3149 = vsel %vm1021, %v3115, %v3116
        %v3150 = vsel %vm1021, %v3114, %v3115
        %v3151 = vsel %vm1021, %v3113, %v3114
        %v3152 = vsel %vm1021, %v3112, %v3113
        %v3153 = vsel %vm1021, %v3111, %v3112
        %v3154 = vsel %vm1021, %v3110, %v3111
        %v3155 = vsel %vm1021, %v3109, %v3110
        %v3156 = vsel %vm1021, %v3108, %v3109
        %v3157 = vsel %vm1021, %v3107, %v3108
        %v3158 = vsel %vm1021, %v3106, %v3107
        %v3159 = vsel %vm1021, %v3105, %v3106
        %v3160 = vsel %vm1021, %v3104, %v3105
        %v3161 = vsel %vm1021, %v3103, %v3104
        %v3162 = vsel %vm1021, %v3102, %v3103
        %v3163 = vsel %vm1021, %v3101, %v3102
        %v3164 = vsel %vm1021, %v3132, %v3101
        %v3165 = vsel %vm1054, %v3133, 0.0
        %v3166 = vsel %vm1055, %v3164, 0.0
        %v3167 = vsel %vm1056, %v3163, 0.0
        %v3168 = vsel %vm1057, %v3162, 0.0
        %v3169 = vsel %vm1058, %v3161, 0.0
        %v3170 = vsel %vm1059, %v3160, 0.0
        %v3171 = vsel %vm1060, %v3159, 0.0
        %v3172 = vsel %vm1061, %v3158, 0.0
        %v3173 = vsel %vm1062, %v3157, 0.0
        %v3174 = vsel %vm1063, %v3156, 0.0
        %v3175 = vsel %vm1064, %v3155, 0.0
        %v3176 = vsel %vm1065, %v3154, 0.0
        %v3177 = vsel %vm1066, %v3153, 0.0
        %v3178 = vsel %vm1067, %v3152, 0.0
        %v3179 = vsel %vm1068, %v3151, 0.0
        %v3180 = vsel %vm1069, %v3150, 0.0
        %v3181 = vsel %vm1070, %v3149, 0.0
        %v3182 = vsel %vm1071, %v3148, 0.0
        %v3183 = vsel %vm1072, %v3147, 0.0
        %v3184 = vsel %vm1073, %v3146, 0.0
        %v3185 = vsel %vm1074, %v3145, 0.0
        %v3186 = vsel %vm1075, %v3144, 0.0
        %v3187 = vsel %vm1076, %v3143, 0.0
        %v3188 = vsel %vm1077, %v3142, 0.0
        %v3189 = vsel %vm1078, %v3141, 0.0
        %v3190 = vsel %vm1079, %v3140, 0.0
        %v3191 = vsel %vm1080, %v3139, 0.0
        %v3192 = vsel %vm1081, %v3138, 0.0
        %v3193 = vsel %vm1082, %v3137, 0.0
        %v3194 = vsel %vm1083, %v3136, 0.0
        %v3195 = vsel %vm1084, %v3135, 0.0
        %v3196 = vsel %vm1085, %v3134, 0.0
        %v3197 = vpack.c.bf16 %v3166, %v3165
        %v3198 = vpack.c.bf16 %v3168, %v3167
        %v3199 = vpack.c.bf16 %v3170, %v3169
        %v3200 = vpack.c.bf16 %v3172, %v3171
        %v3201 = vpack.c.bf16 %v3174, %v3173
        %v3202 = vpack.c.bf16 %v3176, %v3175
        %v3203 = vpack.c.bf16 %v3178, %v3177
        %v3204 = vpack.c.bf16 %v3180, %v3179
        %v3205 = vpack.c.bf16 %v3182, %v3181
        %v3206 = vpack.c.bf16 %v3184, %v3183
        %v3207 = vpack.c.bf16 %v3186, %v3185
        %v3208 = vpack.c.bf16 %v3188, %v3187
        %v3209 = vpack.c.bf16 %v3190, %v3189
        %v3210 = vpack.c.bf16 %v3192, %v3191
        %v3211 = vpack.c.bf16 %v3194, %v3193
        %v3212 = vpack.c.bf16 %v3196, %v3195
        %v3213 = vsel %vm353, %v3004, 0.0
        %v3214 = vsel %vm354, %v3003, 0.0
        %v3215 = vsel %vm355, %v3002, 0.0
        %v3216 = vsel %vm356, %v3001, 0.0
        %v3217 = vsel %vm357, %v3000, 0.0
        %v3218 = vsel %vm358, %v2999, 0.0
        %v3219 = vsel %vm359, %v2998, 0.0
        %v3220 = vsel %vm360, %v2997, 0.0
        %v3221 = vsel %vm361, %v2996, 0.0
        %v3222 = vsel %vm362, %v2995, 0.0
        %v3223 = vsel %vm363, %v2994, 0.0
        %v3224 = vsel %vm364, %v2993, 0.0
        %v3225 = vsel %vm365, %v2992, 0.0
        %v3226 = vsel %vm366, %v2991, 0.0
        %v3227 = vsel %vm367, %v2990, 0.0
        %v3228 = vsel %vm368, %v2989, 0.0
        %v3229 = vsel %vm369, %v2988, 0.0
        %v3230 = vsel %vm370, %v2987, 0.0
        %v3231 = vsel %vm371, %v2986, 0.0
        %v3232 = vsel %vm372, %v2985, 0.0
        %v3233 = vsel %vm373, %v2984, 0.0
        %v3234 = vsel %vm374, %v2983, 0.0
        %v3235 = vsel %vm375, %v2982, 0.0
        %v3236 = vsel %vm376, %v2981, 0.0
        %v3237 = vsel %vm377, %v2980, 0.0
        %v3238 = vsel %vm378, %v2979, 0.0
        %v3239 = vsel %vm379, %v2978, 0.0
        %v3240 = vsel %vm380, %v2977, 0.0
        %v3241 = vsel %vm381, %v2976, 0.0
        %v3242 = vsel %vm382, %v2975, 0.0
        %v3243 = vsel %vm383, %v2974, 0.0
        %v3244 = vsel %vm384, %v2973, 0.0
        %v3245 = vpack.c.bf16 %v3214, %v3213
        %v3246 = vpack.c.bf16 %v3216, %v3215
        %v3247 = vpack.c.bf16 %v3218, %v3217
        %v3248 = vpack.c.bf16 %v3220, %v3219
        %v3249 = vpack.c.bf16 %v3222, %v3221
        %v3250 = vpack.c.bf16 %v3224, %v3223
        %v3251 = vpack.c.bf16 %v3226, %v3225
        %v3252 = vpack.c.bf16 %v3228, %v3227
        %v3253 = vpack.c.bf16 %v3230, %v3229
        %v3254 = vpack.c.bf16 %v3232, %v3231
        %v3255 = vpack.c.bf16 %v3234, %v3233
        %v3256 = vpack.c.bf16 %v3236, %v3235
        %v3257 = vpack.c.bf16 %v3238, %v3237
        %v3258 = vpack.c.bf16 %v3240, %v3239
        %v3259 = vpack.c.bf16 %v3242, %v3241
        %v3260 = vpack.c.bf16 %v3244, %v3243
        %v3261 = vpack.c.bf16 %v2910, %v2909
        %v3262 = vpack.c.bf16 %v2912, %v2911
        %v3263 = vpack.c.bf16 %v2914, %v2913
        %v3264 = vpack.c.bf16 %v2916, %v2915
        %v3265 = vpack.c.bf16 %v2918, %v2917
        %v3266 = vpack.c.bf16 %v2920, %v2919
        %v3267 = vpack.c.bf16 %v2922, %v2921
        %v3268 = vpack.c.bf16 %v2924, %v2923
        %v3269 = vpack.c.bf16 %v2926, %v2925
        %v3270 = vpack.c.bf16 %v2928, %v2927
        %v3271 = vpack.c.bf16 %v2930, %v2929
        %v3272 = vpack.c.bf16 %v2932, %v2931
        %v3273 = vpack.c.bf16 %v2934, %v2933
        %v3274 = vpack.c.bf16 %v2936, %v2935
        %v3275 = vpack.c.bf16 %v2938, %v2937
        %v3276 = vpack.c.bf16 %v2940, %v2939
        %v3277 = vsel %vm385, %v3163, 0.0
        %v3278 = vsel %vm386, %v3162, 0.0
        %v3279 = vsel %vm387, %v3161, 0.0
        %v3280 = vsel %vm388, %v3160, 0.0
        %v3281 = vsel %vm389, %v3159, 0.0
        %v3282 = vsel %vm390, %v3158, 0.0
        %v3283 = vsel %vm391, %v3157, 0.0
        %v3284 = vsel %vm392, %v3156, 0.0
        %v3285 = vsel %vm393, %v3155, 0.0
        %v3286 = vsel %vm394, %v3154, 0.0
        %v3287 = vsel %vm395, %v3153, 0.0
        %v3288 = vsel %vm396, %v3152, 0.0
        %v3289 = vsel %vm397, %v3151, 0.0
        %v3290 = vsel %vm398, %v3150, 0.0
        %v3291 = vsel %vm399, %v3149, 0.0
        %v3292 = vsel %vm400, %v3148, 0.0
        %v3293 = vsel %vm401, %v3147, 0.0
        %v3294 = vsel %vm402, %v3146, 0.0
        %v3295 = vsel %vm403, %v3145, 0.0
        %v3296 = vsel %vm404, %v3144, 0.0
        %v3297 = vsel %vm405, %v3143, 0.0
        %v3298 = vsel %vm406, %v3142, 0.0
        %v3299 = vsel %vm407, %v3141, 0.0
        %v3300 = vsel %vm408, %v3140, 0.0
        %v3301 = vsel %vm409, %v3139, 0.0
        %v3302 = vsel %vm410, %v3138, 0.0
        %v3303 = vsel %vm411, %v3137, 0.0
        %v3304 = vsel %vm412, %v3136, 0.0
        %v3305 = vsel %vm413, %v3135, 0.0
        %v3306 = vsel %vm414, %v3134, 0.0
        %v3307 = vsel %vm415, %v3133, 0.0
        %v3308 = vsel %vm416, %v3164, 0.0
        %v3309 = vpack.c.bf16 %v3278, %v3277
        %v3310 = vpack.c.bf16 %v3280, %v3279
        %v3311 = vpack.c.bf16 %v3282, %v3281
        %v3312 = vpack.c.bf16 %v3284, %v3283
        %v3313 = vpack.c.bf16 %v3286, %v3285
        %v3314 = vpack.c.bf16 %v3288, %v3287
        %v3315 = vpack.c.bf16 %v3290, %v3289
        %v3316 = vpack.c.bf16 %v3292, %v3291
        %v3317 = vpack.c.bf16 %v3294, %v3293
        %v3318 = vpack.c.bf16 %v3296, %v3295
        %v3319 = vpack.c.bf16 %v3298, %v3297
        %v3320 = vpack.c.bf16 %v3300, %v3299
        %v3321 = vpack.c.bf16 %v3302, %v3301
        %v3322 = vpack.c.bf16 %v3304, %v3303
        %v3323 = vpack.c.bf16 %v3306, %v3305
        %v3324 = vpack.c.bf16 %v3308, %v3307
        %v3325 = vsel %vm1246, %v3002, 0.0
        %v3326 = vsel %vm1247, %v3001, 0.0
        %v3327 = vsel %vm1248, %v3000, 0.0
        %v3328 = vsel %vm1249, %v2999, 0.0
        %v3329 = vsel %vm1250, %v2998, 0.0
        %v3330 = vsel %vm1251, %v2997, 0.0
        %v3331 = vsel %vm1252, %v2996, 0.0
        %v3332 = vsel %vm1253, %v2995, 0.0
        %v3333 = vsel %vm1254, %v2994, 0.0
        %v3334 = vsel %vm1255, %v2993, 0.0
        %v3335 = vsel %vm1256, %v2992, 0.0
        %v3336 = vsel %vm1257, %v2991, 0.0
        %v3337 = vsel %vm1258, %v2990, 0.0
        %v3338 = vsel %vm1259, %v2989, 0.0
        %v3339 = vsel %vm1260, %v2988, 0.0
        %v3340 = vsel %vm1261, %v2987, 0.0
        %v3341 = vsel %vm1262, %v2986, 0.0
        %v3342 = vsel %vm1263, %v2985, 0.0
        %v3343 = vsel %vm1264, %v2984, 0.0
        %v3344 = vsel %vm1265, %v2983, 0.0
        %v3345 = vsel %vm1266, %v2982, 0.0
        %v3346 = vsel %vm1267, %v2981, 0.0
        %v3347 = vsel %vm1268, %v2980, 0.0
        %v3348 = vsel %vm1269, %v2979, 0.0
        %v3349 = vsel %vm1270, %v2978, 0.0
        %v3350 = vsel %vm1271, %v2977, 0.0
        %v3351 = vsel %vm1272, %v2976, 0.0
        %v3352 = vsel %vm1273, %v2975, 0.0
        %v3353 = vsel %vm1274, %v2974, 0.0
        %v3354 = vsel %vm1275, %v2973, 0.0
        %v3355 = vsel %vm1276, %v3004, 0.0
        %v3356 = vsel %vm1277, %v3003, 0.0
        %v3357 = vpack.c.bf16 %v3326, %v3325
        %v3358 = vpack.c.bf16 %v3328, %v3327
        %v3359 = vpack.c.bf16 %v3330, %v3329
        %v3360 = vpack.c.bf16 %v3332, %v3331
        %v3361 = vpack.c.bf16 %v3334, %v3333
        %v3362 = vpack.c.bf16 %v3336, %v3335
        %v3363 = vpack.c.bf16 %v3338, %v3337
        %v3364 = vpack.c.bf16 %v3340, %v3339
        %v3365 = vpack.c.bf16 %v3342, %v3341
        %v3366 = vpack.c.bf16 %v3344, %v3343
        %v3367 = vpack.c.bf16 %v3346, %v3345
        %v3368 = vpack.c.bf16 %v3348, %v3347
        %v3369 = vpack.c.bf16 %v3350, %v3349
        %v3370 = vpack.c.bf16 %v3352, %v3351
        %v3371 = vpack.c.bf16 %v3354, %v3353
        %v3372 = vpack.c.bf16 %v3356, %v3355
        %v3373 = vsel %vm321, %v2911, 0.0
        %v3374 = vsel %vm322, %v2912, 0.0
        %v3375 = vsel %vm323, %v2913, 0.0
        %v3376 = vsel %vm324, %v2914, 0.0
        %v3377 = vsel %vm325, %v2915, 0.0
        %v3378 = vsel %vm326, %v2916, 0.0
        %v3379 = vsel %vm327, %v2917, 0.0
        %v3380 = vsel %vm328, %v2918, 0.0
        %v3381 = vsel %vm329, %v2919, 0.0
        %v3382 = vsel %vm330, %v2920, 0.0
        %v3383 = vsel %vm331, %v2921, 0.0
        %v3384 = vsel %vm332, %v2922, 0.0
        %v3385 = vsel %vm333, %v2923, 0.0
        %v3386 = vsel %vm334, %v2924, 0.0
        %v3387 = vsel %vm335, %v2925, 0.0
        %v3388 = vsel %vm336, %v2926, 0.0
        %v3389 = vsel %vm337, %v2927, 0.0
        %v3390 = vsel %vm338, %v2928, 0.0
        %v3391 = vsel %vm339, %v2929, 0.0
        %v3392 = vsel %vm340, %v2930, 0.0
        %v3393 = vsel %vm341, %v2931, 0.0
        %v3394 = vsel %vm342, %v2932, 0.0
        %v3395 = vsel %vm343, %v2933, 0.0
        %v3396 = vsel %vm344, %v2934, 0.0
        %v3397 = vsel %vm345, %v2935, 0.0
        %v3398 = vsel %vm346, %v2936, 0.0
        %v3399 = vsel %vm347, %v2937, 0.0
        %v3400 = vsel %vm348, %v2938, 0.0
        %v3401 = vsel %vm349, %v2939, 0.0
        %v3402 = vsel %vm350, %v2940, 0.0
        %v3403 = vsel %vm351, %v2909, 0.0
        %v3404 = vsel %vm352, %v2910, 0.0
        %v3405 = vpack.c.bf16 %v3374, %v3373
        %v3406 = vpack.c.bf16 %v3376, %v3375
        %v3407 = vpack.c.bf16 %v3378, %v3377
        %v3408 = vpack.c.bf16 %v3380, %v3379
        %v3409 = vpack.c.bf16 %v3382, %v3381
        %v3410 = vpack.c.bf16 %v3384, %v3383
        %v3411 = vpack.c.bf16 %v3386, %v3385
        %v3412 = vpack.c.bf16 %v3388, %v3387
        %v3413 = vpack.c.bf16 %v3390, %v3389
        %v3414 = vpack.c.bf16 %v3392, %v3391
        %v3415 = vpack.c.bf16 %v3394, %v3393
        %v3416 = vpack.c.bf16 %v3396, %v3395
        %v3417 = vpack.c.bf16 %v3398, %v3397
        %v3418 = vpack.c.bf16 %v3400, %v3399
        %v3419 = vpack.c.bf16 %v3402, %v3401
        %v3420 = vpack.c.bf16 %v3404, %v3403
        %v3421 = vsel %vm1374, %v3161, 0.0
        %v3422 = vsel %vm1375, %v3160, 0.0
        %v3423 = vsel %vm1376, %v3159, 0.0
        %v3424 = vsel %vm1377, %v3158, 0.0
        %v3425 = vsel %vm1378, %v3157, 0.0
        %v3426 = vsel %vm1379, %v3156, 0.0
        %v3427 = vsel %vm1380, %v3155, 0.0
        %v3428 = vsel %vm1381, %v3154, 0.0
        %v3429 = vsel %vm1382, %v3153, 0.0
        %v3430 = vsel %vm1383, %v3152, 0.0
        %v3431 = vsel %vm1384, %v3151, 0.0
        %v3432 = vsel %vm1385, %v3150, 0.0
        %v3433 = vsel %vm1386, %v3149, 0.0
        %v3434 = vsel %vm1387, %v3148, 0.0
        %v3435 = vsel %vm1388, %v3147, 0.0
        %v3436 = vsel %vm1389, %v3146, 0.0
        %v3437 = vsel %vm1390, %v3145, 0.0
        %v3438 = vsel %vm1391, %v3144, 0.0
        %v3439 = vsel %vm1392, %v3143, 0.0
        %v3440 = vsel %vm1393, %v3142, 0.0
        %v3441 = vsel %vm1394, %v3141, 0.0
        %v3442 = vsel %vm1395, %v3140, 0.0
        %v3443 = vsel %vm1396, %v3139, 0.0
        %v3444 = vsel %vm1397, %v3138, 0.0
        %v3445 = vsel %vm1398, %v3137, 0.0
        %v3446 = vsel %vm1399, %v3136, 0.0
        %v3447 = vsel %vm1400, %v3135, 0.0
        %v3448 = vsel %vm1401, %v3134, 0.0
        %v3449 = vsel %vm1402, %v3133, 0.0
        %v3450 = vsel %vm1403, %v3164, 0.0
        %v3451 = vsel %vm1404, %v3163, 0.0
        %v3452 = vsel %vm1405, %v3162, 0.0
        %v3453 = vpack.c.bf16 %v3422, %v3421
        %v3454 = vpack.c.bf16 %v3424, %v3423
        %v3455 = vpack.c.bf16 %v3426, %v3425
        %v3456 = vpack.c.bf16 %v3428, %v3427
        %v3457 = vpack.c.bf16 %v3430, %v3429
        %v3458 = vpack.c.bf16 %v3432, %v3431
        %v3459 = vpack.c.bf16 %v3434, %v3433
        %v3460 = vpack.c.bf16 %v3436, %v3435
        %v3461 = vpack.c.bf16 %v3438, %v3437
        %v3462 = vpack.c.bf16 %v3440, %v3439
        %v3463 = vpack.c.bf16 %v3442, %v3441
        %v3464 = vpack.c.bf16 %v3444, %v3443
        %v3465 = vpack.c.bf16 %v3446, %v3445
        %v3466 = vpack.c.bf16 %v3448, %v3447
        %v3467 = vpack.c.bf16 %v3450, %v3449
        %v3468 = vpack.c.bf16 %v3452, %v3451
        %s3469 = scalar_lea.vmem %s2, 576
        %v3470 = vld [vmem:[%s3469] sm:$0xf]
        %v3471 = vld [vmem:[%s3469 + $0x4] sm:$0xf]
        %v3472 = vld [vmem:[%s3469 + $0x8] sm:$0xf]
        %v3473 = vld [vmem:[%s3469 + $0xc] sm:$0xf]
        %v3474 = vld [vmem:[%s3469 + $0x10] sm:$0xf]
        %v3475 = vld [vmem:[%s3469 + $0x14] sm:$0xf]
        %v3476 = vld [vmem:[%s3469 + $0x18] sm:$0xf]
        %v3477 = vld [vmem:[%s3469 + $0x1c] sm:$0xf]
        %v3478 = vld [vmem:[%s3469 + $0x20] sm:$0xf]
        %v3479 = vld [vmem:[%s3469 + $0x24] sm:$0xf]
        %v3480 = vld [vmem:[%s3469 + $0x28] sm:$0xf]
        %v3481 = vld [vmem:[%s3469 + $0x2c] sm:$0xf]
        %v3482 = vld [vmem:[%s3469 + $0x30] sm:$0xf]
        %v3483 = vld [vmem:[%s3469 + $0x34] sm:$0xf]
        %v3484 = vld [vmem:[%s3469 + $0x38] sm:$0xf]
        %v3485 = vld [vmem:[%s3469 + $0x3c] sm:$0xf]
        %v3486 = vld [vmem:[%s3469 + $0x40] sm:$0xf]
        %v3487 = vld [vmem:[%s3469 + $0x44] sm:$0xf]
        %v3488 = vld [vmem:[%s3469 + $0x48] sm:$0xf]
        %v3489 = vld [vmem:[%s3469 + $0x4c] sm:$0xf]
        %v3490 = vld [vmem:[%s3469 + $0x50] sm:$0xf]
        %v3491 = vld [vmem:[%s3469 + $0x54] sm:$0xf]
        %v3492 = vld [vmem:[%s3469 + $0x58] sm:$0xf]
        %v3493 = vld [vmem:[%s3469 + $0x5c] sm:$0xf]
        %v3494 = vld [vmem:[%s3469 + $0x60] sm:$0xf]
        %v3495 = vld [vmem:[%s3469 + $0x64] sm:$0xf]
        %v3496 = vld [vmem:[%s3469 + $0x68] sm:$0xf]
        %v3497 = vld [vmem:[%s3469 + $0x6c] sm:$0xf]
        %v3498 = vld [vmem:[%s3469 + $0x70] sm:$0xf]
        %v3499 = vld [vmem:[%s3469 + $0x74] sm:$0xf]
        %v3500 = vld [vmem:[%s3469 + $0x78] sm:$0xf]
        %v3501 = vld [vmem:[%s3469 + $0x7c] sm:$0xf]
        %v3502 = vld [vmem:[%s3469 + $0x80] sm:$0xf]
        %v3503 = vld [vmem:[%s3469 + $0x84] sm:$0xf]
        %v3504 = vld [vmem:[%s3469 + $0x88] sm:$0xf]
        %v3505 = vld [vmem:[%s3469 + $0x8c] sm:$0xf]
        %v3506 = vld [vmem:[%s3469 + $0x90] sm:$0xf]
        %v3507 = vld [vmem:[%s3469 + $0x94] sm:$0xf]
        %v3508 = vld [vmem:[%s3469 + $0x98] sm:$0xf]
        %v3509 = vld [vmem:[%s3469 + $0x9c] sm:$0xf]
        %v3510 = vld [vmem:[%s3469 + $0xa0] sm:$0xf]
        %v3511 = vld [vmem:[%s3469 + $0xa4] sm:$0xf]
        %v3512 = vld [vmem:[%s3469 + $0xa8] sm:$0xf]
        %v3513 = vld [vmem:[%s3469 + $0xac] sm:$0xf]
        %v3514 = vld [vmem:[%s3469 + $0xb0] sm:$0xf]
        %v3515 = vld [vmem:[%s3469 + $0xb4] sm:$0xf]
        %v3516 = vld [vmem:[%s3469 + $0xb8] sm:$0xf]
        %v3517 = vld [vmem:[%s3469 + $0xbc] sm:$0xf]
        %v3518 = vld [vmem:[%s3469 + $0xc0] sm:$0xf]
        %v3519 = vld [vmem:[%s3469 + $0xc4] sm:$0xf]
        %v3520 = vld [vmem:[%s3469 + $0xc8] sm:$0xf]
        %v3521 = vld [vmem:[%s3469 + $0xcc] sm:$0xf]
        %v3522 = vld [vmem:[%s3469 + $0xd0] sm:$0xf]
        %v3523 = vld [vmem:[%s3469 + $0xd4] sm:$0xf]
        %v3524 = vld [vmem:[%s3469 + $0xd8] sm:$0xf]
        %v3525 = vld [vmem:[%s3469 + $0xdc] sm:$0xf]
        %v3526 = vld [vmem:[%s3469 + $0xe0] sm:$0xf]
        %v3527 = vld [vmem:[%s3469 + $0xe4] sm:$0xf]
        %v3528 = vld [vmem:[%s3469 + $0xe8] sm:$0xf]
        %v3529 = vld [vmem:[%s3469 + $0xec] sm:$0xf]
        %v3530 = vld [vmem:[%s3469 + $0xf0] sm:$0xf]
        %v3531 = vld [vmem:[%s3469 + $0xf4] sm:$0xf]
        %v3532 = vld [vmem:[%s3469 + $0xf8] sm:$0xf]
        %v3533 = vld [vmem:[%s3469 + $0xfc] sm:$0xf]
        %v3534 = vld [vmem:[%s3469 + $0x100] sm:$0xf]
        %v3535 = vld [vmem:[%s3469 + $0x104] sm:$0xf]
        %v3536 = vld [vmem:[%s3469 + $0x108] sm:$0xf]
        %v3537 = vld [vmem:[%s3469 + $0x10c] sm:$0xf]
        %v3538 = vld [vmem:[%s3469 + $0x110] sm:$0xf]
        %v3539 = vld [vmem:[%s3469 + $0x114] sm:$0xf]
        %v3540 = vld [vmem:[%s3469 + $0x118] sm:$0xf]
        %v3541 = vld [vmem:[%s3469 + $0x11c] sm:$0xf]
        %v3542 = vld [vmem:[%s3469 + $0x120] sm:$0xf]
        %v3543 = vld [vmem:[%s3469 + $0x124] sm:$0xf]
        %v3544 = vld [vmem:[%s3469 + $0x128] sm:$0xf]
        %v3545 = vld [vmem:[%s3469 + $0x12c] sm:$0xf]
        %v3546 = vld [vmem:[%s3469 + $0x130] sm:$0xf]
        %v3547 = vld [vmem:[%s3469 + $0x134] sm:$0xf]
        %v3548 = vld [vmem:[%s3469 + $0x138] sm:$0xf]
        %v3549 = vld [vmem:[%s3469 + $0x13c] sm:$0xf]
        %v3550 = vld [vmem:[%s3469 + $0x140] sm:$0xf]
        %v3551 = vld [vmem:[%s3469 + $0x144] sm:$0xf]
        %v3552 = vld [vmem:[%s3469 + $0x148] sm:$0xf]
        %v3553 = vld [vmem:[%s3469 + $0x14c] sm:$0xf]
        %v3554 = vld [vmem:[%s3469 + $0x150] sm:$0xf]
        %v3555 = vld [vmem:[%s3469 + $0x154] sm:$0xf]
        %v3556 = vld [vmem:[%s3469 + $0x158] sm:$0xf]
        %v3557 = vld [vmem:[%s3469 + $0x15c] sm:$0xf]
        %v3558 = vld [vmem:[%s3469 + $0x160] sm:$0xf]
        %v3559 = vld [vmem:[%s3469 + $0x164] sm:$0xf]
        %v3560 = vld [vmem:[%s3469 + $0x168] sm:$0xf]
        %v3561 = vld [vmem:[%s3469 + $0x16c] sm:$0xf]
        %v3562 = vld [vmem:[%s3469 + $0x170] sm:$0xf]
        %v3563 = vld [vmem:[%s3469 + $0x174] sm:$0xf]
        %v3564 = vld [vmem:[%s3469 + $0x178] sm:$0xf]
        %v3565 = vld [vmem:[%s3469 + $0x17c] sm:$0xf]
        %v3566 = vld [vmem:[%s3469 + $0x180] sm:$0xf]
        %v3567 = vld [vmem:[%s3469 + $0x184] sm:$0xf]
        %v3568 = vld [vmem:[%s3469 + $0x188] sm:$0xf]
        %v3569 = vld [vmem:[%s3469 + $0x18c] sm:$0xf]
        %v3570 = vld [vmem:[%s3469 + $0x190] sm:$0xf]
        %v3571 = vld [vmem:[%s3469 + $0x194] sm:$0xf]
        %v3572 = vld [vmem:[%s3469 + $0x198] sm:$0xf]
        %v3573 = vld [vmem:[%s3469 + $0x19c] sm:$0xf]
        %v3574 = vld [vmem:[%s3469 + $0x1a0] sm:$0xf]
        %v3575 = vld [vmem:[%s3469 + $0x1a4] sm:$0xf]
        %v3576 = vld [vmem:[%s3469 + $0x1a8] sm:$0xf]
        %v3577 = vld [vmem:[%s3469 + $0x1ac] sm:$0xf]
        %v3578 = vld [vmem:[%s3469 + $0x1b0] sm:$0xf]
        %v3579 = vld [vmem:[%s3469 + $0x1b4] sm:$0xf]
        %v3580 = vld [vmem:[%s3469 + $0x1b8] sm:$0xf]
        %v3581 = vld [vmem:[%s3469 + $0x1bc] sm:$0xf]
        %v3582 = vld [vmem:[%s3469 + $0x1c0] sm:$0xf]
        %v3583 = vld [vmem:[%s3469 + $0x1c4] sm:$0xf]
        %v3584 = vld [vmem:[%s3469 + $0x1c8] sm:$0xf]
        %v3585 = vld [vmem:[%s3469 + $0x1cc] sm:$0xf]
        %v3586 = vld [vmem:[%s3469 + $0x1d0] sm:$0xf]
        %v3587 = vld [vmem:[%s3469 + $0x1d4] sm:$0xf]
        %v3588 = vld [vmem:[%s3469 + $0x1d8] sm:$0xf]
        %v3589 = vld [vmem:[%s3469 + $0x1dc] sm:$0xf]
        %v3590 = vld [vmem:[%s3469 + $0x1e0] sm:$0xf]
        %v3591 = vld [vmem:[%s3469 + $0x1e4] sm:$0xf]
        %v3592 = vld [vmem:[%s3469 + $0x1e8] sm:$0xf]
        %v3593 = vld [vmem:[%s3469 + $0x1ec] sm:$0xf]
        %v3594 = vld [vmem:[%s3469 + $0x1f0] sm:$0xf]
        %v3595 = vld [vmem:[%s3469 + $0x1f4] sm:$0xf]
        %v3596 = vld [vmem:[%s3469 + $0x1f8] sm:$0xf]
        %v3597 = vld [vmem:[%s3469 + $0x1fc] sm:$0xf]
        %v3598 = vld [vmem:[%s3469 + $0x200] sm:$0xf]
        %v3599 = vld [vmem:[%s3469 + $0x204] sm:$0xf]
        %v3600 = vld [vmem:[%s3469 + $0x208] sm:$0xf]
        %v3601 = vld [vmem:[%s3469 + $0x20c] sm:$0xf]
        %v3602 = vld [vmem:[%s3469 + $0x210] sm:$0xf]
        %v3603 = vld [vmem:[%s3469 + $0x214] sm:$0xf]
        %v3604 = vld [vmem:[%s3469 + $0x218] sm:$0xf]
        %v3605 = vld [vmem:[%s3469 + $0x21c] sm:$0xf]
        %v3606 = vld [vmem:[%s3469 + $0x220] sm:$0xf]
        %v3607 = vld [vmem:[%s3469 + $0x224] sm:$0xf]
        %v3608 = vld [vmem:[%s3469 + $0x228] sm:$0xf]
        %v3609 = vld [vmem:[%s3469 + $0x22c] sm:$0xf]
        %v3610 = vld [vmem:[%s3469 + $0x230] sm:$0xf]
        %v3611 = vld [vmem:[%s3469 + $0x234] sm:$0xf]
        %v3612 = vld [vmem:[%s3469 + $0x238] sm:$0xf]
        %v3613 = vld [vmem:[%s3469 + $0x23c] sm:$0xf]
        %v3614 = vld [vmem:[%s3 + $0x2] sm:$0x1]
        %v3615 = vlaneseq
        %v3616 = vshrl.u32 %v3615, 7
        %v3617 = vsub.s32 0, %v3616
        %v3618 = vrot.slane %v3614, %v3617
        %v3763 = vunpack.c.l.b16 %v3470
        %v3764 = vunpack.c.l.b16 %v3471
        %v3765 = vunpack.c.l.b16 %v3472
        %v3766 = vunpack.c.l.b16 %v3473
        %v3767 = vunpack.c.l.b16 %v3474
        %v3768 = vunpack.c.l.b16 %v3475
        %v3769 = vunpack.c.l.b16 %v3476
        %v3770 = vunpack.c.l.b16 %v3477
        %v3771 = vunpack.c.l.b16 %v3478
        %v3772 = vunpack.c.l.b16 %v3479
        %v3773 = vunpack.c.l.b16 %v3480
        %v3774 = vunpack.c.l.b16 %v3481
        %v3775 = vunpack.c.l.b16 %v3482
        %v3776 = vunpack.c.l.b16 %v3483
        %v3777 = vunpack.c.l.b16 %v3484
        %v3778 = vunpack.c.l.b16 %v3485
        %v3779 = vunpack.c.l.b16 %v3486
        %v3780 = vunpack.c.l.b16 %v3487
        %v3781 = vunpack.c.l.b16 %v3488
        %v3782 = vunpack.c.l.b16 %v3489
        %v3783 = vunpack.c.l.b16 %v3490
        %v3784 = vunpack.c.l.b16 %v3491
        %v3785 = vunpack.c.l.b16 %v3492
        %v3786 = vunpack.c.l.b16 %v3493
        %v3787 = vunpack.c.l.b16 %v3494
        %v3788 = vunpack.c.l.b16 %v3495
        %v3789 = vunpack.c.l.b16 %v3496
        %v3790 = vunpack.c.l.b16 %v3497
        %v3791 = vunpack.c.l.b16 %v3498
        %v3792 = vunpack.c.l.b16 %v3499
        %v3793 = vunpack.c.l.b16 %v3500
        %v3794 = vunpack.c.l.b16 %v3501
        %v3795 = vunpack.c.l.b16 %v3502
        %v3796 = vunpack.c.l.b16 %v3503
        %v3797 = vunpack.c.l.b16 %v3504
        %v3798 = vunpack.c.l.b16 %v3505
        %v3799 = vunpack.c.l.b16 %v3506
        %v3800 = vunpack.c.l.b16 %v3507
        %v3801 = vunpack.c.l.b16 %v3508
        %v3802 = vunpack.c.l.b16 %v3509
        %v3803 = vunpack.c.l.b16 %v3510
        %v3804 = vunpack.c.l.b16 %v3511
        %v3805 = vunpack.c.l.b16 %v3512
        %v3806 = vunpack.c.l.b16 %v3513
        %v3807 = vunpack.c.l.b16 %v3514
        %v3808 = vunpack.c.l.b16 %v3515
        %v3809 = vunpack.c.l.b16 %v3516
        %v3810 = vunpack.c.l.b16 %v3517
        %v3811 = vunpack.c.l.b16 %v3518
        %v3812 = vunpack.c.l.b16 %v3519
        %v3813 = vunpack.c.l.b16 %v3520
        %v3814 = vunpack.c.l.b16 %v3521
        %v3815 = vunpack.c.l.b16 %v3522
        %v3816 = vunpack.c.l.b16 %v3523
        %v3817 = vunpack.c.l.b16 %v3524
        %v3818 = vunpack.c.l.b16 %v3525
        %v3819 = vunpack.c.l.b16 %v3526
        %v3820 = vunpack.c.l.b16 %v3527
        %v3821 = vunpack.c.l.b16 %v3528
        %v3822 = vunpack.c.l.b16 %v3529
        %v3823 = vunpack.c.l.b16 %v3530
        %v3824 = vunpack.c.l.b16 %v3531
        %v3825 = vunpack.c.l.b16 %v3532
        %v3826 = vunpack.c.l.b16 %v3533
        %v3827 = vunpack.c.l.b16 %v3534
        %v3828 = vunpack.c.l.b16 %v3535
        %v3829 = vunpack.c.l.b16 %v3536
        %v3830 = vunpack.c.l.b16 %v3537
        %v3831 = vunpack.c.l.b16 %v3538
        %v3832 = vunpack.c.l.b16 %v3539
        %v3833 = vunpack.c.l.b16 %v3540
        %v3834 = vunpack.c.l.b16 %v3541
        %v3835 = vunpack.c.l.b16 %v3542
        %v3836 = vunpack.c.l.b16 %v3543
        %v3837 = vunpack.c.l.b16 %v3544
        %v3838 = vunpack.c.l.b16 %v3545
        %v3839 = vunpack.c.l.b16 %v3546
        %v3840 = vunpack.c.l.b16 %v3547
        %v3841 = vunpack.c.l.b16 %v3548
        %v3842 = vunpack.c.l.b16 %v3549
        %v3843 = vunpack.c.l.b16 %v3550
        %v3844 = vunpack.c.l.b16 %v3551
        %v3845 = vunpack.c.l.b16 %v3552
        %v3846 = vunpack.c.l.b16 %v3553
        %v3847 = vunpack.c.l.b16 %v3554
        %v3848 = vunpack.c.l.b16 %v3555
        %v3849 = vunpack.c.l.b16 %v3556
        %v3850 = vunpack.c.l.b16 %v3557
        %v3851 = vunpack.c.l.b16 %v3558
        %v3852 = vunpack.c.l.b16 %v3559
        %v3853 = vunpack.c.l.b16 %v3560
        %v3854 = vunpack.c.l.b16 %v3561
        %v3855 = vunpack.c.l.b16 %v3562
        %v3856 = vunpack.c.l.b16 %v3563
        %v3857 = vunpack.c.l.b16 %v3564
        %v3858 = vunpack.c.l.b16 %v3565
        %v3859 = vunpack.c.l.b16 %v3566
        %v3860 = vunpack.c.l.b16 %v3567
        %v3861 = vunpack.c.l.b16 %v3568
        %v3862 = vunpack.c.l.b16 %v3569
        %v3863 = vunpack.c.l.b16 %v3570
        %v3864 = vunpack.c.l.b16 %v3571
        %v3865 = vunpack.c.l.b16 %v3572
        %v3866 = vunpack.c.l.b16 %v3573
        %v3867 = vunpack.c.l.b16 %v3574
        %v3868 = vunpack.c.l.b16 %v3575
        %v3869 = vunpack.c.l.b16 %v3576
        %v3870 = vunpack.c.l.b16 %v3577
        %v3871 = vunpack.c.l.b16 %v3578
        %v3872 = vunpack.c.l.b16 %v3579
        %v3873 = vunpack.c.l.b16 %v3580
        %v3874 = vunpack.c.l.b16 %v3581
        %v3875 = vunpack.c.l.b16 %v3582
        %v3876 = vunpack.c.l.b16 %v3583
        %v3877 = vunpack.c.l.b16 %v3584
        %v3878 = vunpack.c.l.b16 %v3585
        %v3879 = vunpack.c.l.b16 %v3586
        %v3880 = vunpack.c.l.b16 %v3587
        %v3881 = vunpack.c.l.b16 %v3588
        %v3882 = vunpack.c.l.b16 %v3589
        %v3883 = vunpack.c.l.b16 %v3590
        %v3884 = vunpack.c.l.b16 %v3591
        %v3885 = vunpack.c.l.b16 %v3592
        %v3886 = vunpack.c.l.b16 %v3593
        %v3887 = vunpack.c.l.b16 %v3594
        %v3888 = vunpack.c.l.b16 %v3595
        %v3889 = vunpack.c.l.b16 %v3596
        %v3890 = vunpack.c.l.b16 %v3597
        %v3891 = vunpack.c.l.b16 %v3598
        %v3892 = vunpack.c.l.b16 %v3599
        %v3893 = vunpack.c.l.b16 %v3600
        %v3894 = vunpack.c.l.b16 %v3601
        %v3895 = vunpack.c.l.b16 %v3602
        %v3896 = vunpack.c.l.b16 %v3603
        %v3897 = vunpack.c.l.b16 %v3604
        %v3898 = vunpack.c.l.b16 %v3605
        %v3899 = vunpack.c.l.b16 %v3606
        %v3900 = vunpack.c.l.b16 %v3607
        %v3901 = vunpack.c.l.b16 %v3608
        %v3902 = vunpack.c.l.b16 %v3609
        %v3903 = vunpack.c.l.b16 %v3610
        %v3904 = vunpack.c.l.b16 %v3611
        %v3905 = vunpack.c.l.b16 %v3612
        %v3906 = vunpack.c.l.b16 %v3613
        %v3907 = vpack.c.b16 %v3764, %v3763
        %v3908 = vpack.c.b16 %v3766, %v3765
        %v3909 = vpack.c.b16 %v3768, %v3767
        %v3910 = vpack.c.b16 %v3770, %v3769
        %v3911 = vpack.c.b16 %v3772, %v3771
        %v3912 = vpack.c.b16 %v3774, %v3773
        %v3913 = vpack.c.b16 %v3776, %v3775
        %v3914 = vpack.c.b16 %v3778, %v3777
        %v3915 = vpack.c.b16 %v3780, %v3779
        %v3916 = vpack.c.b16 %v3782, %v3781
        %v3917 = vpack.c.b16 %v3784, %v3783
        %v3918 = vpack.c.b16 %v3786, %v3785
        %v3919 = vpack.c.b16 %v3788, %v3787
        %v3920 = vpack.c.b16 %v3790, %v3789
        %v3921 = vpack.c.b16 %v3792, %v3791
        %v3922 = vpack.c.b16 %v3794, %v3793
        %v3923 = vpack.c.b16 %v3796, %v3795
        %v3924 = vpack.c.b16 %v3798, %v3797
        %v3925 = vpack.c.b16 %v3800, %v3799
        %v3926 = vpack.c.b16 %v3802, %v3801
        %v3927 = vpack.c.b16 %v3804, %v3803
        %v3928 = vpack.c.b16 %v3806, %v3805
        %v3929 = vpack.c.b16 %v3808, %v3807
        %v3930 = vpack.c.b16 %v3810, %v3809
        %v3931 = vpack.c.b16 %v3812, %v3811
        %v3932 = vpack.c.b16 %v3814, %v3813
        %v3933 = vpack.c.b16 %v3816, %v3815
        %v3934 = vpack.c.b16 %v3818, %v3817
        %v3935 = vpack.c.b16 %v3820, %v3819
        %v3936 = vpack.c.b16 %v3822, %v3821
        %v3937 = vpack.c.b16 %v3824, %v3823
        %v3938 = vpack.c.b16 %v3826, %v3825
        %v3939 = vpack.c.b16 %v3828, %v3827
        %v3940 = vpack.c.b16 %v3830, %v3829
        %v3941 = vpack.c.b16 %v3832, %v3831
        %v3942 = vpack.c.b16 %v3834, %v3833
        %v3943 = vpack.c.b16 %v3836, %v3835
        %v3944 = vpack.c.b16 %v3838, %v3837
        %v3945 = vpack.c.b16 %v3840, %v3839
        %v3946 = vpack.c.b16 %v3842, %v3841
        %v3947 = vpack.c.b16 %v3844, %v3843
        %v3948 = vpack.c.b16 %v3846, %v3845
        %v3949 = vpack.c.b16 %v3848, %v3847
        %v3950 = vpack.c.b16 %v3850, %v3849
        %v3951 = vpack.c.b16 %v3852, %v3851
        %v3952 = vpack.c.b16 %v3854, %v3853
        %v3953 = vpack.c.b16 %v3856, %v3855
        %v3954 = vpack.c.b16 %v3858, %v3857
        %v3955 = vpack.c.b16 %v3860, %v3859
        %v3956 = vpack.c.b16 %v3862, %v3861
        %v3957 = vpack.c.b16 %v3864, %v3863
        %v3958 = vpack.c.b16 %v3866, %v3865
        %v3959 = vpack.c.b16 %v3868, %v3867
        %v3960 = vpack.c.b16 %v3870, %v3869
        %v3961 = vpack.c.b16 %v3872, %v3871
        %v3962 = vpack.c.b16 %v3874, %v3873
        %v3963 = vpack.c.b16 %v3876, %v3875
        %v3964 = vpack.c.b16 %v3878, %v3877
        %v3965 = vpack.c.b16 %v3880, %v3879
        %v3966 = vpack.c.b16 %v3882, %v3881
        %v3967 = vpack.c.b16 %v3884, %v3883
        %v3968 = vpack.c.b16 %v3886, %v3885
        %v3969 = vpack.c.b16 %v3888, %v3887
        %v3970 = vpack.c.b16 %v3890, %v3889
        %v3971 = vpack.c.b16 %v3892, %v3891
        %v3972 = vpack.c.b16 %v3894, %v3893
        %v3973 = vpack.c.b16 %v3896, %v3895
        %v3974 = vpack.c.b16 %v3898, %v3897
        %v3975 = vpack.c.b16 %v3900, %v3899
        %v3976 = vpack.c.b16 %v3902, %v3901
        %v3977 = vpack.c.b16 %v3904, %v3903
        %v3978 = vpack.c.b16 %v3906, %v3905
        %4051 = vmatprep.subr.bf16.mxu0 0
        %4052 = vmatpush1.bf16.msra.mxu0 %v3907
        %4053 = vmatprep.subr.bf16.mxu0 0
        %4054 = vmatpush1.bf16.msra.mxu0 %v3908
        %4055 = vmatprep.subr.bf16.mxu0 0
        %4056 = vmatpush1.bf16.msra.mxu0 %v3909
        %4057 = vmatprep.subr.bf16.mxu0 0
        %4058 = vmatpush1.bf16.msra.mxu0 %v3910
        %4059 = vmatprep.subr.bf16.mxu0 0
        %4060 = vmatpush1.bf16.msra.mxu0 %v3911
        %4061 = vmatprep.subr.bf16.mxu0 0
        %4062 = vmatpush1.bf16.msra.mxu0 %v3912
        %4063 = vmatprep.subr.bf16.mxu0 0
        %4064 = vmatpush1.bf16.msra.mxu0 %v3913
        %4065 = vmatprep.subr.bf16.mxu0 0
        %4066 = vmatpush1.bf16.msra.mxu0 %v3914
        %4067 = vmatprep.subr.bf16.mxu0 0
        %4068 = vmatpush1.bf16.msra.mxu0 %v3915
        %4069 = vmatprep.subr.bf16.mxu0 0
        %4070 = vmatpush1.bf16.msra.mxu0 %v3916
        %4071 = vmatprep.subr.bf16.mxu0 0
        %4072 = vmatpush1.bf16.msra.mxu0 %v3917
        %4073 = vmatprep.subr.bf16.mxu0 0
        %4074 = vmatpush1.bf16.msra.mxu0 %v3918
        %4075 = vmatprep.subr.bf16.mxu0 0
        %4076 = vmatpush1.bf16.msra.mxu0 %v3919
        %4077 = vmatprep.subr.bf16.mxu0 0
        %4078 = vmatpush1.bf16.msra.mxu0 %v3920
        %4079 = vmatprep.subr.bf16.mxu0 0
        %4080 = vmatpush1.bf16.msra.mxu0 %v3921
        %4081 = vmatprep.subr.bf16.mxu0 0
        %4082 = vmatpush1.bf16.msra.mxu0 %v3922
        %4083 = vmatprep.mubr.bf16.mxu0 %v3085
        %4084 = vmatmul.mubr.bf16.gmra.mrb[0].mxu0 %v3037
        %v4085 = vpop.f32.mrb[0].mxu0
        %v4086 = vadd.f32 %v3618, %v4085
        %v4087 = vpop.f32.mrb[0].mxu0
        %v4088 = vpop.f32.mrb[0].mxu0
        %v4089 = vadd.f32 %v3618, %v4088
        %v4090 = vpop.f32.mrb[0].mxu0
        %4091 = vmatprep.mubr.bf16.mxu0 %v3086
        %4092 = vmatmul.mubr.bf16.gmra.mrb[0].mxu0 %v3038
        %v4093 = vpop.f32.mrb[0].mxu0
        %v4094 = vadd.f32 %v3618, %v4093
        %v4095 = vpop.f32.mrb[0].mxu0
        %v4096 = vpop.f32.mrb[0].mxu0
        %v4097 = vadd.f32 %v3618, %v4096
        %v4098 = vpop.f32.mrb[0].mxu0
        %4099 = vmatprep.mubr.bf16.mxu0 %v3087
        %4100 = vmatmul.mubr.bf16.gmra.mrb[0].mxu0 %v3039
        %v4101 = vpop.f32.mrb[0].mxu0
        %v4102 = vadd.f32 %v3618, %v4101
        %v4103 = vpop.f32.mrb[0].mxu0
        %v4104 = vpop.f32.mrb[0].mxu0
        %v4105 = vadd.f32 %v3618, %v4104
        %v4106 = vpop.f32.mrb[0].mxu0
        %4107 = vmatprep.mubr.bf16.mxu0 %v3088
        %4108 = vmatmul.mubr.bf16.gmra.mrb[0].mxu0 %v3040
        %v4109 = vpop.f32.mrb[0].mxu0
        %v4110 = vadd.f32 %v3618, %v4109
        %v4111 = vpop.f32.mrb[0].mxu0
        %v4112 = vpop.f32.mrb[0].mxu0
        %v4113 = vadd.f32 %v3618, %v4112
        %v4114 = vpop.f32.mrb[0].mxu0
        %4115 = vmatprep.mubr.bf16.mxu0 %v3089
        %4116 = vmatmul.mubr.bf16.gmra.mrb[0].mxu0 %v3041
        %v4117 = vpop.f32.mrb[0].mxu0
        %v4118 = vadd.f32 %v3618, %v4117
        %v4119 = vpop.f32.mrb[0].mxu0
        %v4120 = vpop.f32.mrb[0].mxu0
        %v4121 = vadd.f32 %v3618, %v4120
        %v4122 = vpop.f32.mrb[0].mxu0
        %4123 = vmatprep.mubr.bf16.mxu0 %v3090
        %4124 = vmatmul.mubr.bf16.gmra.mrb[0].mxu0 %v3042
        %v4125 = vpop.f32.mrb[0].mxu0
        %v4126 = vadd.f32 %v3618, %v4125
        %v4127 = vpop.f32.mrb[0].mxu0
        %v4128 = vpop.f32.mrb[0].mxu0
        %v4129 = vadd.f32 %v3618, %v4128
        %v4130 = vpop.f32.mrb[0].mxu0
        %4131 = vmatprep.mubr.bf16.mxu0 %v3091
        %4132 = vmatmul.mubr.bf16.gmra.mrb[0].mxu0 %v3043
        %v4133 = vpop.f32.mrb[0].mxu0
        %v4134 = vadd.f32 %v3618, %v4133
        %v4135 = vpop.f32.mrb[0].mxu0
        %v4136 = vpop.f32.mrb[0].mxu0
        %v4137 = vadd.f32 %v3618, %v4136
        %v4138 = vpop.f32.mrb[0].mxu0
        %4139 = vmatprep.mubr.bf16.mxu0 %v3092
        %4140 = vmatmul.mubr.bf16.gmra.mrb[0].mxu0 %v3044
        %v4141 = vpop.f32.mrb[0].mxu0
        %v4142 = vadd.f32 %v3618, %v4141
        %v4143 = vpop.f32.mrb[0].mxu0
        %v4144 = vpop.f32.mrb[0].mxu0
        %v4145 = vadd.f32 %v3618, %v4144
        %v4146 = vpop.f32.mrb[0].mxu0
        %4147 = vmatprep.mubr.bf16.mxu0 %v3093
        %4148 = vmatmul.mubr.bf16.gmra.mrb[0].mxu0 %v3045
        %v4149 = vpop.f32.mrb[0].mxu0
        %v4150 = vadd.f32 %v3618, %v4149
        %v4151 = vpop.f32.mrb[0].mxu0
        %v4152 = vpop.f32.mrb[0].mxu0
        %v4153 = vadd.f32 %v3618, %v4152
        %v4154 = vpop.f32.mrb[0].mxu0
        %4155 = vmatprep.mubr.bf16.mxu0 %v3094
        %4156 = vmatmul.mubr.bf16.gmra.mrb[0].mxu0 %v3046
        %v4157 = vpop.f32.mrb[0].mxu0
        %v4158 = vadd.f32 %v3618, %v4157
        %v4159 = vpop.f32.mrb[0].mxu0
        %v4160 = vpop.f32.mrb[0].mxu0
        %v4161 = vadd.f32 %v3618, %v4160
        %v4162 = vpop.f32.mrb[0].mxu0
        %4163 = vmatprep.mubr.bf16.mxu0 %v3095
        %4164 = vmatmul.mubr.bf16.gmra.mrb[0].mxu0 %v3047
        %v4165 = vpop.f32.mrb[0].mxu0
        %v4166 = vadd.f32 %v3618, %v4165
        %v4167 = vpop.f32.mrb[0].mxu0
        %v4168 = vpop.f32.mrb[0].mxu0
        %v4169 = vadd.f32 %v3618, %v4168
        %v4170 = vpop.f32.mrb[0].mxu0
        %4171 = vmatprep.mubr.bf16.mxu0 %v3096
        %4172 = vmatmul.mubr.bf16.gmra.mrb[0].mxu0 %v3048
        %v4173 = vpop.f32.mrb[0].mxu0
        %v4174 = vadd.f32 %v3618, %v4173
        %v4175 = vpop.f32.mrb[0].mxu0
        %v4176 = vpop.f32.mrb[0].mxu0
        %v4177 = vadd.f32 %v3618, %v4176
        %v4178 = vpop.f32.mrb[0].mxu0
        %4179 = vmatprep.mubr.bf16.mxu0 %v3097
        %4180 = vmatmul.mubr.bf16.gmra.mrb[0].mxu0 %v3049
        %v4181 = vpop.f32.mrb[0].mxu0
        %v4182 = vadd.f32 %v3618, %v4181
        %v4183 = vpop.f32.mrb[0].mxu0
        %v4184 = vpop.f32.mrb[0].mxu0
        %v4185 = vadd.f32 %v3618, %v4184
        %v4186 = vpop.f32.mrb[0].mxu0
        %4187 = vmatprep.mubr.bf16.mxu0 %v3098
        %4188 = vmatmul.mubr.bf16.gmra.mrb[0].mxu0 %v3050
        %v4189 = vpop.f32.mrb[0].mxu0
        %v4190 = vadd.f32 %v3618, %v4189
        %v4191 = vpop.f32.mrb[0].mxu0
        %v4192 = vpop.f32.mrb[0].mxu0
        %v4193 = vadd.f32 %v3618, %v4192
        %v4194 = vpop.f32.mrb[0].mxu0
        %4195 = vmatprep.mubr.bf16.mxu0 %v3099
        %4196 = vmatmul.mubr.bf16.gmra.mrb[0].mxu0 %v3051
        %v4197 = vpop.f32.mrb[0].mxu0
        %v4198 = vadd.f32 %v3618, %v4197
        %v4199 = vpop.f32.mrb[0].mxu0
        %v4200 = vpop.f32.mrb[0].mxu0
        %v4201 = vadd.f32 %v3618, %v4200
        %v4202 = vpop.f32.mrb[0].mxu0
        %4203 = vmatprep.mubr.bf16.mxu0 %v3100
        %4204 = vmatmul.mubr.bf16.gmra.mrb[0].mxu0 %v3052
        %v4205 = vpop.f32.mrb[0].mxu0
        %v4206 = vadd.f32 %v3618, %v4205
        %v4207 = vpop.f32.mrb[0].mxu0
        %v4208 = vpop.f32.mrb[0].mxu0
        %v4209 = vadd.f32 %v3618, %v4208
        %v4210 = vpop.f32.mrb[0].mxu0
        %4211 = vdwg.mxu0
        %4212 = vmatprep.subr.bf16.mxu0 0
        %4213 = vmatpush1.bf16.msra.mxu0 %v3923
        %4214 = vmatprep.subr.bf16.mxu0 0
        %4215 = vmatpush1.bf16.msra.mxu0 %v3924
        %4216 = vmatprep.subr.bf16.mxu0 0
        %4217 = vmatpush1.bf16.msra.mxu0 %v3925
        %4218 = vmatprep.subr.bf16.mxu0 0
        %4219 = vmatpush1.bf16.msra.mxu0 %v3926
        %4220 = vmatprep.subr.bf16.mxu0 0
        %4221 = vmatpush1.bf16.msra.mxu0 %v3927
        %4222 = vmatprep.subr.bf16.mxu0 0
        %4223 = vmatpush1.bf16.msra.mxu0 %v3928
        %4224 = vmatprep.subr.bf16.mxu0 0
        %4225 = vmatpush1.bf16.msra.mxu0 %v3929
        %4226 = vmatprep.subr.bf16.mxu0 0
        %4227 = vmatpush1.bf16.msra.mxu0 %v3930
        %4228 = vmatprep.subr.bf16.mxu0 0
        %4229 = vmatpush1.bf16.msra.mxu0 %v3931
        %4230 = vmatprep.subr.bf16.mxu0 0
        %4231 = vmatpush1.bf16.msra.mxu0 %v3932
        %4232 = vmatprep.subr.bf16.mxu0 0
        %4233 = vmatpush1.bf16.msra.mxu0 %v3933
        %4234 = vmatprep.subr.bf16.mxu0 0
        %4235 = vmatpush1.bf16.msra.mxu0 %v3934
        %4236 = vmatprep.subr.bf16.mxu0 0
        %4237 = vmatpush1.bf16.msra.mxu0 %v3935
        %4238 = vmatprep.subr.bf16.mxu0 0
        %4239 = vmatpush1.bf16.msra.mxu0 %v3936
        %4240 = vmatprep.subr.bf16.mxu0 0
        %4241 = vmatpush1.bf16.msra.mxu0 %v3937
        %4242 = vmatprep.subr.bf16.mxu0 0
        %4243 = vmatpush1.bf16.msra.mxu0 %v3938
        %4244 = vmatprep.mubr.bf16.mxu0 %v3245
        %4245 = vmatmul.mubr.bf16.gmra.mrb[0].mxu0 %v3197
        %v4246 = vpop.f32.mrb[0].mxu0
        %v4247 = vadd.f32 %v4086, %v4246
        %v4248 = vpop.f32.mrb[0].mxu0
        %v4249 = vpop.f32.mrb[0].mxu0
        %v4250 = vadd.f32 %v4089, %v4249
        %v4251 = vpop.f32.mrb[0].mxu0
        %4252 = vmatprep.mubr.bf16.mxu0 %v3246
        %4253 = vmatmul.mubr.bf16.gmra.mrb[0].mxu0 %v3198
        %v4254 = vpop.f32.mrb[0].mxu0
        %v4255 = vadd.f32 %v4094, %v4254
        %v4256 = vpop.f32.mrb[0].mxu0
        %v4257 = vpop.f32.mrb[0].mxu0
        %v4258 = vadd.f32 %v4097, %v4257
        %v4259 = vpop.f32.mrb[0].mxu0
        %4260 = vmatprep.mubr.bf16.mxu0 %v3247
        %4261 = vmatmul.mubr.bf16.gmra.mrb[0].mxu0 %v3199
        %v4262 = vpop.f32.mrb[0].mxu0
        %v4263 = vadd.f32 %v4102, %v4262
        %v4264 = vpop.f32.mrb[0].mxu0
        %v4265 = vpop.f32.mrb[0].mxu0
        %v4266 = vadd.f32 %v4105, %v4265
        %v4267 = vpop.f32.mrb[0].mxu0
        %4268 = vmatprep.mubr.bf16.mxu0 %v3248
        %4269 = vmatmul.mubr.bf16.gmra.mrb[0].mxu0 %v3200
        %v4270 = vpop.f32.mrb[0].mxu0
        %v4271 = vadd.f32 %v4110, %v4270
        %v4272 = vpop.f32.mrb[0].mxu0
        %v4273 = vpop.f32.mrb[0].mxu0
        %v4274 = vadd.f32 %v4113, %v4273
        %v4275 = vpop.f32.mrb[0].mxu0
        %4276 = vmatprep.mubr.bf16.mxu0 %v3249
        %4277 = vmatmul.mubr.bf16.gmra.mrb[0].mxu0 %v3201
        %v4278 = vpop.f32.mrb[0].mxu0
        %v4279 = vadd.f32 %v4118, %v4278
        %v4280 = vpop.f32.mrb[0].mxu0
        %v4281 = vpop.f32.mrb[0].mxu0
        %v4282 = vadd.f32 %v4121, %v4281
        %v4283 = vpop.f32.mrb[0].mxu0
        %4284 = vmatprep.mubr.bf16.mxu0 %v3250
        %4285 = vmatmul.mubr.bf16.gmra.mrb[0].mxu0 %v3202
        %v4286 = vpop.f32.mrb[0].mxu0
        %v4287 = vadd.f32 %v4126, %v4286
        %v4288 = vpop.f32.mrb[0].mxu0
        %v4289 = vpop.f32.mrb[0].mxu0
        %v4290 = vadd.f32 %v4129, %v4289
        %v4291 = vpop.f32.mrb[0].mxu0
        %4292 = vmatprep.mubr.bf16.mxu0 %v3251
        %4293 = vmatmul.mubr.bf16.gmra.mrb[0].mxu0 %v3203
        %v4294 = vpop.f32.mrb[0].mxu0
        %v4295 = vadd.f32 %v4134, %v4294
        %v4296 = vpop.f32.mrb[0].mxu0
        %v4297 = vpop.f32.mrb[0].mxu0
        %v4298 = vadd.f32 %v4137, %v4297
        %v4299 = vpop.f32.mrb[0].mxu0
        %4300 = vmatprep.mubr.bf16.mxu0 %v3252
        %4301 = vmatmul.mubr.bf16.gmra.mrb[0].mxu0 %v3204
        %v4302 = vpop.f32.mrb[0].mxu0
        %v4303 = vadd.f32 %v4142, %v4302
        %v4304 = vpop.f32.mrb[0].mxu0
        %v4305 = vpop.f32.mrb[0].mxu0
        %v4306 = vadd.f32 %v4145, %v4305
        %v4307 = vpop.f32.mrb[0].mxu0
        %4308 = vmatprep.mubr.bf16.mxu0 %v3253
        %4309 = vmatmul.mubr.bf16.gmra.mrb[0].mxu0 %v3205
        %v4310 = vpop.f32.mrb[0].mxu0
        %v4311 = vadd.f32 %v4150, %v4310
        %v4312 = vpop.f32.mrb[0].mxu0
        %v4313 = vpop.f32.mrb[0].mxu0
        %v4314 = vadd.f32 %v4153, %v4313
        %v4315 = vpop.f32.mrb[0].mxu0
        %4316 = vmatprep.mubr.bf16.mxu0 %v3254
        %4317 = vmatmul.mubr.bf16.gmra.mrb[0].mxu0 %v3206
        %v4318 = vpop.f32.mrb[0].mxu0
        %v4319 = vadd.f32 %v4158, %v4318
        %v4320 = vpop.f32.mrb[0].mxu0
        %v4321 = vpop.f32.mrb[0].mxu0
        %v4322 = vadd.f32 %v4161, %v4321
        %v4323 = vpop.f32.mrb[0].mxu0
        %4324 = vmatprep.mubr.bf16.mxu0 %v3255
        %4325 = vmatmul.mubr.bf16.gmra.mrb[0].mxu0 %v3207
        %v4326 = vpop.f32.mrb[0].mxu0
        %v4327 = vadd.f32 %v4166, %v4326
        %v4328 = vpop.f32.mrb[0].mxu0
        %v4329 = vpop.f32.mrb[0].mxu0
        %v4330 = vadd.f32 %v4169, %v4329
        %v4331 = vpop.f32.mrb[0].mxu0
        %4332 = vmatprep.mubr.bf16.mxu0 %v3256
        %4333 = vmatmul.mubr.bf16.gmra.mrb[0].mxu0 %v3208
        %v4334 = vpop.f32.mrb[0].mxu0
        %v4335 = vadd.f32 %v4174, %v4334
        %v4336 = vpop.f32.mrb[0].mxu0
        %v4337 = vpop.f32.mrb[0].mxu0
        %v4338 = vadd.f32 %v4177, %v4337
        %v4339 = vpop.f32.mrb[0].mxu0
        %4340 = vmatprep.mubr.bf16.mxu0 %v3257
        %4341 = vmatmul.mubr.bf16.gmra.mrb[0].mxu0 %v3209
        %v4342 = vpop.f32.mrb[0].mxu0
        %v4343 = vadd.f32 %v4182, %v4342
        %v4344 = vpop.f32.mrb[0].mxu0
        %v4345 = vpop.f32.mrb[0].mxu0
        %v4346 = vadd.f32 %v4185, %v4345
        %v4347 = vpop.f32.mrb[0].mxu0
        %4348 = vmatprep.mubr.bf16.mxu0 %v3258
        %4349 = vmatmul.mubr.bf16.gmra.mrb[0].mxu0 %v3210
        %v4350 = vpop.f32.mrb[0].mxu0
        %v4351 = vadd.f32 %v4190, %v4350
        %v4352 = vpop.f32.mrb[0].mxu0
        %v4353 = vpop.f32.mrb[0].mxu0
        %v4354 = vadd.f32 %v4193, %v4353
        %v4355 = vpop.f32.mrb[0].mxu0
        %4356 = vmatprep.mubr.bf16.mxu0 %v3259
        %4357 = vmatmul.mubr.bf16.gmra.mrb[0].mxu0 %v3211
        %v4358 = vpop.f32.mrb[0].mxu0
        %v4359 = vadd.f32 %v4198, %v4358
        %v4360 = vpop.f32.mrb[0].mxu0
        %v4361 = vpop.f32.mrb[0].mxu0
        %v4362 = vadd.f32 %v4201, %v4361
        %v4363 = vpop.f32.mrb[0].mxu0
        %4364 = vmatprep.mubr.bf16.mxu0 %v3260
        %4365 = vmatmul.mubr.bf16.gmra.mrb[0].mxu0 %v3212
        %v4366 = vpop.f32.mrb[0].mxu0
        %v4367 = vadd.f32 %v4206, %v4366
        %v4368 = vpop.f32.mrb[0].mxu0
        %v4369 = vpop.f32.mrb[0].mxu0
        %v4370 = vadd.f32 %v4209, %v4369
        %v4371 = vpop.f32.mrb[0].mxu0
        %4372 = vdwg.mxu0
        %4373 = vmatprep.subr.bf16.mxu0 0
        %4374 = vmatpush1.bf16.msra.mxu0 %v3939
        %4375 = vmatprep.subr.bf16.mxu0 0
        %4376 = vmatpush1.bf16.msra.mxu0 %v3940
        %4377 = vmatprep.subr.bf16.mxu0 0
        %4378 = vmatpush1.bf16.msra.mxu0 %v3941
        %4379 = vmatprep.subr.bf16.mxu0 0
        %4380 = vmatpush1.bf16.msra.mxu0 %v3942
        %4381 = vmatprep.subr.bf16.mxu0 0
        %4382 = vmatpush1.bf16.msra.mxu0 %v3943
        %4383 = vmatprep.subr.bf16.mxu0 0
        %4384 = vmatpush1.bf16.msra.mxu0 %v3944
        %4385 = vmatprep.subr.bf16.mxu0 0
        %4386 = vmatpush1.bf16.msra.mxu0 %v3945
        %4387 = vmatprep.subr.bf16.mxu0 0
        %4388 = vmatpush1.bf16.msra.mxu0 %v3946
        %4389 = vmatprep.subr.bf16.mxu0 0
        %4390 = vmatpush1.bf16.msra.mxu0 %v3947
        %4391 = vmatprep.subr.bf16.mxu0 0
        %4392 = vmatpush1.bf16.msra.mxu0 %v3948
        %4393 = vmatprep.subr.bf16.mxu0 0
        %4394 = vmatpush1.bf16.msra.mxu0 %v3949
        %4395 = vmatprep.subr.bf16.mxu0 0
        %4396 = vmatpush1.bf16.msra.mxu0 %v3950
        %4397 = vmatprep.subr.bf16.mxu0 0
        %4398 = vmatpush1.bf16.msra.mxu0 %v3951
        %4399 = vmatprep.subr.bf16.mxu0 0
        %4400 = vmatpush1.bf16.msra.mxu0 %v3952
        %4401 = vmatprep.subr.bf16.mxu0 0
        %4402 = vmatpush1.bf16.msra.mxu0 %v3953
        %4403 = vmatprep.subr.bf16.mxu0 0
        %4404 = vmatpush1.bf16.msra.mxu0 %v3954
        %4405 = vmatprep.mubr.bf16.mxu0 %v3309
        %4406 = vmatmul.mubr.bf16.gmra.mrb[0].mxu0 %v3261
        %v4407 = vpop.f32.mrb[0].mxu0
        %v4408 = vadd.f32 %v4247, %v4407
        %v4409 = vpop.f32.mrb[0].mxu0
        %v4410 = vpop.f32.mrb[0].mxu0
        %v4411 = vadd.f32 %v4250, %v4410
        %v4412 = vpop.f32.mrb[0].mxu0
        %4413 = vmatprep.mubr.bf16.mxu0 %v3310
        %4414 = vmatmul.mubr.bf16.gmra.mrb[0].mxu0 %v3262
        %v4415 = vpop.f32.mrb[0].mxu0
        %v4416 = vadd.f32 %v4255, %v4415
        %v4417 = vpop.f32.mrb[0].mxu0
        %v4418 = vpop.f32.mrb[0].mxu0
        %v4419 = vadd.f32 %v4258, %v4418
        %v4420 = vpop.f32.mrb[0].mxu0
        %4421 = vmatprep.mubr.bf16.mxu0 %v3311
        %4422 = vmatmul.mubr.bf16.gmra.mrb[0].mxu0 %v3263
        %v4423 = vpop.f32.mrb[0].mxu0
        %v4424 = vadd.f32 %v4263, %v4423
        %v4425 = vpop.f32.mrb[0].mxu0
        %v4426 = vpop.f32.mrb[0].mxu0
        %v4427 = vadd.f32 %v4266, %v4426
        %v4428 = vpop.f32.mrb[0].mxu0
        %4429 = vmatprep.mubr.bf16.mxu0 %v3312
        %4430 = vmatmul.mubr.bf16.gmra.mrb[0].mxu0 %v3264
        %v4431 = vpop.f32.mrb[0].mxu0
        %v4432 = vadd.f32 %v4271, %v4431
        %v4433 = vpop.f32.mrb[0].mxu0
        %v4434 = vpop.f32.mrb[0].mxu0
        %v4435 = vadd.f32 %v4274, %v4434
        %v4436 = vpop.f32.mrb[0].mxu0
        %4437 = vmatprep.mubr.bf16.mxu0 %v3313
        %4438 = vmatmul.mubr.bf16.gmra.mrb[0].mxu0 %v3265
        %v4439 = vpop.f32.mrb[0].mxu0
        %v4440 = vadd.f32 %v4279, %v4439
        %v4441 = vpop.f32.mrb[0].mxu0
        %v4442 = vpop.f32.mrb[0].mxu0
        %v4443 = vadd.f32 %v4282, %v4442
        %v4444 = vpop.f32.mrb[0].mxu0
        %4445 = vmatprep.mubr.bf16.mxu0 %v3314
        %4446 = vmatmul.mubr.bf16.gmra.mrb[0].mxu0 %v3266
        %v4447 = vpop.f32.mrb[0].mxu0
        %v4448 = vadd.f32 %v4287, %v4447
        %v4449 = vpop.f32.mrb[0].mxu0
        %v4450 = vpop.f32.mrb[0].mxu0
        %v4451 = vadd.f32 %v4290, %v4450
        %v4452 = vpop.f32.mrb[0].mxu0
        %4453 = vmatprep.mubr.bf16.mxu0 %v3315
        %4454 = vmatmul.mubr.bf16.gmra.mrb[0].mxu0 %v3267
        %v4455 = vpop.f32.mrb[0].mxu0
        %v4456 = vadd.f32 %v4295, %v4455
        %v4457 = vpop.f32.mrb[0].mxu0
        %v4458 = vpop.f32.mrb[0].mxu0
        %v4459 = vadd.f32 %v4298, %v4458
        %v4460 = vpop.f32.mrb[0].mxu0
        %4461 = vmatprep.mubr.bf16.mxu0 %v3316
        %4462 = vmatmul.mubr.bf16.gmra.mrb[0].mxu0 %v3268
        %v4463 = vpop.f32.mrb[0].mxu0
        %v4464 = vadd.f32 %v4303, %v4463
        %v4465 = vpop.f32.mrb[0].mxu0
        %v4466 = vpop.f32.mrb[0].mxu0
        %v4467 = vadd.f32 %v4306, %v4466
        %v4468 = vpop.f32.mrb[0].mxu0
        %4469 = vmatprep.mubr.bf16.mxu0 %v3317
        %4470 = vmatmul.mubr.bf16.gmra.mrb[0].mxu0 %v3269
        %v4471 = vpop.f32.mrb[0].mxu0
        %v4472 = vadd.f32 %v4311, %v4471
        %v4473 = vpop.f32.mrb[0].mxu0
        %v4474 = vpop.f32.mrb[0].mxu0
        %v4475 = vadd.f32 %v4314, %v4474
        %v4476 = vpop.f32.mrb[0].mxu0
        %4477 = vmatprep.mubr.bf16.mxu0 %v3318
        %4478 = vmatmul.mubr.bf16.gmra.mrb[0].mxu0 %v3270
        %v4479 = vpop.f32.mrb[0].mxu0
        %v4480 = vadd.f32 %v4319, %v4479
        %v4481 = vpop.f32.mrb[0].mxu0
        %v4482 = vpop.f32.mrb[0].mxu0
        %v4483 = vadd.f32 %v4322, %v4482
        %v4484 = vpop.f32.mrb[0].mxu0
        %4485 = vmatprep.mubr.bf16.mxu0 %v3319
        %4486 = vmatmul.mubr.bf16.gmra.mrb[0].mxu0 %v3271
        %v4487 = vpop.f32.mrb[0].mxu0
        %v4488 = vadd.f32 %v4327, %v4487
        %v4489 = vpop.f32.mrb[0].mxu0
        %v4490 = vpop.f32.mrb[0].mxu0
        %v4491 = vadd.f32 %v4330, %v4490
        %v4492 = vpop.f32.mrb[0].mxu0
        %4493 = vmatprep.mubr.bf16.mxu0 %v3320
        %4494 = vmatmul.mubr.bf16.gmra.mrb[0].mxu0 %v3272
        %v4495 = vpop.f32.mrb[0].mxu0
        %v4496 = vadd.f32 %v4335, %v4495
        %v4497 = vpop.f32.mrb[0].mxu0
        %v4498 = vpop.f32.mrb[0].mxu0
        %v4499 = vadd.f32 %v4338, %v4498
        %v4500 = vpop.f32.mrb[0].mxu0
        %4501 = vmatprep.mubr.bf16.mxu0 %v3321
        %4502 = vmatmul.mubr.bf16.gmra.mrb[0].mxu0 %v3273
        %v4503 = vpop.f32.mrb[0].mxu0
        %v4504 = vadd.f32 %v4343, %v4503
        %v4505 = vpop.f32.mrb[0].mxu0
        %v4506 = vpop.f32.mrb[0].mxu0
        %v4507 = vadd.f32 %v4346, %v4506
        %v4508 = vpop.f32.mrb[0].mxu0
        %4509 = vmatprep.mubr.bf16.mxu0 %v3322
        %4510 = vmatmul.mubr.bf16.gmra.mrb[0].mxu0 %v3274
        %v4511 = vpop.f32.mrb[0].mxu0
        %v4512 = vadd.f32 %v4351, %v4511
        %v4513 = vpop.f32.mrb[0].mxu0
        %v4514 = vpop.f32.mrb[0].mxu0
        %v4515 = vadd.f32 %v4354, %v4514
        %v4516 = vpop.f32.mrb[0].mxu0
        %4517 = vmatprep.mubr.bf16.mxu0 %v3323
        %4518 = vmatmul.mubr.bf16.gmra.mrb[0].mxu0 %v3275
        %v4519 = vpop.f32.mrb[0].mxu0
        %v4520 = vadd.f32 %v4359, %v4519
        %v4521 = vpop.f32.mrb[0].mxu0
        %v4522 = vpop.f32.mrb[0].mxu0
        %v4523 = vadd.f32 %v4362, %v4522
        %v4524 = vpop.f32.mrb[0].mxu0
        %4525 = vmatprep.mubr.bf16.mxu0 %v3324
        %4526 = vmatmul.mubr.bf16.gmra.mrb[0].mxu0 %v3276
        %v4527 = vpop.f32.mrb[0].mxu0
        %v4528 = vadd.f32 %v4367, %v4527
        %v4529 = vpop.f32.mrb[0].mxu0
        %v4530 = vpop.f32.mrb[0].mxu0
        %v4531 = vadd.f32 %v4370, %v4530
        %v4532 = vpop.f32.mrb[0].mxu0
        %4533 = vdwg.mxu0
        %4534 = vmatprep.subr.bf16.mxu0 0
        %4535 = vmatpush1.bf16.msra.mxu0 %v3955
        %4536 = vmatprep.subr.bf16.mxu0 0
        %4537 = vmatpush1.bf16.msra.mxu0 %v3956
        %4538 = vmatprep.subr.bf16.mxu0 0
        %4539 = vmatpush1.bf16.msra.mxu0 %v3957
        %4540 = vmatprep.subr.bf16.mxu0 0
        %4541 = vmatpush1.bf16.msra.mxu0 %v3958
        %4542 = vmatprep.subr.bf16.mxu0 0
        %4543 = vmatpush1.bf16.msra.mxu0 %v3959
        %4544 = vmatprep.subr.bf16.mxu0 0
        %4545 = vmatpush1.bf16.msra.mxu0 %v3960
        %4546 = vmatprep.subr.bf16.mxu0 0
        %4547 = vmatpush1.bf16.msra.mxu0 %v3961
        %4548 = vmatprep.subr.bf16.mxu0 0
        %4549 = vmatpush1.bf16.msra.mxu0 %v3962
        %4550 = vmatprep.subr.bf16.mxu0 0
        %4551 = vmatpush1.bf16.msra.mxu0 %v3963
        %4552 = vmatprep.subr.bf16.mxu0 0
        %4553 = vmatpush1.bf16.msra.mxu0 %v3964
        %4554 = vmatprep.subr.bf16.mxu0 0
        %4555 = vmatpush1.bf16.msra.mxu0 %v3965
        %4556 = vmatprep.subr.bf16.mxu0 0
        %4557 = vmatpush1.bf16.msra.mxu0 %v3966
        %4558 = vmatprep.subr.bf16.mxu0 0
        %4559 = vmatpush1.bf16.msra.mxu0 %v3967
        %4560 = vmatprep.subr.bf16.mxu0 0
        %4561 = vmatpush1.bf16.msra.mxu0 %v3968
        %4562 = vmatprep.subr.bf16.mxu0 0
        %4563 = vmatpush1.bf16.msra.mxu0 %v3969
        %4564 = vmatprep.subr.bf16.mxu0 0
        %4565 = vmatpush1.bf16.msra.mxu0 %v3970
        %4566 = vmatprep.mubr.bf16.mxu0 %v3405
        %4567 = vmatmul.mubr.bf16.gmra.mrb[0].mxu0 %v3357
        %v4568 = vpop.f32.mrb[0].mxu0
        %v4569 = vadd.f32 %v4408, %v4568
        %v4570 = vpop.f32.mrb[0].mxu0
        %v4571 = vpop.f32.mrb[0].mxu0
        %v4572 = vadd.f32 %v4411, %v4571
        %v4573 = vpop.f32.mrb[0].mxu0
        %4574 = vmatprep.mubr.bf16.mxu0 %v3406
        %4575 = vmatmul.mubr.bf16.gmra.mrb[0].mxu0 %v3358
        %v4576 = vpop.f32.mrb[0].mxu0
        %v4577 = vadd.f32 %v4416, %v4576
        %v4578 = vpop.f32.mrb[0].mxu0
        %v4579 = vpop.f32.mrb[0].mxu0
        %v4580 = vadd.f32 %v4419, %v4579
        %v4581 = vpop.f32.mrb[0].mxu0
        %4582 = vmatprep.mubr.bf16.mxu0 %v3407
        %4583 = vmatmul.mubr.bf16.gmra.mrb[0].mxu0 %v3359
        %v4584 = vpop.f32.mrb[0].mxu0
        %v4585 = vadd.f32 %v4424, %v4584
        %v4586 = vpop.f32.mrb[0].mxu0
        %v4587 = vpop.f32.mrb[0].mxu0
        %v4588 = vadd.f32 %v4427, %v4587
        %v4589 = vpop.f32.mrb[0].mxu0
        %4590 = vmatprep.mubr.bf16.mxu0 %v3408
        %4591 = vmatmul.mubr.bf16.gmra.mrb[0].mxu0 %v3360
        %v4592 = vpop.f32.mrb[0].mxu0
        %v4593 = vadd.f32 %v4432, %v4592
        %v4594 = vpop.f32.mrb[0].mxu0
        %v4595 = vpop.f32.mrb[0].mxu0
        %v4596 = vadd.f32 %v4435, %v4595
        %v4597 = vpop.f32.mrb[0].mxu0
        %4598 = vmatprep.mubr.bf16.mxu0 %v3409
        %4599 = vmatmul.mubr.bf16.gmra.mrb[0].mxu0 %v3361
        %v4600 = vpop.f32.mrb[0].mxu0
        %v4601 = vadd.f32 %v4440, %v4600
        %v4602 = vpop.f32.mrb[0].mxu0
        %v4603 = vpop.f32.mrb[0].mxu0
        %v4604 = vadd.f32 %v4443, %v4603
        %v4605 = vpop.f32.mrb[0].mxu0
        %4606 = vmatprep.mubr.bf16.mxu0 %v3410
        %4607 = vmatmul.mubr.bf16.gmra.mrb[0].mxu0 %v3362
        %v4608 = vpop.f32.mrb[0].mxu0
        %v4609 = vadd.f32 %v4448, %v4608
        %v4610 = vpop.f32.mrb[0].mxu0
        %v4611 = vpop.f32.mrb[0].mxu0
        %v4612 = vadd.f32 %v4451, %v4611
        %v4613 = vpop.f32.mrb[0].mxu0
        %4614 = vmatprep.mubr.bf16.mxu0 %v3411
        %4615 = vmatmul.mubr.bf16.gmra.mrb[0].mxu0 %v3363
        %v4616 = vpop.f32.mrb[0].mxu0
        %v4617 = vadd.f32 %v4456, %v4616
        %v4618 = vpop.f32.mrb[0].mxu0
        %v4619 = vpop.f32.mrb[0].mxu0
        %v4620 = vadd.f32 %v4459, %v4619
        %v4621 = vpop.f32.mrb[0].mxu0
        %4622 = vmatprep.mubr.bf16.mxu0 %v3412
        %4623 = vmatmul.mubr.bf16.gmra.mrb[0].mxu0 %v3364
        %v4624 = vpop.f32.mrb[0].mxu0
        %v4625 = vadd.f32 %v4464, %v4624
        %v4626 = vpop.f32.mrb[0].mxu0
        %v4627 = vpop.f32.mrb[0].mxu0
        %v4628 = vadd.f32 %v4467, %v4627
        %v4629 = vpop.f32.mrb[0].mxu0
        %4630 = vmatprep.mubr.bf16.mxu0 %v3413
        %4631 = vmatmul.mubr.bf16.gmra.mrb[0].mxu0 %v3365
        %v4632 = vpop.f32.mrb[0].mxu0
        %v4633 = vadd.f32 %v4472, %v4632
        %v4634 = vpop.f32.mrb[0].mxu0
        %v4635 = vpop.f32.mrb[0].mxu0
        %v4636 = vadd.f32 %v4475, %v4635
        %v4637 = vpop.f32.mrb[0].mxu0
        %4638 = vmatprep.mubr.bf16.mxu0 %v3414
        %4639 = vmatmul.mubr.bf16.gmra.mrb[0].mxu0 %v3366
        %v4640 = vpop.f32.mrb[0].mxu0
        %v4641 = vadd.f32 %v4480, %v4640
        %v4642 = vpop.f32.mrb[0].mxu0
        %v4643 = vpop.f32.mrb[0].mxu0
        %v4644 = vadd.f32 %v4483, %v4643
        %v4645 = vpop.f32.mrb[0].mxu0
        %4646 = vmatprep.mubr.bf16.mxu0 %v3415
        %4647 = vmatmul.mubr.bf16.gmra.mrb[0].mxu0 %v3367
        %v4648 = vpop.f32.mrb[0].mxu0
        %v4649 = vadd.f32 %v4488, %v4648
        %v4650 = vpop.f32.mrb[0].mxu0
        %v4651 = vpop.f32.mrb[0].mxu0
        %v4652 = vadd.f32 %v4491, %v4651
        %v4653 = vpop.f32.mrb[0].mxu0
        %4654 = vmatprep.mubr.bf16.mxu0 %v3416
        %4655 = vmatmul.mubr.bf16.gmra.mrb[0].mxu0 %v3368
        %v4656 = vpop.f32.mrb[0].mxu0
        %v4657 = vadd.f32 %v4496, %v4656
        %v4658 = vpop.f32.mrb[0].mxu0
        %v4659 = vpop.f32.mrb[0].mxu0
        %v4660 = vadd.f32 %v4499, %v4659
        %v4661 = vpop.f32.mrb[0].mxu0
        %4662 = vmatprep.mubr.bf16.mxu0 %v3417
        %4663 = vmatmul.mubr.bf16.gmra.mrb[0].mxu0 %v3369
        %v4664 = vpop.f32.mrb[0].mxu0
        %v4665 = vadd.f32 %v4504, %v4664
        %v4666 = vpop.f32.mrb[0].mxu0
        %v4667 = vpop.f32.mrb[0].mxu0
        %v4668 = vadd.f32 %v4507, %v4667
        %v4669 = vpop.f32.mrb[0].mxu0
        %4670 = vmatprep.mubr.bf16.mxu0 %v3418
        %4671 = vmatmul.mubr.bf16.gmra.mrb[0].mxu0 %v3370
        %v4672 = vpop.f32.mrb[0].mxu0
        %v4673 = vadd.f32 %v4512, %v4672
        %v4674 = vpop.f32.mrb[0].mxu0
        %v4675 = vpop.f32.mrb[0].mxu0
        %v4676 = vadd.f32 %v4515, %v4675
        %v4677 = vpop.f32.mrb[0].mxu0
        %4678 = vmatprep.mubr.bf16.mxu0 %v3419
        %4679 = vmatmul.mubr.bf16.gmra.mrb[0].mxu0 %v3371
        %v4680 = vpop.f32.mrb[0].mxu0
        %v4681 = vadd.f32 %v4520, %v4680
        %v4682 = vpop.f32.mrb[0].mxu0
        %v4683 = vpop.f32.mrb[0].mxu0
        %v4684 = vadd.f32 %v4523, %v4683
        %v4685 = vpop.f32.mrb[0].mxu0
        %4686 = vmatprep.mubr.bf16.mxu0 %v3420
        %4687 = vmatmul.mubr.bf16.gmra.mrb[0].mxu0 %v3372
        %v4688 = vpop.f32.mrb[0].mxu0
        %v4689 = vadd.f32 %v4528, %v4688
        %v4690 = vpop.f32.mrb[0].mxu0
        %v4691 = vpop.f32.mrb[0].mxu0
        %v4692 = vadd.f32 %v4531, %v4691
        %v4693 = vpop.f32.mrb[0].mxu0
        %4694 = vdwg.mxu0
        %4695 = vmatprep.subr.bf16.mxu0 0
        %4696 = vmatpush1.bf16.msra.mxu0 %v3971
        %4697 = vmatprep.subr.bf16.mxu0 0
        %4698 = vmatpush1.bf16.msra.mxu0 %v3972
        %4699 = vmatprep.subr.bf16.mxu0 0
        %4700 = vmatpush1.bf16.msra.mxu0 %v3973
        %4701 = vmatprep.subr.bf16.mxu0 0
        %4702 = vmatpush1.bf16.msra.mxu0 %v3974
        %4703 = vmatprep.subr.bf16.mxu0 0
        %4704 = vmatpush1.bf16.msra.mxu0 %v3975
        %4705 = vmatprep.subr.bf16.mxu0 0
        %4706 = vmatpush1.bf16.msra.mxu0 %v3976
        %4707 = vmatprep.subr.bf16.mxu0 0
        %4708 = vmatpush1.bf16.msra.mxu0 %v3977
        %4709 = vmatprep.subr.bf16.mxu0 0
        %4710 = vmatpush1.bf16.msra.mxu0 %v3978
        %4711 = vmatprep.subr.bf16.mxu0 0
        %4712 = vmatpush1.bf16.msra.mxu0 0
        %4713 = vmatprep.subr.bf16.mxu0 0
        %4714 = vmatpush1.bf16.msra.mxu0 0
        %4715 = vmatprep.subr.bf16.mxu0 0
        %4716 = vmatpush1.bf16.msra.mxu0 0
        %4717 = vmatprep.subr.bf16.mxu0 0
        %4718 = vmatpush1.bf16.msra.mxu0 0
        %4719 = vmatprep.subr.bf16.mxu0 0
        %4720 = vmatpush1.bf16.msra.mxu0 0
        %4721 = vmatprep.subr.bf16.mxu0 0
        %4722 = vmatpush1.bf16.msra.mxu0 0
        %4723 = vmatprep.subr.bf16.mxu0 0
        %4724 = vmatpush1.bf16.msra.mxu0 0
        %4725 = vmatprep.subr.bf16.mxu0 0
        %4726 = vmatpush1.bf16.msra.mxu0 0
        %4727 = vmatprep.mubr.bf16.mxu0 0
        %4728 = vmatmul.mubr.bf16.gmra.mrb[0].mxu0 %v3453
        %v4729 = vpop.f32.mrb[0].mxu0
        %v4730 = vadd.f32 %v4569, %v4729
        %v4731 = vpop.f32.mrb[0].mxu0
        %v4732 = vpop.f32.mrb[0].mxu0
        %v4733 = vadd.f32 %v4572, %v4732
        %v4734 = vpop.f32.mrb[0].mxu0
        %4735 = vmatprep.mubr.bf16.mxu0 0
        %4736 = vmatmul.mubr.bf16.gmra.mrb[0].mxu0 %v3454
        %v4737 = vpop.f32.mrb[0].mxu0
        %v4738 = vadd.f32 %v4577, %v4737
        %v4739 = vpop.f32.mrb[0].mxu0
        %v4740 = vpop.f32.mrb[0].mxu0
        %v4741 = vadd.f32 %v4580, %v4740
        %v4742 = vpop.f32.mrb[0].mxu0
        %4743 = vmatprep.mubr.bf16.mxu0 0
        %4744 = vmatmul.mubr.bf16.gmra.mrb[0].mxu0 %v3455
        %v4745 = vpop.f32.mrb[0].mxu0
        %v4746 = vadd.f32 %v4585, %v4745
        %v4747 = vpop.f32.mrb[0].mxu0
        %v4748 = vpop.f32.mrb[0].mxu0
        %v4749 = vadd.f32 %v4588, %v4748
        %v4750 = vpop.f32.mrb[0].mxu0
        %4751 = vmatprep.mubr.bf16.mxu0 0
        %4752 = vmatmul.mubr.bf16.gmra.mrb[0].mxu0 %v3456
        %v4753 = vpop.f32.mrb[0].mxu0
        %v4754 = vadd.f32 %v4593, %v4753
        %v4755 = vpop.f32.mrb[0].mxu0
        %v4756 = vpop.f32.mrb[0].mxu0
        %v4757 = vadd.f32 %v4596, %v4756
        %v4758 = vpop.f32.mrb[0].mxu0
        %4759 = vmatprep.mubr.bf16.mxu0 0
        %4760 = vmatmul.mubr.bf16.gmra.mrb[0].mxu0 %v3457
        %v4761 = vpop.f32.mrb[0].mxu0
        %v4762 = vadd.f32 %v4601, %v4761
        %v4763 = vpop.f32.mrb[0].mxu0
        %v4764 = vpop.f32.mrb[0].mxu0
        %v4765 = vadd.f32 %v4604, %v4764
        %v4766 = vpop.f32.mrb[0].mxu0
        %4767 = vmatprep.mubr.bf16.mxu0 0
        %4768 = vmatmul.mubr.bf16.gmra.mrb[0].mxu0 %v3458
        %v4769 = vpop.f32.mrb[0].mxu0
        %v4770 = vadd.f32 %v4609, %v4769
        %v4771 = vpop.f32.mrb[0].mxu0
        %v4772 = vpop.f32.mrb[0].mxu0
        %v4773 = vadd.f32 %v4612, %v4772
        %v4774 = vpop.f32.mrb[0].mxu0
        %4775 = vmatprep.mubr.bf16.mxu0 0
        %4776 = vmatmul.mubr.bf16.gmra.mrb[0].mxu0 %v3459
        %v4777 = vpop.f32.mrb[0].mxu0
        %v4778 = vadd.f32 %v4617, %v4777
        %v4779 = vpop.f32.mrb[0].mxu0
        %v4780 = vpop.f32.mrb[0].mxu0
        %v4781 = vadd.f32 %v4620, %v4780
        %v4782 = vpop.f32.mrb[0].mxu0
        %4783 = vmatprep.mubr.bf16.mxu0 0
        %4784 = vmatmul.mubr.bf16.gmra.mrb[0].mxu0 %v3460
        %v4785 = vpop.f32.mrb[0].mxu0
        %v4786 = vadd.f32 %v4625, %v4785
        %v4787 = vpop.f32.mrb[0].mxu0
        %v4788 = vpop.f32.mrb[0].mxu0
        %v4789 = vadd.f32 %v4628, %v4788
        %v4790 = vpop.f32.mrb[0].mxu0
        %4791 = vmatprep.mubr.bf16.mxu0 0
        %4792 = vmatmul.mubr.bf16.gmra.mrb[0].mxu0 %v3461
        %v4793 = vpop.f32.mrb[0].mxu0
        %v4794 = vadd.f32 %v4633, %v4793
        %v4795 = vpop.f32.mrb[0].mxu0
        %v4796 = vpop.f32.mrb[0].mxu0
        %v4797 = vadd.f32 %v4636, %v4796
        %v4798 = vpop.f32.mrb[0].mxu0
        %4799 = vmatprep.mubr.bf16.mxu0 0
        %4800 = vmatmul.mubr.bf16.gmra.mrb[0].mxu0 %v3462
        %v4801 = vpop.f32.mrb[0].mxu0
        %v4802 = vadd.f32 %v4641, %v4801
        %v4803 = vpop.f32.mrb[0].mxu0
        %v4804 = vpop.f32.mrb[0].mxu0
        %v4805 = vadd.f32 %v4644, %v4804
        %v4806 = vpop.f32.mrb[0].mxu0
        %4807 = vmatprep.mubr.bf16.mxu0 0
        %4808 = vmatmul.mubr.bf16.gmra.mrb[0].mxu0 %v3463
        %v4809 = vpop.f32.mrb[0].mxu0
        %v4810 = vadd.f32 %v4649, %v4809
        %v4811 = vpop.f32.mrb[0].mxu0
        %v4812 = vpop.f32.mrb[0].mxu0
        %v4813 = vadd.f32 %v4652, %v4812
        %v4814 = vpop.f32.mrb[0].mxu0
        %4815 = vmatprep.mubr.bf16.mxu0 0
        %4816 = vmatmul.mubr.bf16.gmra.mrb[0].mxu0 %v3464
        %v4817 = vpop.f32.mrb[0].mxu0
        %v4818 = vadd.f32 %v4657, %v4817
        %v4819 = vpop.f32.mrb[0].mxu0
        %v4820 = vpop.f32.mrb[0].mxu0
        %v4821 = vadd.f32 %v4660, %v4820
        %v4822 = vpop.f32.mrb[0].mxu0
        %4823 = vmatprep.mubr.bf16.mxu0 0
        %4824 = vmatmul.mubr.bf16.gmra.mrb[0].mxu0 %v3465
        %v4825 = vpop.f32.mrb[0].mxu0
        %v4826 = vadd.f32 %v4665, %v4825
        %v4827 = vpop.f32.mrb[0].mxu0
        %v4828 = vpop.f32.mrb[0].mxu0
        %v4829 = vadd.f32 %v4668, %v4828
        %v4830 = vpop.f32.mrb[0].mxu0
        %4831 = vmatprep.mubr.bf16.mxu0 0
        %4832 = vmatmul.mubr.bf16.gmra.mrb[0].mxu0 %v3466
        %v4833 = vpop.f32.mrb[0].mxu0
        %v4834 = vadd.f32 %v4673, %v4833
        %v4835 = vpop.f32.mrb[0].mxu0
        %v4836 = vpop.f32.mrb[0].mxu0
        %v4837 = vadd.f32 %v4676, %v4836
        %v4838 = vpop.f32.mrb[0].mxu0
        %4839 = vmatprep.mubr.bf16.mxu0 0
        %4840 = vmatmul.mubr.bf16.gmra.mrb[0].mxu0 %v3467
        %v4841 = vpop.f32.mrb[0].mxu0
        %v4842 = vadd.f32 %v4681, %v4841
        %v4843 = vpop.f32.mrb[0].mxu0
        %v4844 = vpop.f32.mrb[0].mxu0
        %v4845 = vadd.f32 %v4684, %v4844
        %v4846 = vpop.f32.mrb[0].mxu0
        %4847 = vmatprep.mubr.bf16.mxu0 0
        %4848 = vmatmul.mubr.bf16.gmra.mrb[0].mxu0 %v3468
        %v4849 = vpop.f32.mrb[0].mxu0
        %v4850 = vadd.f32 %v4689, %v4849
        %v4851 = vpop.f32.mrb[0].mxu0
        %v4852 = vpop.f32.mrb[0].mxu0
        %v4853 = vadd.f32 %v4692, %v4852
        %v4854 = vpop.f32.mrb[0].mxu0
        %4855 = vdwg.mxu0
        %v4856 = vld [vmem:[%s4 + $0x2] sm:$0x1]
        %vm4857 = vcmp.ge.f32.partialorder %v4730, 0.0
        %vm4858 = vcmp.ge.f32.partialorder %v4733, 0.0
        %vm4859 = vcmp.ge.f32.partialorder %v4738, 0.0
        %vm4860 = vcmp.ge.f32.partialorder %v4741, 0.0
        %vm4861 = vcmp.ge.f32.partialorder %v4746, 0.0
        %vm4862 = vcmp.ge.f32.partialorder %v4749, 0.0
        %vm4863 = vcmp.ge.f32.partialorder %v4754, 0.0
        %vm4864 = vcmp.ge.f32.partialorder %v4757, 0.0
        %vm4865 = vcmp.ge.f32.partialorder %v4762, 0.0
        %vm4866 = vcmp.ge.f32.partialorder %v4765, 0.0
        %vm4867 = vcmp.ge.f32.partialorder %v4770, 0.0
        %vm4868 = vcmp.ge.f32.partialorder %v4773, 0.0
        %vm4869 = vcmp.ge.f32.partialorder %v4778, 0.0
        %vm4870 = vcmp.ge.f32.partialorder %v4781, 0.0
        %vm4871 = vcmp.ge.f32.partialorder %v4786, 0.0
        %vm4872 = vcmp.ge.f32.partialorder %v4789, 0.0
        %vm4873 = vcmp.ge.f32.partialorder %v4794, 0.0
        %vm4874 = vcmp.ge.f32.partialorder %v4797, 0.0
        %vm4875 = vcmp.ge.f32.partialorder %v4802, 0.0
        %vm4876 = vcmp.ge.f32.partialorder %v4805, 0.0
        %vm4877 = vcmp.ge.f32.partialorder %v4810, 0.0
        %vm4878 = vcmp.ge.f32.partialorder %v4813, 0.0
        %vm4879 = vcmp.ge.f32.partialorder %v4818, 0.0
        %vm4880 = vcmp.ge.f32.partialorder %v4821, 0.0
        %vm4881 = vcmp.ge.f32.partialorder %v4826, 0.0
        %vm4882 = vcmp.ge.f32.partialorder %v4829, 0.0
        %vm4883 = vcmp.ge.f32.partialorder %v4834, 0.0
        %vm4884 = vcmp.ge.f32.partialorder %v4837, 0.0
        %vm4885 = vcmp.ge.f32.partialorder %v4842, 0.0
        %vm4886 = vcmp.ge.f32.partialorder %v4845, 0.0
        %vm4887 = vcmp.ge.f32.partialorder %v4850, 0.0
        %vm4888 = vcmp.ge.f32.partialorder %v4853, 0.0
        %v4889 = vlaneseq
        %v4890 = vshrl.u32 %v4889, 7
        %v4891 = vsub.s32 0, %v4890
        %v4892 = vrot.slane %v4856, %v4891
        %v4893 = vmul.f32 %v4730, %v4892
        %v4894 = vmul.f32 %v4733, %v4892
        %v4895 = vmul.f32 %v4738, %v4892
        %v4896 = vmul.f32 %v4741, %v4892
        %v4897 = vmul.f32 %v4746, %v4892
        %v4898 = vmul.f32 %v4749, %v4892
        %v4899 = vmul.f32 %v4754, %v4892
        %v4900 = vmul.f32 %v4757, %v4892
        %v4901 = vmul.f32 %v4762, %v4892
        %v4902 = vmul.f32 %v4765, %v4892
        %v4903 = vmul.f32 %v4770, %v4892
        %v4904 = vmul.f32 %v4773, %v4892
        %v4905 = vmul.f32 %v4778, %v4892
        %v4906 = vmul.f32 %v4781, %v4892
        %v4907 = vmul.f32 %v4786, %v4892
        %v4908 = vmul.f32 %v4789, %v4892
        %v4909 = vmul.f32 %v4794, %v4892
        %v4910 = vmul.f32 %v4797, %v4892
        %v4911 = vmul.f32 %v4802, %v4892
        %v4912 = vmul.f32 %v4805, %v4892
        %v4913 = vmul.f32 %v4810, %v4892
        %v4914 = vmul.f32 %v4813, %v4892
        %v4915 = vmul.f32 %v4818, %v4892
        %v4916 = vmul.f32 %v4821, %v4892
        %v4917 = vmul.f32 %v4826, %v4892
        %v4918 = vmul.f32 %v4829, %v4892
        %v4919 = vmul.f32 %v4834, %v4892
        %v4920 = vmul.f32 %v4837, %v4892
        %v4921 = vmul.f32 %v4842, %v4892
        %v4922 = vmul.f32 %v4845, %v4892
        %v4923 = vmul.f32 %v4850, %v4892
        %v4924 = vmul.f32 %v4853, %v4892
        %v4925 = vsel %vm4857, %v4730, %v4893
        %v4926 = vsel %vm4858, %v4733, %v4894
        %v4927 = vsel %vm4859, %v4738, %v4895
        %v4928 = vsel %vm4860, %v4741, %v4896
        %v4929 = vsel %vm4861, %v4746, %v4897
        %v4930 = vsel %vm4862, %v4749, %v4898
        %v4931 = vsel %vm4863, %v4754, %v4899
        %v4932 = vsel %vm4864, %v4757, %v4900
        %v4933 = vsel %vm4865, %v4762, %v4901
        %v4934 = vsel %vm4866, %v4765, %v4902
        %v4935 = vsel %vm4867, %v4770, %v4903
        %v4936 = vsel %vm4868, %v4773, %v4904
        %v4937 = vsel %vm4869, %v4778, %v4905
        %v4938 = vsel %vm4870, %v4781, %v4906
        %v4939 = vsel %vm4871, %v4786, %v4907
        %v4940 = vsel %vm4872, %v4789, %v4908
        %v4941 = vsel %vm4873, %v4794, %v4909
        %v4942 = vsel %vm4874, %v4797, %v4910
        %v4943 = vsel %vm4875, %v4802, %v4911
        %v4944 = vsel %vm4876, %v4805, %v4912
        %v4945 = vsel %vm4877, %v4810, %v4913
        %v4946 = vsel %vm4878, %v4813, %v4914
        %v4947 = vsel %vm4879, %v4818, %v4915
        %v4948 = vsel %vm4880, %v4821, %v4916
        %v4949 = vsel %vm4881, %v4826, %v4917
        %v4950 = vsel %vm4882, %v4829, %v4918
        %v4951 = vsel %vm4883, %v4834, %v4919
        %v4952 = vsel %vm4884, %v4837, %v4920
        %v4953 = vsel %vm4885, %v4842, %v4921
        %v4954 = vsel %vm4886, %v4845, %v4922
        %v4955 = vsel %vm4887, %v4850, %v4923
        %v4956 = vsel %vm4888, %v4853, %v4924
        %v4957 = vadd.f32 %v764, %v4925
        %v4958 = vadd.f32 %v765, %v4926
        %v4959 = vadd.f32 %v766, %v4927
        %v4960 = vadd.f32 %v767, %v4928
        %v4961 = vadd.f32 %v768, %v4929
        %v4962 = vadd.f32 %v769, %v4930
        %v4963 = vadd.f32 %v770, %v4931
        %v4964 = vadd.f32 %v771, %v4932
        %v4965 = vadd.f32 %v772, %v4933
        %v4966 = vadd.f32 %v773, %v4934
        %v4967 = vadd.f32 %v774, %v4935
        %v4968 = vadd.f32 %v775, %v4936
        %v4969 = vadd.f32 %v776, %v4937
        %v4970 = vadd.f32 %v777, %v4938
        %v4971 = vadd.f32 %v778, %v4939
        %v4972 = vadd.f32 %v779, %v4940
        %v4973 = vadd.f32 %v780, %v4941
        %v4974 = vadd.f32 %v781, %v4942
        %v4975 = vadd.f32 %v782, %v4943
        %v4976 = vadd.f32 %v783, %v4944
        %v4977 = vadd.f32 %v784, %v4945
        %v4978 = vadd.f32 %v785, %v4946
        %v4979 = vadd.f32 %v786, %v4947
        %v4980 = vadd.f32 %v787, %v4948
        %v4981 = vadd.f32 %v788, %v4949
        %v4982 = vadd.f32 %v789, %v4950
        %v4983 = vadd.f32 %v790, %v4951
        %v4984 = vadd.f32 %v791, %v4952
        %v4985 = vadd.f32 %v792, %v4953
        %v4986 = vadd.f32 %v793, %v4954
        %v4987 = vadd.f32 %v794, %v4955
        %v4988 = vadd.f32 %v795, %v4956
        %v4989 = vrot.slane %v4957, 7
        %v4990 = vrot.slane %v4958, 7
        %v4991 = vrot.slane %v4959, 7
        %v4992 = vrot.slane %v4960, 7
        %v4993 = vrot.slane %v4961, 7
        %v4994 = vrot.slane %v4962, 7
        %v4995 = vrot.slane %v4963, 7
        %v4996 = vrot.slane %v4964, 7
        %v4997 = vrot.slane %v4965, 7
        %v4998 = vrot.slane %v4966, 7
        %v4999 = vrot.slane %v4967, 7
        %v5000 = vrot.slane %v4968, 7
        %v5001 = vrot.slane %v4969, 7
        %v5002 = vrot.slane %v4970, 7
        %v5003 = vrot.slane %v4971, 7
        %v5004 = vrot.slane %v4972, 7
        %v5005 = vrot.slane %v4973, 7
        %v5006 = vrot.slane %v4974, 7
        %v5007 = vrot.slane %v4975, 7
        %v5008 = vrot.slane %v4976, 7
        %v5009 = vrot.slane %v4977, 7
        %v5010 = vrot.slane %v4978, 7
        %v5011 = vrot.slane %v4979, 7
        %v5012 = vrot.slane %v4980, 7
        %v5013 = vrot.slane %v4981, 7
        %v5014 = vrot.slane %v4982, 7
        %v5015 = vrot.slane %v4983, 7
        %v5016 = vrot.slane %v4984, 7
        %v5017 = vrot.slane %v4985, 7
        %v5018 = vrot.slane %v4986, 7
        %v5019 = vrot.slane %v4987, 7
        %v5020 = vrot.slane %v4988, 7
        %v5021 = vsel %vm828, %v5019, %v5020
        %v5022 = vsel %vm828, %v5018, %v5019
        %v5023 = vsel %vm828, %v5017, %v5018
        %v5024 = vsel %vm828, %v5016, %v5017
        %v5025 = vsel %vm828, %v5015, %v5016
        %v5026 = vsel %vm828, %v5014, %v5015
        %v5027 = vsel %vm828, %v5013, %v5014
        %v5028 = vsel %vm828, %v5012, %v5013
        %v5029 = vsel %vm828, %v5011, %v5012
        %v5030 = vsel %vm828, %v5010, %v5011
        %v5031 = vsel %vm828, %v5009, %v5010
        %v5032 = vsel %vm828, %v5008, %v5009
        %v5033 = vsel %vm828, %v5007, %v5008
        %v5034 = vsel %vm828, %v5006, %v5007
        %v5035 = vsel %vm828, %v5005, %v5006
        %v5036 = vsel %vm828, %v5004, %v5005
        %v5037 = vsel %vm828, %v5003, %v5004
        %v5038 = vsel %vm828, %v5002, %v5003
        %v5039 = vsel %vm828, %v5001, %v5002
        %v5040 = vsel %vm828, %v5000, %v5001
        %v5041 = vsel %vm828, %v4999, %v5000
        %v5042 = vsel %vm828, %v4998, %v4999
        %v5043 = vsel %vm828, %v4997, %v4998
        %v5044 = vsel %vm828, %v4996, %v4997
        %v5045 = vsel %vm828, %v4995, %v4996
        %v5046 = vsel %vm828, %v4994, %v4995
        %v5047 = vsel %vm828, %v4993, %v4994
        %v5048 = vsel %vm828, %v4992, %v4993
        %v5049 = vsel %vm828, %v4991, %v4992
        %v5050 = vsel %vm828, %v4990, %v4991
        %v5051 = vsel %vm828, %v4989, %v4990
        %v5052 = vsel %vm828, %v5020, %v4989
        %v5053 = vsel %vm861, %v5022, 0.0
        %v5054 = vsel %vm862, %v5021, 0.0
        %v5055 = vsel %vm863, %v5052, 0.0
        %v5056 = vsel %vm864, %v5051, 0.0
        %v5057 = vsel %vm865, %v5050, 0.0
        %v5058 = vsel %vm866, %v5049, 0.0
        %v5059 = vsel %vm867, %v5048, 0.0
        %v5060 = vsel %vm868, %v5047, 0.0
        %v5061 = vsel %vm869, %v5046, 0.0
        %v5062 = vsel %vm870, %v5045, 0.0
        %v5063 = vsel %vm871, %v5044, 0.0
        %v5064 = vsel %vm872, %v5043, 0.0
        %v5065 = vsel %vm873, %v5042, 0.0
        %v5066 = vsel %vm874, %v5041, 0.0
        %v5067 = vsel %vm875, %v5040, 0.0
        %v5068 = vsel %vm876, %v5039, 0.0
        %v5069 = vsel %vm877, %v5038, 0.0
        %v5070 = vsel %vm878, %v5037, 0.0
        %v5071 = vsel %vm879, %v5036, 0.0
        %v5072 = vsel %vm880, %v5035, 0.0
        %v5073 = vsel %vm881, %v5034, 0.0
        %v5074 = vsel %vm882, %v5033, 0.0
        %v5075 = vsel %vm883, %v5032, 0.0
        %v5076 = vsel %vm884, %v5031, 0.0
        %v5077 = vsel %vm885, %v5030, 0.0
        %v5078 = vsel %vm886, %v5029, 0.0
        %v5079 = vsel %vm887, %v5028, 0.0
        %v5080 = vsel %vm888, %v5027, 0.0
        %v5081 = vsel %vm889, %v5026, 0.0
        %v5082 = vsel %vm890, %v5025, 0.0
        %v5083 = vsel %vm891, %v5024, 0.0
        %v5084 = vsel %vm892, %v5023, 0.0
        %v5085 = vpack.c.bf16 %v5054, %v5053
        %v5086 = vpack.c.bf16 %v5056, %v5055
        %v5087 = vpack.c.bf16 %v5058, %v5057
        %v5088 = vpack.c.bf16 %v5060, %v5059
        %v5089 = vpack.c.bf16 %v5062, %v5061
        %v5090 = vpack.c.bf16 %v5064, %v5063
        %v5091 = vpack.c.bf16 %v5066, %v5065
        %v5092 = vpack.c.bf16 %v5068, %v5067
        %v5093 = vpack.c.bf16 %v5070, %v5069
        %v5094 = vpack.c.bf16 %v5072, %v5071
        %v5095 = vpack.c.bf16 %v5074, %v5073
        %v5096 = vpack.c.bf16 %v5076, %v5075
        %v5097 = vpack.c.bf16 %v5078, %v5077
        %v5098 = vpack.c.bf16 %v5080, %v5079
        %v5099 = vpack.c.bf16 %v5082, %v5081
        %v5100 = vpack.c.bf16 %v5084, %v5083
        %v5101 = vsel %vm289, %v4987, 0.0
        %v5102 = vsel %vm290, %v4988, 0.0
        %v5103 = vsel %vm291, %v4957, 0.0
        %v5104 = vsel %vm292, %v4958, 0.0
        %v5105 = vsel %vm293, %v4959, 0.0
        %v5106 = vsel %vm294, %v4960, 0.0
        %v5107 = vsel %vm295, %v4961, 0.0
        %v5108 = vsel %vm296, %v4962, 0.0
        %v5109 = vsel %vm297, %v4963, 0.0
        %v5110 = vsel %vm298, %v4964, 0.0
        %v5111 = vsel %vm299, %v4965, 0.0
        %v5112 = vsel %vm300, %v4966, 0.0
        %v5113 = vsel %vm301, %v4967, 0.0
        %v5114 = vsel %vm302, %v4968, 0.0
        %v5115 = vsel %vm303, %v4969, 0.0
        %v5116 = vsel %vm304, %v4970, 0.0
        %v5117 = vsel %vm305, %v4971, 0.0
        %v5118 = vsel %vm306, %v4972, 0.0
        %v5119 = vsel %vm307, %v4973, 0.0
        %v5120 = vsel %vm308, %v4974, 0.0
        %v5121 = vsel %vm309, %v4975, 0.0
        %v5122 = vsel %vm310, %v4976, 0.0
        %v5123 = vsel %vm311, %v4977, 0.0
        %v5124 = vsel %vm312, %v4978, 0.0
        %v5125 = vsel %vm313, %v4979, 0.0
        %v5126 = vsel %vm314, %v4980, 0.0
        %v5127 = vsel %vm315, %v4981, 0.0
        %v5128 = vsel %vm316, %v4982, 0.0
        %v5129 = vsel %vm317, %v4983, 0.0
        %v5130 = vsel %vm318, %v4984, 0.0
        %v5131 = vsel %vm319, %v4985, 0.0
        %v5132 = vsel %vm320, %v4986, 0.0
        %v5133 = vpack.c.bf16 %v5102, %v5101
        %v5134 = vpack.c.bf16 %v5104, %v5103
        %v5135 = vpack.c.bf16 %v5106, %v5105
        %v5136 = vpack.c.bf16 %v5108, %v5107
        %v5137 = vpack.c.bf16 %v5110, %v5109
        %v5138 = vpack.c.bf16 %v5112, %v5111
        %v5139 = vpack.c.bf16 %v5114, %v5113
        %v5140 = vpack.c.bf16 %v5116, %v5115
        %v5141 = vpack.c.bf16 %v5118, %v5117
        %v5142 = vpack.c.bf16 %v5120, %v5119
        %v5143 = vpack.c.bf16 %v5122, %v5121
        %v5144 = vpack.c.bf16 %v5124, %v5123
        %v5145 = vpack.c.bf16 %v5126, %v5125
        %v5146 = vpack.c.bf16 %v5128, %v5127
        %v5147 = vpack.c.bf16 %v5130, %v5129
        %v5148 = vpack.c.bf16 %v5132, %v5131
        %v5149 = vrot.slane %v4957, 1
        %v5150 = vrot.slane %v4958, 1
        %v5151 = vrot.slane %v4959, 1
        %v5152 = vrot.slane %v4960, 1
        %v5153 = vrot.slane %v4961, 1
        %v5154 = vrot.slane %v4962, 1
        %v5155 = vrot.slane %v4963, 1
        %v5156 = vrot.slane %v4964, 1
        %v5157 = vrot.slane %v4965, 1
        %v5158 = vrot.slane %v4966, 1
        %v5159 = vrot.slane %v4967, 1
        %v5160 = vrot.slane %v4968, 1
        %v5161 = vrot.slane %v4969, 1
        %v5162 = vrot.slane %v4970, 1
        %v5163 = vrot.slane %v4971, 1
        %v5164 = vrot.slane %v4972, 1
        %v5165 = vrot.slane %v4973, 1
        %v5166 = vrot.slane %v4974, 1
        %v5167 = vrot.slane %v4975, 1
        %v5168 = vrot.slane %v4976, 1
        %v5169 = vrot.slane %v4977, 1
        %v5170 = vrot.slane %v4978, 1
        %v5171 = vrot.slane %v4979, 1
        %v5172 = vrot.slane %v4980, 1
        %v5173 = vrot.slane %v4981, 1
        %v5174 = vrot.slane %v4982, 1
        %v5175 = vrot.slane %v4983, 1
        %v5176 = vrot.slane %v4984, 1
        %v5177 = vrot.slane %v4985, 1
        %v5178 = vrot.slane %v4986, 1
        %v5179 = vrot.slane %v4987, 1
        %v5180 = vrot.slane %v4988, 1
        %v5181 = vsel %vm1021, %v5179, %v5180
        %v5182 = vsel %vm1021, %v5178, %v5179
        %v5183 = vsel %vm1021, %v5177, %v5178
        %v5184 = vsel %vm1021, %v5176, %v5177
        %v5185 = vsel %vm1021, %v5175, %v5176
        %v5186 = vsel %vm1021, %v5174, %v5175
        %v5187 = vsel %vm1021, %v5173, %v5174
        %v5188 = vsel %vm1021, %v5172, %v5173
        %v5189 = vsel %vm1021, %v5171, %v5172
        %v5190 = vsel %vm1021, %v5170, %v5171
        %v5191 = vsel %vm1021, %v5169, %v5170
        %v5192 = vsel %vm1021, %v5168, %v5169
        %v5193 = vsel %vm1021, %v5167, %v5168
        %v5194 = vsel %vm1021, %v5166, %v5167
        %v5195 = vsel %vm1021, %v5165, %v5166
        %v5196 = vsel %vm1021, %v5164, %v5165
        %v5197 = vsel %vm1021, %v5163, %v5164
        %v5198 = vsel %vm1021, %v5162, %v5163
        %v5199 = vsel %vm1021, %v5161, %v5162
        %v5200 = vsel %vm1021, %v5160, %v5161
        %v5201 = vsel %vm1021, %v5159, %v5160
        %v5202 = vsel %vm1021, %v5158, %v5159
        %v5203 = vsel %vm1021, %v5157, %v5158
        %v5204 = vsel %vm1021, %v5156, %v5157
        %v5205 = vsel %vm1021, %v5155, %v5156
        %v5206 = vsel %vm1021, %v5154, %v5155
        %v5207 = vsel %vm1021, %v5153, %v5154
        %v5208 = vsel %vm1021, %v5152, %v5153
        %v5209 = vsel %vm1021, %v5151, %v5152
        %v5210 = vsel %vm1021, %v5150, %v5151
        %v5211 = vsel %vm1021, %v5149, %v5150
        %v5212 = vsel %vm1021, %v5180, %v5149
        %v5213 = vsel %vm1054, %v5181, 0.0
        %v5214 = vsel %vm1055, %v5212, 0.0
        %v5215 = vsel %vm1056, %v5211, 0.0
        %v5216 = vsel %vm1057, %v5210, 0.0
        %v5217 = vsel %vm1058, %v5209, 0.0
        %v5218 = vsel %vm1059, %v5208, 0.0
        %v5219 = vsel %vm1060, %v5207, 0.0
        %v5220 = vsel %vm1061, %v5206, 0.0
        %v5221 = vsel %vm1062, %v5205, 0.0
        %v5222 = vsel %vm1063, %v5204, 0.0
        %v5223 = vsel %vm1064, %v5203, 0.0
        %v5224 = vsel %vm1065, %v5202, 0.0
        %v5225 = vsel %vm1066, %v5201, 0.0
        %v5226 = vsel %vm1067, %v5200, 0.0
        %v5227 = vsel %vm1068, %v5199, 0.0
        %v5228 = vsel %vm1069, %v5198, 0.0
        %v5229 = vsel %vm1070, %v5197, 0.0
        %v5230 = vsel %vm1071, %v5196, 0.0
        %v5231 = vsel %vm1072, %v5195, 0.0
        %v5232 = vsel %vm1073, %v5194, 0.0
        %v5233 = vsel %vm1074, %v5193, 0.0
        %v5234 = vsel %vm1075, %v5192, 0.0
        %v5235 = vsel %vm1076, %v5191, 0.0
        %v5236 = vsel %vm1077, %v5190, 0.0
        %v5237 = vsel %vm1078, %v5189, 0.0
        %v5238 = vsel %vm1079, %v5188, 0.0
        %v5239 = vsel %vm1080, %v5187, 0.0
        %v5240 = vsel %vm1081, %v5186, 0.0
        %v5241 = vsel %vm1082, %v5185, 0.0
        %v5242 = vsel %vm1083, %v5184, 0.0
        %v5243 = vsel %vm1084, %v5183, 0.0
        %v5244 = vsel %vm1085, %v5182, 0.0
        %v5245 = vpack.c.bf16 %v5214, %v5213
        %v5246 = vpack.c.bf16 %v5216, %v5215
        %v5247 = vpack.c.bf16 %v5218, %v5217
        %v5248 = vpack.c.bf16 %v5220, %v5219
        %v5249 = vpack.c.bf16 %v5222, %v5221
        %v5250 = vpack.c.bf16 %v5224, %v5223
        %v5251 = vpack.c.bf16 %v5226, %v5225
        %v5252 = vpack.c.bf16 %v5228, %v5227
        %v5253 = vpack.c.bf16 %v5230, %v5229
        %v5254 = vpack.c.bf16 %v5232, %v5231
        %v5255 = vpack.c.bf16 %v5234, %v5233
        %v5256 = vpack.c.bf16 %v5236, %v5235
        %v5257 = vpack.c.bf16 %v5238, %v5237
        %v5258 = vpack.c.bf16 %v5240, %v5239
        %v5259 = vpack.c.bf16 %v5242, %v5241
        %v5260 = vpack.c.bf16 %v5244, %v5243
        %v5261 = vsel %vm353, %v5052, 0.0
        %v5262 = vsel %vm354, %v5051, 0.0
        %v5263 = vsel %vm355, %v5050, 0.0
        %v5264 = vsel %vm356, %v5049, 0.0
        %v5265 = vsel %vm357, %v5048, 0.0
        %v5266 = vsel %vm358, %v5047, 0.0
        %v5267 = vsel %vm359, %v5046, 0.0
        %v5268 = vsel %vm360, %v5045, 0.0
        %v5269 = vsel %vm361, %v5044, 0.0
        %v5270 = vsel %vm362, %v5043, 0.0
        %v5271 = vsel %vm363, %v5042, 0.0
        %v5272 = vsel %vm364, %v5041, 0.0
        %v5273 = vsel %vm365, %v5040, 0.0
        %v5274 = vsel %vm366, %v5039, 0.0
        %v5275 = vsel %vm367, %v5038, 0.0
        %v5276 = vsel %vm368, %v5037, 0.0
        %v5277 = vsel %vm369, %v5036, 0.0
        %v5278 = vsel %vm370, %v5035, 0.0
        %v5279 = vsel %vm371, %v5034, 0.0
        %v5280 = vsel %vm372, %v5033, 0.0
        %v5281 = vsel %vm373, %v5032, 0.0
        %v5282 = vsel %vm374, %v5031, 0.0
        %v5283 = vsel %vm375, %v5030, 0.0
        %v5284 = vsel %vm376, %v5029, 0.0
        %v5285 = vsel %vm377, %v5028, 0.0
        %v5286 = vsel %vm378, %v5027, 0.0
        %v5287 = vsel %vm379, %v5026, 0.0
        %v5288 = vsel %vm380, %v5025, 0.0
        %v5289 = vsel %vm381, %v5024, 0.0
        %v5290 = vsel %vm382, %v5023, 0.0
        %v5291 = vsel %vm383, %v5022, 0.0
        %v5292 = vsel %vm384, %v5021, 0.0
        %v5293 = vpack.c.bf16 %v5262, %v5261
        %v5294 = vpack.c.bf16 %v5264, %v5263
        %v5295 = vpack.c.bf16 %v5266, %v5265
        %v5296 = vpack.c.bf16 %v5268, %v5267
        %v5297 = vpack.c.bf16 %v5270, %v5269
        %v5298 = vpack.c.bf16 %v5272, %v5271
        %v5299 = vpack.c.bf16 %v5274, %v5273
        %v5300 = vpack.c.bf16 %v5276, %v5275
        %v5301 = vpack.c.bf16 %v5278, %v5277
        %v5302 = vpack.c.bf16 %v5280, %v5279
        %v5303 = vpack.c.bf16 %v5282, %v5281
        %v5304 = vpack.c.bf16 %v5284, %v5283
        %v5305 = vpack.c.bf16 %v5286, %v5285
        %v5306 = vpack.c.bf16 %v5288, %v5287
        %v5307 = vpack.c.bf16 %v5290, %v5289
        %v5308 = vpack.c.bf16 %v5292, %v5291
        %v5309 = vpack.c.bf16 %v4958, %v4957
        %v5310 = vpack.c.bf16 %v4960, %v4959
        %v5311 = vpack.c.bf16 %v4962, %v4961
        %v5312 = vpack.c.bf16 %v4964, %v4963
        %v5313 = vpack.c.bf16 %v4966, %v4965
        %v5314 = vpack.c.bf16 %v4968, %v4967
        %v5315 = vpack.c.bf16 %v4970, %v4969
        %v5316 = vpack.c.bf16 %v4972, %v4971
        %v5317 = vpack.c.bf16 %v4974, %v4973
        %v5318 = vpack.c.bf16 %v4976, %v4975
        %v5319 = vpack.c.bf16 %v4978, %v4977
        %v5320 = vpack.c.bf16 %v4980, %v4979
        %v5321 = vpack.c.bf16 %v4982, %v4981
        %v5322 = vpack.c.bf16 %v4984, %v4983
        %v5323 = vpack.c.bf16 %v4986, %v4985
        %v5324 = vpack.c.bf16 %v4988, %v4987
        %v5325 = vsel %vm385, %v5211, 0.0
        %v5326 = vsel %vm386, %v5210, 0.0
        %v5327 = vsel %vm387, %v5209, 0.0
        %v5328 = vsel %vm388, %v5208, 0.0
        %v5329 = vsel %vm389, %v5207, 0.0
        %v5330 = vsel %vm390, %v5206, 0.0
        %v5331 = vsel %vm391, %v5205, 0.0
        %v5332 = vsel %vm392, %v5204, 0.0
        %v5333 = vsel %vm393, %v5203, 0.0
        %v5334 = vsel %vm394, %v5202, 0.0
        %v5335 = vsel %vm395, %v5201, 0.0
        %v5336 = vsel %vm396, %v5200, 0.0
        %v5337 = vsel %vm397, %v5199, 0.0
        %v5338 = vsel %vm398, %v5198, 0.0
        %v5339 = vsel %vm399, %v5197, 0.0
        %v5340 = vsel %vm400, %v5196, 0.0
        %v5341 = vsel %vm401, %v5195, 0.0
        %v5342 = vsel %vm402, %v5194, 0.0
        %v5343 = vsel %vm403, %v5193, 0.0
        %v5344 = vsel %vm404, %v5192, 0.0
        %v5345 = vsel %vm405, %v5191, 0.0
        %v5346 = vsel %vm406, %v5190, 0.0
        %v5347 = vsel %vm407, %v5189, 0.0
        %v5348 = vsel %vm408, %v5188, 0.0
        %v5349 = vsel %vm409, %v5187, 0.0
        %v5350 = vsel %vm410, %v5186, 0.0
        %v5351 = vsel %vm411, %v5185, 0.0
        %v5352 = vsel %vm412, %v5184, 0.0
        %v5353 = vsel %vm413, %v5183, 0.0
        %v5354 = vsel %vm414, %v5182, 0.0
        %v5355 = vsel %vm415, %v5181, 0.0
        %v5356 = vsel %vm416, %v5212, 0.0
        %v5357 = vpack.c.bf16 %v5326, %v5325
        %v5358 = vpack.c.bf16 %v5328, %v5327
        %v5359 = vpack.c.bf16 %v5330, %v5329
        %v5360 = vpack.c.bf16 %v5332, %v5331
        %v5361 = vpack.c.bf16 %v5334, %v5333
        %v5362 = vpack.c.bf16 %v5336, %v5335
        %v5363 = vpack.c.bf16 %v5338, %v5337
        %v5364 = vpack.c.bf16 %v5340, %v5339
        %v5365 = vpack.c.bf16 %v5342, %v5341
        %v5366 = vpack.c.bf16 %v5344, %v5343
        %v5367 = vpack.c.bf16 %v5346, %v5345
        %v5368 = vpack.c.bf16 %v5348, %v5347
        %v5369 = vpack.c.bf16 %v5350, %v5349
        %v5370 = vpack.c.bf16 %v5352, %v5351
        %v5371 = vpack.c.bf16 %v5354, %v5353
        %v5372 = vpack.c.bf16 %v5356, %v5355
        %v5373 = vsel %vm1246, %v5050, 0.0
        %v5374 = vsel %vm1247, %v5049, 0.0
        %v5375 = vsel %vm1248, %v5048, 0.0
        %v5376 = vsel %vm1249, %v5047, 0.0
        %v5377 = vsel %vm1250, %v5046, 0.0
        %v5378 = vsel %vm1251, %v5045, 0.0
        %v5379 = vsel %vm1252, %v5044, 0.0
        %v5380 = vsel %vm1253, %v5043, 0.0
        %v5381 = vsel %vm1254, %v5042, 0.0
        %v5382 = vsel %vm1255, %v5041, 0.0
        %v5383 = vsel %vm1256, %v5040, 0.0
        %v5384 = vsel %vm1257, %v5039, 0.0
        %v5385 = vsel %vm1258, %v5038, 0.0
        %v5386 = vsel %vm1259, %v5037, 0.0
        %v5387 = vsel %vm1260, %v5036, 0.0
        %v5388 = vsel %vm1261, %v5035, 0.0
        %v5389 = vsel %vm1262, %v5034, 0.0
        %v5390 = vsel %vm1263, %v5033, 0.0
        %v5391 = vsel %vm1264, %v5032, 0.0
        %v5392 = vsel %vm1265, %v5031, 0.0
        %v5393 = vsel %vm1266, %v5030, 0.0
        %v5394 = vsel %vm1267, %v5029, 0.0
        %v5395 = vsel %vm1268, %v5028, 0.0
        %v5396 = vsel %vm1269, %v5027, 0.0
        %v5397 = vsel %vm1270, %v5026, 0.0
        %v5398 = vsel %vm1271, %v5025, 0.0
        %v5399 = vsel %vm1272, %v5024, 0.0
        %v5400 = vsel %vm1273, %v5023, 0.0
        %v5401 = vsel %vm1274, %v5022, 0.0
        %v5402 = vsel %vm1275, %v5021, 0.0
        %v5403 = vsel %vm1276, %v5052, 0.0
        %v5404 = vsel %vm1277, %v5051, 0.0
        %v5405 = vpack.c.bf16 %v5374, %v5373
        %v5406 = vpack.c.bf16 %v5376, %v5375
        %v5407 = vpack.c.bf16 %v5378, %v5377
        %v5408 = vpack.c.bf16 %v5380, %v5379
        %v5409 = vpack.c.bf16 %v5382, %v5381
        %v5410 = vpack.c.bf16 %v5384, %v5383
        %v5411 = vpack.c.bf16 %v5386, %v5385
        %v5412 = vpack.c.bf16 %v5388, %v5387
        %v5413 = vpack.c.bf16 %v5390, %v5389
        %v5414 = vpack.c.bf16 %v5392, %v5391
        %v5415 = vpack.c.bf16 %v5394, %v5393
        %v5416 = vpack.c.bf16 %v5396, %v5395
        %v5417 = vpack.c.bf16 %v5398, %v5397
        %v5418 = vpack.c.bf16 %v5400, %v5399
        %v5419 = vpack.c.bf16 %v5402, %v5401
        %v5420 = vpack.c.bf16 %v5404, %v5403
        %v5421 = vsel %vm321, %v4959, 0.0
        %v5422 = vsel %vm322, %v4960, 0.0
        %v5423 = vsel %vm323, %v4961, 0.0
        %v5424 = vsel %vm324, %v4962, 0.0
        %v5425 = vsel %vm325, %v4963, 0.0
        %v5426 = vsel %vm326, %v4964, 0.0
        %v5427 = vsel %vm327, %v4965, 0.0
        %v5428 = vsel %vm328, %v4966, 0.0
        %v5429 = vsel %vm329, %v4967, 0.0
        %v5430 = vsel %vm330, %v4968, 0.0
        %v5431 = vsel %vm331, %v4969, 0.0
        %v5432 = vsel %vm332, %v4970, 0.0
        %v5433 = vsel %vm333, %v4971, 0.0
        %v5434 = vsel %vm334, %v4972, 0.0
        %v5435 = vsel %vm335, %v4973, 0.0
        %v5436 = vsel %vm336, %v4974, 0.0
        %v5437 = vsel %vm337, %v4975, 0.0
        %v5438 = vsel %vm338, %v4976, 0.0
        %v5439 = vsel %vm339, %v4977, 0.0
        %v5440 = vsel %vm340, %v4978, 0.0
        %v5441 = vsel %vm341, %v4979, 0.0
        %v5442 = vsel %vm342, %v4980, 0.0
        %v5443 = vsel %vm343, %v4981, 0.0
        %v5444 = vsel %vm344, %v4982, 0.0
        %v5445 = vsel %vm345, %v4983, 0.0
        %v5446 = vsel %vm346, %v4984, 0.0
        %v5447 = vsel %vm347, %v4985, 0.0
        %v5448 = vsel %vm348, %v4986, 0.0
        %v5449 = vsel %vm349, %v4987, 0.0
        %v5450 = vsel %vm350, %v4988, 0.0
        %v5451 = vsel %vm351, %v4957, 0.0
        %v5452 = vsel %vm352, %v4958, 0.0
        %v5453 = vpack.c.bf16 %v5422, %v5421
        %v5454 = vpack.c.bf16 %v5424, %v5423
        %v5455 = vpack.c.bf16 %v5426, %v5425
        %v5456 = vpack.c.bf16 %v5428, %v5427
        %v5457 = vpack.c.bf16 %v5430, %v5429
        %v5458 = vpack.c.bf16 %v5432, %v5431
        %v5459 = vpack.c.bf16 %v5434, %v5433
        %v5460 = vpack.c.bf16 %v5436, %v5435
        %v5461 = vpack.c.bf16 %v5438, %v5437
        %v5462 = vpack.c.bf16 %v5440, %v5439
        %v5463 = vpack.c.bf16 %v5442, %v5441
        %v5464 = vpack.c.bf16 %v5444, %v5443
        %v5465 = vpack.c.bf16 %v5446, %v5445
        %v5466 = vpack.c.bf16 %v5448, %v5447
        %v5467 = vpack.c.bf16 %v5450, %v5449
        %v5468 = vpack.c.bf16 %v5452, %v5451
        %v5469 = vsel %vm1374, %v5209, 0.0
        %v5470 = vsel %vm1375, %v5208, 0.0
        %v5471 = vsel %vm1376, %v5207, 0.0
        %v5472 = vsel %vm1377, %v5206, 0.0
        %v5473 = vsel %vm1378, %v5205, 0.0
        %v5474 = vsel %vm1379, %v5204, 0.0
        %v5475 = vsel %vm1380, %v5203, 0.0
        %v5476 = vsel %vm1381, %v5202, 0.0
        %v5477 = vsel %vm1382, %v5201, 0.0
        %v5478 = vsel %vm1383, %v5200, 0.0
        %v5479 = vsel %vm1384, %v5199, 0.0
        %v5480 = vsel %vm1385, %v5198, 0.0
        %v5481 = vsel %vm1386, %v5197, 0.0
        %v5482 = vsel %vm1387, %v5196, 0.0
        %v5483 = vsel %vm1388, %v5195, 0.0
        %v5484 = vsel %vm1389, %v5194, 0.0
        %v5485 = vsel %vm1390, %v5193, 0.0
        %v5486 = vsel %vm1391, %v5192, 0.0
        %v5487 = vsel %vm1392, %v5191, 0.0
        %v5488 = vsel %vm1393, %v5190, 0.0
        %v5489 = vsel %vm1394, %v5189, 0.0
        %v5490 = vsel %vm1395, %v5188, 0.0
        %v5491 = vsel %vm1396, %v5187, 0.0
        %v5492 = vsel %vm1397, %v5186, 0.0
        %v5493 = vsel %vm1398, %v5185, 0.0
        %v5494 = vsel %vm1399, %v5184, 0.0
        %v5495 = vsel %vm1400, %v5183, 0.0
        %v5496 = vsel %vm1401, %v5182, 0.0
        %v5497 = vsel %vm1402, %v5181, 0.0
        %v5498 = vsel %vm1403, %v5212, 0.0
        %v5499 = vsel %vm1404, %v5211, 0.0
        %v5500 = vsel %vm1405, %v5210, 0.0
        %v5501 = vpack.c.bf16 %v5470, %v5469
        %v5502 = vpack.c.bf16 %v5472, %v5471
        %v5503 = vpack.c.bf16 %v5474, %v5473
        %v5504 = vpack.c.bf16 %v5476, %v5475
        %v5505 = vpack.c.bf16 %v5478, %v5477
        %v5506 = vpack.c.bf16 %v5480, %v5479
        %v5507 = vpack.c.bf16 %v5482, %v5481
        %v5508 = vpack.c.bf16 %v5484, %v5483
        %v5509 = vpack.c.bf16 %v5486, %v5485
        %v5510 = vpack.c.bf16 %v5488, %v5487
        %v5511 = vpack.c.bf16 %v5490, %v5489
        %v5512 = vpack.c.bf16 %v5492, %v5491
        %v5513 = vpack.c.bf16 %v5494, %v5493
        %v5514 = vpack.c.bf16 %v5496, %v5495
        %v5515 = vpack.c.bf16 %v5498, %v5497
        %v5516 = vpack.c.bf16 %v5500, %v5499
        %s5517 = scalar_lea.vmem %s2, 1152
        %v5518 = vld [vmem:[%s5517] sm:$0xf]
        %v5519 = vld [vmem:[%s5517 + $0x4] sm:$0xf]
        %v5520 = vld [vmem:[%s5517 + $0x8] sm:$0xf]
        %v5521 = vld [vmem:[%s5517 + $0xc] sm:$0xf]
        %v5522 = vld [vmem:[%s5517 + $0x10] sm:$0xf]
        %v5523 = vld [vmem:[%s5517 + $0x14] sm:$0xf]
        %v5524 = vld [vmem:[%s5517 + $0x18] sm:$0xf]
        %v5525 = vld [vmem:[%s5517 + $0x1c] sm:$0xf]
        %v5526 = vld [vmem:[%s5517 + $0x20] sm:$0xf]
        %v5527 = vld [vmem:[%s5517 + $0x24] sm:$0xf]
        %v5528 = vld [vmem:[%s5517 + $0x28] sm:$0xf]
        %v5529 = vld [vmem:[%s5517 + $0x2c] sm:$0xf]
        %v5530 = vld [vmem:[%s5517 + $0x30] sm:$0xf]
        %v5531 = vld [vmem:[%s5517 + $0x34] sm:$0xf]
        %v5532 = vld [vmem:[%s5517 + $0x38] sm:$0xf]
        %v5533 = vld [vmem:[%s5517 + $0x3c] sm:$0xf]
        %v5534 = vld [vmem:[%s5517 + $0x40] sm:$0xf]
        %v5535 = vld [vmem:[%s5517 + $0x44] sm:$0xf]
        %v5536 = vld [vmem:[%s5517 + $0x48] sm:$0xf]
        %v5537 = vld [vmem:[%s5517 + $0x4c] sm:$0xf]
        %v5538 = vld [vmem:[%s5517 + $0x50] sm:$0xf]
        %v5539 = vld [vmem:[%s5517 + $0x54] sm:$0xf]
        %v5540 = vld [vmem:[%s5517 + $0x58] sm:$0xf]
        %v5541 = vld [vmem:[%s5517 + $0x5c] sm:$0xf]
        %v5542 = vld [vmem:[%s5517 + $0x60] sm:$0xf]
        %v5543 = vld [vmem:[%s5517 + $0x64] sm:$0xf]
        %v5544 = vld [vmem:[%s5517 + $0x68] sm:$0xf]
        %v5545 = vld [vmem:[%s5517 + $0x6c] sm:$0xf]
        %v5546 = vld [vmem:[%s5517 + $0x70] sm:$0xf]
        %v5547 = vld [vmem:[%s5517 + $0x74] sm:$0xf]
        %v5548 = vld [vmem:[%s5517 + $0x78] sm:$0xf]
        %v5549 = vld [vmem:[%s5517 + $0x7c] sm:$0xf]
        %v5550 = vld [vmem:[%s5517 + $0x80] sm:$0xf]
        %v5551 = vld [vmem:[%s5517 + $0x84] sm:$0xf]
        %v5552 = vld [vmem:[%s5517 + $0x88] sm:$0xf]
        %v5553 = vld [vmem:[%s5517 + $0x8c] sm:$0xf]
        %v5554 = vld [vmem:[%s5517 + $0x90] sm:$0xf]
        %v5555 = vld [vmem:[%s5517 + $0x94] sm:$0xf]
        %v5556 = vld [vmem:[%s5517 + $0x98] sm:$0xf]
        %v5557 = vld [vmem:[%s5517 + $0x9c] sm:$0xf]
        %v5558 = vld [vmem:[%s5517 + $0xa0] sm:$0xf]
        %v5559 = vld [vmem:[%s5517 + $0xa4] sm:$0xf]
        %v5560 = vld [vmem:[%s5517 + $0xa8] sm:$0xf]
        %v5561 = vld [vmem:[%s5517 + $0xac] sm:$0xf]
        %v5562 = vld [vmem:[%s5517 + $0xb0] sm:$0xf]
        %v5563 = vld [vmem:[%s5517 + $0xb4] sm:$0xf]
        %v5564 = vld [vmem:[%s5517 + $0xb8] sm:$0xf]
        %v5565 = vld [vmem:[%s5517 + $0xbc] sm:$0xf]
        %v5566 = vld [vmem:[%s5517 + $0xc0] sm:$0xf]
        %v5567 = vld [vmem:[%s5517 + $0xc4] sm:$0xf]
        %v5568 = vld [vmem:[%s5517 + $0xc8] sm:$0xf]
        %v5569 = vld [vmem:[%s5517 + $0xcc] sm:$0xf]
        %v5570 = vld [vmem:[%s5517 + $0xd0] sm:$0xf]
        %v5571 = vld [vmem:[%s5517 + $0xd4] sm:$0xf]
        %v5572 = vld [vmem:[%s5517 + $0xd8] sm:$0xf]
        %v5573 = vld [vmem:[%s5517 + $0xdc] sm:$0xf]
        %v5574 = vld [vmem:[%s5517 + $0xe0] sm:$0xf]
        %v5575 = vld [vmem:[%s5517 + $0xe4] sm:$0xf]
        %v5576 = vld [vmem:[%s5517 + $0xe8] sm:$0xf]
        %v5577 = vld [vmem:[%s5517 + $0xec] sm:$0xf]
        %v5578 = vld [vmem:[%s5517 + $0xf0] sm:$0xf]
        %v5579 = vld [vmem:[%s5517 + $0xf4] sm:$0xf]
        %v5580 = vld [vmem:[%s5517 + $0xf8] sm:$0xf]
        %v5581 = vld [vmem:[%s5517 + $0xfc] sm:$0xf]
        %v5582 = vld [vmem:[%s5517 + $0x100] sm:$0xf]
        %v5583 = vld [vmem:[%s5517 + $0x104] sm:$0xf]
        %v5584 = vld [vmem:[%s5517 + $0x108] sm:$0xf]
        %v5585 = vld [vmem:[%s5517 + $0x10c] sm:$0xf]
        %v5586 = vld [vmem:[%s5517 + $0x110] sm:$0xf]
        %v5587 = vld [vmem:[%s5517 + $0x114] sm:$0xf]
        %v5588 = vld [vmem:[%s5517 + $0x118] sm:$0xf]
        %v5589 = vld [vmem:[%s5517 + $0x11c] sm:$0xf]
        %v5590 = vld [vmem:[%s5517 + $0x120] sm:$0xf]
        %v5591 = vld [vmem:[%s5517 + $0x124] sm:$0xf]
        %v5592 = vld [vmem:[%s5517 + $0x128] sm:$0xf]
        %v5593 = vld [vmem:[%s5517 + $0x12c] sm:$0xf]
        %v5594 = vld [vmem:[%s5517 + $0x130] sm:$0xf]
        %v5595 = vld [vmem:[%s5517 + $0x134] sm:$0xf]
        %v5596 = vld [vmem:[%s5517 + $0x138] sm:$0xf]
        %v5597 = vld [vmem:[%s5517 + $0x13c] sm:$0xf]
        %v5598 = vld [vmem:[%s5517 + $0x140] sm:$0xf]
        %v5599 = vld [vmem:[%s5517 + $0x144] sm:$0xf]
        %v5600 = vld [vmem:[%s5517 + $0x148] sm:$0xf]
        %v5601 = vld [vmem:[%s5517 + $0x14c] sm:$0xf]
        %v5602 = vld [vmem:[%s5517 + $0x150] sm:$0xf]
        %v5603 = vld [vmem:[%s5517 + $0x154] sm:$0xf]
        %v5604 = vld [vmem:[%s5517 + $0x158] sm:$0xf]
        %v5605 = vld [vmem:[%s5517 + $0x15c] sm:$0xf]
        %v5606 = vld [vmem:[%s5517 + $0x160] sm:$0xf]
        %v5607 = vld [vmem:[%s5517 + $0x164] sm:$0xf]
        %v5608 = vld [vmem:[%s5517 + $0x168] sm:$0xf]
        %v5609 = vld [vmem:[%s5517 + $0x16c] sm:$0xf]
        %v5610 = vld [vmem:[%s5517 + $0x170] sm:$0xf]
        %v5611 = vld [vmem:[%s5517 + $0x174] sm:$0xf]
        %v5612 = vld [vmem:[%s5517 + $0x178] sm:$0xf]
        %v5613 = vld [vmem:[%s5517 + $0x17c] sm:$0xf]
        %v5614 = vld [vmem:[%s5517 + $0x180] sm:$0xf]
        %v5615 = vld [vmem:[%s5517 + $0x184] sm:$0xf]
        %v5616 = vld [vmem:[%s5517 + $0x188] sm:$0xf]
        %v5617 = vld [vmem:[%s5517 + $0x18c] sm:$0xf]
        %v5618 = vld [vmem:[%s5517 + $0x190] sm:$0xf]
        %v5619 = vld [vmem:[%s5517 + $0x194] sm:$0xf]
        %v5620 = vld [vmem:[%s5517 + $0x198] sm:$0xf]
        %v5621 = vld [vmem:[%s5517 + $0x19c] sm:$0xf]
        %v5622 = vld [vmem:[%s5517 + $0x1a0] sm:$0xf]
        %v5623 = vld [vmem:[%s5517 + $0x1a4] sm:$0xf]
        %v5624 = vld [vmem:[%s5517 + $0x1a8] sm:$0xf]
        %v5625 = vld [vmem:[%s5517 + $0x1ac] sm:$0xf]
        %v5626 = vld [vmem:[%s5517 + $0x1b0] sm:$0xf]
        %v5627 = vld [vmem:[%s5517 + $0x1b4] sm:$0xf]
        %v5628 = vld [vmem:[%s5517 + $0x1b8] sm:$0xf]
        %v5629 = vld [vmem:[%s5517 + $0x1bc] sm:$0xf]
        %v5630 = vld [vmem:[%s5517 + $0x1c0] sm:$0xf]
        %v5631 = vld [vmem:[%s5517 + $0x1c4] sm:$0xf]
        %v5632 = vld [vmem:[%s5517 + $0x1c8] sm:$0xf]
        %v5633 = vld [vmem:[%s5517 + $0x1cc] sm:$0xf]
        %v5634 = vld [vmem:[%s5517 + $0x1d0] sm:$0xf]
        %v5635 = vld [vmem:[%s5517 + $0x1d4] sm:$0xf]
        %v5636 = vld [vmem:[%s5517 + $0x1d8] sm:$0xf]
        %v5637 = vld [vmem:[%s5517 + $0x1dc] sm:$0xf]
        %v5638 = vld [vmem:[%s5517 + $0x1e0] sm:$0xf]
        %v5639 = vld [vmem:[%s5517 + $0x1e4] sm:$0xf]
        %v5640 = vld [vmem:[%s5517 + $0x1e8] sm:$0xf]
        %v5641 = vld [vmem:[%s5517 + $0x1ec] sm:$0xf]
        %v5642 = vld [vmem:[%s5517 + $0x1f0] sm:$0xf]
        %v5643 = vld [vmem:[%s5517 + $0x1f4] sm:$0xf]
        %v5644 = vld [vmem:[%s5517 + $0x1f8] sm:$0xf]
        %v5645 = vld [vmem:[%s5517 + $0x1fc] sm:$0xf]
        %v5646 = vld [vmem:[%s5517 + $0x200] sm:$0xf]
        %v5647 = vld [vmem:[%s5517 + $0x204] sm:$0xf]
        %v5648 = vld [vmem:[%s5517 + $0x208] sm:$0xf]
        %v5649 = vld [vmem:[%s5517 + $0x20c] sm:$0xf]
        %v5650 = vld [vmem:[%s5517 + $0x210] sm:$0xf]
        %v5651 = vld [vmem:[%s5517 + $0x214] sm:$0xf]
        %v5652 = vld [vmem:[%s5517 + $0x218] sm:$0xf]
        %v5653 = vld [vmem:[%s5517 + $0x21c] sm:$0xf]
        %v5654 = vld [vmem:[%s5517 + $0x220] sm:$0xf]
        %v5655 = vld [vmem:[%s5517 + $0x224] sm:$0xf]
        %v5656 = vld [vmem:[%s5517 + $0x228] sm:$0xf]
        %v5657 = vld [vmem:[%s5517 + $0x22c] sm:$0xf]
        %v5658 = vld [vmem:[%s5517 + $0x230] sm:$0xf]
        %v5659 = vld [vmem:[%s5517 + $0x234] sm:$0xf]
        %v5660 = vld [vmem:[%s5517 + $0x238] sm:$0xf]
        %v5661 = vld [vmem:[%s5517 + $0x23c] sm:$0xf]
        %v5662 = vld [vmem:[%s3 + $0x3] sm:$0x1]
        %v5663 = vlaneseq
        %v5664 = vshrl.u32 %v5663, 7
        %v5665 = vsub.s32 0, %v5664
        %v5666 = vrot.slane %v5662, %v5665
        %v5811 = vunpack.c.l.b16 %v5518
        %v5812 = vunpack.c.l.b16 %v5519
        %v5813 = vunpack.c.l.b16 %v5520
        %v5814 = vunpack.c.l.b16 %v5521
        %v5815 = vunpack.c.l.b16 %v5522
        %v5816 = vunpack.c.l.b16 %v5523
        %v5817 = vunpack.c.l.b16 %v5524
        %v5818 = vunpack.c.l.b16 %v5525
        %v5819 = vunpack.c.l.b16 %v5526
        %v5820 = vunpack.c.l.b16 %v5527
        %v5821 = vunpack.c.l.b16 %v5528
        %v5822 = vunpack.c.l.b16 %v5529
        %v5823 = vunpack.c.l.b16 %v5530
        %v5824 = vunpack.c.l.b16 %v5531
        %v5825 = vunpack.c.l.b16 %v5532
        %v5826 = vunpack.c.l.b16 %v5533
        %v5827 = vunpack.c.l.b16 %v5534
        %v5828 = vunpack.c.l.b16 %v5535
        %v5829 = vunpack.c.l.b16 %v5536
        %v5830 = vunpack.c.l.b16 %v5537
        %v5831 = vunpack.c.l.b16 %v5538
        %v5832 = vunpack.c.l.b16 %v5539
        %v5833 = vunpack.c.l.b16 %v5540
        %v5834 = vunpack.c.l.b16 %v5541
        %v5835 = vunpack.c.l.b16 %v5542
        %v5836 = vunpack.c.l.b16 %v5543
        %v5837 = vunpack.c.l.b16 %v5544
        %v5838 = vunpack.c.l.b16 %v5545
        %v5839 = vunpack.c.l.b16 %v5546
        %v5840 = vunpack.c.l.b16 %v5547
        %v5841 = vunpack.c.l.b16 %v5548
        %v5842 = vunpack.c.l.b16 %v5549
        %v5843 = vunpack.c.l.b16 %v5550
        %v5844 = vunpack.c.l.b16 %v5551
        %v5845 = vunpack.c.l.b16 %v5552
        %v5846 = vunpack.c.l.b16 %v5553
        %v5847 = vunpack.c.l.b16 %v5554
        %v5848 = vunpack.c.l.b16 %v5555
        %v5849 = vunpack.c.l.b16 %v5556
        %v5850 = vunpack.c.l.b16 %v5557
        %v5851 = vunpack.c.l.b16 %v5558
        %v5852 = vunpack.c.l.b16 %v5559
        %v5853 = vunpack.c.l.b16 %v5560
        %v5854 = vunpack.c.l.b16 %v5561
        %v5855 = vunpack.c.l.b16 %v5562
        %v5856 = vunpack.c.l.b16 %v5563
        %v5857 = vunpack.c.l.b16 %v5564
        %v5858 = vunpack.c.l.b16 %v5565
        %v5859 = vunpack.c.l.b16 %v5566
        %v5860 = vunpack.c.l.b16 %v5567
        %v5861 = vunpack.c.l.b16 %v5568
        %v5862 = vunpack.c.l.b16 %v5569
        %v5863 = vunpack.c.l.b16 %v5570
        %v5864 = vunpack.c.l.b16 %v5571
        %v5865 = vunpack.c.l.b16 %v5572
        %v5866 = vunpack.c.l.b16 %v5573
        %v5867 = vunpack.c.l.b16 %v5574
        %v5868 = vunpack.c.l.b16 %v5575
        %v5869 = vunpack.c.l.b16 %v5576
        %v5870 = vunpack.c.l.b16 %v5577
        %v5871 = vunpack.c.l.b16 %v5578
        %v5872 = vunpack.c.l.b16 %v5579
        %v5873 = vunpack.c.l.b16 %v5580
        %v5874 = vunpack.c.l.b16 %v5581
        %v5875 = vunpack.c.l.b16 %v5582
        %v5876 = vunpack.c.l.b16 %v5583
        %v5877 = vunpack.c.l.b16 %v5584
        %v5878 = vunpack.c.l.b16 %v5585
        %v5879 = vunpack.c.l.b16 %v5586
        %v5880 = vunpack.c.l.b16 %v5587
        %v5881 = vunpack.c.l.b16 %v5588
        %v5882 = vunpack.c.l.b16 %v5589
        %v5883 = vunpack.c.l.b16 %v5590
        %v5884 = vunpack.c.l.b16 %v5591
        %v5885 = vunpack.c.l.b16 %v5592
        %v5886 = vunpack.c.l.b16 %v5593
        %v5887 = vunpack.c.l.b16 %v5594
        %v5888 = vunpack.c.l.b16 %v5595
        %v5889 = vunpack.c.l.b16 %v5596
        %v5890 = vunpack.c.l.b16 %v5597
        %v5891 = vunpack.c.l.b16 %v5598
        %v5892 = vunpack.c.l.b16 %v5599
        %v5893 = vunpack.c.l.b16 %v5600
        %v5894 = vunpack.c.l.b16 %v5601
        %v5895 = vunpack.c.l.b16 %v5602
        %v5896 = vunpack.c.l.b16 %v5603
        %v5897 = vunpack.c.l.b16 %v5604
        %v5898 = vunpack.c.l.b16 %v5605
        %v5899 = vunpack.c.l.b16 %v5606
        %v5900 = vunpack.c.l.b16 %v5607
        %v5901 = vunpack.c.l.b16 %v5608
        %v5902 = vunpack.c.l.b16 %v5609
        %v5903 = vunpack.c.l.b16 %v5610
        %v5904 = vunpack.c.l.b16 %v5611
        %v5905 = vunpack.c.l.b16 %v5612
        %v5906 = vunpack.c.l.b16 %v5613
        %v5907 = vunpack.c.l.b16 %v5614
        %v5908 = vunpack.c.l.b16 %v5615
        %v5909 = vunpack.c.l.b16 %v5616
        %v5910 = vunpack.c.l.b16 %v5617
        %v5911 = vunpack.c.l.b16 %v5618
        %v5912 = vunpack.c.l.b16 %v5619
        %v5913 = vunpack.c.l.b16 %v5620
        %v5914 = vunpack.c.l.b16 %v5621
        %v5915 = vunpack.c.l.b16 %v5622
        %v5916 = vunpack.c.l.b16 %v5623
        %v5917 = vunpack.c.l.b16 %v5624
        %v5918 = vunpack.c.l.b16 %v5625
        %v5919 = vunpack.c.l.b16 %v5626
        %v5920 = vunpack.c.l.b16 %v5627
        %v5921 = vunpack.c.l.b16 %v5628
        %v5922 = vunpack.c.l.b16 %v5629
        %v5923 = vunpack.c.l.b16 %v5630
        %v5924 = vunpack.c.l.b16 %v5631
        %v5925 = vunpack.c.l.b16 %v5632
        %v5926 = vunpack.c.l.b16 %v5633
        %v5927 = vunpack.c.l.b16 %v5634
        %v5928 = vunpack.c.l.b16 %v5635
        %v5929 = vunpack.c.l.b16 %v5636
        %v5930 = vunpack.c.l.b16 %v5637
        %v5931 = vunpack.c.l.b16 %v5638
        %v5932 = vunpack.c.l.b16 %v5639
        %v5933 = vunpack.c.l.b16 %v5640
        %v5934 = vunpack.c.l.b16 %v5641
        %v5935 = vunpack.c.l.b16 %v5642
        %v5936 = vunpack.c.l.b16 %v5643
        %v5937 = vunpack.c.l.b16 %v5644
        %v5938 = vunpack.c.l.b16 %v5645
        %v5939 = vunpack.c.l.b16 %v5646
        %v5940 = vunpack.c.l.b16 %v5647
        %v5941 = vunpack.c.l.b16 %v5648
        %v5942 = vunpack.c.l.b16 %v5649
        %v5943 = vunpack.c.l.b16 %v5650
        %v5944 = vunpack.c.l.b16 %v5651
        %v5945 = vunpack.c.l.b16 %v5652
        %v5946 = vunpack.c.l.b16 %v5653
        %v5947 = vunpack.c.l.b16 %v5654
        %v5948 = vunpack.c.l.b16 %v5655
        %v5949 = vunpack.c.l.b16 %v5656
        %v5950 = vunpack.c.l.b16 %v5657
        %v5951 = vunpack.c.l.b16 %v5658
        %v5952 = vunpack.c.l.b16 %v5659
        %v5953 = vunpack.c.l.b16 %v5660
        %v5954 = vunpack.c.l.b16 %v5661
        %v5955 = vpack.c.b16 %v5812, %v5811
        %v5956 = vpack.c.b16 %v5814, %v5813
        %v5957 = vpack.c.b16 %v5816, %v5815
        %v5958 = vpack.c.b16 %v5818, %v5817
        %v5959 = vpack.c.b16 %v5820, %v5819
        %v5960 = vpack.c.b16 %v5822, %v5821
        %v5961 = vpack.c.b16 %v5824, %v5823
        %v5962 = vpack.c.b16 %v5826, %v5825
        %v5963 = vpack.c.b16 %v5828, %v5827
        %v5964 = vpack.c.b16 %v5830, %v5829
        %v5965 = vpack.c.b16 %v5832, %v5831
        %v5966 = vpack.c.b16 %v5834, %v5833
        %v5967 = vpack.c.b16 %v5836, %v5835
        %v5968 = vpack.c.b16 %v5838, %v5837
        %v5969 = vpack.c.b16 %v5840, %v5839
        %v5970 = vpack.c.b16 %v5842, %v5841
        %v5971 = vpack.c.b16 %v5844, %v5843
        %v5972 = vpack.c.b16 %v5846, %v5845
        %v5973 = vpack.c.b16 %v5848, %v5847
        %v5974 = vpack.c.b16 %v5850, %v5849
        %v5975 = vpack.c.b16 %v5852, %v5851
        %v5976 = vpack.c.b16 %v5854, %v5853
        %v5977 = vpack.c.b16 %v5856, %v5855
        %v5978 = vpack.c.b16 %v5858, %v5857
        %v5979 = vpack.c.b16 %v5860, %v5859
        %v5980 = vpack.c.b16 %v5862, %v5861
        %v5981 = vpack.c.b16 %v5864, %v5863
        %v5982 = vpack.c.b16 %v5866, %v5865
        %v5983 = vpack.c.b16 %v5868, %v5867
        %v5984 = vpack.c.b16 %v5870, %v5869
        %v5985 = vpack.c.b16 %v5872, %v5871
        %v5986 = vpack.c.b16 %v5874, %v5873
        %v5987 = vpack.c.b16 %v5876, %v5875
        %v5988 = vpack.c.b16 %v5878, %v5877
        %v5989 = vpack.c.b16 %v5880, %v5879
        %v5990 = vpack.c.b16 %v5882, %v5881
        %v5991 = vpack.c.b16 %v5884, %v5883
        %v5992 = vpack.c.b16 %v5886, %v5885
        %v5993 = vpack.c.b16 %v5888, %v5887
        %v5994 = vpack.c.b16 %v5890, %v5889
        %v5995 = vpack.c.b16 %v5892, %v5891
        %v5996 = vpack.c.b16 %v5894, %v5893
        %v5997 = vpack.c.b16 %v5896, %v5895
        %v5998 = vpack.c.b16 %v5898, %v5897
        %v5999 = vpack.c.b16 %v5900, %v5899
        %v6000 = vpack.c.b16 %v5902, %v5901
        %v6001 = vpack.c.b16 %v5904, %v5903
        %v6002 = vpack.c.b16 %v5906, %v5905
        %v6003 = vpack.c.b16 %v5908, %v5907
        %v6004 = vpack.c.b16 %v5910, %v5909
        %v6005 = vpack.c.b16 %v5912, %v5911
        %v6006 = vpack.c.b16 %v5914, %v5913
        %v6007 = vpack.c.b16 %v5916, %v5915
        %v6008 = vpack.c.b16 %v5918, %v5917
        %v6009 = vpack.c.b16 %v5920, %v5919
        %v6010 = vpack.c.b16 %v5922, %v5921
        %v6011 = vpack.c.b16 %v5924, %v5923
        %v6012 = vpack.c.b16 %v5926, %v5925
        %v6013 = vpack.c.b16 %v5928, %v5927
        %v6014 = vpack.c.b16 %v5930, %v5929
        %v6015 = vpack.c.b16 %v5932, %v5931
        %v6016 = vpack.c.b16 %v5934, %v5933
        %v6017 = vpack.c.b16 %v5936, %v5935
        %v6018 = vpack.c.b16 %v5938, %v5937
        %v6019 = vpack.c.b16 %v5940, %v5939
        %v6020 = vpack.c.b16 %v5942, %v5941
        %v6021 = vpack.c.b16 %v5944, %v5943
        %v6022 = vpack.c.b16 %v5946, %v5945
        %v6023 = vpack.c.b16 %v5948, %v5947
        %v6024 = vpack.c.b16 %v5950, %v5949
        %v6025 = vpack.c.b16 %v5952, %v5951
        %v6026 = vpack.c.b16 %v5954, %v5953
        %6099 = vmatprep.subr.bf16.mxu0 0
        %6100 = vmatpush1.bf16.msra.mxu0 %v5955
        %6101 = vmatprep.subr.bf16.mxu0 0
        %6102 = vmatpush1.bf16.msra.mxu0 %v5956
        %6103 = vmatprep.subr.bf16.mxu0 0
        %6104 = vmatpush1.bf16.msra.mxu0 %v5957
        %6105 = vmatprep.subr.bf16.mxu0 0
        %6106 = vmatpush1.bf16.msra.mxu0 %v5958
        %6107 = vmatprep.subr.bf16.mxu0 0
        %6108 = vmatpush1.bf16.msra.mxu0 %v5959
        %6109 = vmatprep.subr.bf16.mxu0 0
        %6110 = vmatpush1.bf16.msra.mxu0 %v5960
        %6111 = vmatprep.subr.bf16.mxu0 0
        %6112 = vmatpush1.bf16.msra.mxu0 %v5961
        %6113 = vmatprep.subr.bf16.mxu0 0
        %6114 = vmatpush1.bf16.msra.mxu0 %v5962
        %6115 = vmatprep.subr.bf16.mxu0 0
        %6116 = vmatpush1.bf16.msra.mxu0 %v5963
        %6117 = vmatprep.subr.bf16.mxu0 0
        %6118 = vmatpush1.bf16.msra.mxu0 %v5964
        %6119 = vmatprep.subr.bf16.mxu0 0
        %6120 = vmatpush1.bf16.msra.mxu0 %v5965
        %6121 = vmatprep.subr.bf16.mxu0 0
        %6122 = vmatpush1.bf16.msra.mxu0 %v5966
        %6123 = vmatprep.subr.bf16.mxu0 0
        %6124 = vmatpush1.bf16.msra.mxu0 %v5967
        %6125 = vmatprep.subr.bf16.mxu0 0
        %6126 = vmatpush1.bf16.msra.mxu0 %v5968
        %6127 = vmatprep.subr.bf16.mxu0 0
        %6128 = vmatpush1.bf16.msra.mxu0 %v5969
        %6129 = vmatprep.subr.bf16.mxu0 0
        %6130 = vmatpush1.bf16.msra.mxu0 %v5970
        %6131 = vmatprep.mubr.bf16.mxu0 %v5133
        %6132 = vmatmul.mubr.bf16.gmra.mrb[0].mxu0 %v5085
        %v6133 = vpop.f32.mrb[0].mxu0
        %v6134 = vadd.f32 %v5666, %v6133
        %v6135 = vpop.f32.mrb[0].mxu0
        %v6136 = vpop.f32.mrb[0].mxu0
        %v6137 = vadd.f32 %v5666, %v6136
        %v6138 = vpop.f32.mrb[0].mxu0
        %6139 = vmatprep.mubr.bf16.mxu0 %v5134
        %6140 = vmatmul.mubr.bf16.gmra.mrb[0].mxu0 %v5086
        %v6141 = vpop.f32.mrb[0].mxu0
        %v6142 = vadd.f32 %v5666, %v6141
        %v6143 = vpop.f32.mrb[0].mxu0
        %v6144 = vpop.f32.mrb[0].mxu0
        %v6145 = vadd.f32 %v5666, %v6144
        %v6146 = vpop.f32.mrb[0].mxu0
        %6147 = vmatprep.mubr.bf16.mxu0 %v5135
        %6148 = vmatmul.mubr.bf16.gmra.mrb[0].mxu0 %v5087
        %v6149 = vpop.f32.mrb[0].mxu0
        %v6150 = vadd.f32 %v5666, %v6149
        %v6151 = vpop.f32.mrb[0].mxu0
        %v6152 = vpop.f32.mrb[0].mxu0
        %v6153 = vadd.f32 %v5666, %v6152
        %v6154 = vpop.f32.mrb[0].mxu0
        %6155 = vmatprep.mubr.bf16.mxu0 %v5136
        %6156 = vmatmul.mubr.bf16.gmra.mrb[0].mxu0 %v5088
        %v6157 = vpop.f32.mrb[0].mxu0
        %v6158 = vadd.f32 %v5666, %v6157
        %v6159 = vpop.f32.mrb[0].mxu0
        %v6160 = vpop.f32.mrb[0].mxu0
        %v6161 = vadd.f32 %v5666, %v6160
        %v6162 = vpop.f32.mrb[0].mxu0
        %6163 = vmatprep.mubr.bf16.mxu0 %v5137
        %6164 = vmatmul.mubr.bf16.gmra.mrb[0].mxu0 %v5089
        %v6165 = vpop.f32.mrb[0].mxu0
        %v6166 = vadd.f32 %v5666, %v6165
        %v6167 = vpop.f32.mrb[0].mxu0
        %v6168 = vpop.f32.mrb[0].mxu0
        %v6169 = vadd.f32 %v5666, %v6168
        %v6170 = vpop.f32.mrb[0].mxu0
        %6171 = vmatprep.mubr.bf16.mxu0 %v5138
        %6172 = vmatmul.mubr.bf16.gmra.mrb[0].mxu0 %v5090
        %v6173 = vpop.f32.mrb[0].mxu0
        %v6174 = vadd.f32 %v5666, %v6173
        %v6175 = vpop.f32.mrb[0].mxu0
        %v6176 = vpop.f32.mrb[0].mxu0
        %v6177 = vadd.f32 %v5666, %v6176
        %v6178 = vpop.f32.mrb[0].mxu0
        %6179 = vmatprep.mubr.bf16.mxu0 %v5139
        %6180 = vmatmul.mubr.bf16.gmra.mrb[0].mxu0 %v5091
        %v6181 = vpop.f32.mrb[0].mxu0
        %v6182 = vadd.f32 %v5666, %v6181
        %v6183 = vpop.f32.mrb[0].mxu0
        %v6184 = vpop.f32.mrb[0].mxu0
        %v6185 = vadd.f32 %v5666, %v6184
        %v6186 = vpop.f32.mrb[0].mxu0
        %6187 = vmatprep.mubr.bf16.mxu0 %v5140
        %6188 = vmatmul.mubr.bf16.gmra.mrb[0].mxu0 %v5092
        %v6189 = vpop.f32.mrb[0].mxu0
        %v6190 = vadd.f32 %v5666, %v6189
        %v6191 = vpop.f32.mrb[0].mxu0
        %v6192 = vpop.f32.mrb[0].mxu0
        %v6193 = vadd.f32 %v5666, %v6192
        %v6194 = vpop.f32.mrb[0].mxu0
        %6195 = vmatprep.mubr.bf16.mxu0 %v5141
        %6196 = vmatmul.mubr.bf16.gmra.mrb[0].mxu0 %v5093
        %v6197 = vpop.f32.mrb[0].mxu0
        %v6198 = vadd.f32 %v5666, %v6197
        %v6199 = vpop.f32.mrb[0].mxu0
        %v6200 = vpop.f32.mrb[0].mxu0
        %v6201 = vadd.f32 %v5666, %v6200
        %v6202 = vpop.f32.mrb[0].mxu0
        %6203 = vmatprep.mubr.bf16.mxu0 %v5142
        %6204 = vmatmul.mubr.bf16.gmra.mrb[0].mxu0 %v5094
        %v6205 = vpop.f32.mrb[0].mxu0
        %v6206 = vadd.f32 %v5666, %v6205
        %v6207 = vpop.f32.mrb[0].mxu0
        %v6208 = vpop.f32.mrb[0].mxu0
        %v6209 = vadd.f32 %v5666, %v6208
        %v6210 = vpop.f32.mrb[0].mxu0
        %6211 = vmatprep.mubr.bf16.mxu0 %v5143
        %6212 = vmatmul.mubr.bf16.gmra.mrb[0].mxu0 %v5095
        %v6213 = vpop.f32.mrb[0].mxu0
        %v6214 = vadd.f32 %v5666, %v6213
        %v6215 = vpop.f32.mrb[0].mxu0
        %v6216 = vpop.f32.mrb[0].mxu0
        %v6217 = vadd.f32 %v5666, %v6216
        %v6218 = vpop.f32.mrb[0].mxu0
        %6219 = vmatprep.mubr.bf16.mxu0 %v5144
        %6220 = vmatmul.mubr.bf16.gmra.mrb[0].mxu0 %v5096
        %v6221 = vpop.f32.mrb[0].mxu0
        %v6222 = vadd.f32 %v5666, %v6221
        %v6223 = vpop.f32.mrb[0].mxu0
        %v6224 = vpop.f32.mrb[0].mxu0
        %v6225 = vadd.f32 %v5666, %v6224
        %v6226 = vpop.f32.mrb[0].mxu0
        %6227 = vmatprep.mubr.bf16.mxu0 %v5145
        %6228 = vmatmul.mubr.bf16.gmra.mrb[0].mxu0 %v5097
        %v6229 = vpop.f32.mrb[0].mxu0
        %v6230 = vadd.f32 %v5666, %v6229
        %v6231 = vpop.f32.mrb[0].mxu0
        %v6232 = vpop.f32.mrb[0].mxu0
        %v6233 = vadd.f32 %v5666, %v6232
        %v6234 = vpop.f32.mrb[0].mxu0
        %6235 = vmatprep.mubr.bf16.mxu0 %v5146
        %6236 = vmatmul.mubr.bf16.gmra.mrb[0].mxu0 %v5098
        %v6237 = vpop.f32.mrb[0].mxu0
        %v6238 = vadd.f32 %v5666, %v6237
        %v6239 = vpop.f32.mrb[0].mxu0
        %v6240 = vpop.f32.mrb[0].mxu0
        %v6241 = vadd.f32 %v5666, %v6240
        %v6242 = vpop.f32.mrb[0].mxu0
        %6243 = vmatprep.mubr.bf16.mxu0 %v5147
        %6244 = vmatmul.mubr.bf16.gmra.mrb[0].mxu0 %v5099
        %v6245 = vpop.f32.mrb[0].mxu0
        %v6246 = vadd.f32 %v5666, %v6245
        %v6247 = vpop.f32.mrb[0].mxu0
        %v6248 = vpop.f32.mrb[0].mxu0
        %v6249 = vadd.f32 %v5666, %v6248
        %v6250 = vpop.f32.mrb[0].mxu0
        %6251 = vmatprep.mubr.bf16.mxu0 %v5148
        %6252 = vmatmul.mubr.bf16.gmra.mrb[0].mxu0 %v5100
        %v6253 = vpop.f32.mrb[0].mxu0
        %v6254 = vadd.f32 %v5666, %v6253
        %v6255 = vpop.f32.mrb[0].mxu0
        %v6256 = vpop.f32.mrb[0].mxu0
        %v6257 = vadd.f32 %v5666, %v6256
        %v6258 = vpop.f32.mrb[0].mxu0
        %6259 = vdwg.mxu0
        %6260 = vmatprep.subr.bf16.mxu0 0
        %6261 = vmatpush1.bf16.msra.mxu0 %v5971
        %6262 = vmatprep.subr.bf16.mxu0 0
        %6263 = vmatpush1.bf16.msra.mxu0 %v5972
        %6264 = vmatprep.subr.bf16.mxu0 0
        %6265 = vmatpush1.bf16.msra.mxu0 %v5973
        %6266 = vmatprep.subr.bf16.mxu0 0
        %6267 = vmatpush1.bf16.msra.mxu0 %v5974
        %6268 = vmatprep.subr.bf16.mxu0 0
        %6269 = vmatpush1.bf16.msra.mxu0 %v5975
        %6270 = vmatprep.subr.bf16.mxu0 0
        %6271 = vmatpush1.bf16.msra.mxu0 %v5976
        %6272 = vmatprep.subr.bf16.mxu0 0
        %6273 = vmatpush1.bf16.msra.mxu0 %v5977
        %6274 = vmatprep.subr.bf16.mxu0 0
        %6275 = vmatpush1.bf16.msra.mxu0 %v5978
        %6276 = vmatprep.subr.bf16.mxu0 0
        %6277 = vmatpush1.bf16.msra.mxu0 %v5979
        %6278 = vmatprep.subr.bf16.mxu0 0
        %6279 = vmatpush1.bf16.msra.mxu0 %v5980
        %6280 = vmatprep.subr.bf16.mxu0 0
        %6281 = vmatpush1.bf16.msra.mxu0 %v5981
        %6282 = vmatprep.subr.bf16.mxu0 0
        %6283 = vmatpush1.bf16.msra.mxu0 %v5982
        %6284 = vmatprep.subr.bf16.mxu0 0
        %6285 = vmatpush1.bf16.msra.mxu0 %v5983
        %6286 = vmatprep.subr.bf16.mxu0 0
        %6287 = vmatpush1.bf16.msra.mxu0 %v5984
        %6288 = vmatprep.subr.bf16.mxu0 0
        %6289 = vmatpush1.bf16.msra.mxu0 %v5985
        %6290 = vmatprep.subr.bf16.mxu0 0
        %6291 = vmatpush1.bf16.msra.mxu0 %v5986
        %6292 = vmatprep.mubr.bf16.mxu0 %v5293
        %6293 = vmatmul.mubr.bf16.gmra.mrb[0].mxu0 %v5245
        %v6294 = vpop.f32.mrb[0].mxu0
        %v6295 = vadd.f32 %v6134, %v6294
        %v6296 = vpop.f32.mrb[0].mxu0
        %v6297 = vpop.f32.mrb[0].mxu0
        %v6298 = vadd.f32 %v6137, %v6297
        %v6299 = vpop.f32.mrb[0].mxu0
        %6300 = vmatprep.mubr.bf16.mxu0 %v5294
        %6301 = vmatmul.mubr.bf16.gmra.mrb[0].mxu0 %v5246
        %v6302 = vpop.f32.mrb[0].mxu0
        %v6303 = vadd.f32 %v6142, %v6302
        %v6304 = vpop.f32.mrb[0].mxu0
        %v6305 = vpop.f32.mrb[0].mxu0
        %v6306 = vadd.f32 %v6145, %v6305
        %v6307 = vpop.f32.mrb[0].mxu0
        %6308 = vmatprep.mubr.bf16.mxu0 %v5295
        %6309 = vmatmul.mubr.bf16.gmra.mrb[0].mxu0 %v5247
        %v6310 = vpop.f32.mrb[0].mxu0
        %v6311 = vadd.f32 %v6150, %v6310
        %v6312 = vpop.f32.mrb[0].mxu0
        %v6313 = vpop.f32.mrb[0].mxu0
        %v6314 = vadd.f32 %v6153, %v6313
        %v6315 = vpop.f32.mrb[0].mxu0
        %6316 = vmatprep.mubr.bf16.mxu0 %v5296
        %6317 = vmatmul.mubr.bf16.gmra.mrb[0].mxu0 %v5248
        %v6318 = vpop.f32.mrb[0].mxu0
        %v6319 = vadd.f32 %v6158, %v6318
        %v6320 = vpop.f32.mrb[0].mxu0
        %v6321 = vpop.f32.mrb[0].mxu0
        %v6322 = vadd.f32 %v6161, %v6321
        %v6323 = vpop.f32.mrb[0].mxu0
        %6324 = vmatprep.mubr.bf16.mxu0 %v5297
        %6325 = vmatmul.mubr.bf16.gmra.mrb[0].mxu0 %v5249
        %v6326 = vpop.f32.mrb[0].mxu0
        %v6327 = vadd.f32 %v6166, %v6326
        %v6328 = vpop.f32.mrb[0].mxu0
        %v6329 = vpop.f32.mrb[0].mxu0
        %v6330 = vadd.f32 %v6169, %v6329
        %v6331 = vpop.f32.mrb[0].mxu0
        %6332 = vmatprep.mubr.bf16.mxu0 %v5298
        %6333 = vmatmul.mubr.bf16.gmra.mrb[0].mxu0 %v5250
        %v6334 = vpop.f32.mrb[0].mxu0
        %v6335 = vadd.f32 %v6174, %v6334
        %v6336 = vpop.f32.mrb[0].mxu0
        %v6337 = vpop.f32.mrb[0].mxu0
        %v6338 = vadd.f32 %v6177, %v6337
        %v6339 = vpop.f32.mrb[0].mxu0
        %6340 = vmatprep.mubr.bf16.mxu0 %v5299
        %6341 = vmatmul.mubr.bf16.gmra.mrb[0].mxu0 %v5251
        %v6342 = vpop.f32.mrb[0].mxu0
        %v6343 = vadd.f32 %v6182, %v6342
        %v6344 = vpop.f32.mrb[0].mxu0
        %v6345 = vpop.f32.mrb[0].mxu0
        %v6346 = vadd.f32 %v6185, %v6345
        %v6347 = vpop.f32.mrb[0].mxu0
        %6348 = vmatprep.mubr.bf16.mxu0 %v5300
        %6349 = vmatmul.mubr.bf16.gmra.mrb[0].mxu0 %v5252
        %v6350 = vpop.f32.mrb[0].mxu0
        %v6351 = vadd.f32 %v6190, %v6350
        %v6352 = vpop.f32.mrb[0].mxu0
        %v6353 = vpop.f32.mrb[0].mxu0
        %v6354 = vadd.f32 %v6193, %v6353
        %v6355 = vpop.f32.mrb[0].mxu0
        %6356 = vmatprep.mubr.bf16.mxu0 %v5301
        %6357 = vmatmul.mubr.bf16.gmra.mrb[0].mxu0 %v5253
        %v6358 = vpop.f32.mrb[0].mxu0
        %v6359 = vadd.f32 %v6198, %v6358
        %v6360 = vpop.f32.mrb[0].mxu0
        %v6361 = vpop.f32.mrb[0].mxu0
        %v6362 = vadd.f32 %v6201, %v6361
        %v6363 = vpop.f32.mrb[0].mxu0
        %6364 = vmatprep.mubr.bf16.mxu0 %v5302
        %6365 = vmatmul.mubr.bf16.gmra.mrb[0].mxu0 %v5254
        %v6366 = vpop.f32.mrb[0].mxu0
        %v6367 = vadd.f32 %v6206, %v6366
        %v6368 = vpop.f32.mrb[0].mxu0
        %v6369 = vpop.f32.mrb[0].mxu0
        %v6370 = vadd.f32 %v6209, %v6369
        %v6371 = vpop.f32.mrb[0].mxu0
        %6372 = vmatprep.mubr.bf16.mxu0 %v5303
        %6373 = vmatmul.mubr.bf16.gmra.mrb[0].mxu0 %v5255
        %v6374 = vpop.f32.mrb[0].mxu0
        %v6375 = vadd.f32 %v6214, %v6374
        %v6376 = vpop.f32.mrb[0].mxu0
        %v6377 = vpop.f32.mrb[0].mxu0
        %v6378 = vadd.f32 %v6217, %v6377
        %v6379 = vpop.f32.mrb[0].mxu0
        %6380 = vmatprep.mubr.bf16.mxu0 %v5304
        %6381 = vmatmul.mubr.bf16.gmra.mrb[0].mxu0 %v5256
        %v6382 = vpop.f32.mrb[0].mxu0
        %v6383 = vadd.f32 %v6222, %v6382
        %v6384 = vpop.f32.mrb[0].mxu0
        %v6385 = vpop.f32.mrb[0].mxu0
        %v6386 = vadd.f32 %v6225, %v6385
        %v6387 = vpop.f32.mrb[0].mxu0
        %6388 = vmatprep.mubr.bf16.mxu0 %v5305
        %6389 = vmatmul.mubr.bf16.gmra.mrb[0].mxu0 %v5257
        %v6390 = vpop.f32.mrb[0].mxu0
        %v6391 = vadd.f32 %v6230, %v6390
        %v6392 = vpop.f32.mrb[0].mxu0
        %v6393 = vpop.f32.mrb[0].mxu0
        %v6394 = vadd.f32 %v6233, %v6393
        %v6395 = vpop.f32.mrb[0].mxu0
        %6396 = vmatprep.mubr.bf16.mxu0 %v5306
        %6397 = vmatmul.mubr.bf16.gmra.mrb[0].mxu0 %v5258
        %v6398 = vpop.f32.mrb[0].mxu0
        %v6399 = vadd.f32 %v6238, %v6398
        %v6400 = vpop.f32.mrb[0].mxu0
        %v6401 = vpop.f32.mrb[0].mxu0
        %v6402 = vadd.f32 %v6241, %v6401
        %v6403 = vpop.f32.mrb[0].mxu0
        %6404 = vmatprep.mubr.bf16.mxu0 %v5307
        %6405 = vmatmul.mubr.bf16.gmra.mrb[0].mxu0 %v5259
        %v6406 = vpop.f32.mrb[0].mxu0
        %v6407 = vadd.f32 %v6246, %v6406
        %v6408 = vpop.f32.mrb[0].mxu0
        %v6409 = vpop.f32.mrb[0].mxu0
        %v6410 = vadd.f32 %v6249, %v6409
        %v6411 = vpop.f32.mrb[0].mxu0
        %6412 = vmatprep.mubr.bf16.mxu0 %v5308
        %6413 = vmatmul.mubr.bf16.gmra.mrb[0].mxu0 %v5260
        %v6414 = vpop.f32.mrb[0].mxu0
        %v6415 = vadd.f32 %v6254, %v6414
        %v6416 = vpop.f32.mrb[0].mxu0
        %v6417 = vpop.f32.mrb[0].mxu0
        %v6418 = vadd.f32 %v6257, %v6417
        %v6419 = vpop.f32.mrb[0].mxu0
        %6420 = vdwg.mxu0
        %6421 = vmatprep.subr.bf16.mxu0 0
        %6422 = vmatpush1.bf16.msra.mxu0 %v5987
        %6423 = vmatprep.subr.bf16.mxu0 0
        %6424 = vmatpush1.bf16.msra.mxu0 %v5988
        %6425 = vmatprep.subr.bf16.mxu0 0
        %6426 = vmatpush1.bf16.msra.mxu0 %v5989
        %6427 = vmatprep.subr.bf16.mxu0 0
        %6428 = vmatpush1.bf16.msra.mxu0 %v5990
        %6429 = vmatprep.subr.bf16.mxu0 0
        %6430 = vmatpush1.bf16.msra.mxu0 %v5991
        %6431 = vmatprep.subr.bf16.mxu0 0
        %6432 = vmatpush1.bf16.msra.mxu0 %v5992
        %6433 = vmatprep.subr.bf16.mxu0 0
        %6434 = vmatpush1.bf16.msra.mxu0 %v5993
        %6435 = vmatprep.subr.bf16.mxu0 0
        %6436 = vmatpush1.bf16.msra.mxu0 %v5994
        %6437 = vmatprep.subr.bf16.mxu0 0
        %6438 = vmatpush1.bf16.msra.mxu0 %v5995
        %6439 = vmatprep.subr.bf16.mxu0 0
        %6440 = vmatpush1.bf16.msra.mxu0 %v5996
        %6441 = vmatprep.subr.bf16.mxu0 0
        %6442 = vmatpush1.bf16.msra.mxu0 %v5997
        %6443 = vmatprep.subr.bf16.mxu0 0
        %6444 = vmatpush1.bf16.msra.mxu0 %v5998
        %6445 = vmatprep.subr.bf16.mxu0 0
        %6446 = vmatpush1.bf16.msra.mxu0 %v5999
        %6447 = vmatprep.subr.bf16.mxu0 0
        %6448 = vmatpush1.bf16.msra.mxu0 %v6000
        %6449 = vmatprep.subr.bf16.mxu0 0
        %6450 = vmatpush1.bf16.msra.mxu0 %v6001
        %6451 = vmatprep.subr.bf16.mxu0 0
        %6452 = vmatpush1.bf16.msra.mxu0 %v6002
        %6453 = vmatprep.mubr.bf16.mxu0 %v5357
        %6454 = vmatmul.mubr.bf16.gmra.mrb[0].mxu0 %v5309
        %v6455 = vpop.f32.mrb[0].mxu0
        %v6456 = vadd.f32 %v6295, %v6455
        %v6457 = vpop.f32.mrb[0].mxu0
        %v6458 = vpop.f32.mrb[0].mxu0
        %v6459 = vadd.f32 %v6298, %v6458
        %v6460 = vpop.f32.mrb[0].mxu0
        %6461 = vmatprep.mubr.bf16.mxu0 %v5358
        %6462 = vmatmul.mubr.bf16.gmra.mrb[0].mxu0 %v5310
        %v6463 = vpop.f32.mrb[0].mxu0
        %v6464 = vadd.f32 %v6303, %v6463
        %v6465 = vpop.f32.mrb[0].mxu0
        %v6466 = vpop.f32.mrb[0].mxu0
        %v6467 = vadd.f32 %v6306, %v6466
        %v6468 = vpop.f32.mrb[0].mxu0
        %6469 = vmatprep.mubr.bf16.mxu0 %v5359
        %6470 = vmatmul.mubr.bf16.gmra.mrb[0].mxu0 %v5311
        %v6471 = vpop.f32.mrb[0].mxu0
        %v6472 = vadd.f32 %v6311, %v6471
        %v6473 = vpop.f32.mrb[0].mxu0
        %v6474 = vpop.f32.mrb[0].mxu0
        %v6475 = vadd.f32 %v6314, %v6474
        %v6476 = vpop.f32.mrb[0].mxu0
        %6477 = vmatprep.mubr.bf16.mxu0 %v5360
        %6478 = vmatmul.mubr.bf16.gmra.mrb[0].mxu0 %v5312
        %v6479 = vpop.f32.mrb[0].mxu0
        %v6480 = vadd.f32 %v6319, %v6479
        %v6481 = vpop.f32.mrb[0].mxu0
        %v6482 = vpop.f32.mrb[0].mxu0
        %v6483 = vadd.f32 %v6322, %v6482
        %v6484 = vpop.f32.mrb[0].mxu0
        %6485 = vmatprep.mubr.bf16.mxu0 %v5361
        %6486 = vmatmul.mubr.bf16.gmra.mrb[0].mxu0 %v5313
        %v6487 = vpop.f32.mrb[0].mxu0
        %v6488 = vadd.f32 %v6327, %v6487
        %v6489 = vpop.f32.mrb[0].mxu0
        %v6490 = vpop.f32.mrb[0].mxu0
        %v6491 = vadd.f32 %v6330, %v6490
        %v6492 = vpop.f32.mrb[0].mxu0
        %6493 = vmatprep.mubr.bf16.mxu0 %v5362
        %6494 = vmatmul.mubr.bf16.gmra.mrb[0].mxu0 %v5314
        %v6495 = vpop.f32.mrb[0].mxu0
        %v6496 = vadd.f32 %v6335, %v6495
        %v6497 = vpop.f32.mrb[0].mxu0
        %v6498 = vpop.f32.mrb[0].mxu0
        %v6499 = vadd.f32 %v6338, %v6498
        %v6500 = vpop.f32.mrb[0].mxu0
        %6501 = vmatprep.mubr.bf16.mxu0 %v5363
        %6502 = vmatmul.mubr.bf16.gmra.mrb[0].mxu0 %v5315
        %v6503 = vpop.f32.mrb[0].mxu0
        %v6504 = vadd.f32 %v6343, %v6503
        %v6505 = vpop.f32.mrb[0].mxu0
        %v6506 = vpop.f32.mrb[0].mxu0
        %v6507 = vadd.f32 %v6346, %v6506
        %v6508 = vpop.f32.mrb[0].mxu0
        %6509 = vmatprep.mubr.bf16.mxu0 %v5364
        %6510 = vmatmul.mubr.bf16.gmra.mrb[0].mxu0 %v5316
        %v6511 = vpop.f32.mrb[0].mxu0
        %v6512 = vadd.f32 %v6351, %v6511
        %v6513 = vpop.f32.mrb[0].mxu0
        %v6514 = vpop.f32.mrb[0].mxu0
        %v6515 = vadd.f32 %v6354, %v6514
        %v6516 = vpop.f32.mrb[0].mxu0
        %6517 = vmatprep.mubr.bf16.mxu0 %v5365
        %6518 = vmatmul.mubr.bf16.gmra.mrb[0].mxu0 %v5317
        %v6519 = vpop.f32.mrb[0].mxu0
        %v6520 = vadd.f32 %v6359, %v6519
        %v6521 = vpop.f32.mrb[0].mxu0
        %v6522 = vpop.f32.mrb[0].mxu0
        %v6523 = vadd.f32 %v6362, %v6522
        %v6524 = vpop.f32.mrb[0].mxu0
        %6525 = vmatprep.mubr.bf16.mxu0 %v5366
        %6526 = vmatmul.mubr.bf16.gmra.mrb[0].mxu0 %v5318
        %v6527 = vpop.f32.mrb[0].mxu0
        %v6528 = vadd.f32 %v6367, %v6527
        %v6529 = vpop.f32.mrb[0].mxu0
        %v6530 = vpop.f32.mrb[0].mxu0
        %v6531 = vadd.f32 %v6370, %v6530
        %v6532 = vpop.f32.mrb[0].mxu0
        %6533 = vmatprep.mubr.bf16.mxu0 %v5367
        %6534 = vmatmul.mubr.bf16.gmra.mrb[0].mxu0 %v5319
        %v6535 = vpop.f32.mrb[0].mxu0
        %v6536 = vadd.f32 %v6375, %v6535
        %v6537 = vpop.f32.mrb[0].mxu0
        %v6538 = vpop.f32.mrb[0].mxu0
        %v6539 = vadd.f32 %v6378, %v6538
        %v6540 = vpop.f32.mrb[0].mxu0
        %6541 = vmatprep.mubr.bf16.mxu0 %v5368
        %6542 = vmatmul.mubr.bf16.gmra.mrb[0].mxu0 %v5320
        %v6543 = vpop.f32.mrb[0].mxu0
        %v6544 = vadd.f32 %v6383, %v6543
        %v6545 = vpop.f32.mrb[0].mxu0
        %v6546 = vpop.f32.mrb[0].mxu0
        %v6547 = vadd.f32 %v6386, %v6546
        %v6548 = vpop.f32.mrb[0].mxu0
        %6549 = vmatprep.mubr.bf16.mxu0 %v5369
        %6550 = vmatmul.mubr.bf16.gmra.mrb[0].mxu0 %v5321
        %v6551 = vpop.f32.mrb[0].mxu0
        %v6552 = vadd.f32 %v6391, %v6551
        %v6553 = vpop.f32.mrb[0].mxu0
        %v6554 = vpop.f32.mrb[0].mxu0
        %v6555 = vadd.f32 %v6394, %v6554
        %v6556 = vpop.f32.mrb[0].mxu0
        %6557 = vmatprep.mubr.bf16.mxu0 %v5370
        %6558 = vmatmul.mubr.bf16.gmra.mrb[0].mxu0 %v5322
        %v6559 = vpop.f32.mrb[0].mxu0
        %v6560 = vadd.f32 %v6399, %v6559
        %v6561 = vpop.f32.mrb[0].mxu0
        %v6562 = vpop.f32.mrb[0].mxu0
        %v6563 = vadd.f32 %v6402, %v6562
        %v6564 = vpop.f32.mrb[0].mxu0
        %6565 = vmatprep.mubr.bf16.mxu0 %v5371
        %6566 = vmatmul.mubr.bf16.gmra.mrb[0].mxu0 %v5323
        %v6567 = vpop.f32.mrb[0].mxu0
        %v6568 = vadd.f32 %v6407, %v6567
        %v6569 = vpop.f32.mrb[0].mxu0
        %v6570 = vpop.f32.mrb[0].mxu0
        %v6571 = vadd.f32 %v6410, %v6570
        %v6572 = vpop.f32.mrb[0].mxu0
        %6573 = vmatprep.mubr.bf16.mxu0 %v5372
        %6574 = vmatmul.mubr.bf16.gmra.mrb[0].mxu0 %v5324
        %v6575 = vpop.f32.mrb[0].mxu0
        %v6576 = vadd.f32 %v6415, %v6575
        %v6577 = vpop.f32.mrb[0].mxu0
        %v6578 = vpop.f32.mrb[0].mxu0
        %v6579 = vadd.f32 %v6418, %v6578
        %v6580 = vpop.f32.mrb[0].mxu0
        %6581 = vdwg.mxu0
        %6582 = vmatprep.subr.bf16.mxu0 0
        %6583 = vmatpush1.bf16.msra.mxu0 %v6003
        %6584 = vmatprep.subr.bf16.mxu0 0
        %6585 = vmatpush1.bf16.msra.mxu0 %v6004
        %6586 = vmatprep.subr.bf16.mxu0 0
        %6587 = vmatpush1.bf16.msra.mxu0 %v6005
        %6588 = vmatprep.subr.bf16.mxu0 0
        %6589 = vmatpush1.bf16.msra.mxu0 %v6006
        %6590 = vmatprep.subr.bf16.mxu0 0
        %6591 = vmatpush1.bf16.msra.mxu0 %v6007
        %6592 = vmatprep.subr.bf16.mxu0 0
        %6593 = vmatpush1.bf16.msra.mxu0 %v6008
        %6594 = vmatprep.subr.bf16.mxu0 0
        %6595 = vmatpush1.bf16.msra.mxu0 %v6009
        %6596 = vmatprep.subr.bf16.mxu0 0
        %6597 = vmatpush1.bf16.msra.mxu0 %v6010
        %6598 = vmatprep.subr.bf16.mxu0 0
        %6599 = vmatpush1.bf16.msra.mxu0 %v6011
        %6600 = vmatprep.subr.bf16.mxu0 0
        %6601 = vmatpush1.bf16.msra.mxu0 %v6012
        %6602 = vmatprep.subr.bf16.mxu0 0
        %6603 = vmatpush1.bf16.msra.mxu0 %v6013
        %6604 = vmatprep.subr.bf16.mxu0 0
        %6605 = vmatpush1.bf16.msra.mxu0 %v6014
        %6606 = vmatprep.subr.bf16.mxu0 0
        %6607 = vmatpush1.bf16.msra.mxu0 %v6015
        %6608 = vmatprep.subr.bf16.mxu0 0
        %6609 = vmatpush1.bf16.msra.mxu0 %v6016
        %6610 = vmatprep.subr.bf16.mxu0 0
        %6611 = vmatpush1.bf16.msra.mxu0 %v6017
        %6612 = vmatprep.subr.bf16.mxu0 0
        %6613 = vmatpush1.bf16.msra.mxu0 %v6018
        %6614 = vmatprep.mubr.bf16.mxu0 %v5453
        %6615 = vmatmul.mubr.bf16.gmra.mrb[0].mxu0 %v5405
        %v6616 = vpop.f32.mrb[0].mxu0
        %v6617 = vadd.f32 %v6456, %v6616
        %v6618 = vpop.f32.mrb[0].mxu0
        %v6619 = vpop.f32.mrb[0].mxu0
        %v6620 = vadd.f32 %v6459, %v6619
        %v6621 = vpop.f32.mrb[0].mxu0
        %6622 = vmatprep.mubr.bf16.mxu0 %v5454
        %6623 = vmatmul.mubr.bf16.gmra.mrb[0].mxu0 %v5406
        %v6624 = vpop.f32.mrb[0].mxu0
        %v6625 = vadd.f32 %v6464, %v6624
        %v6626 = vpop.f32.mrb[0].mxu0
        %v6627 = vpop.f32.mrb[0].mxu0
        %v6628 = vadd.f32 %v6467, %v6627
        %v6629 = vpop.f32.mrb[0].mxu0
        %6630 = vmatprep.mubr.bf16.mxu0 %v5455
        %6631 = vmatmul.mubr.bf16.gmra.mrb[0].mxu0 %v5407
        %v6632 = vpop.f32.mrb[0].mxu0
        %v6633 = vadd.f32 %v6472, %v6632
        %v6634 = vpop.f32.mrb[0].mxu0
        %v6635 = vpop.f32.mrb[0].mxu0
        %v6636 = vadd.f32 %v6475, %v6635
        %v6637 = vpop.f32.mrb[0].mxu0
        %6638 = vmatprep.mubr.bf16.mxu0 %v5456
        %6639 = vmatmul.mubr.bf16.gmra.mrb[0].mxu0 %v5408
        %v6640 = vpop.f32.mrb[0].mxu0
        %v6641 = vadd.f32 %v6480, %v6640
        %v6642 = vpop.f32.mrb[0].mxu0
        %v6643 = vpop.f32.mrb[0].mxu0
        %v6644 = vadd.f32 %v6483, %v6643
        %v6645 = vpop.f32.mrb[0].mxu0
        %6646 = vmatprep.mubr.bf16.mxu0 %v5457
        %6647 = vmatmul.mubr.bf16.gmra.mrb[0].mxu0 %v5409
        %v6648 = vpop.f32.mrb[0].mxu0
        %v6649 = vadd.f32 %v6488, %v6648
        %v6650 = vpop.f32.mrb[0].mxu0
        %v6651 = vpop.f32.mrb[0].mxu0
        %v6652 = vadd.f32 %v6491, %v6651
        %v6653 = vpop.f32.mrb[0].mxu0
        %6654 = vmatprep.mubr.bf16.mxu0 %v5458
        %6655 = vmatmul.mubr.bf16.gmra.mrb[0].mxu0 %v5410
        %v6656 = vpop.f32.mrb[0].mxu0
        %v6657 = vadd.f32 %v6496, %v6656
        %v6658 = vpop.f32.mrb[0].mxu0
        %v6659 = vpop.f32.mrb[0].mxu0
        %v6660 = vadd.f32 %v6499, %v6659
        %v6661 = vpop.f32.mrb[0].mxu0
        %6662 = vmatprep.mubr.bf16.mxu0 %v5459
        %6663 = vmatmul.mubr.bf16.gmra.mrb[0].mxu0 %v5411
        %v6664 = vpop.f32.mrb[0].mxu0
        %v6665 = vadd.f32 %v6504, %v6664
        %v6666 = vpop.f32.mrb[0].mxu0
        %v6667 = vpop.f32.mrb[0].mxu0
        %v6668 = vadd.f32 %v6507, %v6667
        %v6669 = vpop.f32.mrb[0].mxu0
        %6670 = vmatprep.mubr.bf16.mxu0 %v5460
        %6671 = vmatmul.mubr.bf16.gmra.mrb[0].mxu0 %v5412
        %v6672 = vpop.f32.mrb[0].mxu0
        %v6673 = vadd.f32 %v6512, %v6672
        %v6674 = vpop.f32.mrb[0].mxu0
        %v6675 = vpop.f32.mrb[0].mxu0
        %v6676 = vadd.f32 %v6515, %v6675
        %v6677 = vpop.f32.mrb[0].mxu0
        %6678 = vmatprep.mubr.bf16.mxu0 %v5461
        %6679 = vmatmul.mubr.bf16.gmra.mrb[0].mxu0 %v5413
        %v6680 = vpop.f32.mrb[0].mxu0
        %v6681 = vadd.f32 %v6520, %v6680
        %v6682 = vpop.f32.mrb[0].mxu0
        %v6683 = vpop.f32.mrb[0].mxu0
        %v6684 = vadd.f32 %v6523, %v6683
        %v6685 = vpop.f32.mrb[0].mxu0
        %6686 = vmatprep.mubr.bf16.mxu0 %v5462
        %6687 = vmatmul.mubr.bf16.gmra.mrb[0].mxu0 %v5414
        %v6688 = vpop.f32.mrb[0].mxu0
        %v6689 = vadd.f32 %v6528, %v6688
        %v6690 = vpop.f32.mrb[0].mxu0
        %v6691 = vpop.f32.mrb[0].mxu0
        %v6692 = vadd.f32 %v6531, %v6691
        %v6693 = vpop.f32.mrb[0].mxu0
        %6694 = vmatprep.mubr.bf16.mxu0 %v5463
        %6695 = vmatmul.mubr.bf16.gmra.mrb[0].mxu0 %v5415
        %v6696 = vpop.f32.mrb[0].mxu0
        %v6697 = vadd.f32 %v6536, %v6696
        %v6698 = vpop.f32.mrb[0].mxu0
        %v6699 = vpop.f32.mrb[0].mxu0
        %v6700 = vadd.f32 %v6539, %v6699
        %v6701 = vpop.f32.mrb[0].mxu0
        %6702 = vmatprep.mubr.bf16.mxu0 %v5464
        %6703 = vmatmul.mubr.bf16.gmra.mrb[0].mxu0 %v5416
        %v6704 = vpop.f32.mrb[0].mxu0
        %v6705 = vadd.f32 %v6544, %v6704
        %v6706 = vpop.f32.mrb[0].mxu0
        %v6707 = vpop.f32.mrb[0].mxu0
        %v6708 = vadd.f32 %v6547, %v6707
        %v6709 = vpop.f32.mrb[0].mxu0
        %6710 = vmatprep.mubr.bf16.mxu0 %v5465
        %6711 = vmatmul.mubr.bf16.gmra.mrb[0].mxu0 %v5417
        %v6712 = vpop.f32.mrb[0].mxu0
        %v6713 = vadd.f32 %v6552, %v6712
        %v6714 = vpop.f32.mrb[0].mxu0
        %v6715 = vpop.f32.mrb[0].mxu0
        %v6716 = vadd.f32 %v6555, %v6715
        %v6717 = vpop.f32.mrb[0].mxu0
        %6718 = vmatprep.mubr.bf16.mxu0 %v5466
        %6719 = vmatmul.mubr.bf16.gmra.mrb[0].mxu0 %v5418
        %v6720 = vpop.f32.mrb[0].mxu0
        %v6721 = vadd.f32 %v6560, %v6720
        %v6722 = vpop.f32.mrb[0].mxu0
        %v6723 = vpop.f32.mrb[0].mxu0
        %v6724 = vadd.f32 %v6563, %v6723
        %v6725 = vpop.f32.mrb[0].mxu0
        %6726 = vmatprep.mubr.bf16.mxu0 %v5467
        %6727 = vmatmul.mubr.bf16.gmra.mrb[0].mxu0 %v5419
        %v6728 = vpop.f32.mrb[0].mxu0
        %v6729 = vadd.f32 %v6568, %v6728
        %v6730 = vpop.f32.mrb[0].mxu0
        %v6731 = vpop.f32.mrb[0].mxu0
        %v6732 = vadd.f32 %v6571, %v6731
        %v6733 = vpop.f32.mrb[0].mxu0
        %6734 = vmatprep.mubr.bf16.mxu0 %v5468
        %6735 = vmatmul.mubr.bf16.gmra.mrb[0].mxu0 %v5420
        %v6736 = vpop.f32.mrb[0].mxu0
        %v6737 = vadd.f32 %v6576, %v6736
        %v6738 = vpop.f32.mrb[0].mxu0
        %v6739 = vpop.f32.mrb[0].mxu0
        %v6740 = vadd.f32 %v6579, %v6739
        %v6741 = vpop.f32.mrb[0].mxu0
        %6742 = vdwg.mxu0
        %6743 = vmatprep.subr.bf16.mxu0 0
        %6744 = vmatpush1.bf16.msra.mxu0 %v6019
        %6745 = vmatprep.subr.bf16.mxu0 0
        %6746 = vmatpush1.bf16.msra.mxu0 %v6020
        %6747 = vmatprep.subr.bf16.mxu0 0
        %6748 = vmatpush1.bf16.msra.mxu0 %v6021
        %6749 = vmatprep.subr.bf16.mxu0 0
        %6750 = vmatpush1.bf16.msra.mxu0 %v6022
        %6751 = vmatprep.subr.bf16.mxu0 0
        %6752 = vmatpush1.bf16.msra.mxu0 %v6023
        %6753 = vmatprep.subr.bf16.mxu0 0
        %6754 = vmatpush1.bf16.msra.mxu0 %v6024
        %6755 = vmatprep.subr.bf16.mxu0 0
        %6756 = vmatpush1.bf16.msra.mxu0 %v6025
        %6757 = vmatprep.subr.bf16.mxu0 0
        %6758 = vmatpush1.bf16.msra.mxu0 %v6026
        %6759 = vmatprep.subr.bf16.mxu0 0
        %6760 = vmatpush1.bf16.msra.mxu0 0
        %6761 = vmatprep.subr.bf16.mxu0 0
        %6762 = vmatpush1.bf16.msra.mxu0 0
        %6763 = vmatprep.subr.bf16.mxu0 0
        %6764 = vmatpush1.bf16.msra.mxu0 0
        %6765 = vmatprep.subr.bf16.mxu0 0
        %6766 = vmatpush1.bf16.msra.mxu0 0
        %6767 = vmatprep.subr.bf16.mxu0 0
        %6768 = vmatpush1.bf16.msra.mxu0 0
        %6769 = vmatprep.subr.bf16.mxu0 0
        %6770 = vmatpush1.bf16.msra.mxu0 0
        %6771 = vmatprep.subr.bf16.mxu0 0
        %6772 = vmatpush1.bf16.msra.mxu0 0
        %6773 = vmatprep.subr.bf16.mxu0 0
        %6774 = vmatpush1.bf16.msra.mxu0 0
        %6775 = vmatprep.mubr.bf16.mxu0 0
        %6776 = vmatmul.mubr.bf16.gmra.mrb[0].mxu0 %v5501
        %v6777 = vpop.f32.mrb[0].mxu0
        %v6778 = vadd.f32 %v6617, %v6777
        %v6779 = vpop.f32.mrb[0].mxu0
        %v6780 = vpop.f32.mrb[0].mxu0
        %v6781 = vadd.f32 %v6620, %v6780
        %v6782 = vpop.f32.mrb[0].mxu0
        %6783 = vmatprep.mubr.bf16.mxu0 0
        %6784 = vmatmul.mubr.bf16.gmra.mrb[0].mxu0 %v5502
        %v6785 = vpop.f32.mrb[0].mxu0
        %v6786 = vadd.f32 %v6625, %v6785
        %v6787 = vpop.f32.mrb[0].mxu0
        %v6788 = vpop.f32.mrb[0].mxu0
        %v6789 = vadd.f32 %v6628, %v6788
        %v6790 = vpop.f32.mrb[0].mxu0
        %6791 = vmatprep.mubr.bf16.mxu0 0
        %6792 = vmatmul.mubr.bf16.gmra.mrb[0].mxu0 %v5503
        %v6793 = vpop.f32.mrb[0].mxu0
        %v6794 = vadd.f32 %v6633, %v6793
        %v6795 = vpop.f32.mrb[0].mxu0
        %v6796 = vpop.f32.mrb[0].mxu0
        %v6797 = vadd.f32 %v6636, %v6796
        %v6798 = vpop.f32.mrb[0].mxu0
        %6799 = vmatprep.mubr.bf16.mxu0 0
        %6800 = vmatmul.mubr.bf16.gmra.mrb[0].mxu0 %v5504
        %v6801 = vpop.f32.mrb[0].mxu0
        %v6802 = vadd.f32 %v6641, %v6801
        %v6803 = vpop.f32.mrb[0].mxu0
        %v6804 = vpop.f32.mrb[0].mxu0
        %v6805 = vadd.f32 %v6644, %v6804
        %v6806 = vpop.f32.mrb[0].mxu0
        %6807 = vmatprep.mubr.bf16.mxu0 0
        %6808 = vmatmul.mubr.bf16.gmra.mrb[0].mxu0 %v5505
        %v6809 = vpop.f32.mrb[0].mxu0
        %v6810 = vadd.f32 %v6649, %v6809
        %v6811 = vpop.f32.mrb[0].mxu0
        %v6812 = vpop.f32.mrb[0].mxu0
        %v6813 = vadd.f32 %v6652, %v6812
        %v6814 = vpop.f32.mrb[0].mxu0
        %6815 = vmatprep.mubr.bf16.mxu0 0
        %6816 = vmatmul.mubr.bf16.gmra.mrb[0].mxu0 %v5506
        %v6817 = vpop.f32.mrb[0].mxu0
        %v6818 = vadd.f32 %v6657, %v6817
        %v6819 = vpop.f32.mrb[0].mxu0
        %v6820 = vpop.f32.mrb[0].mxu0
        %v6821 = vadd.f32 %v6660, %v6820
        %v6822 = vpop.f32.mrb[0].mxu0
        %6823 = vmatprep.mubr.bf16.mxu0 0
        %6824 = vmatmul.mubr.bf16.gmra.mrb[0].mxu0 %v5507
        %v6825 = vpop.f32.mrb[0].mxu0
        %v6826 = vadd.f32 %v6665, %v6825
        %v6827 = vpop.f32.mrb[0].mxu0
        %v6828 = vpop.f32.mrb[0].mxu0
        %v6829 = vadd.f32 %v6668, %v6828
        %v6830 = vpop.f32.mrb[0].mxu0
        %6831 = vmatprep.mubr.bf16.mxu0 0
        %6832 = vmatmul.mubr.bf16.gmra.mrb[0].mxu0 %v5508
        %v6833 = vpop.f32.mrb[0].mxu0
        %v6834 = vadd.f32 %v6673, %v6833
        %v6835 = vpop.f32.mrb[0].mxu0
        %v6836 = vpop.f32.mrb[0].mxu0
        %v6837 = vadd.f32 %v6676, %v6836
        %v6838 = vpop.f32.mrb[0].mxu0
        %6839 = vmatprep.mubr.bf16.mxu0 0
        %6840 = vmatmul.mubr.bf16.gmra.mrb[0].mxu0 %v5509
        %v6841 = vpop.f32.mrb[0].mxu0
        %v6842 = vadd.f32 %v6681, %v6841
        %v6843 = vpop.f32.mrb[0].mxu0
        %v6844 = vpop.f32.mrb[0].mxu0
        %v6845 = vadd.f32 %v6684, %v6844
        %v6846 = vpop.f32.mrb[0].mxu0
        %6847 = vmatprep.mubr.bf16.mxu0 0
        %6848 = vmatmul.mubr.bf16.gmra.mrb[0].mxu0 %v5510
        %v6849 = vpop.f32.mrb[0].mxu0
        %v6850 = vadd.f32 %v6689, %v6849
        %v6851 = vpop.f32.mrb[0].mxu0
        %v6852 = vpop.f32.mrb[0].mxu0
        %v6853 = vadd.f32 %v6692, %v6852
        %v6854 = vpop.f32.mrb[0].mxu0
        %6855 = vmatprep.mubr.bf16.mxu0 0
        %6856 = vmatmul.mubr.bf16.gmra.mrb[0].mxu0 %v5511
        %v6857 = vpop.f32.mrb[0].mxu0
        %v6858 = vadd.f32 %v6697, %v6857
        %v6859 = vpop.f32.mrb[0].mxu0
        %v6860 = vpop.f32.mrb[0].mxu0
        %v6861 = vadd.f32 %v6700, %v6860
        %v6862 = vpop.f32.mrb[0].mxu0
        %6863 = vmatprep.mubr.bf16.mxu0 0
        %6864 = vmatmul.mubr.bf16.gmra.mrb[0].mxu0 %v5512
        %v6865 = vpop.f32.mrb[0].mxu0
        %v6866 = vadd.f32 %v6705, %v6865
        %v6867 = vpop.f32.mrb[0].mxu0
        %v6868 = vpop.f32.mrb[0].mxu0
        %v6869 = vadd.f32 %v6708, %v6868
        %v6870 = vpop.f32.mrb[0].mxu0
        %6871 = vmatprep.mubr.bf16.mxu0 0
        %6872 = vmatmul.mubr.bf16.gmra.mrb[0].mxu0 %v5513
        %v6873 = vpop.f32.mrb[0].mxu0
        %v6874 = vadd.f32 %v6713, %v6873
        %v6875 = vpop.f32.mrb[0].mxu0
        %v6876 = vpop.f32.mrb[0].mxu0
        %v6877 = vadd.f32 %v6716, %v6876
        %v6878 = vpop.f32.mrb[0].mxu0
        %6879 = vmatprep.mubr.bf16.mxu0 0
        %6880 = vmatmul.mubr.bf16.gmra.mrb[0].mxu0 %v5514
        %v6881 = vpop.f32.mrb[0].mxu0
        %v6882 = vadd.f32 %v6721, %v6881
        %v6883 = vpop.f32.mrb[0].mxu0
        %v6884 = vpop.f32.mrb[0].mxu0
        %v6885 = vadd.f32 %v6724, %v6884
        %v6886 = vpop.f32.mrb[0].mxu0
        %6887 = vmatprep.mubr.bf16.mxu0 0
        %6888 = vmatmul.mubr.bf16.gmra.mrb[0].mxu0 %v5515
        %v6889 = vpop.f32.mrb[0].mxu0
        %v6890 = vadd.f32 %v6729, %v6889
        %v6891 = vpop.f32.mrb[0].mxu0
        %v6892 = vpop.f32.mrb[0].mxu0
        %v6893 = vadd.f32 %v6732, %v6892
        %v6894 = vpop.f32.mrb[0].mxu0
        %6895 = vmatprep.mubr.bf16.mxu0 0
        %6896 = vmatmul.mubr.bf16.gmra.mrb[0].mxu0 %v5516
        %v6897 = vpop.f32.mrb[0].mxu0
        %v6898 = vadd.f32 %v6737, %v6897
        %v6899 = vpop.f32.mrb[0].mxu0
        %v6900 = vpop.f32.mrb[0].mxu0
        %v6901 = vadd.f32 %v6740, %v6900
        %v6902 = vpop.f32.mrb[0].mxu0
        %6903 = vdwg.mxu0
        %v6904 = vld [vmem:[%s4 + $0x3] sm:$0x1]
        %vm6905 = vcmp.ge.f32.partialorder %v6778, 0.0
        %vm6906 = vcmp.ge.f32.partialorder %v6781, 0.0
        %vm6907 = vcmp.ge.f32.partialorder %v6786, 0.0
        %vm6908 = vcmp.ge.f32.partialorder %v6789, 0.0
        %vm6909 = vcmp.ge.f32.partialorder %v6794, 0.0
        %vm6910 = vcmp.ge.f32.partialorder %v6797, 0.0
        %vm6911 = vcmp.ge.f32.partialorder %v6802, 0.0
        %vm6912 = vcmp.ge.f32.partialorder %v6805, 0.0
        %vm6913 = vcmp.ge.f32.partialorder %v6810, 0.0
        %vm6914 = vcmp.ge.f32.partialorder %v6813, 0.0
        %vm6915 = vcmp.ge.f32.partialorder %v6818, 0.0
        %vm6916 = vcmp.ge.f32.partialorder %v6821, 0.0
        %vm6917 = vcmp.ge.f32.partialorder %v6826, 0.0
        %vm6918 = vcmp.ge.f32.partialorder %v6829, 0.0
        %vm6919 = vcmp.ge.f32.partialorder %v6834, 0.0
        %vm6920 = vcmp.ge.f32.partialorder %v6837, 0.0
        %vm6921 = vcmp.ge.f32.partialorder %v6842, 0.0
        %vm6922 = vcmp.ge.f32.partialorder %v6845, 0.0
        %vm6923 = vcmp.ge.f32.partialorder %v6850, 0.0
        %vm6924 = vcmp.ge.f32.partialorder %v6853, 0.0
        %vm6925 = vcmp.ge.f32.partialorder %v6858, 0.0
        %vm6926 = vcmp.ge.f32.partialorder %v6861, 0.0
        %vm6927 = vcmp.ge.f32.partialorder %v6866, 0.0
        %vm6928 = vcmp.ge.f32.partialorder %v6869, 0.0
        %vm6929 = vcmp.ge.f32.partialorder %v6874, 0.0
        %vm6930 = vcmp.ge.f32.partialorder %v6877, 0.0
        %vm6931 = vcmp.ge.f32.partialorder %v6882, 0.0
        %vm6932 = vcmp.ge.f32.partialorder %v6885, 0.0
        %vm6933 = vcmp.ge.f32.partialorder %v6890, 0.0
        %vm6934 = vcmp.ge.f32.partialorder %v6893, 0.0
        %vm6935 = vcmp.ge.f32.partialorder %v6898, 0.0
        %vm6936 = vcmp.ge.f32.partialorder %v6901, 0.0
        %v6937 = vlaneseq
        %v6938 = vshrl.u32 %v6937, 7
        %v6939 = vsub.s32 0, %v6938
        %v6940 = vrot.slane %v6904, %v6939
        %v6941 = vmul.f32 %v6778, %v6940
        %v6942 = vmul.f32 %v6781, %v6940
        %v6943 = vmul.f32 %v6786, %v6940
        %v6944 = vmul.f32 %v6789, %v6940
        %v6945 = vmul.f32 %v6794, %v6940
        %v6946 = vmul.f32 %v6797, %v6940
        %v6947 = vmul.f32 %v6802, %v6940
        %v6948 = vmul.f32 %v6805, %v6940
        %v6949 = vmul.f32 %v6810, %v6940
        %v6950 = vmul.f32 %v6813, %v6940
        %v6951 = vmul.f32 %v6818, %v6940
        %v6952 = vmul.f32 %v6821, %v6940
        %v6953 = vmul.f32 %v6826, %v6940
        %v6954 = vmul.f32 %v6829, %v6940
        %v6955 = vmul.f32 %v6834, %v6940
        %v6956 = vmul.f32 %v6837, %v6940
        %v6957 = vmul.f32 %v6842, %v6940
        %v6958 = vmul.f32 %v6845, %v6940
        %v6959 = vmul.f32 %v6850, %v6940
        %v6960 = vmul.f32 %v6853, %v6940
        %v6961 = vmul.f32 %v6858, %v6940
        %v6962 = vmul.f32 %v6861, %v6940
        %v6963 = vmul.f32 %v6866, %v6940
        %v6964 = vmul.f32 %v6869, %v6940
        %v6965 = vmul.f32 %v6874, %v6940
        %v6966 = vmul.f32 %v6877, %v6940
        %v6967 = vmul.f32 %v6882, %v6940
        %v6968 = vmul.f32 %v6885, %v6940
        %v6969 = vmul.f32 %v6890, %v6940
        %v6970 = vmul.f32 %v6893, %v6940
        %v6971 = vmul.f32 %v6898, %v6940
        %v6972 = vmul.f32 %v6901, %v6940
        %v6973 = vsel %vm6905, %v6778, %v6941
        %v6974 = vsel %vm6906, %v6781, %v6942
        %v6975 = vsel %vm6907, %v6786, %v6943
        %v6976 = vsel %vm6908, %v6789, %v6944
        %v6977 = vsel %vm6909, %v6794, %v6945
        %v6978 = vsel %vm6910, %v6797, %v6946
        %v6979 = vsel %vm6911, %v6802, %v6947
        %v6980 = vsel %vm6912, %v6805, %v6948
        %v6981 = vsel %vm6913, %v6810, %v6949
        %v6982 = vsel %vm6914, %v6813, %v6950
        %v6983 = vsel %vm6915, %v6818, %v6951
        %v6984 = vsel %vm6916, %v6821, %v6952
        %v6985 = vsel %vm6917, %v6826, %v6953
        %v6986 = vsel %vm6918, %v6829, %v6954
        %v6987 = vsel %vm6919, %v6834, %v6955
        %v6988 = vsel %vm6920, %v6837, %v6956
        %v6989 = vsel %vm6921, %v6842, %v6957
        %v6990 = vsel %vm6922, %v6845, %v6958
        %v6991 = vsel %vm6923, %v6850, %v6959
        %v6992 = vsel %vm6924, %v6853, %v6960
        %v6993 = vsel %vm6925, %v6858, %v6961
        %v6994 = vsel %vm6926, %v6861, %v6962
        %v6995 = vsel %vm6927, %v6866, %v6963
        %v6996 = vsel %vm6928, %v6869, %v6964
        %v6997 = vsel %vm6929, %v6874, %v6965
        %v6998 = vsel %vm6930, %v6877, %v6966
        %v6999 = vsel %vm6931, %v6882, %v6967
        %v7000 = vsel %vm6932, %v6885, %v6968
        %v7001 = vsel %vm6933, %v6890, %v6969
        %v7002 = vsel %vm6934, %v6893, %v6970
        %v7003 = vsel %vm6935, %v6898, %v6971
        %v7004 = vsel %vm6936, %v6901, %v6972
        %v7005 = vrot.slane %v6973, 7
        %v7006 = vrot.slane %v6974, 7
        %v7007 = vrot.slane %v6975, 7
        %v7008 = vrot.slane %v6976, 7
        %v7009 = vrot.slane %v6977, 7
        %v7010 = vrot.slane %v6978, 7
        %v7011 = vrot.slane %v6979, 7
        %v7012 = vrot.slane %v6980, 7
        %v7013 = vrot.slane %v6981, 7
        %v7014 = vrot.slane %v6982, 7
        %v7015 = vrot.slane %v6983, 7
        %v7016 = vrot.slane %v6984, 7
        %v7017 = vrot.slane %v6985, 7
        %v7018 = vrot.slane %v6986, 7
        %v7019 = vrot.slane %v6987, 7
        %v7020 = vrot.slane %v6988, 7
        %v7021 = vrot.slane %v6989, 7
        %v7022 = vrot.slane %v6990, 7
        %v7023 = vrot.slane %v6991, 7
        %v7024 = vrot.slane %v6992, 7
        %v7025 = vrot.slane %v6993, 7
        %v7026 = vrot.slane %v6994, 7
        %v7027 = vrot.slane %v6995, 7
        %v7028 = vrot.slane %v6996, 7
        %v7029 = vrot.slane %v6997, 7
        %v7030 = vrot.slane %v6998, 7
        %v7031 = vrot.slane %v6999, 7
        %v7032 = vrot.slane %v7000, 7
        %v7033 = vrot.slane %v7001, 7
        %v7034 = vrot.slane %v7002, 7
        %v7035 = vrot.slane %v7003, 7
        %v7036 = vrot.slane %v7004, 7
        %v7037 = vsel %vm828, %v7035, %v7036
        %v7038 = vsel %vm828, %v7034, %v7035
        %v7039 = vsel %vm828, %v7033, %v7034
        %v7040 = vsel %vm828, %v7032, %v7033
        %v7041 = vsel %vm828, %v7031, %v7032
        %v7042 = vsel %vm828, %v7030, %v7031
        %v7043 = vsel %vm828, %v7029, %v7030
        %v7044 = vsel %vm828, %v7028, %v7029
        %v7045 = vsel %vm828, %v7027, %v7028
        %v7046 = vsel %vm828, %v7026, %v7027
        %v7047 = vsel %vm828, %v7025, %v7026
        %v7048 = vsel %vm828, %v7024, %v7025
        %v7049 = vsel %vm828, %v7023, %v7024
        %v7050 = vsel %vm828, %v7022, %v7023
        %v7051 = vsel %vm828, %v7021, %v7022
        %v7052 = vsel %vm828, %v7020, %v7021
        %v7053 = vsel %vm828, %v7019, %v7020
        %v7054 = vsel %vm828, %v7018, %v7019
        %v7055 = vsel %vm828, %v7017, %v7018
        %v7056 = vsel %vm828, %v7016, %v7017
        %v7057 = vsel %vm828, %v7015, %v7016
        %v7058 = vsel %vm828, %v7014, %v7015
        %v7059 = vsel %vm828, %v7013, %v7014
        %v7060 = vsel %vm828, %v7012, %v7013
        %v7061 = vsel %vm828, %v7011, %v7012
        %v7062 = vsel %vm828, %v7010, %v7011
        %v7063 = vsel %vm828, %v7009, %v7010
        %v7064 = vsel %vm828, %v7008, %v7009
        %v7065 = vsel %vm828, %v7007, %v7008
        %v7066 = vsel %vm828, %v7006, %v7007
        %v7067 = vsel %vm828, %v7005, %v7006
        %v7068 = vsel %vm828, %v7036, %v7005
        %v7069 = vsel %vm861, %v7038, 0.0
        %v7070 = vsel %vm862, %v7037, 0.0
        %v7071 = vsel %vm863, %v7068, 0.0
        %v7072 = vsel %vm864, %v7067, 0.0
        %v7073 = vsel %vm865, %v7066, 0.0
        %v7074 = vsel %vm866, %v7065, 0.0
        %v7075 = vsel %vm867, %v7064, 0.0
        %v7076 = vsel %vm868, %v7063, 0.0
        %v7077 = vsel %vm869, %v7062, 0.0
        %v7078 = vsel %vm870, %v7061, 0.0
        %v7079 = vsel %vm871, %v7060, 0.0
        %v7080 = vsel %vm872, %v7059, 0.0
        %v7081 = vsel %vm873, %v7058, 0.0
        %v7082 = vsel %vm874, %v7057, 0.0
        %v7083 = vsel %vm875, %v7056, 0.0
        %v7084 = vsel %vm876, %v7055, 0.0
        %v7085 = vsel %vm877, %v7054, 0.0
        %v7086 = vsel %vm878, %v7053, 0.0
        %v7087 = vsel %vm879, %v7052, 0.0
        %v7088 = vsel %vm880, %v7051, 0.0
        %v7089 = vsel %vm881, %v7050, 0.0
        %v7090 = vsel %vm882, %v7049, 0.0
        %v7091 = vsel %vm883, %v7048, 0.0
        %v7092 = vsel %vm884, %v7047, 0.0
        %v7093 = vsel %vm885, %v7046, 0.0
        %v7094 = vsel %vm886, %v7045, 0.0
        %v7095 = vsel %vm887, %v7044, 0.0
        %v7096 = vsel %vm888, %v7043, 0.0
        %v7097 = vsel %vm889, %v7042, 0.0
        %v7098 = vsel %vm890, %v7041, 0.0
        %v7099 = vsel %vm891, %v7040, 0.0
        %v7100 = vsel %vm892, %v7039, 0.0
        %v7101 = vpack.c.bf16 %v7070, %v7069
        %v7102 = vpack.c.bf16 %v7072, %v7071
        %v7103 = vpack.c.bf16 %v7074, %v7073
        %v7104 = vpack.c.bf16 %v7076, %v7075
        %v7105 = vpack.c.bf16 %v7078, %v7077
        %v7106 = vpack.c.bf16 %v7080, %v7079
        %v7107 = vpack.c.bf16 %v7082, %v7081
        %v7108 = vpack.c.bf16 %v7084, %v7083
        %v7109 = vpack.c.bf16 %v7086, %v7085
        %v7110 = vpack.c.bf16 %v7088, %v7087
        %v7111 = vpack.c.bf16 %v7090, %v7089
        %v7112 = vpack.c.bf16 %v7092, %v7091
        %v7113 = vpack.c.bf16 %v7094, %v7093
        %v7114 = vpack.c.bf16 %v7096, %v7095
        %v7115 = vpack.c.bf16 %v7098, %v7097
        %v7116 = vpack.c.bf16 %v7100, %v7099
        %v7117 = vsel %vm289, %v7003, 0.0
        %v7118 = vsel %vm290, %v7004, 0.0
        %v7119 = vsel %vm291, %v6973, 0.0
        %v7120 = vsel %vm292, %v6974, 0.0
        %v7121 = vsel %vm293, %v6975, 0.0
        %v7122 = vsel %vm294, %v6976, 0.0
        %v7123 = vsel %vm295, %v6977, 0.0
        %v7124 = vsel %vm296, %v6978, 0.0
        %v7125 = vsel %vm297, %v6979, 0.0
        %v7126 = vsel %vm298, %v6980, 0.0
        %v7127 = vsel %vm299, %v6981, 0.0
        %v7128 = vsel %vm300, %v6982, 0.0
        %v7129 = vsel %vm301, %v6983, 0.0
        %v7130 = vsel %vm302, %v6984, 0.0
        %v7131 = vsel %vm303, %v6985, 0.0
        %v7132 = vsel %vm304, %v6986, 0.0
        %v7133 = vsel %vm305, %v6987, 0.0
        %v7134 = vsel %vm306, %v6988, 0.0
        %v7135 = vsel %vm307, %v6989, 0.0
        %v7136 = vsel %vm308, %v6990, 0.0
        %v7137 = vsel %vm309, %v6991, 0.0
        %v7138 = vsel %vm310, %v6992, 0.0
        %v7139 = vsel %vm311, %v6993, 0.0
        %v7140 = vsel %vm312, %v6994, 0.0
        %v7141 = vsel %vm313, %v6995, 0.0
        %v7142 = vsel %vm314, %v6996, 0.0
        %v7143 = vsel %vm315, %v6997, 0.0
        %v7144 = vsel %vm316, %v6998, 0.0
        %v7145 = vsel %vm317, %v6999, 0.0
        %v7146 = vsel %vm318, %v7000, 0.0
        %v7147 = vsel %vm319, %v7001, 0.0
        %v7148 = vsel %vm320, %v7002, 0.0
        %v7149 = vpack.c.bf16 %v7118, %v7117
        %v7150 = vpack.c.bf16 %v7120, %v7119
        %v7151 = vpack.c.bf16 %v7122, %v7121
        %v7152 = vpack.c.bf16 %v7124, %v7123
        %v7153 = vpack.c.bf16 %v7126, %v7125
        %v7154 = vpack.c.bf16 %v7128, %v7127
        %v7155 = vpack.c.bf16 %v7130, %v7129
        %v7156 = vpack.c.bf16 %v7132, %v7131
        %v7157 = vpack.c.bf16 %v7134, %v7133
        %v7158 = vpack.c.bf16 %v7136, %v7135
        %v7159 = vpack.c.bf16 %v7138, %v7137
        %v7160 = vpack.c.bf16 %v7140, %v7139
        %v7161 = vpack.c.bf16 %v7142, %v7141
        %v7162 = vpack.c.bf16 %v7144, %v7143
        %v7163 = vpack.c.bf16 %v7146, %v7145
        %v7164 = vpack.c.bf16 %v7148, %v7147
        %v7165 = vrot.slane %v6973, 1
        %v7166 = vrot.slane %v6974, 1
        %v7167 = vrot.slane %v6975, 1
        %v7168 = vrot.slane %v6976, 1
        %v7169 = vrot.slane %v6977, 1
        %v7170 = vrot.slane %v6978, 1
        %v7171 = vrot.slane %v6979, 1
        %v7172 = vrot.slane %v6980, 1
        %v7173 = vrot.slane %v6981, 1
        %v7174 = vrot.slane %v6982, 1
        %v7175 = vrot.slane %v6983, 1
        %v7176 = vrot.slane %v6984, 1
        %v7177 = vrot.slane %v6985, 1
        %v7178 = vrot.slane %v6986, 1
        %v7179 = vrot.slane %v6987, 1
        %v7180 = vrot.slane %v6988, 1
        %v7181 = vrot.slane %v6989, 1
        %v7182 = vrot.slane %v6990, 1
        %v7183 = vrot.slane %v6991, 1
        %v7184 = vrot.slane %v6992, 1
        %v7185 = vrot.slane %v6993, 1
        %v7186 = vrot.slane %v6994, 1
        %v7187 = vrot.slane %v6995, 1
        %v7188 = vrot.slane %v6996, 1
        %v7189 = vrot.slane %v6997, 1
        %v7190 = vrot.slane %v6998, 1
        %v7191 = vrot.slane %v6999, 1
        %v7192 = vrot.slane %v7000, 1
        %v7193 = vrot.slane %v7001, 1
        %v7194 = vrot.slane %v7002, 1
        %v7195 = vrot.slane %v7003, 1
        %v7196 = vrot.slane %v7004, 1
        %v7197 = vsel %vm1021, %v7195, %v7196
        %v7198 = vsel %vm1021, %v7194, %v7195
        %v7199 = vsel %vm1021, %v7193, %v7194
        %v7200 = vsel %vm1021, %v7192, %v7193
        %v7201 = vsel %vm1021, %v7191, %v7192
        %v7202 = vsel %vm1021, %v7190, %v7191
        %v7203 = vsel %vm1021, %v7189, %v7190
        %v7204 = vsel %vm1021, %v7188, %v7189
        %v7205 = vsel %vm1021, %v7187, %v7188
        %v7206 = vsel %vm1021, %v7186, %v7187
        %v7207 = vsel %vm1021, %v7185, %v7186
        %v7208 = vsel %vm1021, %v7184, %v7185
        %v7209 = vsel %vm1021, %v7183, %v7184
        %v7210 = vsel %vm1021, %v7182, %v7183
        %v7211 = vsel %vm1021, %v7181, %v7182
        %v7212 = vsel %vm1021, %v7180, %v7181
        %v7213 = vsel %vm1021, %v7179, %v7180
        %v7214 = vsel %vm1021, %v7178, %v7179
        %v7215 = vsel %vm1021, %v7177, %v7178
        %v7216 = vsel %vm1021, %v7176, %v7177
        %v7217 = vsel %vm1021, %v7175, %v7176
        %v7218 = vsel %vm1021, %v7174, %v7175
        %v7219 = vsel %vm1021, %v7173, %v7174
        %v7220 = vsel %vm1021, %v7172, %v7173
        %v7221 = vsel %vm1021, %v7171, %v7172
        %v7222 = vsel %vm1021, %v7170, %v7171
        %v7223 = vsel %vm1021, %v7169, %v7170
        %v7224 = vsel %vm1021, %v7168, %v7169
        %v7225 = vsel %vm1021, %v7167, %v7168
        %v7226 = vsel %vm1021, %v7166, %v7167
        %v7227 = vsel %vm1021, %v7165, %v7166
        %v7228 = vsel %vm1021, %v7196, %v7165
        %v7229 = vsel %vm1054, %v7197, 0.0
        %v7230 = vsel %vm1055, %v7228, 0.0
        %v7231 = vsel %vm1056, %v7227, 0.0
        %v7232 = vsel %vm1057, %v7226, 0.0
        %v7233 = vsel %vm1058, %v7225, 0.0
        %v7234 = vsel %vm1059, %v7224, 0.0
        %v7235 = vsel %vm1060, %v7223, 0.0
        %v7236 = vsel %vm1061, %v7222, 0.0
        %v7237 = vsel %vm1062, %v7221, 0.0
        %v7238 = vsel %vm1063, %v7220, 0.0
        %v7239 = vsel %vm1064, %v7219, 0.0
        %v7240 = vsel %vm1065, %v7218, 0.0
        %v7241 = vsel %vm1066, %v7217, 0.0
        %v7242 = vsel %vm1067, %v7216, 0.0
        %v7243 = vsel %vm1068, %v7215, 0.0
        %v7244 = vsel %vm1069, %v7214, 0.0
        %v7245 = vsel %vm1070, %v7213, 0.0
        %v7246 = vsel %vm1071, %v7212, 0.0
        %v7247 = vsel %vm1072, %v7211, 0.0
        %v7248 = vsel %vm1073, %v7210, 0.0
        %v7249 = vsel %vm1074, %v7209, 0.0
        %v7250 = vsel %vm1075, %v7208, 0.0
        %v7251 = vsel %vm1076, %v7207, 0.0
        %v7252 = vsel %vm1077, %v7206, 0.0
        %v7253 = vsel %vm1078, %v7205, 0.0
        %v7254 = vsel %vm1079, %v7204, 0.0
        %v7255 = vsel %vm1080, %v7203, 0.0
        %v7256 = vsel %vm1081, %v7202, 0.0
        %v7257 = vsel %vm1082, %v7201, 0.0
        %v7258 = vsel %vm1083, %v7200, 0.0
        %v7259 = vsel %vm1084, %v7199, 0.0
        %v7260 = vsel %vm1085, %v7198, 0.0
        %v7261 = vpack.c.bf16 %v7230, %v7229
        %v7262 = vpack.c.bf16 %v7232, %v7231
        %v7263 = vpack.c.bf16 %v7234, %v7233
        %v7264 = vpack.c.bf16 %v7236, %v7235
        %v7265 = vpack.c.bf16 %v7238, %v7237
        %v7266 = vpack.c.bf16 %v7240, %v7239
        %v7267 = vpack.c.bf16 %v7242, %v7241
        %v7268 = vpack.c.bf16 %v7244, %v7243
        %v7269 = vpack.c.bf16 %v7246, %v7245
        %v7270 = vpack.c.bf16 %v7248, %v7247
        %v7271 = vpack.c.bf16 %v7250, %v7249
        %v7272 = vpack.c.bf16 %v7252, %v7251
        %v7273 = vpack.c.bf16 %v7254, %v7253
        %v7274 = vpack.c.bf16 %v7256, %v7255
        %v7275 = vpack.c.bf16 %v7258, %v7257
        %v7276 = vpack.c.bf16 %v7260, %v7259
        %v7277 = vsel %vm353, %v7068, 0.0
        %v7278 = vsel %vm354, %v7067, 0.0
        %v7279 = vsel %vm355, %v7066, 0.0
        %v7280 = vsel %vm356, %v7065, 0.0
        %v7281 = vsel %vm357, %v7064, 0.0
        %v7282 = vsel %vm358, %v7063, 0.0
        %v7283 = vsel %vm359, %v7062, 0.0
        %v7284 = vsel %vm360, %v7061, 0.0
        %v7285 = vsel %vm361, %v7060, 0.0
        %v7286 = vsel %vm362, %v7059, 0.0
        %v7287 = vsel %vm363, %v7058, 0.0
        %v7288 = vsel %vm364, %v7057, 0.0
        %v7289 = vsel %vm365, %v7056, 0.0
        %v7290 = vsel %vm366, %v7055, 0.0
        %v7291 = vsel %vm367, %v7054, 0.0
        %v7292 = vsel %vm368, %v7053, 0.0
        %v7293 = vsel %vm369, %v7052, 0.0
        %v7294 = vsel %vm370, %v7051, 0.0
        %v7295 = vsel %vm371, %v7050, 0.0
        %v7296 = vsel %vm372, %v7049, 0.0
        %v7297 = vsel %vm373, %v7048, 0.0
        %v7298 = vsel %vm374, %v7047, 0.0
        %v7299 = vsel %vm375, %v7046, 0.0
        %v7300 = vsel %vm376, %v7045, 0.0
        %v7301 = vsel %vm377, %v7044, 0.0
        %v7302 = vsel %vm378, %v7043, 0.0
        %v7303 = vsel %vm379, %v7042, 0.0
        %v7304 = vsel %vm380, %v7041, 0.0
        %v7305 = vsel %vm381, %v7040, 0.0
        %v7306 = vsel %vm382, %v7039, 0.0
        %v7307 = vsel %vm383, %v7038, 0.0
        %v7308 = vsel %vm384, %v7037, 0.0
        %v7309 = vpack.c.bf16 %v7278, %v7277
        %v7310 = vpack.c.bf16 %v7280, %v7279
        %v7311 = vpack.c.bf16 %v7282, %v7281
        %v7312 = vpack.c.bf16 %v7284, %v7283
        %v7313 = vpack.c.bf16 %v7286, %v7285
        %v7314 = vpack.c.bf16 %v7288, %v7287
        %v7315 = vpack.c.bf16 %v7290, %v7289
        %v7316 = vpack.c.bf16 %v7292, %v7291
        %v7317 = vpack.c.bf16 %v7294, %v7293
        %v7318 = vpack.c.bf16 %v7296, %v7295
        %v7319 = vpack.c.bf16 %v7298, %v7297
        %v7320 = vpack.c.bf16 %v7300, %v7299
        %v7321 = vpack.c.bf16 %v7302, %v7301
        %v7322 = vpack.c.bf16 %v7304, %v7303
        %v7323 = vpack.c.bf16 %v7306, %v7305
        %v7324 = vpack.c.bf16 %v7308, %v7307
        %v7325 = vpack.c.bf16 %v6974, %v6973
        %v7326 = vpack.c.bf16 %v6976, %v6975
        %v7327 = vpack.c.bf16 %v6978, %v6977
        %v7328 = vpack.c.bf16 %v6980, %v6979
        %v7329 = vpack.c.bf16 %v6982, %v6981
        %v7330 = vpack.c.bf16 %v6984, %v6983
        %v7331 = vpack.c.bf16 %v6986, %v6985
        %v7332 = vpack.c.bf16 %v6988, %v6987
        %v7333 = vpack.c.bf16 %v6990, %v6989
        %v7334 = vpack.c.bf16 %v6992, %v6991
        %v7335 = vpack.c.bf16 %v6994, %v6993
        %v7336 = vpack.c.bf16 %v6996, %v6995
        %v7337 = vpack.c.bf16 %v6998, %v6997
        %v7338 = vpack.c.bf16 %v7000, %v6999
        %v7339 = vpack.c.bf16 %v7002, %v7001
        %v7340 = vpack.c.bf16 %v7004, %v7003
        %v7341 = vsel %vm385, %v7227, 0.0
        %v7342 = vsel %vm386, %v7226, 0.0
        %v7343 = vsel %vm387, %v7225, 0.0
        %v7344 = vsel %vm388, %v7224, 0.0
        %v7345 = vsel %vm389, %v7223, 0.0
        %v7346 = vsel %vm390, %v7222, 0.0
        %v7347 = vsel %vm391, %v7221, 0.0
        %v7348 = vsel %vm392, %v7220, 0.0
        %v7349 = vsel %vm393, %v7219, 0.0
        %v7350 = vsel %vm394, %v7218, 0.0
        %v7351 = vsel %vm395, %v7217, 0.0
        %v7352 = vsel %vm396, %v7216, 0.0
        %v7353 = vsel %vm397, %v7215, 0.0
        %v7354 = vsel %vm398, %v7214, 0.0
        %v7355 = vsel %vm399, %v7213, 0.0
        %v7356 = vsel %vm400, %v7212, 0.0
        %v7357 = vsel %vm401, %v7211, 0.0
        %v7358 = vsel %vm402, %v7210, 0.0
        %v7359 = vsel %vm403, %v7209, 0.0
        %v7360 = vsel %vm404, %v7208, 0.0
        %v7361 = vsel %vm405, %v7207, 0.0
        %v7362 = vsel %vm406, %v7206, 0.0
        %v7363 = vsel %vm407, %v7205, 0.0
        %v7364 = vsel %vm408, %v7204, 0.0
        %v7365 = vsel %vm409, %v7203, 0.0
        %v7366 = vsel %vm410, %v7202, 0.0
        %v7367 = vsel %vm411, %v7201, 0.0
        %v7368 = vsel %vm412, %v7200, 0.0
        %v7369 = vsel %vm413, %v7199, 0.0
        %v7370 = vsel %vm414, %v7198, 0.0
        %v7371 = vsel %vm415, %v7197, 0.0
        %v7372 = vsel %vm416, %v7228, 0.0
        %v7373 = vpack.c.bf16 %v7342, %v7341
        %v7374 = vpack.c.bf16 %v7344, %v7343
        %v7375 = vpack.c.bf16 %v7346, %v7345
        %v7376 = vpack.c.bf16 %v7348, %v7347
        %v7377 = vpack.c.bf16 %v7350, %v7349
        %v7378 = vpack.c.bf16 %v7352, %v7351
        %v7379 = vpack.c.bf16 %v7354, %v7353
        %v7380 = vpack.c.bf16 %v7356, %v7355
        %v7381 = vpack.c.bf16 %v7358, %v7357
        %v7382 = vpack.c.bf16 %v7360, %v7359
        %v7383 = vpack.c.bf16 %v7362, %v7361
        %v7384 = vpack.c.bf16 %v7364, %v7363
        %v7385 = vpack.c.bf16 %v7366, %v7365
        %v7386 = vpack.c.bf16 %v7368, %v7367
        %v7387 = vpack.c.bf16 %v7370, %v7369
        %v7388 = vpack.c.bf16 %v7372, %v7371
        %v7389 = vsel %vm1246, %v7066, 0.0
        %v7390 = vsel %vm1247, %v7065, 0.0
        %v7391 = vsel %vm1248, %v7064, 0.0
        %v7392 = vsel %vm1249, %v7063, 0.0
        %v7393 = vsel %vm1250, %v7062, 0.0
        %v7394 = vsel %vm1251, %v7061, 0.0
        %v7395 = vsel %vm1252, %v7060, 0.0
        %v7396 = vsel %vm1253, %v7059, 0.0
        %v7397 = vsel %vm1254, %v7058, 0.0
        %v7398 = vsel %vm1255, %v7057, 0.0
        %v7399 = vsel %vm1256, %v7056, 0.0
        %v7400 = vsel %vm1257, %v7055, 0.0
        %v7401 = vsel %vm1258, %v7054, 0.0
        %v7402 = vsel %vm1259, %v7053, 0.0
        %v7403 = vsel %vm1260, %v7052, 0.0
        %v7404 = vsel %vm1261, %v7051, 0.0
        %v7405 = vsel %vm1262, %v7050, 0.0
        %v7406 = vsel %vm1263, %v7049, 0.0
        %v7407 = vsel %vm1264, %v7048, 0.0
        %v7408 = vsel %vm1265, %v7047, 0.0
        %v7409 = vsel %vm1266, %v7046, 0.0
        %v7410 = vsel %vm1267, %v7045, 0.0
        %v7411 = vsel %vm1268, %v7044, 0.0
        %v7412 = vsel %vm1269, %v7043, 0.0
        %v7413 = vsel %vm1270, %v7042, 0.0
        %v7414 = vsel %vm1271, %v7041, 0.0
        %v7415 = vsel %vm1272, %v7040, 0.0
        %v7416 = vsel %vm1273, %v7039, 0.0
        %v7417 = vsel %vm1274, %v7038, 0.0
        %v7418 = vsel %vm1275, %v7037, 0.0
        %v7419 = vsel %vm1276, %v7068, 0.0
        %v7420 = vsel %vm1277, %v7067, 0.0
        %v7421 = vpack.c.bf16 %v7390, %v7389
        %v7422 = vpack.c.bf16 %v7392, %v7391
        %v7423 = vpack.c.bf16 %v7394, %v7393
        %v7424 = vpack.c.bf16 %v7396, %v7395
        %v7425 = vpack.c.bf16 %v7398, %v7397
        %v7426 = vpack.c.bf16 %v7400, %v7399
        %v7427 = vpack.c.bf16 %v7402, %v7401
        %v7428 = vpack.c.bf16 %v7404, %v7403
        %v7429 = vpack.c.bf16 %v7406, %v7405
        %v7430 = vpack.c.bf16 %v7408, %v7407
        %v7431 = vpack.c.bf16 %v7410, %v7409
        %v7432 = vpack.c.bf16 %v7412, %v7411
        %v7433 = vpack.c.bf16 %v7414, %v7413
        %v7434 = vpack.c.bf16 %v7416, %v7415
        %v7435 = vpack.c.bf16 %v7418, %v7417
        %v7436 = vpack.c.bf16 %v7420, %v7419
        %v7437 = vsel %vm321, %v6975, 0.0
        %v7438 = vsel %vm322, %v6976, 0.0
        %v7439 = vsel %vm323, %v6977, 0.0
        %v7440 = vsel %vm324, %v6978, 0.0
        %v7441 = vsel %vm325, %v6979, 0.0
        %v7442 = vsel %vm326, %v6980, 0.0
        %v7443 = vsel %vm327, %v6981, 0.0
        %v7444 = vsel %vm328, %v6982, 0.0
        %v7445 = vsel %vm329, %v6983, 0.0
        %v7446 = vsel %vm330, %v6984, 0.0
        %v7447 = vsel %vm331, %v6985, 0.0
        %v7448 = vsel %vm332, %v6986, 0.0
        %v7449 = vsel %vm333, %v6987, 0.0
        %v7450 = vsel %vm334, %v6988, 0.0
        %v7451 = vsel %vm335, %v6989, 0.0
        %v7452 = vsel %vm336, %v6990, 0.0
        %v7453 = vsel %vm337, %v6991, 0.0
        %v7454 = vsel %vm338, %v6992, 0.0
        %v7455 = vsel %vm339, %v6993, 0.0
        %v7456 = vsel %vm340, %v6994, 0.0
        %v7457 = vsel %vm341, %v6995, 0.0
        %v7458 = vsel %vm342, %v6996, 0.0
        %v7459 = vsel %vm343, %v6997, 0.0
        %v7460 = vsel %vm344, %v6998, 0.0
        %v7461 = vsel %vm345, %v6999, 0.0
        %v7462 = vsel %vm346, %v7000, 0.0
        %v7463 = vsel %vm347, %v7001, 0.0
        %v7464 = vsel %vm348, %v7002, 0.0
        %v7465 = vsel %vm349, %v7003, 0.0
        %v7466 = vsel %vm350, %v7004, 0.0
        %v7467 = vsel %vm351, %v6973, 0.0
        %v7468 = vsel %vm352, %v6974, 0.0
        %v7469 = vpack.c.bf16 %v7438, %v7437
        %v7470 = vpack.c.bf16 %v7440, %v7439
        %v7471 = vpack.c.bf16 %v7442, %v7441
        %v7472 = vpack.c.bf16 %v7444, %v7443
        %v7473 = vpack.c.bf16 %v7446, %v7445
        %v7474 = vpack.c.bf16 %v7448, %v7447
        %v7475 = vpack.c.bf16 %v7450, %v7449
        %v7476 = vpack.c.bf16 %v7452, %v7451
        %v7477 = vpack.c.bf16 %v7454, %v7453
        %v7478 = vpack.c.bf16 %v7456, %v7455
        %v7479 = vpack.c.bf16 %v7458, %v7457
        %v7480 = vpack.c.bf16 %v7460, %v7459
        %v7481 = vpack.c.bf16 %v7462, %v7461
        %v7482 = vpack.c.bf16 %v7464, %v7463
        %v7483 = vpack.c.bf16 %v7466, %v7465
        %v7484 = vpack.c.bf16 %v7468, %v7467
        %v7485 = vsel %vm1374, %v7225, 0.0
        %v7486 = vsel %vm1375, %v7224, 0.0
        %v7487 = vsel %vm1376, %v7223, 0.0
        %v7488 = vsel %vm1377, %v7222, 0.0
        %v7489 = vsel %vm1378, %v7221, 0.0
        %v7490 = vsel %vm1379, %v7220, 0.0
        %v7491 = vsel %vm1380, %v7219, 0.0
        %v7492 = vsel %vm1381, %v7218, 0.0
        %v7493 = vsel %vm1382, %v7217, 0.0
        %v7494 = vsel %vm1383, %v7216, 0.0
        %v7495 = vsel %vm1384, %v7215, 0.0
        %v7496 = vsel %vm1385, %v7214, 0.0
        %v7497 = vsel %vm1386, %v7213, 0.0
        %v7498 = vsel %vm1387, %v7212, 0.0
        %v7499 = vsel %vm1388, %v7211, 0.0
        %v7500 = vsel %vm1389, %v7210, 0.0
        %v7501 = vsel %vm1390, %v7209, 0.0
        %v7502 = vsel %vm1391, %v7208, 0.0
        %v7503 = vsel %vm1392, %v7207, 0.0
        %v7504 = vsel %vm1393, %v7206, 0.0
        %v7505 = vsel %vm1394, %v7205, 0.0
        %v7506 = vsel %vm1395, %v7204, 0.0
        %v7507 = vsel %vm1396, %v7203, 0.0
        %v7508 = vsel %vm1397, %v7202, 0.0
        %v7509 = vsel %vm1398, %v7201, 0.0
        %v7510 = vsel %vm1399, %v7200, 0.0
        %v7511 = vsel %vm1400, %v7199, 0.0
        %v7512 = vsel %vm1401, %v7198, 0.0
        %v7513 = vsel %vm1402, %v7197, 0.0
        %v7514 = vsel %vm1403, %v7228, 0.0
        %v7515 = vsel %vm1404, %v7227, 0.0
        %v7516 = vsel %vm1405, %v7226, 0.0
        %v7517 = vpack.c.bf16 %v7486, %v7485
        %v7518 = vpack.c.bf16 %v7488, %v7487
        %v7519 = vpack.c.bf16 %v7490, %v7489
        %v7520 = vpack.c.bf16 %v7492, %v7491
        %v7521 = vpack.c.bf16 %v7494, %v7493
        %v7522 = vpack.c.bf16 %v7496, %v7495
        %v7523 = vpack.c.bf16 %v7498, %v7497
        %v7524 = vpack.c.bf16 %v7500, %v7499
        %v7525 = vpack.c.bf16 %v7502, %v7501
        %v7526 = vpack.c.bf16 %v7504, %v7503
        %v7527 = vpack.c.bf16 %v7506, %v7505
        %v7528 = vpack.c.bf16 %v7508, %v7507
        %v7529 = vpack.c.bf16 %v7510, %v7509
        %v7530 = vpack.c.bf16 %v7512, %v7511
        %v7531 = vpack.c.bf16 %v7514, %v7513
        %v7532 = vpack.c.bf16 %v7516, %v7515
        %s7533 = scalar_lea.vmem %s2, 1728
        %v7534 = vld [vmem:[%s7533] sm:$0xf]
        %v7535 = vld [vmem:[%s7533 + $0x4] sm:$0xf]
        %v7536 = vld [vmem:[%s7533 + $0x8] sm:$0xf]
        %v7537 = vld [vmem:[%s7533 + $0xc] sm:$0xf]
        %v7538 = vld [vmem:[%s7533 + $0x10] sm:$0xf]
        %v7539 = vld [vmem:[%s7533 + $0x14] sm:$0xf]
        %v7540 = vld [vmem:[%s7533 + $0x18] sm:$0xf]
        %v7541 = vld [vmem:[%s7533 + $0x1c] sm:$0xf]
        %v7542 = vld [vmem:[%s7533 + $0x20] sm:$0xf]
        %v7543 = vld [vmem:[%s7533 + $0x24] sm:$0xf]
        %v7544 = vld [vmem:[%s7533 + $0x28] sm:$0xf]
        %v7545 = vld [vmem:[%s7533 + $0x2c] sm:$0xf]
        %v7546 = vld [vmem:[%s7533 + $0x30] sm:$0xf]
        %v7547 = vld [vmem:[%s7533 + $0x34] sm:$0xf]
        %v7548 = vld [vmem:[%s7533 + $0x38] sm:$0xf]
        %v7549 = vld [vmem:[%s7533 + $0x3c] sm:$0xf]
        %v7550 = vld [vmem:[%s7533 + $0x40] sm:$0xf]
        %v7551 = vld [vmem:[%s7533 + $0x44] sm:$0xf]
        %v7552 = vld [vmem:[%s7533 + $0x48] sm:$0xf]
        %v7553 = vld [vmem:[%s7533 + $0x4c] sm:$0xf]
        %v7554 = vld [vmem:[%s7533 + $0x50] sm:$0xf]
        %v7555 = vld [vmem:[%s7533 + $0x54] sm:$0xf]
        %v7556 = vld [vmem:[%s7533 + $0x58] sm:$0xf]
        %v7557 = vld [vmem:[%s7533 + $0x5c] sm:$0xf]
        %v7558 = vld [vmem:[%s7533 + $0x60] sm:$0xf]
        %v7559 = vld [vmem:[%s7533 + $0x64] sm:$0xf]
        %v7560 = vld [vmem:[%s7533 + $0x68] sm:$0xf]
        %v7561 = vld [vmem:[%s7533 + $0x6c] sm:$0xf]
        %v7562 = vld [vmem:[%s7533 + $0x70] sm:$0xf]
        %v7563 = vld [vmem:[%s7533 + $0x74] sm:$0xf]
        %v7564 = vld [vmem:[%s7533 + $0x78] sm:$0xf]
        %v7565 = vld [vmem:[%s7533 + $0x7c] sm:$0xf]
        %v7566 = vld [vmem:[%s7533 + $0x80] sm:$0xf]
        %v7567 = vld [vmem:[%s7533 + $0x84] sm:$0xf]
        %v7568 = vld [vmem:[%s7533 + $0x88] sm:$0xf]
        %v7569 = vld [vmem:[%s7533 + $0x8c] sm:$0xf]
        %v7570 = vld [vmem:[%s7533 + $0x90] sm:$0xf]
        %v7571 = vld [vmem:[%s7533 + $0x94] sm:$0xf]
        %v7572 = vld [vmem:[%s7533 + $0x98] sm:$0xf]
        %v7573 = vld [vmem:[%s7533 + $0x9c] sm:$0xf]
        %v7574 = vld [vmem:[%s7533 + $0xa0] sm:$0xf]
        %v7575 = vld [vmem:[%s7533 + $0xa4] sm:$0xf]
        %v7576 = vld [vmem:[%s7533 + $0xa8] sm:$0xf]
        %v7577 = vld [vmem:[%s7533 + $0xac] sm:$0xf]
        %v7578 = vld [vmem:[%s7533 + $0xb0] sm:$0xf]
        %v7579 = vld [vmem:[%s7533 + $0xb4] sm:$0xf]
        %v7580 = vld [vmem:[%s7533 + $0xb8] sm:$0xf]
        %v7581 = vld [vmem:[%s7533 + $0xbc] sm:$0xf]
        %v7582 = vld [vmem:[%s7533 + $0xc0] sm:$0xf]
        %v7583 = vld [vmem:[%s7533 + $0xc4] sm:$0xf]
        %v7584 = vld [vmem:[%s7533 + $0xc8] sm:$0xf]
        %v7585 = vld [vmem:[%s7533 + $0xcc] sm:$0xf]
        %v7586 = vld [vmem:[%s7533 + $0xd0] sm:$0xf]
        %v7587 = vld [vmem:[%s7533 + $0xd4] sm:$0xf]
        %v7588 = vld [vmem:[%s7533 + $0xd8] sm:$0xf]
        %v7589 = vld [vmem:[%s7533 + $0xdc] sm:$0xf]
        %v7590 = vld [vmem:[%s7533 + $0xe0] sm:$0xf]
        %v7591 = vld [vmem:[%s7533 + $0xe4] sm:$0xf]
        %v7592 = vld [vmem:[%s7533 + $0xe8] sm:$0xf]
        %v7593 = vld [vmem:[%s7533 + $0xec] sm:$0xf]
        %v7594 = vld [vmem:[%s7533 + $0xf0] sm:$0xf]
        %v7595 = vld [vmem:[%s7533 + $0xf4] sm:$0xf]
        %v7596 = vld [vmem:[%s7533 + $0xf8] sm:$0xf]
        %v7597 = vld [vmem:[%s7533 + $0xfc] sm:$0xf]
        %v7598 = vld [vmem:[%s7533 + $0x100] sm:$0xf]
        %v7599 = vld [vmem:[%s7533 + $0x104] sm:$0xf]
        %v7600 = vld [vmem:[%s7533 + $0x108] sm:$0xf]
        %v7601 = vld [vmem:[%s7533 + $0x10c] sm:$0xf]
        %v7602 = vld [vmem:[%s7533 + $0x110] sm:$0xf]
        %v7603 = vld [vmem:[%s7533 + $0x114] sm:$0xf]
        %v7604 = vld [vmem:[%s7533 + $0x118] sm:$0xf]
        %v7605 = vld [vmem:[%s7533 + $0x11c] sm:$0xf]
        %v7606 = vld [vmem:[%s7533 + $0x120] sm:$0xf]
        %v7607 = vld [vmem:[%s7533 + $0x124] sm:$0xf]
        %v7608 = vld [vmem:[%s7533 + $0x128] sm:$0xf]
        %v7609 = vld [vmem:[%s7533 + $0x12c] sm:$0xf]
        %v7610 = vld [vmem:[%s7533 + $0x130] sm:$0xf]
        %v7611 = vld [vmem:[%s7533 + $0x134] sm:$0xf]
        %v7612 = vld [vmem:[%s7533 + $0x138] sm:$0xf]
        %v7613 = vld [vmem:[%s7533 + $0x13c] sm:$0xf]
        %v7614 = vld [vmem:[%s7533 + $0x140] sm:$0xf]
        %v7615 = vld [vmem:[%s7533 + $0x144] sm:$0xf]
        %v7616 = vld [vmem:[%s7533 + $0x148] sm:$0xf]
        %v7617 = vld [vmem:[%s7533 + $0x14c] sm:$0xf]
        %v7618 = vld [vmem:[%s7533 + $0x150] sm:$0xf]
        %v7619 = vld [vmem:[%s7533 + $0x154] sm:$0xf]
        %v7620 = vld [vmem:[%s7533 + $0x158] sm:$0xf]
        %v7621 = vld [vmem:[%s7533 + $0x15c] sm:$0xf]
        %v7622 = vld [vmem:[%s7533 + $0x160] sm:$0xf]
        %v7623 = vld [vmem:[%s7533 + $0x164] sm:$0xf]
        %v7624 = vld [vmem:[%s7533 + $0x168] sm:$0xf]
        %v7625 = vld [vmem:[%s7533 + $0x16c] sm:$0xf]
        %v7626 = vld [vmem:[%s7533 + $0x170] sm:$0xf]
        %v7627 = vld [vmem:[%s7533 + $0x174] sm:$0xf]
        %v7628 = vld [vmem:[%s7533 + $0x178] sm:$0xf]
        %v7629 = vld [vmem:[%s7533 + $0x17c] sm:$0xf]
        %v7630 = vld [vmem:[%s7533 + $0x180] sm:$0xf]
        %v7631 = vld [vmem:[%s7533 + $0x184] sm:$0xf]
        %v7632 = vld [vmem:[%s7533 + $0x188] sm:$0xf]
        %v7633 = vld [vmem:[%s7533 + $0x18c] sm:$0xf]
        %v7634 = vld [vmem:[%s7533 + $0x190] sm:$0xf]
        %v7635 = vld [vmem:[%s7533 + $0x194] sm:$0xf]
        %v7636 = vld [vmem:[%s7533 + $0x198] sm:$0xf]
        %v7637 = vld [vmem:[%s7533 + $0x19c] sm:$0xf]
        %v7638 = vld [vmem:[%s7533 + $0x1a0] sm:$0xf]
        %v7639 = vld [vmem:[%s7533 + $0x1a4] sm:$0xf]
        %v7640 = vld [vmem:[%s7533 + $0x1a8] sm:$0xf]
        %v7641 = vld [vmem:[%s7533 + $0x1ac] sm:$0xf]
        %v7642 = vld [vmem:[%s7533 + $0x1b0] sm:$0xf]
        %v7643 = vld [vmem:[%s7533 + $0x1b4] sm:$0xf]
        %v7644 = vld [vmem:[%s7533 + $0x1b8] sm:$0xf]
        %v7645 = vld [vmem:[%s7533 + $0x1bc] sm:$0xf]
        %v7646 = vld [vmem:[%s7533 + $0x1c0] sm:$0xf]
        %v7647 = vld [vmem:[%s7533 + $0x1c4] sm:$0xf]
        %v7648 = vld [vmem:[%s7533 + $0x1c8] sm:$0xf]
        %v7649 = vld [vmem:[%s7533 + $0x1cc] sm:$0xf]
        %v7650 = vld [vmem:[%s7533 + $0x1d0] sm:$0xf]
        %v7651 = vld [vmem:[%s7533 + $0x1d4] sm:$0xf]
        %v7652 = vld [vmem:[%s7533 + $0x1d8] sm:$0xf]
        %v7653 = vld [vmem:[%s7533 + $0x1dc] sm:$0xf]
        %v7654 = vld [vmem:[%s7533 + $0x1e0] sm:$0xf]
        %v7655 = vld [vmem:[%s7533 + $0x1e4] sm:$0xf]
        %v7656 = vld [vmem:[%s7533 + $0x1e8] sm:$0xf]
        %v7657 = vld [vmem:[%s7533 + $0x1ec] sm:$0xf]
        %v7658 = vld [vmem:[%s7533 + $0x1f0] sm:$0xf]
        %v7659 = vld [vmem:[%s7533 + $0x1f4] sm:$0xf]
        %v7660 = vld [vmem:[%s7533 + $0x1f8] sm:$0xf]
        %v7661 = vld [vmem:[%s7533 + $0x1fc] sm:$0xf]
        %v7662 = vld [vmem:[%s7533 + $0x200] sm:$0xf]
        %v7663 = vld [vmem:[%s7533 + $0x204] sm:$0xf]
        %v7664 = vld [vmem:[%s7533 + $0x208] sm:$0xf]
        %v7665 = vld [vmem:[%s7533 + $0x20c] sm:$0xf]
        %v7666 = vld [vmem:[%s7533 + $0x210] sm:$0xf]
        %v7667 = vld [vmem:[%s7533 + $0x214] sm:$0xf]
        %v7668 = vld [vmem:[%s7533 + $0x218] sm:$0xf]
        %v7669 = vld [vmem:[%s7533 + $0x21c] sm:$0xf]
        %v7670 = vld [vmem:[%s7533 + $0x220] sm:$0xf]
        %v7671 = vld [vmem:[%s7533 + $0x224] sm:$0xf]
        %v7672 = vld [vmem:[%s7533 + $0x228] sm:$0xf]
        %v7673 = vld [vmem:[%s7533 + $0x22c] sm:$0xf]
        %v7674 = vld [vmem:[%s7533 + $0x230] sm:$0xf]
        %v7675 = vld [vmem:[%s7533 + $0x234] sm:$0xf]
        %v7676 = vld [vmem:[%s7533 + $0x238] sm:$0xf]
        %v7677 = vld [vmem:[%s7533 + $0x23c] sm:$0xf]
        %v7678 = vld [vmem:[%s3 + $0x4] sm:$0x1]
        %v7679 = vlaneseq
        %v7680 = vshrl.u32 %v7679, 7
        %v7681 = vsub.s32 0, %v7680
        %v7682 = vrot.slane %v7678, %v7681
        %v7827 = vunpack.c.l.b16 %v7534
        %v7828 = vunpack.c.l.b16 %v7535
        %v7829 = vunpack.c.l.b16 %v7536
        %v7830 = vunpack.c.l.b16 %v7537
        %v7831 = vunpack.c.l.b16 %v7538
        %v7832 = vunpack.c.l.b16 %v7539
        %v7833 = vunpack.c.l.b16 %v7540
        %v7834 = vunpack.c.l.b16 %v7541
        %v7835 = vunpack.c.l.b16 %v7542
        %v7836 = vunpack.c.l.b16 %v7543
        %v7837 = vunpack.c.l.b16 %v7544
        %v7838 = vunpack.c.l.b16 %v7545
        %v7839 = vunpack.c.l.b16 %v7546
        %v7840 = vunpack.c.l.b16 %v7547
        %v7841 = vunpack.c.l.b16 %v7548
        %v7842 = vunpack.c.l.b16 %v7549
        %v7843 = vunpack.c.l.b16 %v7550
        %v7844 = vunpack.c.l.b16 %v7551
        %v7845 = vunpack.c.l.b16 %v7552
        %v7846 = vunpack.c.l.b16 %v7553
        %v7847 = vunpack.c.l.b16 %v7554
        %v7848 = vunpack.c.l.b16 %v7555
        %v7849 = vunpack.c.l.b16 %v7556
        %v7850 = vunpack.c.l.b16 %v7557
        %v7851 = vunpack.c.l.b16 %v7558
        %v7852 = vunpack.c.l.b16 %v7559
        %v7853 = vunpack.c.l.b16 %v7560
        %v7854 = vunpack.c.l.b16 %v7561
        %v7855 = vunpack.c.l.b16 %v7562
        %v7856 = vunpack.c.l.b16 %v7563
        %v7857 = vunpack.c.l.b16 %v7564
        %v7858 = vunpack.c.l.b16 %v7565
        %v7859 = vunpack.c.l.b16 %v7566
        %v7860 = vunpack.c.l.b16 %v7567
        %v7861 = vunpack.c.l.b16 %v7568
        %v7862 = vunpack.c.l.b16 %v7569
        %v7863 = vunpack.c.l.b16 %v7570
        %v7864 = vunpack.c.l.b16 %v7571
        %v7865 = vunpack.c.l.b16 %v7572
        %v7866 = vunpack.c.l.b16 %v7573
        %v7867 = vunpack.c.l.b16 %v7574
        %v7868 = vunpack.c.l.b16 %v7575
        %v7869 = vunpack.c.l.b16 %v7576
        %v7870 = vunpack.c.l.b16 %v7577
        %v7871 = vunpack.c.l.b16 %v7578
        %v7872 = vunpack.c.l.b16 %v7579
        %v7873 = vunpack.c.l.b16 %v7580
        %v7874 = vunpack.c.l.b16 %v7581
        %v7875 = vunpack.c.l.b16 %v7582
        %v7876 = vunpack.c.l.b16 %v7583
        %v7877 = vunpack.c.l.b16 %v7584
        %v7878 = vunpack.c.l.b16 %v7585
        %v7879 = vunpack.c.l.b16 %v7586
        %v7880 = vunpack.c.l.b16 %v7587
        %v7881 = vunpack.c.l.b16 %v7588
        %v7882 = vunpack.c.l.b16 %v7589
        %v7883 = vunpack.c.l.b16 %v7590
        %v7884 = vunpack.c.l.b16 %v7591
        %v7885 = vunpack.c.l.b16 %v7592
        %v7886 = vunpack.c.l.b16 %v7593
        %v7887 = vunpack.c.l.b16 %v7594
        %v7888 = vunpack.c.l.b16 %v7595
        %v7889 = vunpack.c.l.b16 %v7596
        %v7890 = vunpack.c.l.b16 %v7597
        %v7891 = vunpack.c.l.b16 %v7598
        %v7892 = vunpack.c.l.b16 %v7599
        %v7893 = vunpack.c.l.b16 %v7600
        %v7894 = vunpack.c.l.b16 %v7601
        %v7895 = vunpack.c.l.b16 %v7602
        %v7896 = vunpack.c.l.b16 %v7603
        %v7897 = vunpack.c.l.b16 %v7604
        %v7898 = vunpack.c.l.b16 %v7605
        %v7899 = vunpack.c.l.b16 %v7606
        %v7900 = vunpack.c.l.b16 %v7607
        %v7901 = vunpack.c.l.b16 %v7608
        %v7902 = vunpack.c.l.b16 %v7609
        %v7903 = vunpack.c.l.b16 %v7610
        %v7904 = vunpack.c.l.b16 %v7611
        %v7905 = vunpack.c.l.b16 %v7612
        %v7906 = vunpack.c.l.b16 %v7613
        %v7907 = vunpack.c.l.b16 %v7614
        %v7908 = vunpack.c.l.b16 %v7615
        %v7909 = vunpack.c.l.b16 %v7616
        %v7910 = vunpack.c.l.b16 %v7617
        %v7911 = vunpack.c.l.b16 %v7618
        %v7912 = vunpack.c.l.b16 %v7619
        %v7913 = vunpack.c.l.b16 %v7620
        %v7914 = vunpack.c.l.b16 %v7621
        %v7915 = vunpack.c.l.b16 %v7622
        %v7916 = vunpack.c.l.b16 %v7623
        %v7917 = vunpack.c.l.b16 %v7624
        %v7918 = vunpack.c.l.b16 %v7625
        %v7919 = vunpack.c.l.b16 %v7626
        %v7920 = vunpack.c.l.b16 %v7627
        %v7921 = vunpack.c.l.b16 %v7628
        %v7922 = vunpack.c.l.b16 %v7629
        %v7923 = vunpack.c.l.b16 %v7630
        %v7924 = vunpack.c.l.b16 %v7631
        %v7925 = vunpack.c.l.b16 %v7632
        %v7926 = vunpack.c.l.b16 %v7633
        %v7927 = vunpack.c.l.b16 %v7634
        %v7928 = vunpack.c.l.b16 %v7635
        %v7929 = vunpack.c.l.b16 %v7636
        %v7930 = vunpack.c.l.b16 %v7637
        %v7931 = vunpack.c.l.b16 %v7638
        %v7932 = vunpack.c.l.b16 %v7639
        %v7933 = vunpack.c.l.b16 %v7640
        %v7934 = vunpack.c.l.b16 %v7641
        %v7935 = vunpack.c.l.b16 %v7642
        %v7936 = vunpack.c.l.b16 %v7643
        %v7937 = vunpack.c.l.b16 %v7644
        %v7938 = vunpack.c.l.b16 %v7645
        %v7939 = vunpack.c.l.b16 %v7646
        %v7940 = vunpack.c.l.b16 %v7647
        %v7941 = vunpack.c.l.b16 %v7648
        %v7942 = vunpack.c.l.b16 %v7649
        %v7943 = vunpack.c.l.b16 %v7650
        %v7944 = vunpack.c.l.b16 %v7651
        %v7945 = vunpack.c.l.b16 %v7652
        %v7946 = vunpack.c.l.b16 %v7653
        %v7947 = vunpack.c.l.b16 %v7654
        %v7948 = vunpack.c.l.b16 %v7655
        %v7949 = vunpack.c.l.b16 %v7656
        %v7950 = vunpack.c.l.b16 %v7657
        %v7951 = vunpack.c.l.b16 %v7658
        %v7952 = vunpack.c.l.b16 %v7659
        %v7953 = vunpack.c.l.b16 %v7660
        %v7954 = vunpack.c.l.b16 %v7661
        %v7955 = vunpack.c.l.b16 %v7662
        %v7956 = vunpack.c.l.b16 %v7663
        %v7957 = vunpack.c.l.b16 %v7664
        %v7958 = vunpack.c.l.b16 %v7665
        %v7959 = vunpack.c.l.b16 %v7666
        %v7960 = vunpack.c.l.b16 %v7667
        %v7961 = vunpack.c.l.b16 %v7668
        %v7962 = vunpack.c.l.b16 %v7669
        %v7963 = vunpack.c.l.b16 %v7670
        %v7964 = vunpack.c.l.b16 %v7671
        %v7965 = vunpack.c.l.b16 %v7672
        %v7966 = vunpack.c.l.b16 %v7673
        %v7967 = vunpack.c.l.b16 %v7674
        %v7968 = vunpack.c.l.b16 %v7675
        %v7969 = vunpack.c.l.b16 %v7676
        %v7970 = vunpack.c.l.b16 %v7677
        %v7971 = vpack.c.b16 %v7828, %v7827
        %v7972 = vpack.c.b16 %v7830, %v7829
        %v7973 = vpack.c.b16 %v7832, %v7831
        %v7974 = vpack.c.b16 %v7834, %v7833
        %v7975 = vpack.c.b16 %v7836, %v7835
        %v7976 = vpack.c.b16 %v7838, %v7837
        %v7977 = vpack.c.b16 %v7840, %v7839
        %v7978 = vpack.c.b16 %v7842, %v7841
        %v7979 = vpack.c.b16 %v7844, %v7843
        %v7980 = vpack.c.b16 %v7846, %v7845
        %v7981 = vpack.c.b16 %v7848, %v7847
        %v7982 = vpack.c.b16 %v7850, %v7849
        %v7983 = vpack.c.b16 %v7852, %v7851
        %v7984 = vpack.c.b16 %v7854, %v7853
        %v7985 = vpack.c.b16 %v7856, %v7855
        %v7986 = vpack.c.b16 %v7858, %v7857
        %v7987 = vpack.c.b16 %v7860, %v7859
        %v7988 = vpack.c.b16 %v7862, %v7861
        %v7989 = vpack.c.b16 %v7864, %v7863
        %v7990 = vpack.c.b16 %v7866, %v7865
        %v7991 = vpack.c.b16 %v7868, %v7867
        %v7992 = vpack.c.b16 %v7870, %v7869
        %v7993 = vpack.c.b16 %v7872, %v7871
        %v7994 = vpack.c.b16 %v7874, %v7873
        %v7995 = vpack.c.b16 %v7876, %v7875
        %v7996 = vpack.c.b16 %v7878, %v7877
        %v7997 = vpack.c.b16 %v7880, %v7879
        %v7998 = vpack.c.b16 %v7882, %v7881
        %v7999 = vpack.c.b16 %v7884, %v7883
        %v8000 = vpack.c.b16 %v7886, %v7885
        %v8001 = vpack.c.b16 %v7888, %v7887
        %v8002 = vpack.c.b16 %v7890, %v7889
        %v8003 = vpack.c.b16 %v7892, %v7891
        %v8004 = vpack.c.b16 %v7894, %v7893
        %v8005 = vpack.c.b16 %v7896, %v7895
        %v8006 = vpack.c.b16 %v7898, %v7897
        %v8007 = vpack.c.b16 %v7900, %v7899
        %v8008 = vpack.c.b16 %v7902, %v7901
        %v8009 = vpack.c.b16 %v7904, %v7903
        %v8010 = vpack.c.b16 %v7906, %v7905
        %v8011 = vpack.c.b16 %v7908, %v7907
        %v8012 = vpack.c.b16 %v7910, %v7909
        %v8013 = vpack.c.b16 %v7912, %v7911
        %v8014 = vpack.c.b16 %v7914, %v7913
        %v8015 = vpack.c.b16 %v7916, %v7915
        %v8016 = vpack.c.b16 %v7918, %v7917
        %v8017 = vpack.c.b16 %v7920, %v7919
        %v8018 = vpack.c.b16 %v7922, %v7921
        %v8019 = vpack.c.b16 %v7924, %v7923
        %v8020 = vpack.c.b16 %v7926, %v7925
        %v8021 = vpack.c.b16 %v7928, %v7927
        %v8022 = vpack.c.b16 %v7930, %v7929
        %v8023 = vpack.c.b16 %v7932, %v7931
        %v8024 = vpack.c.b16 %v7934, %v7933
        %v8025 = vpack.c.b16 %v7936, %v7935
        %v8026 = vpack.c.b16 %v7938, %v7937
        %v8027 = vpack.c.b16 %v7940, %v7939
        %v8028 = vpack.c.b16 %v7942, %v7941
        %v8029 = vpack.c.b16 %v7944, %v7943
        %v8030 = vpack.c.b16 %v7946, %v7945
        %v8031 = vpack.c.b16 %v7948, %v7947
        %v8032 = vpack.c.b16 %v7950, %v7949
        %v8033 = vpack.c.b16 %v7952, %v7951
        %v8034 = vpack.c.b16 %v7954, %v7953
        %v8035 = vpack.c.b16 %v7956, %v7955
        %v8036 = vpack.c.b16 %v7958, %v7957
        %v8037 = vpack.c.b16 %v7960, %v7959
        %v8038 = vpack.c.b16 %v7962, %v7961
        %v8039 = vpack.c.b16 %v7964, %v7963
        %v8040 = vpack.c.b16 %v7966, %v7965
        %v8041 = vpack.c.b16 %v7968, %v7967
        %v8042 = vpack.c.b16 %v7970, %v7969
        %8115 = vmatprep.subr.bf16.mxu0 0
        %8116 = vmatpush1.bf16.msra.mxu0 %v7971
        %8117 = vmatprep.subr.bf16.mxu0 0
        %8118 = vmatpush1.bf16.msra.mxu0 %v7972
        %8119 = vmatprep.subr.bf16.mxu0 0
        %8120 = vmatpush1.bf16.msra.mxu0 %v7973
        %8121 = vmatprep.subr.bf16.mxu0 0
        %8122 = vmatpush1.bf16.msra.mxu0 %v7974
        %8123 = vmatprep.subr.bf16.mxu0 0
        %8124 = vmatpush1.bf16.msra.mxu0 %v7975
        %8125 = vmatprep.subr.bf16.mxu0 0
        %8126 = vmatpush1.bf16.msra.mxu0 %v7976
        %8127 = vmatprep.subr.bf16.mxu0 0
        %8128 = vmatpush1.bf16.msra.mxu0 %v7977
        %8129 = vmatprep.subr.bf16.mxu0 0
        %8130 = vmatpush1.bf16.msra.mxu0 %v7978
        %8131 = vmatprep.subr.bf16.mxu0 0
        %8132 = vmatpush1.bf16.msra.mxu0 %v7979
        %8133 = vmatprep.subr.bf16.mxu0 0
        %8134 = vmatpush1.bf16.msra.mxu0 %v7980
        %8135 = vmatprep.subr.bf16.mxu0 0
        %8136 = vmatpush1.bf16.msra.mxu0 %v7981
        %8137 = vmatprep.subr.bf16.mxu0 0
        %8138 = vmatpush1.bf16.msra.mxu0 %v7982
        %8139 = vmatprep.subr.bf16.mxu0 0
        %8140 = vmatpush1.bf16.msra.mxu0 %v7983
        %8141 = vmatprep.subr.bf16.mxu0 0
        %8142 = vmatpush1.bf16.msra.mxu0 %v7984
        %8143 = vmatprep.subr.bf16.mxu0 0
        %8144 = vmatpush1.bf16.msra.mxu0 %v7985
        %8145 = vmatprep.subr.bf16.mxu0 0
        %8146 = vmatpush1.bf16.msra.mxu0 %v7986
        %8147 = vmatprep.mubr.bf16.mxu0 %v7149
        %8148 = vmatmul.mubr.bf16.gmra.mrb[0].mxu0 %v7101
        %v8149 = vpop.f32.mrb[0].mxu0
        %v8150 = vadd.f32 %v7682, %v8149
        %v8151 = vpop.f32.mrb[0].mxu0
        %v8152 = vpop.f32.mrb[0].mxu0
        %v8153 = vadd.f32 %v7682, %v8152
        %v8154 = vpop.f32.mrb[0].mxu0
        %8155 = vmatprep.mubr.bf16.mxu0 %v7150
        %8156 = vmatmul.mubr.bf16.gmra.mrb[0].mxu0 %v7102
        %v8157 = vpop.f32.mrb[0].mxu0
        %v8158 = vadd.f32 %v7682, %v8157
        %v8159 = vpop.f32.mrb[0].mxu0
        %v8160 = vpop.f32.mrb[0].mxu0
        %v8161 = vadd.f32 %v7682, %v8160
        %v8162 = vpop.f32.mrb[0].mxu0
        %8163 = vmatprep.mubr.bf16.mxu0 %v7151
        %8164 = vmatmul.mubr.bf16.gmra.mrb[0].mxu0 %v7103
        %v8165 = vpop.f32.mrb[0].mxu0
        %v8166 = vadd.f32 %v7682, %v8165
        %v8167 = vpop.f32.mrb[0].mxu0
        %v8168 = vpop.f32.mrb[0].mxu0
        %v8169 = vadd.f32 %v7682, %v8168
        %v8170 = vpop.f32.mrb[0].mxu0
        %8171 = vmatprep.mubr.bf16.mxu0 %v7152
        %8172 = vmatmul.mubr.bf16.gmra.mrb[0].mxu0 %v7104
        %v8173 = vpop.f32.mrb[0].mxu0
        %v8174 = vadd.f32 %v7682, %v8173
        %v8175 = vpop.f32.mrb[0].mxu0
        %v8176 = vpop.f32.mrb[0].mxu0
        %v8177 = vadd.f32 %v7682, %v8176
        %v8178 = vpop.f32.mrb[0].mxu0
        %8179 = vmatprep.mubr.bf16.mxu0 %v7153
        %8180 = vmatmul.mubr.bf16.gmra.mrb[0].mxu0 %v7105
        %v8181 = vpop.f32.mrb[0].mxu0
        %v8182 = vadd.f32 %v7682, %v8181
        %v8183 = vpop.f32.mrb[0].mxu0
        %v8184 = vpop.f32.mrb[0].mxu0
        %v8185 = vadd.f32 %v7682, %v8184
        %v8186 = vpop.f32.mrb[0].mxu0
        %8187 = vmatprep.mubr.bf16.mxu0 %v7154
        %8188 = vmatmul.mubr.bf16.gmra.mrb[0].mxu0 %v7106
        %v8189 = vpop.f32.mrb[0].mxu0
        %v8190 = vadd.f32 %v7682, %v8189
        %v8191 = vpop.f32.mrb[0].mxu0
        %v8192 = vpop.f32.mrb[0].mxu0
        %v8193 = vadd.f32 %v7682, %v8192
        %v8194 = vpop.f32.mrb[0].mxu0
        %8195 = vmatprep.mubr.bf16.mxu0 %v7155
        %8196 = vmatmul.mubr.bf16.gmra.mrb[0].mxu0 %v7107
        %v8197 = vpop.f32.mrb[0].mxu0
        %v8198 = vadd.f32 %v7682, %v8197
        %v8199 = vpop.f32.mrb[0].mxu0
        %v8200 = vpop.f32.mrb[0].mxu0
        %v8201 = vadd.f32 %v7682, %v8200
        %v8202 = vpop.f32.mrb[0].mxu0
        %8203 = vmatprep.mubr.bf16.mxu0 %v7156
        %8204 = vmatmul.mubr.bf16.gmra.mrb[0].mxu0 %v7108
        %v8205 = vpop.f32.mrb[0].mxu0
        %v8206 = vadd.f32 %v7682, %v8205
        %v8207 = vpop.f32.mrb[0].mxu0
        %v8208 = vpop.f32.mrb[0].mxu0
        %v8209 = vadd.f32 %v7682, %v8208
        %v8210 = vpop.f32.mrb[0].mxu0
        %8211 = vmatprep.mubr.bf16.mxu0 %v7157
        %8212 = vmatmul.mubr.bf16.gmra.mrb[0].mxu0 %v7109
        %v8213 = vpop.f32.mrb[0].mxu0
        %v8214 = vadd.f32 %v7682, %v8213
        %v8215 = vpop.f32.mrb[0].mxu0
        %v8216 = vpop.f32.mrb[0].mxu0
        %v8217 = vadd.f32 %v7682, %v8216
        %v8218 = vpop.f32.mrb[0].mxu0
        %8219 = vmatprep.mubr.bf16.mxu0 %v7158
        %8220 = vmatmul.mubr.bf16.gmra.mrb[0].mxu0 %v7110
        %v8221 = vpop.f32.mrb[0].mxu0
        %v8222 = vadd.f32 %v7682, %v8221
        %v8223 = vpop.f32.mrb[0].mxu0
        %v8224 = vpop.f32.mrb[0].mxu0
        %v8225 = vadd.f32 %v7682, %v8224
        %v8226 = vpop.f32.mrb[0].mxu0
        %8227 = vmatprep.mubr.bf16.mxu0 %v7159
        %8228 = vmatmul.mubr.bf16.gmra.mrb[0].mxu0 %v7111
        %v8229 = vpop.f32.mrb[0].mxu0
        %v8230 = vadd.f32 %v7682, %v8229
        %v8231 = vpop.f32.mrb[0].mxu0
        %v8232 = vpop.f32.mrb[0].mxu0
        %v8233 = vadd.f32 %v7682, %v8232
        %v8234 = vpop.f32.mrb[0].mxu0
        %8235 = vmatprep.mubr.bf16.mxu0 %v7160
        %8236 = vmatmul.mubr.bf16.gmra.mrb[0].mxu0 %v7112
        %v8237 = vpop.f32.mrb[0].mxu0
        %v8238 = vadd.f32 %v7682, %v8237
        %v8239 = vpop.f32.mrb[0].mxu0
        %v8240 = vpop.f32.mrb[0].mxu0
        %v8241 = vadd.f32 %v7682, %v8240
        %v8242 = vpop.f32.mrb[0].mxu0
        %8243 = vmatprep.mubr.bf16.mxu0 %v7161
        %8244 = vmatmul.mubr.bf16.gmra.mrb[0].mxu0 %v7113
        %v8245 = vpop.f32.mrb[0].mxu0
        %v8246 = vadd.f32 %v7682, %v8245
        %v8247 = vpop.f32.mrb[0].mxu0
        %v8248 = vpop.f32.mrb[0].mxu0
        %v8249 = vadd.f32 %v7682, %v8248
        %v8250 = vpop.f32.mrb[0].mxu0
        %8251 = vmatprep.mubr.bf16.mxu0 %v7162
        %8252 = vmatmul.mubr.bf16.gmra.mrb[0].mxu0 %v7114
        %v8253 = vpop.f32.mrb[0].mxu0
        %v8254 = vadd.f32 %v7682, %v8253
        %v8255 = vpop.f32.mrb[0].mxu0
        %v8256 = vpop.f32.mrb[0].mxu0
        %v8257 = vadd.f32 %v7682, %v8256
        %v8258 = vpop.f32.mrb[0].mxu0
        %8259 = vmatprep.mubr.bf16.mxu0 %v7163
        %8260 = vmatmul.mubr.bf16.gmra.mrb[0].mxu0 %v7115
        %v8261 = vpop.f32.mrb[0].mxu0
        %v8262 = vadd.f32 %v7682, %v8261
        %v8263 = vpop.f32.mrb[0].mxu0
        %v8264 = vpop.f32.mrb[0].mxu0
        %v8265 = vadd.f32 %v7682, %v8264
        %v8266 = vpop.f32.mrb[0].mxu0
        %8267 = vmatprep.mubr.bf16.mxu0 %v7164
        %8268 = vmatmul.mubr.bf16.gmra.mrb[0].mxu0 %v7116
        %v8269 = vpop.f32.mrb[0].mxu0
        %v8270 = vadd.f32 %v7682, %v8269
        %v8271 = vpop.f32.mrb[0].mxu0
        %v8272 = vpop.f32.mrb[0].mxu0
        %v8273 = vadd.f32 %v7682, %v8272
        %v8274 = vpop.f32.mrb[0].mxu0
        %8275 = vdwg.mxu0
        %8276 = vmatprep.subr.bf16.mxu0 0
        %8277 = vmatpush1.bf16.msra.mxu0 %v7987
        %8278 = vmatprep.subr.bf16.mxu0 0
        %8279 = vmatpush1.bf16.msra.mxu0 %v7988
        %8280 = vmatprep.subr.bf16.mxu0 0
        %8281 = vmatpush1.bf16.msra.mxu0 %v7989
        %8282 = vmatprep.subr.bf16.mxu0 0
        %8283 = vmatpush1.bf16.msra.mxu0 %v7990
        %8284 = vmatprep.subr.bf16.mxu0 0
        %8285 = vmatpush1.bf16.msra.mxu0 %v7991
        %8286 = vmatprep.subr.bf16.mxu0 0
        %8287 = vmatpush1.bf16.msra.mxu0 %v7992
        %8288 = vmatprep.subr.bf16.mxu0 0
        %8289 = vmatpush1.bf16.msra.mxu0 %v7993
        %8290 = vmatprep.subr.bf16.mxu0 0
        %8291 = vmatpush1.bf16.msra.mxu0 %v7994
        %8292 = vmatprep.subr.bf16.mxu0 0
        %8293 = vmatpush1.bf16.msra.mxu0 %v7995
        %8294 = vmatprep.subr.bf16.mxu0 0
        %8295 = vmatpush1.bf16.msra.mxu0 %v7996
        %8296 = vmatprep.subr.bf16.mxu0 0
        %8297 = vmatpush1.bf16.msra.mxu0 %v7997
        %8298 = vmatprep.subr.bf16.mxu0 0
        %8299 = vmatpush1.bf16.msra.mxu0 %v7998
        %8300 = vmatprep.subr.bf16.mxu0 0
        %8301 = vmatpush1.bf16.msra.mxu0 %v7999
        %8302 = vmatprep.subr.bf16.mxu0 0
        %8303 = vmatpush1.bf16.msra.mxu0 %v8000
        %8304 = vmatprep.subr.bf16.mxu0 0
        %8305 = vmatpush1.bf16.msra.mxu0 %v8001
        %8306 = vmatprep.subr.bf16.mxu0 0
        %8307 = vmatpush1.bf16.msra.mxu0 %v8002
        %8308 = vmatprep.mubr.bf16.mxu0 %v7309
        %8309 = vmatmul.mubr.bf16.gmra.mrb[0].mxu0 %v7261
        %v8310 = vpop.f32.mrb[0].mxu0
        %v8311 = vadd.f32 %v8150, %v8310
        %v8312 = vpop.f32.mrb[0].mxu0
        %v8313 = vpop.f32.mrb[0].mxu0
        %v8314 = vadd.f32 %v8153, %v8313
        %v8315 = vpop.f32.mrb[0].mxu0
        %8316 = vmatprep.mubr.bf16.mxu0 %v7310
        %8317 = vmatmul.mubr.bf16.gmra.mrb[0].mxu0 %v7262
        %v8318 = vpop.f32.mrb[0].mxu0
        %v8319 = vadd.f32 %v8158, %v8318
        %v8320 = vpop.f32.mrb[0].mxu0
        %v8321 = vpop.f32.mrb[0].mxu0
        %v8322 = vadd.f32 %v8161, %v8321
        %v8323 = vpop.f32.mrb[0].mxu0
        %8324 = vmatprep.mubr.bf16.mxu0 %v7311
        %8325 = vmatmul.mubr.bf16.gmra.mrb[0].mxu0 %v7263
        %v8326 = vpop.f32.mrb[0].mxu0
        %v8327 = vadd.f32 %v8166, %v8326
        %v8328 = vpop.f32.mrb[0].mxu0
        %v8329 = vpop.f32.mrb[0].mxu0
        %v8330 = vadd.f32 %v8169, %v8329
        %v8331 = vpop.f32.mrb[0].mxu0
        %8332 = vmatprep.mubr.bf16.mxu0 %v7312
        %8333 = vmatmul.mubr.bf16.gmra.mrb[0].mxu0 %v7264
        %v8334 = vpop.f32.mrb[0].mxu0
        %v8335 = vadd.f32 %v8174, %v8334
        %v8336 = vpop.f32.mrb[0].mxu0
        %v8337 = vpop.f32.mrb[0].mxu0
        %v8338 = vadd.f32 %v8177, %v8337
        %v8339 = vpop.f32.mrb[0].mxu0
        %8340 = vmatprep.mubr.bf16.mxu0 %v7313
        %8341 = vmatmul.mubr.bf16.gmra.mrb[0].mxu0 %v7265
        %v8342 = vpop.f32.mrb[0].mxu0
        %v8343 = vadd.f32 %v8182, %v8342
        %v8344 = vpop.f32.mrb[0].mxu0
        %v8345 = vpop.f32.mrb[0].mxu0
        %v8346 = vadd.f32 %v8185, %v8345
        %v8347 = vpop.f32.mrb[0].mxu0
        %8348 = vmatprep.mubr.bf16.mxu0 %v7314
        %8349 = vmatmul.mubr.bf16.gmra.mrb[0].mxu0 %v7266
        %v8350 = vpop.f32.mrb[0].mxu0
        %v8351 = vadd.f32 %v8190, %v8350
        %v8352 = vpop.f32.mrb[0].mxu0
        %v8353 = vpop.f32.mrb[0].mxu0
        %v8354 = vadd.f32 %v8193, %v8353
        %v8355 = vpop.f32.mrb[0].mxu0
        %8356 = vmatprep.mubr.bf16.mxu0 %v7315
        %8357 = vmatmul.mubr.bf16.gmra.mrb[0].mxu0 %v7267
        %v8358 = vpop.f32.mrb[0].mxu0
        %v8359 = vadd.f32 %v8198, %v8358
        %v8360 = vpop.f32.mrb[0].mxu0
        %v8361 = vpop.f32.mrb[0].mxu0
        %v8362 = vadd.f32 %v8201, %v8361
        %v8363 = vpop.f32.mrb[0].mxu0
        %8364 = vmatprep.mubr.bf16.mxu0 %v7316
        %8365 = vmatmul.mubr.bf16.gmra.mrb[0].mxu0 %v7268
        %v8366 = vpop.f32.mrb[0].mxu0
        %v8367 = vadd.f32 %v8206, %v8366
        %v8368 = vpop.f32.mrb[0].mxu0
        %v8369 = vpop.f32.mrb[0].mxu0
        %v8370 = vadd.f32 %v8209, %v8369
        %v8371 = vpop.f32.mrb[0].mxu0
        %8372 = vmatprep.mubr.bf16.mxu0 %v7317
        %8373 = vmatmul.mubr.bf16.gmra.mrb[0].mxu0 %v7269
        %v8374 = vpop.f32.mrb[0].mxu0
        %v8375 = vadd.f32 %v8214, %v8374
        %v8376 = vpop.f32.mrb[0].mxu0
        %v8377 = vpop.f32.mrb[0].mxu0
        %v8378 = vadd.f32 %v8217, %v8377
        %v8379 = vpop.f32.mrb[0].mxu0
        %8380 = vmatprep.mubr.bf16.mxu0 %v7318
        %8381 = vmatmul.mubr.bf16.gmra.mrb[0].mxu0 %v7270
        %v8382 = vpop.f32.mrb[0].mxu0
        %v8383 = vadd.f32 %v8222, %v8382
        %v8384 = vpop.f32.mrb[0].mxu0
        %v8385 = vpop.f32.mrb[0].mxu0
        %v8386 = vadd.f32 %v8225, %v8385
        %v8387 = vpop.f32.mrb[0].mxu0
        %8388 = vmatprep.mubr.bf16.mxu0 %v7319
        %8389 = vmatmul.mubr.bf16.gmra.mrb[0].mxu0 %v7271
        %v8390 = vpop.f32.mrb[0].mxu0
        %v8391 = vadd.f32 %v8230, %v8390
        %v8392 = vpop.f32.mrb[0].mxu0
        %v8393 = vpop.f32.mrb[0].mxu0
        %v8394 = vadd.f32 %v8233, %v8393
        %v8395 = vpop.f32.mrb[0].mxu0
        %8396 = vmatprep.mubr.bf16.mxu0 %v7320
        %8397 = vmatmul.mubr.bf16.gmra.mrb[0].mxu0 %v7272
        %v8398 = vpop.f32.mrb[0].mxu0
        %v8399 = vadd.f32 %v8238, %v8398
        %v8400 = vpop.f32.mrb[0].mxu0
        %v8401 = vpop.f32.mrb[0].mxu0
        %v8402 = vadd.f32 %v8241, %v8401
        %v8403 = vpop.f32.mrb[0].mxu0
        %8404 = vmatprep.mubr.bf16.mxu0 %v7321
        %8405 = vmatmul.mubr.bf16.gmra.mrb[0].mxu0 %v7273
        %v8406 = vpop.f32.mrb[0].mxu0
        %v8407 = vadd.f32 %v8246, %v8406
        %v8408 = vpop.f32.mrb[0].mxu0
        %v8409 = vpop.f32.mrb[0].mxu0
        %v8410 = vadd.f32 %v8249, %v8409
        %v8411 = vpop.f32.mrb[0].mxu0
        %8412 = vmatprep.mubr.bf16.mxu0 %v7322
        %8413 = vmatmul.mubr.bf16.gmra.mrb[0].mxu0 %v7274
        %v8414 = vpop.f32.mrb[0].mxu0
        %v8415 = vadd.f32 %v8254, %v8414
        %v8416 = vpop.f32.mrb[0].mxu0
        %v8417 = vpop.f32.mrb[0].mxu0
        %v8418 = vadd.f32 %v8257, %v8417
        %v8419 = vpop.f32.mrb[0].mxu0
        %8420 = vmatprep.mubr.bf16.mxu0 %v7323
        %8421 = vmatmul.mubr.bf16.gmra.mrb[0].mxu0 %v7275
        %v8422 = vpop.f32.mrb[0].mxu0
        %v8423 = vadd.f32 %v8262, %v8422
        %v8424 = vpop.f32.mrb[0].mxu0
        %v8425 = vpop.f32.mrb[0].mxu0
        %v8426 = vadd.f32 %v8265, %v8425
        %v8427 = vpop.f32.mrb[0].mxu0
        %8428 = vmatprep.mubr.bf16.mxu0 %v7324
        %8429 = vmatmul.mubr.bf16.gmra.mrb[0].mxu0 %v7276
        %v8430 = vpop.f32.mrb[0].mxu0
        %v8431 = vadd.f32 %v8270, %v8430
        %v8432 = vpop.f32.mrb[0].mxu0
        %v8433 = vpop.f32.mrb[0].mxu0
        %v8434 = vadd.f32 %v8273, %v8433
        %v8435 = vpop.f32.mrb[0].mxu0
        %8436 = vdwg.mxu0
        %8437 = vmatprep.subr.bf16.mxu0 0
        %8438 = vmatpush1.bf16.msra.mxu0 %v8003
        %8439 = vmatprep.subr.bf16.mxu0 0
        %8440 = vmatpush1.bf16.msra.mxu0 %v8004
        %8441 = vmatprep.subr.bf16.mxu0 0
        %8442 = vmatpush1.bf16.msra.mxu0 %v8005
        %8443 = vmatprep.subr.bf16.mxu0 0
        %8444 = vmatpush1.bf16.msra.mxu0 %v8006
        %8445 = vmatprep.subr.bf16.mxu0 0
        %8446 = vmatpush1.bf16.msra.mxu0 %v8007
        %8447 = vmatprep.subr.bf16.mxu0 0
        %8448 = vmatpush1.bf16.msra.mxu0 %v8008
        %8449 = vmatprep.subr.bf16.mxu0 0
        %8450 = vmatpush1.bf16.msra.mxu0 %v8009
        %8451 = vmatprep.subr.bf16.mxu0 0
        %8452 = vmatpush1.bf16.msra.mxu0 %v8010
        %8453 = vmatprep.subr.bf16.mxu0 0
        %8454 = vmatpush1.bf16.msra.mxu0 %v8011
        %8455 = vmatprep.subr.bf16.mxu0 0
        %8456 = vmatpush1.bf16.msra.mxu0 %v8012
        %8457 = vmatprep.subr.bf16.mxu0 0
        %8458 = vmatpush1.bf16.msra.mxu0 %v8013
        %8459 = vmatprep.subr.bf16.mxu0 0
        %8460 = vmatpush1.bf16.msra.mxu0 %v8014
        %8461 = vmatprep.subr.bf16.mxu0 0
        %8462 = vmatpush1.bf16.msra.mxu0 %v8015
        %8463 = vmatprep.subr.bf16.mxu0 0
        %8464 = vmatpush1.bf16.msra.mxu0 %v8016
        %8465 = vmatprep.subr.bf16.mxu0 0
        %8466 = vmatpush1.bf16.msra.mxu0 %v8017
        %8467 = vmatprep.subr.bf16.mxu0 0
        %8468 = vmatpush1.bf16.msra.mxu0 %v8018
        %8469 = vmatprep.mubr.bf16.mxu0 %v7373
        %8470 = vmatmul.mubr.bf16.gmra.mrb[0].mxu0 %v7325
        %v8471 = vpop.f32.mrb[0].mxu0
        %v8472 = vadd.f32 %v8311, %v8471
        %v8473 = vpop.f32.mrb[0].mxu0
        %v8474 = vpop.f32.mrb[0].mxu0
        %v8475 = vadd.f32 %v8314, %v8474
        %v8476 = vpop.f32.mrb[0].mxu0
        %8477 = vmatprep.mubr.bf16.mxu0 %v7374
        %8478 = vmatmul.mubr.bf16.gmra.mrb[0].mxu0 %v7326
        %v8479 = vpop.f32.mrb[0].mxu0
        %v8480 = vadd.f32 %v8319, %v8479
        %v8481 = vpop.f32.mrb[0].mxu0
        %v8482 = vpop.f32.mrb[0].mxu0
        %v8483 = vadd.f32 %v8322, %v8482
        %v8484 = vpop.f32.mrb[0].mxu0
        %8485 = vmatprep.mubr.bf16.mxu0 %v7375
        %8486 = vmatmul.mubr.bf16.gmra.mrb[0].mxu0 %v7327
        %v8487 = vpop.f32.mrb[0].mxu0
        %v8488 = vadd.f32 %v8327, %v8487
        %v8489 = vpop.f32.mrb[0].mxu0
        %v8490 = vpop.f32.mrb[0].mxu0
        %v8491 = vadd.f32 %v8330, %v8490
        %v8492 = vpop.f32.mrb[0].mxu0
        %8493 = vmatprep.mubr.bf16.mxu0 %v7376
        %8494 = vmatmul.mubr.bf16.gmra.mrb[0].mxu0 %v7328
        %v8495 = vpop.f32.mrb[0].mxu0
        %v8496 = vadd.f32 %v8335, %v8495
        %v8497 = vpop.f32.mrb[0].mxu0
        %v8498 = vpop.f32.mrb[0].mxu0
        %v8499 = vadd.f32 %v8338, %v8498
        %v8500 = vpop.f32.mrb[0].mxu0
        %8501 = vmatprep.mubr.bf16.mxu0 %v7377
        %8502 = vmatmul.mubr.bf16.gmra.mrb[0].mxu0 %v7329
        %v8503 = vpop.f32.mrb[0].mxu0
        %v8504 = vadd.f32 %v8343, %v8503
        %v8505 = vpop.f32.mrb[0].mxu0
        %v8506 = vpop.f32.mrb[0].mxu0
        %v8507 = vadd.f32 %v8346, %v8506
        %v8508 = vpop.f32.mrb[0].mxu0
        %8509 = vmatprep.mubr.bf16.mxu0 %v7378
        %8510 = vmatmul.mubr.bf16.gmra.mrb[0].mxu0 %v7330
        %v8511 = vpop.f32.mrb[0].mxu0
        %v8512 = vadd.f32 %v8351, %v8511
        %v8513 = vpop.f32.mrb[0].mxu0
        %v8514 = vpop.f32.mrb[0].mxu0
        %v8515 = vadd.f32 %v8354, %v8514
        %v8516 = vpop.f32.mrb[0].mxu0
        %8517 = vmatprep.mubr.bf16.mxu0 %v7379
        %8518 = vmatmul.mubr.bf16.gmra.mrb[0].mxu0 %v7331
        %v8519 = vpop.f32.mrb[0].mxu0
        %v8520 = vadd.f32 %v8359, %v8519
        %v8521 = vpop.f32.mrb[0].mxu0
        %v8522 = vpop.f32.mrb[0].mxu0
        %v8523 = vadd.f32 %v8362, %v8522
        %v8524 = vpop.f32.mrb[0].mxu0
        %8525 = vmatprep.mubr.bf16.mxu0 %v7380
        %8526 = vmatmul.mubr.bf16.gmra.mrb[0].mxu0 %v7332
        %v8527 = vpop.f32.mrb[0].mxu0
        %v8528 = vadd.f32 %v8367, %v8527
        %v8529 = vpop.f32.mrb[0].mxu0
        %v8530 = vpop.f32.mrb[0].mxu0
        %v8531 = vadd.f32 %v8370, %v8530
        %v8532 = vpop.f32.mrb[0].mxu0
        %8533 = vmatprep.mubr.bf16.mxu0 %v7381
        %8534 = vmatmul.mubr.bf16.gmra.mrb[0].mxu0 %v7333
        %v8535 = vpop.f32.mrb[0].mxu0
        %v8536 = vadd.f32 %v8375, %v8535
        %v8537 = vpop.f32.mrb[0].mxu0
        %v8538 = vpop.f32.mrb[0].mxu0
        %v8539 = vadd.f32 %v8378, %v8538
        %v8540 = vpop.f32.mrb[0].mxu0
        %8541 = vmatprep.mubr.bf16.mxu0 %v7382
        %8542 = vmatmul.mubr.bf16.gmra.mrb[0].mxu0 %v7334
        %v8543 = vpop.f32.mrb[0].mxu0
        %v8544 = vadd.f32 %v8383, %v8543
        %v8545 = vpop.f32.mrb[0].mxu0
        %v8546 = vpop.f32.mrb[0].mxu0
        %v8547 = vadd.f32 %v8386, %v8546
        %v8548 = vpop.f32.mrb[0].mxu0
        %8549 = vmatprep.mubr.bf16.mxu0 %v7383
        %8550 = vmatmul.mubr.bf16.gmra.mrb[0].mxu0 %v7335
        %v8551 = vpop.f32.mrb[0].mxu0
        %v8552 = vadd.f32 %v8391, %v8551
        %v8553 = vpop.f32.mrb[0].mxu0
        %v8554 = vpop.f32.mrb[0].mxu0
        %v8555 = vadd.f32 %v8394, %v8554
        %v8556 = vpop.f32.mrb[0].mxu0
        %8557 = vmatprep.mubr.bf16.mxu0 %v7384
        %8558 = vmatmul.mubr.bf16.gmra.mrb[0].mxu0 %v7336
        %v8559 = vpop.f32.mrb[0].mxu0
        %v8560 = vadd.f32 %v8399, %v8559
        %v8561 = vpop.f32.mrb[0].mxu0
        %v8562 = vpop.f32.mrb[0].mxu0
        %v8563 = vadd.f32 %v8402, %v8562
        %v8564 = vpop.f32.mrb[0].mxu0
        %8565 = vmatprep.mubr.bf16.mxu0 %v7385
        %8566 = vmatmul.mubr.bf16.gmra.mrb[0].mxu0 %v7337
        %v8567 = vpop.f32.mrb[0].mxu0
        %v8568 = vadd.f32 %v8407, %v8567
        %v8569 = vpop.f32.mrb[0].mxu0
        %v8570 = vpop.f32.mrb[0].mxu0
        %v8571 = vadd.f32 %v8410, %v8570
        %v8572 = vpop.f32.mrb[0].mxu0
        %8573 = vmatprep.mubr.bf16.mxu0 %v7386
        %8574 = vmatmul.mubr.bf16.gmra.mrb[0].mxu0 %v7338
        %v8575 = vpop.f32.mrb[0].mxu0
        %v8576 = vadd.f32 %v8415, %v8575
        %v8577 = vpop.f32.mrb[0].mxu0
        %v8578 = vpop.f32.mrb[0].mxu0
        %v8579 = vadd.f32 %v8418, %v8578
        %v8580 = vpop.f32.mrb[0].mxu0
        %8581 = vmatprep.mubr.bf16.mxu0 %v7387
        %8582 = vmatmul.mubr.bf16.gmra.mrb[0].mxu0 %v7339
        %v8583 = vpop.f32.mrb[0].mxu0
        %v8584 = vadd.f32 %v8423, %v8583
        %v8585 = vpop.f32.mrb[0].mxu0
        %v8586 = vpop.f32.mrb[0].mxu0
        %v8587 = vadd.f32 %v8426, %v8586
        %v8588 = vpop.f32.mrb[0].mxu0
        %8589 = vmatprep.mubr.bf16.mxu0 %v7388
        %8590 = vmatmul.mubr.bf16.gmra.mrb[0].mxu0 %v7340
        %v8591 = vpop.f32.mrb[0].mxu0
        %v8592 = vadd.f32 %v8431, %v8591
        %v8593 = vpop.f32.mrb[0].mxu0
        %v8594 = vpop.f32.mrb[0].mxu0
        %v8595 = vadd.f32 %v8434, %v8594
        %v8596 = vpop.f32.mrb[0].mxu0
        %8597 = vdwg.mxu0
        %8598 = vmatprep.subr.bf16.mxu0 0
        %8599 = vmatpush1.bf16.msra.mxu0 %v8019
        %8600 = vmatprep.subr.bf16.mxu0 0
        %8601 = vmatpush1.bf16.msra.mxu0 %v8020
        %8602 = vmatprep.subr.bf16.mxu0 0
        %8603 = vmatpush1.bf16.msra.mxu0 %v8021
        %8604 = vmatprep.subr.bf16.mxu0 0
        %8605 = vmatpush1.bf16.msra.mxu0 %v8022
        %8606 = vmatprep.subr.bf16.mxu0 0
        %8607 = vmatpush1.bf16.msra.mxu0 %v8023
        %8608 = vmatprep.subr.bf16.mxu0 0
        %8609 = vmatpush1.bf16.msra.mxu0 %v8024
        %8610 = vmatprep.subr.bf16.mxu0 0
        %8611 = vmatpush1.bf16.msra.mxu0 %v8025
        %8612 = vmatprep.subr.bf16.mxu0 0
        %8613 = vmatpush1.bf16.msra.mxu0 %v8026
        %8614 = vmatprep.subr.bf16.mxu0 0
        %8615 = vmatpush1.bf16.msra.mxu0 %v8027
        %8616 = vmatprep.subr.bf16.mxu0 0
        %8617 = vmatpush1.bf16.msra.mxu0 %v8028
        %8618 = vmatprep.subr.bf16.mxu0 0
        %8619 = vmatpush1.bf16.msra.mxu0 %v8029
        %8620 = vmatprep.subr.bf16.mxu0 0
        %8621 = vmatpush1.bf16.msra.mxu0 %v8030
        %8622 = vmatprep.subr.bf16.mxu0 0
        %8623 = vmatpush1.bf16.msra.mxu0 %v8031
        %8624 = vmatprep.subr.bf16.mxu0 0
        %8625 = vmatpush1.bf16.msra.mxu0 %v8032
        %8626 = vmatprep.subr.bf16.mxu0 0
        %8627 = vmatpush1.bf16.msra.mxu0 %v8033
        %8628 = vmatprep.subr.bf16.mxu0 0
        %8629 = vmatpush1.bf16.msra.mxu0 %v8034
        %8630 = vmatprep.mubr.bf16.mxu0 %v7469
        %8631 = vmatmul.mubr.bf16.gmra.mrb[0].mxu0 %v7421
        %v8632 = vpop.f32.mrb[0].mxu0
        %v8633 = vadd.f32 %v8472, %v8632
        %v8634 = vpop.f32.mrb[0].mxu0
        %v8635 = vpop.f32.mrb[0].mxu0
        %v8636 = vadd.f32 %v8475, %v8635
        %v8637 = vpop.f32.mrb[0].mxu0
        %8638 = vmatprep.mubr.bf16.mxu0 %v7470
        %8639 = vmatmul.mubr.bf16.gmra.mrb[0].mxu0 %v7422
        %v8640 = vpop.f32.mrb[0].mxu0
        %v8641 = vadd.f32 %v8480, %v8640
        %v8642 = vpop.f32.mrb[0].mxu0
        %v8643 = vpop.f32.mrb[0].mxu0
        %v8644 = vadd.f32 %v8483, %v8643
        %v8645 = vpop.f32.mrb[0].mxu0
        %8646 = vmatprep.mubr.bf16.mxu0 %v7471
        %8647 = vmatmul.mubr.bf16.gmra.mrb[0].mxu0 %v7423
        %v8648 = vpop.f32.mrb[0].mxu0
        %v8649 = vadd.f32 %v8488, %v8648
        %v8650 = vpop.f32.mrb[0].mxu0
        %v8651 = vpop.f32.mrb[0].mxu0
        %v8652 = vadd.f32 %v8491, %v8651
        %v8653 = vpop.f32.mrb[0].mxu0
        %8654 = vmatprep.mubr.bf16.mxu0 %v7472
        %8655 = vmatmul.mubr.bf16.gmra.mrb[0].mxu0 %v7424
        %v8656 = vpop.f32.mrb[0].mxu0
        %v8657 = vadd.f32 %v8496, %v8656
        %v8658 = vpop.f32.mrb[0].mxu0
        %v8659 = vpop.f32.mrb[0].mxu0
        %v8660 = vadd.f32 %v8499, %v8659
        %v8661 = vpop.f32.mrb[0].mxu0
        %8662 = vmatprep.mubr.bf16.mxu0 %v7473
        %8663 = vmatmul.mubr.bf16.gmra.mrb[0].mxu0 %v7425
        %v8664 = vpop.f32.mrb[0].mxu0
        %v8665 = vadd.f32 %v8504, %v8664
        %v8666 = vpop.f32.mrb[0].mxu0
        %v8667 = vpop.f32.mrb[0].mxu0
        %v8668 = vadd.f32 %v8507, %v8667
        %v8669 = vpop.f32.mrb[0].mxu0
        %8670 = vmatprep.mubr.bf16.mxu0 %v7474
        %8671 = vmatmul.mubr.bf16.gmra.mrb[0].mxu0 %v7426
        %v8672 = vpop.f32.mrb[0].mxu0
        %v8673 = vadd.f32 %v8512, %v8672
        %v8674 = vpop.f32.mrb[0].mxu0
        %v8675 = vpop.f32.mrb[0].mxu0
        %v8676 = vadd.f32 %v8515, %v8675
        %v8677 = vpop.f32.mrb[0].mxu0
        %8678 = vmatprep.mubr.bf16.mxu0 %v7475
        %8679 = vmatmul.mubr.bf16.gmra.mrb[0].mxu0 %v7427
        %v8680 = vpop.f32.mrb[0].mxu0
        %v8681 = vadd.f32 %v8520, %v8680
        %v8682 = vpop.f32.mrb[0].mxu0
        %v8683 = vpop.f32.mrb[0].mxu0
        %v8684 = vadd.f32 %v8523, %v8683
        %v8685 = vpop.f32.mrb[0].mxu0
        %8686 = vmatprep.mubr.bf16.mxu0 %v7476
        %8687 = vmatmul.mubr.bf16.gmra.mrb[0].mxu0 %v7428
        %v8688 = vpop.f32.mrb[0].mxu0
        %v8689 = vadd.f32 %v8528, %v8688
        %v8690 = vpop.f32.mrb[0].mxu0
        %v8691 = vpop.f32.mrb[0].mxu0
        %v8692 = vadd.f32 %v8531, %v8691
        %v8693 = vpop.f32.mrb[0].mxu0
        %8694 = vmatprep.mubr.bf16.mxu0 %v7477
        %8695 = vmatmul.mubr.bf16.gmra.mrb[0].mxu0 %v7429
        %v8696 = vpop.f32.mrb[0].mxu0
        %v8697 = vadd.f32 %v8536, %v8696
        %v8698 = vpop.f32.mrb[0].mxu0
        %v8699 = vpop.f32.mrb[0].mxu0
        %v8700 = vadd.f32 %v8539, %v8699
        %v8701 = vpop.f32.mrb[0].mxu0
        %8702 = vmatprep.mubr.bf16.mxu0 %v7478
        %8703 = vmatmul.mubr.bf16.gmra.mrb[0].mxu0 %v7430
        %v8704 = vpop.f32.mrb[0].mxu0
        %v8705 = vadd.f32 %v8544, %v8704
        %v8706 = vpop.f32.mrb[0].mxu0
        %v8707 = vpop.f32.mrb[0].mxu0
        %v8708 = vadd.f32 %v8547, %v8707
        %v8709 = vpop.f32.mrb[0].mxu0
        %8710 = vmatprep.mubr.bf16.mxu0 %v7479
        %8711 = vmatmul.mubr.bf16.gmra.mrb[0].mxu0 %v7431
        %v8712 = vpop.f32.mrb[0].mxu0
        %v8713 = vadd.f32 %v8552, %v8712
        %v8714 = vpop.f32.mrb[0].mxu0
        %v8715 = vpop.f32.mrb[0].mxu0
        %v8716 = vadd.f32 %v8555, %v8715
        %v8717 = vpop.f32.mrb[0].mxu0
        %8718 = vmatprep.mubr.bf16.mxu0 %v7480
        %8719 = vmatmul.mubr.bf16.gmra.mrb[0].mxu0 %v7432
        %v8720 = vpop.f32.mrb[0].mxu0
        %v8721 = vadd.f32 %v8560, %v8720
        %v8722 = vpop.f32.mrb[0].mxu0
        %v8723 = vpop.f32.mrb[0].mxu0
        %v8724 = vadd.f32 %v8563, %v8723
        %v8725 = vpop.f32.mrb[0].mxu0
        %8726 = vmatprep.mubr.bf16.mxu0 %v7481
        %8727 = vmatmul.mubr.bf16.gmra.mrb[0].mxu0 %v7433
        %v8728 = vpop.f32.mrb[0].mxu0
        %v8729 = vadd.f32 %v8568, %v8728
        %v8730 = vpop.f32.mrb[0].mxu0
        %v8731 = vpop.f32.mrb[0].mxu0
        %v8732 = vadd.f32 %v8571, %v8731
        %v8733 = vpop.f32.mrb[0].mxu0
        %8734 = vmatprep.mubr.bf16.mxu0 %v7482
        %8735 = vmatmul.mubr.bf16.gmra.mrb[0].mxu0 %v7434
        %v8736 = vpop.f32.mrb[0].mxu0
        %v8737 = vadd.f32 %v8576, %v8736
        %v8738 = vpop.f32.mrb[0].mxu0
        %v8739 = vpop.f32.mrb[0].mxu0
        %v8740 = vadd.f32 %v8579, %v8739
        %v8741 = vpop.f32.mrb[0].mxu0
        %8742 = vmatprep.mubr.bf16.mxu0 %v7483
        %8743 = vmatmul.mubr.bf16.gmra.mrb[0].mxu0 %v7435
        %v8744 = vpop.f32.mrb[0].mxu0
        %v8745 = vadd.f32 %v8584, %v8744
        %v8746 = vpop.f32.mrb[0].mxu0
        %v8747 = vpop.f32.mrb[0].mxu0
        %v8748 = vadd.f32 %v8587, %v8747
        %v8749 = vpop.f32.mrb[0].mxu0
        %8750 = vmatprep.mubr.bf16.mxu0 %v7484
        %8751 = vmatmul.mubr.bf16.gmra.mrb[0].mxu0 %v7436
        %v8752 = vpop.f32.mrb[0].mxu0
        %v8753 = vadd.f32 %v8592, %v8752
        %v8754 = vpop.f32.mrb[0].mxu0
        %v8755 = vpop.f32.mrb[0].mxu0
        %v8756 = vadd.f32 %v8595, %v8755
        %v8757 = vpop.f32.mrb[0].mxu0
        %8758 = vdwg.mxu0
        %8759 = vmatprep.subr.bf16.mxu0 0
        %8760 = vmatpush1.bf16.msra.mxu0 %v8035
        %8761 = vmatprep.subr.bf16.mxu0 0
        %8762 = vmatpush1.bf16.msra.mxu0 %v8036
        %8763 = vmatprep.subr.bf16.mxu0 0
        %8764 = vmatpush1.bf16.msra.mxu0 %v8037
        %8765 = vmatprep.subr.bf16.mxu0 0
        %8766 = vmatpush1.bf16.msra.mxu0 %v8038
        %8767 = vmatprep.subr.bf16.mxu0 0
        %8768 = vmatpush1.bf16.msra.mxu0 %v8039
        %8769 = vmatprep.subr.bf16.mxu0 0
        %8770 = vmatpush1.bf16.msra.mxu0 %v8040
        %8771 = vmatprep.subr.bf16.mxu0 0
        %8772 = vmatpush1.bf16.msra.mxu0 %v8041
        %8773 = vmatprep.subr.bf16.mxu0 0
        %8774 = vmatpush1.bf16.msra.mxu0 %v8042
        %8775 = vmatprep.subr.bf16.mxu0 0
        %8776 = vmatpush1.bf16.msra.mxu0 0
        %8777 = vmatprep.subr.bf16.mxu0 0
        %8778 = vmatpush1.bf16.msra.mxu0 0
        %8779 = vmatprep.subr.bf16.mxu0 0
        %8780 = vmatpush1.bf16.msra.mxu0 0
        %8781 = vmatprep.subr.bf16.mxu0 0
        %8782 = vmatpush1.bf16.msra.mxu0 0
        %8783 = vmatprep.subr.bf16.mxu0 0
        %8784 = vmatpush1.bf16.msra.mxu0 0
        %8785 = vmatprep.subr.bf16.mxu0 0
        %8786 = vmatpush1.bf16.msra.mxu0 0
        %8787 = vmatprep.subr.bf16.mxu0 0
        %8788 = vmatpush1.bf16.msra.mxu0 0
        %8789 = vmatprep.subr.bf16.mxu0 0
        %8790 = vmatpush1.bf16.msra.mxu0 0
        %8791 = vmatprep.mubr.bf16.mxu0 0
        %8792 = vmatmul.mubr.bf16.gmra.mrb[0].mxu0 %v7517
        %v8793 = vpop.f32.mrb[0].mxu0
        %v8794 = vadd.f32 %v8633, %v8793
        %v8795 = vpop.f32.mrb[0].mxu0
        %v8796 = vpop.f32.mrb[0].mxu0
        %v8797 = vadd.f32 %v8636, %v8796
        %v8798 = vpop.f32.mrb[0].mxu0
        %8799 = vmatprep.mubr.bf16.mxu0 0
        %8800 = vmatmul.mubr.bf16.gmra.mrb[0].mxu0 %v7518
        %v8801 = vpop.f32.mrb[0].mxu0
        %v8802 = vadd.f32 %v8641, %v8801
        %v8803 = vpop.f32.mrb[0].mxu0
        %v8804 = vpop.f32.mrb[0].mxu0
        %v8805 = vadd.f32 %v8644, %v8804
        %v8806 = vpop.f32.mrb[0].mxu0
        %8807 = vmatprep.mubr.bf16.mxu0 0
        %8808 = vmatmul.mubr.bf16.gmra.mrb[0].mxu0 %v7519
        %v8809 = vpop.f32.mrb[0].mxu0
        %v8810 = vadd.f32 %v8649, %v8809
        %v8811 = vpop.f32.mrb[0].mxu0
        %v8812 = vpop.f32.mrb[0].mxu0
        %v8813 = vadd.f32 %v8652, %v8812
        %v8814 = vpop.f32.mrb[0].mxu0
        %8815 = vmatprep.mubr.bf16.mxu0 0
        %8816 = vmatmul.mubr.bf16.gmra.mrb[0].mxu0 %v7520
        %v8817 = vpop.f32.mrb[0].mxu0
        %v8818 = vadd.f32 %v8657, %v8817
        %v8819 = vpop.f32.mrb[0].mxu0
        %v8820 = vpop.f32.mrb[0].mxu0
        %v8821 = vadd.f32 %v8660, %v8820
        %v8822 = vpop.f32.mrb[0].mxu0
        %8823 = vmatprep.mubr.bf16.mxu0 0
        %8824 = vmatmul.mubr.bf16.gmra.mrb[0].mxu0 %v7521
        %v8825 = vpop.f32.mrb[0].mxu0
        %v8826 = vadd.f32 %v8665, %v8825
        %v8827 = vpop.f32.mrb[0].mxu0
        %v8828 = vpop.f32.mrb[0].mxu0
        %v8829 = vadd.f32 %v8668, %v8828
        %v8830 = vpop.f32.mrb[0].mxu0
        %8831 = vmatprep.mubr.bf16.mxu0 0
        %8832 = vmatmul.mubr.bf16.gmra.mrb[0].mxu0 %v7522
        %v8833 = vpop.f32.mrb[0].mxu0
        %v8834 = vadd.f32 %v8673, %v8833
        %v8835 = vpop.f32.mrb[0].mxu0
        %v8836 = vpop.f32.mrb[0].mxu0
        %v8837 = vadd.f32 %v8676, %v8836
        %v8838 = vpop.f32.mrb[0].mxu0
        %8839 = vmatprep.mubr.bf16.mxu0 0
        %8840 = vmatmul.mubr.bf16.gmra.mrb[0].mxu0 %v7523
        %v8841 = vpop.f32.mrb[0].mxu0
        %v8842 = vadd.f32 %v8681, %v8841
        %v8843 = vpop.f32.mrb[0].mxu0
        %v8844 = vpop.f32.mrb[0].mxu0
        %v8845 = vadd.f32 %v8684, %v8844
        %v8846 = vpop.f32.mrb[0].mxu0
        %8847 = vmatprep.mubr.bf16.mxu0 0
        %8848 = vmatmul.mubr.bf16.gmra.mrb[0].mxu0 %v7524
        %v8849 = vpop.f32.mrb[0].mxu0
        %v8850 = vadd.f32 %v8689, %v8849
        %v8851 = vpop.f32.mrb[0].mxu0
        %v8852 = vpop.f32.mrb[0].mxu0
        %v8853 = vadd.f32 %v8692, %v8852
        %v8854 = vpop.f32.mrb[0].mxu0
        %8855 = vmatprep.mubr.bf16.mxu0 0
        %8856 = vmatmul.mubr.bf16.gmra.mrb[0].mxu0 %v7525
        %v8857 = vpop.f32.mrb[0].mxu0
        %v8858 = vadd.f32 %v8697, %v8857
        %v8859 = vpop.f32.mrb[0].mxu0
        %v8860 = vpop.f32.mrb[0].mxu0
        %v8861 = vadd.f32 %v8700, %v8860
        %v8862 = vpop.f32.mrb[0].mxu0
        %8863 = vmatprep.mubr.bf16.mxu0 0
        %8864 = vmatmul.mubr.bf16.gmra.mrb[0].mxu0 %v7526
        %v8865 = vpop.f32.mrb[0].mxu0
        %v8866 = vadd.f32 %v8705, %v8865
        %v8867 = vpop.f32.mrb[0].mxu0
        %v8868 = vpop.f32.mrb[0].mxu0
        %v8869 = vadd.f32 %v8708, %v8868
        %v8870 = vpop.f32.mrb[0].mxu0
        %8871 = vmatprep.mubr.bf16.mxu0 0
        %8872 = vmatmul.mubr.bf16.gmra.mrb[0].mxu0 %v7527
        %v8873 = vpop.f32.mrb[0].mxu0
        %v8874 = vadd.f32 %v8713, %v8873
        %v8875 = vpop.f32.mrb[0].mxu0
        %v8876 = vpop.f32.mrb[0].mxu0
        %v8877 = vadd.f32 %v8716, %v8876
        %v8878 = vpop.f32.mrb[0].mxu0
        %8879 = vmatprep.mubr.bf16.mxu0 0
        %8880 = vmatmul.mubr.bf16.gmra.mrb[0].mxu0 %v7528
        %v8881 = vpop.f32.mrb[0].mxu0
        %v8882 = vadd.f32 %v8721, %v8881
        %v8883 = vpop.f32.mrb[0].mxu0
        %v8884 = vpop.f32.mrb[0].mxu0
        %v8885 = vadd.f32 %v8724, %v8884
        %v8886 = vpop.f32.mrb[0].mxu0
        %8887 = vmatprep.mubr.bf16.mxu0 0
        %8888 = vmatmul.mubr.bf16.gmra.mrb[0].mxu0 %v7529
        %v8889 = vpop.f32.mrb[0].mxu0
        %v8890 = vadd.f32 %v8729, %v8889
        %v8891 = vpop.f32.mrb[0].mxu0
        %v8892 = vpop.f32.mrb[0].mxu0
        %v8893 = vadd.f32 %v8732, %v8892
        %v8894 = vpop.f32.mrb[0].mxu0
        %8895 = vmatprep.mubr.bf16.mxu0 0
        %8896 = vmatmul.mubr.bf16.gmra.mrb[0].mxu0 %v7530
        %v8897 = vpop.f32.mrb[0].mxu0
        %v8898 = vadd.f32 %v8737, %v8897
        %v8899 = vpop.f32.mrb[0].mxu0
        %v8900 = vpop.f32.mrb[0].mxu0
        %v8901 = vadd.f32 %v8740, %v8900
        %v8902 = vpop.f32.mrb[0].mxu0
        %8903 = vmatprep.mubr.bf16.mxu0 0
        %8904 = vmatmul.mubr.bf16.gmra.mrb[0].mxu0 %v7531
        %v8905 = vpop.f32.mrb[0].mxu0
        %v8906 = vadd.f32 %v8745, %v8905
        %v8907 = vpop.f32.mrb[0].mxu0
        %v8908 = vpop.f32.mrb[0].mxu0
        %v8909 = vadd.f32 %v8748, %v8908
        %v8910 = vpop.f32.mrb[0].mxu0
        %8911 = vmatprep.mubr.bf16.mxu0 0
        %8912 = vmatmul.mubr.bf16.gmra.mrb[0].mxu0 %v7532
        %v8913 = vpop.f32.mrb[0].mxu0
        %v8914 = vadd.f32 %v8753, %v8913
        %v8915 = vpop.f32.mrb[0].mxu0
        %v8916 = vpop.f32.mrb[0].mxu0
        %v8917 = vadd.f32 %v8756, %v8916
        %v8918 = vpop.f32.mrb[0].mxu0
        %8919 = vdwg.mxu0
        %v8920 = vld [vmem:[%s4 + $0x4] sm:$0x1]
        %vm8921 = vcmp.ge.f32.partialorder %v8794, 0.0
        %vm8922 = vcmp.ge.f32.partialorder %v8797, 0.0
        %vm8923 = vcmp.ge.f32.partialorder %v8802, 0.0
        %vm8924 = vcmp.ge.f32.partialorder %v8805, 0.0
        %vm8925 = vcmp.ge.f32.partialorder %v8810, 0.0
        %vm8926 = vcmp.ge.f32.partialorder %v8813, 0.0
        %vm8927 = vcmp.ge.f32.partialorder %v8818, 0.0
        %vm8928 = vcmp.ge.f32.partialorder %v8821, 0.0
        %vm8929 = vcmp.ge.f32.partialorder %v8826, 0.0
        %vm8930 = vcmp.ge.f32.partialorder %v8829, 0.0
        %vm8931 = vcmp.ge.f32.partialorder %v8834, 0.0
        %vm8932 = vcmp.ge.f32.partialorder %v8837, 0.0
        %vm8933 = vcmp.ge.f32.partialorder %v8842, 0.0
        %vm8934 = vcmp.ge.f32.partialorder %v8845, 0.0
        %vm8935 = vcmp.ge.f32.partialorder %v8850, 0.0
        %vm8936 = vcmp.ge.f32.partialorder %v8853, 0.0
        %vm8937 = vcmp.ge.f32.partialorder %v8858, 0.0
        %vm8938 = vcmp.ge.f32.partialorder %v8861, 0.0
        %vm8939 = vcmp.ge.f32.partialorder %v8866, 0.0
        %vm8940 = vcmp.ge.f32.partialorder %v8869, 0.0
        %vm8941 = vcmp.ge.f32.partialorder %v8874, 0.0
        %vm8942 = vcmp.ge.f32.partialorder %v8877, 0.0
        %vm8943 = vcmp.ge.f32.partialorder %v8882, 0.0
        %vm8944 = vcmp.ge.f32.partialorder %v8885, 0.0
        %vm8945 = vcmp.ge.f32.partialorder %v8890, 0.0
        %vm8946 = vcmp.ge.f32.partialorder %v8893, 0.0
        %vm8947 = vcmp.ge.f32.partialorder %v8898, 0.0
        %vm8948 = vcmp.ge.f32.partialorder %v8901, 0.0
        %vm8949 = vcmp.ge.f32.partialorder %v8906, 0.0
        %vm8950 = vcmp.ge.f32.partialorder %v8909, 0.0
        %vm8951 = vcmp.ge.f32.partialorder %v8914, 0.0
        %vm8952 = vcmp.ge.f32.partialorder %v8917, 0.0
        %v8953 = vlaneseq
        %v8954 = vshrl.u32 %v8953, 7
        %v8955 = vsub.s32 0, %v8954
        %v8956 = vrot.slane %v8920, %v8955
        %v8957 = vmul.f32 %v8794, %v8956
        %v8958 = vmul.f32 %v8797, %v8956
        %v8959 = vmul.f32 %v8802, %v8956
        %v8960 = vmul.f32 %v8805, %v8956
        %v8961 = vmul.f32 %v8810, %v8956
        %v8962 = vmul.f32 %v8813, %v8956
        %v8963 = vmul.f32 %v8818, %v8956
        %v8964 = vmul.f32 %v8821, %v8956
        %v8965 = vmul.f32 %v8826, %v8956
        %v8966 = vmul.f32 %v8829, %v8956
        %v8967 = vmul.f32 %v8834, %v8956
        %v8968 = vmul.f32 %v8837, %v8956
        %v8969 = vmul.f32 %v8842, %v8956
        %v8970 = vmul.f32 %v8845, %v8956
        %v8971 = vmul.f32 %v8850, %v8956
        %v8972 = vmul.f32 %v8853, %v8956
        %v8973 = vmul.f32 %v8858, %v8956
        %v8974 = vmul.f32 %v8861, %v8956
        %v8975 = vmul.f32 %v8866, %v8956
        %v8976 = vmul.f32 %v8869, %v8956
        %v8977 = vmul.f32 %v8874, %v8956
        %v8978 = vmul.f32 %v8877, %v8956
        %v8979 = vmul.f32 %v8882, %v8956
        %v8980 = vmul.f32 %v8885, %v8956
        %v8981 = vmul.f32 %v8890, %v8956
        %v8982 = vmul.f32 %v8893, %v8956
        %v8983 = vmul.f32 %v8898, %v8956
        %v8984 = vmul.f32 %v8901, %v8956
        %v8985 = vmul.f32 %v8906, %v8956
        %v8986 = vmul.f32 %v8909, %v8956
        %v8987 = vmul.f32 %v8914, %v8956
        %v8988 = vmul.f32 %v8917, %v8956
        %v8989 = vsel %vm8921, %v8794, %v8957
        %v8990 = vsel %vm8922, %v8797, %v8958
        %v8991 = vsel %vm8923, %v8802, %v8959
        %v8992 = vsel %vm8924, %v8805, %v8960
        %v8993 = vsel %vm8925, %v8810, %v8961
        %v8994 = vsel %vm8926, %v8813, %v8962
        %v8995 = vsel %vm8927, %v8818, %v8963
        %v8996 = vsel %vm8928, %v8821, %v8964
        %v8997 = vsel %vm8929, %v8826, %v8965
        %v8998 = vsel %vm8930, %v8829, %v8966
        %v8999 = vsel %vm8931, %v8834, %v8967
        %v9000 = vsel %vm8932, %v8837, %v8968
        %v9001 = vsel %vm8933, %v8842, %v8969
        %v9002 = vsel %vm8934, %v8845, %v8970
        %v9003 = vsel %vm8935, %v8850, %v8971
        %v9004 = vsel %vm8936, %v8853, %v8972
        %v9005 = vsel %vm8937, %v8858, %v8973
        %v9006 = vsel %vm8938, %v8861, %v8974
        %v9007 = vsel %vm8939, %v8866, %v8975
        %v9008 = vsel %vm8940, %v8869, %v8976
        %v9009 = vsel %vm8941, %v8874, %v8977
        %v9010 = vsel %vm8942, %v8877, %v8978
        %v9011 = vsel %vm8943, %v8882, %v8979
        %v9012 = vsel %vm8944, %v8885, %v8980
        %v9013 = vsel %vm8945, %v8890, %v8981
        %v9014 = vsel %vm8946, %v8893, %v8982
        %v9015 = vsel %vm8947, %v8898, %v8983
        %v9016 = vsel %vm8948, %v8901, %v8984
        %v9017 = vsel %vm8949, %v8906, %v8985
        %v9018 = vsel %vm8950, %v8909, %v8986
        %v9019 = vsel %vm8951, %v8914, %v8987
        %v9020 = vsel %vm8952, %v8917, %v8988
        %v9021 = vadd.f32 %v4957, %v8989
        %v9022 = vadd.f32 %v4958, %v8990
        %v9023 = vadd.f32 %v4959, %v8991
        %v9024 = vadd.f32 %v4960, %v8992
        %v9025 = vadd.f32 %v4961, %v8993
        %v9026 = vadd.f32 %v4962, %v8994
        %v9027 = vadd.f32 %v4963, %v8995
        %v9028 = vadd.f32 %v4964, %v8996
        %v9029 = vadd.f32 %v4965, %v8997
        %v9030 = vadd.f32 %v4966, %v8998
        %v9031 = vadd.f32 %v4967, %v8999
        %v9032 = vadd.f32 %v4968, %v9000
        %v9033 = vadd.f32 %v4969, %v9001
        %v9034 = vadd.f32 %v4970, %v9002
        %v9035 = vadd.f32 %v4971, %v9003
        %v9036 = vadd.f32 %v4972, %v9004
        %v9037 = vadd.f32 %v4973, %v9005
        %v9038 = vadd.f32 %v4974, %v9006
        %v9039 = vadd.f32 %v4975, %v9007
        %v9040 = vadd.f32 %v4976, %v9008
        %v9041 = vadd.f32 %v4977, %v9009
        %v9042 = vadd.f32 %v4978, %v9010
        %v9043 = vadd.f32 %v4979, %v9011
        %v9044 = vadd.f32 %v4980, %v9012
        %v9045 = vadd.f32 %v4981, %v9013
        %v9046 = vadd.f32 %v4982, %v9014
        %v9047 = vadd.f32 %v4983, %v9015
        %v9048 = vadd.f32 %v4984, %v9016
        %v9049 = vadd.f32 %v4985, %v9017
        %v9050 = vadd.f32 %v4986, %v9018
        %v9051 = vadd.f32 %v4987, %v9019
        %v9052 = vadd.f32 %v4988, %v9020
        %v9053 = vrot.slane %v9021, 7
        %v9054 = vrot.slane %v9022, 7
        %v9055 = vrot.slane %v9023, 7
        %v9056 = vrot.slane %v9024, 7
        %v9057 = vrot.slane %v9025, 7
        %v9058 = vrot.slane %v9026, 7
        %v9059 = vrot.slane %v9027, 7
        %v9060 = vrot.slane %v9028, 7
        %v9061 = vrot.slane %v9029, 7
        %v9062 = vrot.slane %v9030, 7
        %v9063 = vrot.slane %v9031, 7
        %v9064 = vrot.slane %v9032, 7
        %v9065 = vrot.slane %v9033, 7
        %v9066 = vrot.slane %v9034, 7
        %v9067 = vrot.slane %v9035, 7
        %v9068 = vrot.slane %v9036, 7
        %v9069 = vrot.slane %v9037, 7
        %v9070 = vrot.slane %v9038, 7
        %v9071 = vrot.slane %v9039, 7
        %v9072 = vrot.slane %v9040, 7
        %v9073 = vrot.slane %v9041, 7
        %v9074 = vrot.slane %v9042, 7
        %v9075 = vrot.slane %v9043, 7
        %v9076 = vrot.slane %v9044, 7
        %v9077 = vrot.slane %v9045, 7
        %v9078 = vrot.slane %v9046, 7
        %v9079 = vrot.slane %v9047, 7
        %v9080 = vrot.slane %v9048, 7
        %v9081 = vrot.slane %v9049, 7
        %v9082 = vrot.slane %v9050, 7
        %v9083 = vrot.slane %v9051, 7
        %v9084 = vrot.slane %v9052, 7
        %v9085 = vsel %vm828, %v9083, %v9084
        %v9086 = vsel %vm828, %v9082, %v9083
        %v9087 = vsel %vm828, %v9081, %v9082
        %v9088 = vsel %vm828, %v9080, %v9081
        %v9089 = vsel %vm828, %v9079, %v9080
        %v9090 = vsel %vm828, %v9078, %v9079
        %v9091 = vsel %vm828, %v9077, %v9078
        %v9092 = vsel %vm828, %v9076, %v9077
        %v9093 = vsel %vm828, %v9075, %v9076
        %v9094 = vsel %vm828, %v9074, %v9075
        %v9095 = vsel %vm828, %v9073, %v9074
        %v9096 = vsel %vm828, %v9072, %v9073
        %v9097 = vsel %vm828, %v9071, %v9072
        %v9098 = vsel %vm828, %v9070, %v9071
        %v9099 = vsel %vm828, %v9069, %v9070
        %v9100 = vsel %vm828, %v9068, %v9069
        %v9101 = vsel %vm828, %v9067, %v9068
        %v9102 = vsel %vm828, %v9066, %v9067
        %v9103 = vsel %vm828, %v9065, %v9066
        %v9104 = vsel %vm828, %v9064, %v9065
        %v9105 = vsel %vm828, %v9063, %v9064
        %v9106 = vsel %vm828, %v9062, %v9063
        %v9107 = vsel %vm828, %v9061, %v9062
        %v9108 = vsel %vm828, %v9060, %v9061
        %v9109 = vsel %vm828, %v9059, %v9060
        %v9110 = vsel %vm828, %v9058, %v9059
        %v9111 = vsel %vm828, %v9057, %v9058
        %v9112 = vsel %vm828, %v9056, %v9057
        %v9113 = vsel %vm828, %v9055, %v9056
        %v9114 = vsel %vm828, %v9054, %v9055
        %v9115 = vsel %vm828, %v9053, %v9054
        %v9116 = vsel %vm828, %v9084, %v9053
        %v9117 = vsel %vm861, %v9086, 0.0
        %v9118 = vsel %vm862, %v9085, 0.0
        %v9119 = vsel %vm863, %v9116, 0.0
        %v9120 = vsel %vm864, %v9115, 0.0
        %v9121 = vsel %vm865, %v9114, 0.0
        %v9122 = vsel %vm866, %v9113, 0.0
        %v9123 = vsel %vm867, %v9112, 0.0
        %v9124 = vsel %vm868, %v9111, 0.0
        %v9125 = vsel %vm869, %v9110, 0.0
        %v9126 = vsel %vm870, %v9109, 0.0
        %v9127 = vsel %vm871, %v9108, 0.0
        %v9128 = vsel %vm872, %v9107, 0.0
        %v9129 = vsel %vm873, %v9106, 0.0
        %v9130 = vsel %vm874, %v9105, 0.0
        %v9131 = vsel %vm875, %v9104, 0.0
        %v9132 = vsel %vm876, %v9103, 0.0
        %v9133 = vsel %vm877, %v9102, 0.0
        %v9134 = vsel %vm878, %v9101, 0.0
        %v9135 = vsel %vm879, %v9100, 0.0
        %v9136 = vsel %vm880, %v9099, 0.0
        %v9137 = vsel %vm881, %v9098, 0.0
        %v9138 = vsel %vm882, %v9097, 0.0
        %v9139 = vsel %vm883, %v9096, 0.0
        %v9140 = vsel %vm884, %v9095, 0.0
        %v9141 = vsel %vm885, %v9094, 0.0
        %v9142 = vsel %vm886, %v9093, 0.0
        %v9143 = vsel %vm887, %v9092, 0.0
        %v9144 = vsel %vm888, %v9091, 0.0
        %v9145 = vsel %vm889, %v9090, 0.0
        %v9146 = vsel %vm890, %v9089, 0.0
        %v9147 = vsel %vm891, %v9088, 0.0
        %v9148 = vsel %vm892, %v9087, 0.0
        %v9149 = vpack.c.bf16 %v9118, %v9117
        %v9150 = vpack.c.bf16 %v9120, %v9119
        %v9151 = vpack.c.bf16 %v9122, %v9121
        %v9152 = vpack.c.bf16 %v9124, %v9123
        %v9153 = vpack.c.bf16 %v9126, %v9125
        %v9154 = vpack.c.bf16 %v9128, %v9127
        %v9155 = vpack.c.bf16 %v9130, %v9129
        %v9156 = vpack.c.bf16 %v9132, %v9131
        %v9157 = vpack.c.bf16 %v9134, %v9133
        %v9158 = vpack.c.bf16 %v9136, %v9135
        %v9159 = vpack.c.bf16 %v9138, %v9137
        %v9160 = vpack.c.bf16 %v9140, %v9139
        %v9161 = vpack.c.bf16 %v9142, %v9141
        %v9162 = vpack.c.bf16 %v9144, %v9143
        %v9163 = vpack.c.bf16 %v9146, %v9145
        %v9164 = vpack.c.bf16 %v9148, %v9147
        %v9165 = vsel %vm289, %v9051, 0.0
        %v9166 = vsel %vm290, %v9052, 0.0
        %v9167 = vsel %vm291, %v9021, 0.0
        %v9168 = vsel %vm292, %v9022, 0.0
        %v9169 = vsel %vm293, %v9023, 0.0
        %v9170 = vsel %vm294, %v9024, 0.0
        %v9171 = vsel %vm295, %v9025, 0.0
        %v9172 = vsel %vm296, %v9026, 0.0
        %v9173 = vsel %vm297, %v9027, 0.0
        %v9174 = vsel %vm298, %v9028, 0.0
        %v9175 = vsel %vm299, %v9029, 0.0
        %v9176 = vsel %vm300, %v9030, 0.0
        %v9177 = vsel %vm301, %v9031, 0.0
        %v9178 = vsel %vm302, %v9032, 0.0
        %v9179 = vsel %vm303, %v9033, 0.0
        %v9180 = vsel %vm304, %v9034, 0.0
        %v9181 = vsel %vm305, %v9035, 0.0
        %v9182 = vsel %vm306, %v9036, 0.0
        %v9183 = vsel %vm307, %v9037, 0.0
        %v9184 = vsel %vm308, %v9038, 0.0
        %v9185 = vsel %vm309, %v9039, 0.0
        %v9186 = vsel %vm310, %v9040, 0.0
        %v9187 = vsel %vm311, %v9041, 0.0
        %v9188 = vsel %vm312, %v9042, 0.0
        %v9189 = vsel %vm313, %v9043, 0.0
        %v9190 = vsel %vm314, %v9044, 0.0
        %v9191 = vsel %vm315, %v9045, 0.0
        %v9192 = vsel %vm316, %v9046, 0.0
        %v9193 = vsel %vm317, %v9047, 0.0
        %v9194 = vsel %vm318, %v9048, 0.0
        %v9195 = vsel %vm319, %v9049, 0.0
        %v9196 = vsel %vm320, %v9050, 0.0
        %v9197 = vpack.c.bf16 %v9166, %v9165
        %v9198 = vpack.c.bf16 %v9168, %v9167
        %v9199 = vpack.c.bf16 %v9170, %v9169
        %v9200 = vpack.c.bf16 %v9172, %v9171
        %v9201 = vpack.c.bf16 %v9174, %v9173
        %v9202 = vpack.c.bf16 %v9176, %v9175
        %v9203 = vpack.c.bf16 %v9178, %v9177
        %v9204 = vpack.c.bf16 %v9180, %v9179
        %v9205 = vpack.c.bf16 %v9182, %v9181
        %v9206 = vpack.c.bf16 %v9184, %v9183
        %v9207 = vpack.c.bf16 %v9186, %v9185
        %v9208 = vpack.c.bf16 %v9188, %v9187
        %v9209 = vpack.c.bf16 %v9190, %v9189
        %v9210 = vpack.c.bf16 %v9192, %v9191
        %v9211 = vpack.c.bf16 %v9194, %v9193
        %v9212 = vpack.c.bf16 %v9196, %v9195
        %v9213 = vrot.slane %v9021, 1
        %v9214 = vrot.slane %v9022, 1
        %v9215 = vrot.slane %v9023, 1
        %v9216 = vrot.slane %v9024, 1
        %v9217 = vrot.slane %v9025, 1
        %v9218 = vrot.slane %v9026, 1
        %v9219 = vrot.slane %v9027, 1
        %v9220 = vrot.slane %v9028, 1
        %v9221 = vrot.slane %v9029, 1
        %v9222 = vrot.slane %v9030, 1
        %v9223 = vrot.slane %v9031, 1
        %v9224 = vrot.slane %v9032, 1
        %v9225 = vrot.slane %v9033, 1
        %v9226 = vrot.slane %v9034, 1
        %v9227 = vrot.slane %v9035, 1
        %v9228 = vrot.slane %v9036, 1
        %v9229 = vrot.slane %v9037, 1
        %v9230 = vrot.slane %v9038, 1
        %v9231 = vrot.slane %v9039, 1
        %v9232 = vrot.slane %v9040, 1
        %v9233 = vrot.slane %v9041, 1
        %v9234 = vrot.slane %v9042, 1
        %v9235 = vrot.slane %v9043, 1
        %v9236 = vrot.slane %v9044, 1
        %v9237 = vrot.slane %v9045, 1
        %v9238 = vrot.slane %v9046, 1
        %v9239 = vrot.slane %v9047, 1
        %v9240 = vrot.slane %v9048, 1
        %v9241 = vrot.slane %v9049, 1
        %v9242 = vrot.slane %v9050, 1
        %v9243 = vrot.slane %v9051, 1
        %v9244 = vrot.slane %v9052, 1
        %v9245 = vsel %vm1021, %v9243, %v9244
        %v9246 = vsel %vm1021, %v9242, %v9243
        %v9247 = vsel %vm1021, %v9241, %v9242
        %v9248 = vsel %vm1021, %v9240, %v9241
        %v9249 = vsel %vm1021, %v9239, %v9240
        %v9250 = vsel %vm1021, %v9238, %v9239
        %v9251 = vsel %vm1021, %v9237, %v9238
        %v9252 = vsel %vm1021, %v9236, %v9237
        %v9253 = vsel %vm1021, %v9235, %v9236
        %v9254 = vsel %vm1021, %v9234, %v9235
        %v9255 = vsel %vm1021, %v9233, %v9234
        %v9256 = vsel %vm1021, %v9232, %v9233
        %v9257 = vsel %vm1021, %v9231, %v9232
        %v9258 = vsel %vm1021, %v9230, %v9231
        %v9259 = vsel %vm1021, %v9229, %v9230
        %v9260 = vsel %vm1021, %v9228, %v9229
        %v9261 = vsel %vm1021, %v9227, %v9228
        %v9262 = vsel %vm1021, %v9226, %v9227
        %v9263 = vsel %vm1021, %v9225, %v9226
        %v9264 = vsel %vm1021, %v9224, %v9225
        %v9265 = vsel %vm1021, %v9223, %v9224
        %v9266 = vsel %vm1021, %v9222, %v9223
        %v9267 = vsel %vm1021, %v9221, %v9222
        %v9268 = vsel %vm1021, %v9220, %v9221
        %v9269 = vsel %vm1021, %v9219, %v9220
        %v9270 = vsel %vm1021, %v9218, %v9219
        %v9271 = vsel %vm1021, %v9217, %v9218
        %v9272 = vsel %vm1021, %v9216, %v9217
        %v9273 = vsel %vm1021, %v9215, %v9216
        %v9274 = vsel %vm1021, %v9214, %v9215
        %v9275 = vsel %vm1021, %v9213, %v9214
        %v9276 = vsel %vm1021, %v9244, %v9213
        %v9277 = vsel %vm1054, %v9245, 0.0
        %v9278 = vsel %vm1055, %v9276, 0.0
        %v9279 = vsel %vm1056, %v9275, 0.0
        %v9280 = vsel %vm1057, %v9274, 0.0
        %v9281 = vsel %vm1058, %v9273, 0.0
        %v9282 = vsel %vm1059, %v9272, 0.0
        %v9283 = vsel %vm1060, %v9271, 0.0
        %v9284 = vsel %vm1061, %v9270, 0.0
        %v9285 = vsel %vm1062, %v9269, 0.0
        %v9286 = vsel %vm1063, %v9268, 0.0
        %v9287 = vsel %vm1064, %v9267, 0.0
        %v9288 = vsel %vm1065, %v9266, 0.0
        %v9289 = vsel %vm1066, %v9265, 0.0
        %v9290 = vsel %vm1067, %v9264, 0.0
        %v9291 = vsel %vm1068, %v9263, 0.0
        %v9292 = vsel %vm1069, %v9262, 0.0
        %v9293 = vsel %vm1070, %v9261, 0.0
        %v9294 = vsel %vm1071, %v9260, 0.0
        %v9295 = vsel %vm1072, %v9259, 0.0
        %v9296 = vsel %vm1073, %v9258, 0.0
        %v9297 = vsel %vm1074, %v9257, 0.0
        %v9298 = vsel %vm1075, %v9256, 0.0
        %v9299 = vsel %vm1076, %v9255, 0.0
        %v9300 = vsel %vm1077, %v9254, 0.0
        %v9301 = vsel %vm1078, %v9253, 0.0
        %v9302 = vsel %vm1079, %v9252, 0.0
        %v9303 = vsel %vm1080, %v9251, 0.0
        %v9304 = vsel %vm1081, %v9250, 0.0
        %v9305 = vsel %vm1082, %v9249, 0.0
        %v9306 = vsel %vm1083, %v9248, 0.0
        %v9307 = vsel %vm1084, %v9247, 0.0
        %v9308 = vsel %vm1085, %v9246, 0.0
        %v9309 = vpack.c.bf16 %v9278, %v9277
        %v9310 = vpack.c.bf16 %v9280, %v9279
        %v9311 = vpack.c.bf16 %v9282, %v9281
        %v9312 = vpack.c.bf16 %v9284, %v9283
        %v9313 = vpack.c.bf16 %v9286, %v9285
        %v9314 = vpack.c.bf16 %v9288, %v9287
        %v9315 = vpack.c.bf16 %v9290, %v9289
        %v9316 = vpack.c.bf16 %v9292, %v9291
        %v9317 = vpack.c.bf16 %v9294, %v9293
        %v9318 = vpack.c.bf16 %v9296, %v9295
        %v9319 = vpack.c.bf16 %v9298, %v9297
        %v9320 = vpack.c.bf16 %v9300, %v9299
        %v9321 = vpack.c.bf16 %v9302, %v9301
        %v9322 = vpack.c.bf16 %v9304, %v9303
        %v9323 = vpack.c.bf16 %v9306, %v9305
        %v9324 = vpack.c.bf16 %v9308, %v9307
        %v9325 = vsel %vm353, %v9116, 0.0
        %v9326 = vsel %vm354, %v9115, 0.0
        %v9327 = vsel %vm355, %v9114, 0.0
        %v9328 = vsel %vm356, %v9113, 0.0
        %v9329 = vsel %vm357, %v9112, 0.0
        %v9330 = vsel %vm358, %v9111, 0.0
        %v9331 = vsel %vm359, %v9110, 0.0
        %v9332 = vsel %vm360, %v9109, 0.0
        %v9333 = vsel %vm361, %v9108, 0.0
        %v9334 = vsel %vm362, %v9107, 0.0
        %v9335 = vsel %vm363, %v9106, 0.0
        %v9336 = vsel %vm364, %v9105, 0.0
        %v9337 = vsel %vm365, %v9104, 0.0
        %v9338 = vsel %vm366, %v9103, 0.0
        %v9339 = vsel %vm367, %v9102, 0.0
        %v9340 = vsel %vm368, %v9101, 0.0
        %v9341 = vsel %vm369, %v9100, 0.0
        %v9342 = vsel %vm370, %v9099, 0.0
        %v9343 = vsel %vm371, %v9098, 0.0
        %v9344 = vsel %vm372, %v9097, 0.0
        %v9345 = vsel %vm373, %v9096, 0.0
        %v9346 = vsel %vm374, %v9095, 0.0
        %v9347 = vsel %vm375, %v9094, 0.0
        %v9348 = vsel %vm376, %v9093, 0.0
        %v9349 = vsel %vm377, %v9092, 0.0
        %v9350 = vsel %vm378, %v9091, 0.0
        %v9351 = vsel %vm379, %v9090, 0.0
        %v9352 = vsel %vm380, %v9089, 0.0
        %v9353 = vsel %vm381, %v9088, 0.0
        %v9354 = vsel %vm382, %v9087, 0.0
        %v9355 = vsel %vm383, %v9086, 0.0
        %v9356 = vsel %vm384, %v9085, 0.0
        %v9357 = vpack.c.bf16 %v9326, %v9325
        %v9358 = vpack.c.bf16 %v9328, %v9327
        %v9359 = vpack.c.bf16 %v9330, %v9329
        %v9360 = vpack.c.bf16 %v9332, %v9331
        %v9361 = vpack.c.bf16 %v9334, %v9333
        %v9362 = vpack.c.bf16 %v9336, %v9335
        %v9363 = vpack.c.bf16 %v9338, %v9337
        %v9364 = vpack.c.bf16 %v9340, %v9339
        %v9365 = vpack.c.bf16 %v9342, %v9341
        %v9366 = vpack.c.bf16 %v9344, %v9343
        %v9367 = vpack.c.bf16 %v9346, %v9345
        %v9368 = vpack.c.bf16 %v9348, %v9347
        %v9369 = vpack.c.bf16 %v9350, %v9349
        %v9370 = vpack.c.bf16 %v9352, %v9351
        %v9371 = vpack.c.bf16 %v9354, %v9353
        %v9372 = vpack.c.bf16 %v9356, %v9355
        %v9373 = vpack.c.bf16 %v9022, %v9021
        %v9374 = vpack.c.bf16 %v9024, %v9023
        %v9375 = vpack.c.bf16 %v9026, %v9025
        %v9376 = vpack.c.bf16 %v9028, %v9027
        %v9377 = vpack.c.bf16 %v9030, %v9029
        %v9378 = vpack.c.bf16 %v9032, %v9031
        %v9379 = vpack.c.bf16 %v9034, %v9033
        %v9380 = vpack.c.bf16 %v9036, %v9035
        %v9381 = vpack.c.bf16 %v9038, %v9037
        %v9382 = vpack.c.bf16 %v9040, %v9039
        %v9383 = vpack.c.bf16 %v9042, %v9041
        %v9384 = vpack.c.bf16 %v9044, %v9043
        %v9385 = vpack.c.bf16 %v9046, %v9045
        %v9386 = vpack.c.bf16 %v9048, %v9047
        %v9387 = vpack.c.bf16 %v9050, %v9049
        %v9388 = vpack.c.bf16 %v9052, %v9051
        %v9389 = vsel %vm385, %v9275, 0.0
        %v9390 = vsel %vm386, %v9274, 0.0
        %v9391 = vsel %vm387, %v9273, 0.0
        %v9392 = vsel %vm388, %v9272, 0.0
        %v9393 = vsel %vm389, %v9271, 0.0
        %v9394 = vsel %vm390, %v9270, 0.0
        %v9395 = vsel %vm391, %v9269, 0.0
        %v9396 = vsel %vm392, %v9268, 0.0
        %v9397 = vsel %vm393, %v9267, 0.0
        %v9398 = vsel %vm394, %v9266, 0.0
        %v9399 = vsel %vm395, %v9265, 0.0
        %v9400 = vsel %vm396, %v9264, 0.0
        %v9401 = vsel %vm397, %v9263, 0.0
        %v9402 = vsel %vm398, %v9262, 0.0
        %v9403 = vsel %vm399, %v9261, 0.0
        %v9404 = vsel %vm400, %v9260, 0.0
        %v9405 = vsel %vm401, %v9259, 0.0
        %v9406 = vsel %vm402, %v9258, 0.0
        %v9407 = vsel %vm403, %v9257, 0.0
        %v9408 = vsel %vm404, %v9256, 0.0
        %v9409 = vsel %vm405, %v9255, 0.0
        %v9410 = vsel %vm406, %v9254, 0.0
        %v9411 = vsel %vm407, %v9253, 0.0
        %v9412 = vsel %vm408, %v9252, 0.0
        %v9413 = vsel %vm409, %v9251, 0.0
        %v9414 = vsel %vm410, %v9250, 0.0
        %v9415 = vsel %vm411, %v9249, 0.0
        %v9416 = vsel %vm412, %v9248, 0.0
        %v9417 = vsel %vm413, %v9247, 0.0
        %v9418 = vsel %vm414, %v9246, 0.0
        %v9419 = vsel %vm415, %v9245, 0.0
        %v9420 = vsel %vm416, %v9276, 0.0
        %v9421 = vpack.c.bf16 %v9390, %v9389
        %v9422 = vpack.c.bf16 %v9392, %v9391
        %v9423 = vpack.c.bf16 %v9394, %v9393
        %v9424 = vpack.c.bf16 %v9396, %v9395
        %v9425 = vpack.c.bf16 %v9398, %v9397
        %v9426 = vpack.c.bf16 %v9400, %v9399
        %v9427 = vpack.c.bf16 %v9402, %v9401
        %v9428 = vpack.c.bf16 %v9404, %v9403
        %v9429 = vpack.c.bf16 %v9406, %v9405
        %v9430 = vpack.c.bf16 %v9408, %v9407
        %v9431 = vpack.c.bf16 %v9410, %v9409
        %v9432 = vpack.c.bf16 %v9412, %v9411
        %v9433 = vpack.c.bf16 %v9414, %v9413
        %v9434 = vpack.c.bf16 %v9416, %v9415
        %v9435 = vpack.c.bf16 %v9418, %v9417
        %v9436 = vpack.c.bf16 %v9420, %v9419
        %v9437 = vsel %vm1246, %v9114, 0.0
        %v9438 = vsel %vm1247, %v9113, 0.0
        %v9439 = vsel %vm1248, %v9112, 0.0
        %v9440 = vsel %vm1249, %v9111, 0.0
        %v9441 = vsel %vm1250, %v9110, 0.0
        %v9442 = vsel %vm1251, %v9109, 0.0
        %v9443 = vsel %vm1252, %v9108, 0.0
        %v9444 = vsel %vm1253, %v9107, 0.0
        %v9445 = vsel %vm1254, %v9106, 0.0
        %v9446 = vsel %vm1255, %v9105, 0.0
        %v9447 = vsel %vm1256, %v9104, 0.0
        %v9448 = vsel %vm1257, %v9103, 0.0
        %v9449 = vsel %vm1258, %v9102, 0.0
        %v9450 = vsel %vm1259, %v9101, 0.0
        %v9451 = vsel %vm1260, %v9100, 0.0
        %v9452 = vsel %vm1261, %v9099, 0.0
        %v9453 = vsel %vm1262, %v9098, 0.0
        %v9454 = vsel %vm1263, %v9097, 0.0
        %v9455 = vsel %vm1264, %v9096, 0.0
        %v9456 = vsel %vm1265, %v9095, 0.0
        %v9457 = vsel %vm1266, %v9094, 0.0
        %v9458 = vsel %vm1267, %v9093, 0.0
        %v9459 = vsel %vm1268, %v9092, 0.0
        %v9460 = vsel %vm1269, %v9091, 0.0
        %v9461 = vsel %vm1270, %v9090, 0.0
        %v9462 = vsel %vm1271, %v9089, 0.0
        %v9463 = vsel %vm1272, %v9088, 0.0
        %v9464 = vsel %vm1273, %v9087, 0.0
        %v9465 = vsel %vm1274, %v9086, 0.0
        %v9466 = vsel %vm1275, %v9085, 0.0
        %v9467 = vsel %vm1276, %v9116, 0.0
        %v9468 = vsel %vm1277, %v9115, 0.0
        %v9469 = vpack.c.bf16 %v9438, %v9437
        %v9470 = vpack.c.bf16 %v9440, %v9439
        %v9471 = vpack.c.bf16 %v9442, %v9441
        %v9472 = vpack.c.bf16 %v9444, %v9443
        %v9473 = vpack.c.bf16 %v9446, %v9445
        %v9474 = vpack.c.bf16 %v9448, %v9447
        %v9475 = vpack.c.bf16 %v9450, %v9449
        %v9476 = vpack.c.bf16 %v9452, %v9451
        %v9477 = vpack.c.bf16 %v9454, %v9453
        %v9478 = vpack.c.bf16 %v9456, %v9455
        %v9479 = vpack.c.bf16 %v9458, %v9457
        %v9480 = vpack.c.bf16 %v9460, %v9459
        %v9481 = vpack.c.bf16 %v9462, %v9461
        %v9482 = vpack.c.bf16 %v9464, %v9463
        %v9483 = vpack.c.bf16 %v9466, %v9465
        %v9484 = vpack.c.bf16 %v9468, %v9467
        %v9485 = vsel %vm321, %v9023, 0.0
        %v9486 = vsel %vm322, %v9024, 0.0
        %v9487 = vsel %vm323, %v9025, 0.0
        %v9488 = vsel %vm324, %v9026, 0.0
        %v9489 = vsel %vm325, %v9027, 0.0
        %v9490 = vsel %vm326, %v9028, 0.0
        %v9491 = vsel %vm327, %v9029, 0.0
        %v9492 = vsel %vm328, %v9030, 0.0
        %v9493 = vsel %vm329, %v9031, 0.0
        %v9494 = vsel %vm330, %v9032, 0.0
        %v9495 = vsel %vm331, %v9033, 0.0
        %v9496 = vsel %vm332, %v9034, 0.0
        %v9497 = vsel %vm333, %v9035, 0.0
        %v9498 = vsel %vm334, %v9036, 0.0
        %v9499 = vsel %vm335, %v9037, 0.0
        %v9500 = vsel %vm336, %v9038, 0.0
        %v9501 = vsel %vm337, %v9039, 0.0
        %v9502 = vsel %vm338, %v9040, 0.0
        %v9503 = vsel %vm339, %v9041, 0.0
        %v9504 = vsel %vm340, %v9042, 0.0
        %v9505 = vsel %vm341, %v9043, 0.0
        %v9506 = vsel %vm342, %v9044, 0.0
        %v9507 = vsel %vm343, %v9045, 0.0
        %v9508 = vsel %vm344, %v9046, 0.0
        %v9509 = vsel %vm345, %v9047, 0.0
        %v9510 = vsel %vm346, %v9048, 0.0
        %v9511 = vsel %vm347, %v9049, 0.0
        %v9512 = vsel %vm348, %v9050, 0.0
        %v9513 = vsel %vm349, %v9051, 0.0
        %v9514 = vsel %vm350, %v9052, 0.0
        %v9515 = vsel %vm351, %v9021, 0.0
        %v9516 = vsel %vm352, %v9022, 0.0
        %v9517 = vpack.c.bf16 %v9486, %v9485
        %v9518 = vpack.c.bf16 %v9488, %v9487
        %v9519 = vpack.c.bf16 %v9490, %v9489
        %v9520 = vpack.c.bf16 %v9492, %v9491
        %v9521 = vpack.c.bf16 %v9494, %v9493
        %v9522 = vpack.c.bf16 %v9496, %v9495
        %v9523 = vpack.c.bf16 %v9498, %v9497
        %v9524 = vpack.c.bf16 %v9500, %v9499
        %v9525 = vpack.c.bf16 %v9502, %v9501
        %v9526 = vpack.c.bf16 %v9504, %v9503
        %v9527 = vpack.c.bf16 %v9506, %v9505
        %v9528 = vpack.c.bf16 %v9508, %v9507
        %v9529 = vpack.c.bf16 %v9510, %v9509
        %v9530 = vpack.c.bf16 %v9512, %v9511
        %v9531 = vpack.c.bf16 %v9514, %v9513
        %v9532 = vpack.c.bf16 %v9516, %v9515
        %v9533 = vsel %vm1374, %v9273, 0.0
        %v9534 = vsel %vm1375, %v9272, 0.0
        %v9535 = vsel %vm1376, %v9271, 0.0
        %v9536 = vsel %vm1377, %v9270, 0.0
        %v9537 = vsel %vm1378, %v9269, 0.0
        %v9538 = vsel %vm1379, %v9268, 0.0
        %v9539 = vsel %vm1380, %v9267, 0.0
        %v9540 = vsel %vm1381, %v9266, 0.0
        %v9541 = vsel %vm1382, %v9265, 0.0
        %v9542 = vsel %vm1383, %v9264, 0.0
        %v9543 = vsel %vm1384, %v9263, 0.0
        %v9544 = vsel %vm1385, %v9262, 0.0
        %v9545 = vsel %vm1386, %v9261, 0.0
        %v9546 = vsel %vm1387, %v9260, 0.0
        %v9547 = vsel %vm1388, %v9259, 0.0
        %v9548 = vsel %vm1389, %v9258, 0.0
        %v9549 = vsel %vm1390, %v9257, 0.0
        %v9550 = vsel %vm1391, %v9256, 0.0
        %v9551 = vsel %vm1392, %v9255, 0.0
        %v9552 = vsel %vm1393, %v9254, 0.0
        %v9553 = vsel %vm1394, %v9253, 0.0
        %v9554 = vsel %vm1395, %v9252, 0.0
        %v9555 = vsel %vm1396, %v9251, 0.0
        %v9556 = vsel %vm1397, %v9250, 0.0
        %v9557 = vsel %vm1398, %v9249, 0.0
        %v9558 = vsel %vm1399, %v9248, 0.0
        %v9559 = vsel %vm1400, %v9247, 0.0
        %v9560 = vsel %vm1401, %v9246, 0.0
        %v9561 = vsel %vm1402, %v9245, 0.0
        %v9562 = vsel %vm1403, %v9276, 0.0
        %v9563 = vsel %vm1404, %v9275, 0.0
        %v9564 = vsel %vm1405, %v9274, 0.0
        %v9565 = vpack.c.bf16 %v9534, %v9533
        %v9566 = vpack.c.bf16 %v9536, %v9535
        %v9567 = vpack.c.bf16 %v9538, %v9537
        %v9568 = vpack.c.bf16 %v9540, %v9539
        %v9569 = vpack.c.bf16 %v9542, %v9541
        %v9570 = vpack.c.bf16 %v9544, %v9543
        %v9571 = vpack.c.bf16 %v9546, %v9545
        %v9572 = vpack.c.bf16 %v9548, %v9547
        %v9573 = vpack.c.bf16 %v9550, %v9549
        %v9574 = vpack.c.bf16 %v9552, %v9551
        %v9575 = vpack.c.bf16 %v9554, %v9553
        %v9576 = vpack.c.bf16 %v9556, %v9555
        %v9577 = vpack.c.bf16 %v9558, %v9557
        %v9578 = vpack.c.bf16 %v9560, %v9559
        %v9579 = vpack.c.bf16 %v9562, %v9561
        %v9580 = vpack.c.bf16 %v9564, %v9563
        %s9581 = scalar_lea.vmem %s2, 2304
        %v9582 = vld [vmem:[%s9581] sm:$0xf]
        %v9583 = vld [vmem:[%s9581 + $0x4] sm:$0xf]
        %v9584 = vld [vmem:[%s9581 + $0x8] sm:$0xf]
        %v9585 = vld [vmem:[%s9581 + $0xc] sm:$0xf]
        %v9586 = vld [vmem:[%s9581 + $0x10] sm:$0xf]
        %v9587 = vld [vmem:[%s9581 + $0x14] sm:$0xf]
        %v9588 = vld [vmem:[%s9581 + $0x18] sm:$0xf]
        %v9589 = vld [vmem:[%s9581 + $0x1c] sm:$0xf]
        %v9590 = vld [vmem:[%s9581 + $0x20] sm:$0xf]
        %v9591 = vld [vmem:[%s9581 + $0x24] sm:$0xf]
        %v9592 = vld [vmem:[%s9581 + $0x28] sm:$0xf]
        %v9593 = vld [vmem:[%s9581 + $0x2c] sm:$0xf]
        %v9594 = vld [vmem:[%s9581 + $0x30] sm:$0xf]
        %v9595 = vld [vmem:[%s9581 + $0x34] sm:$0xf]
        %v9596 = vld [vmem:[%s9581 + $0x38] sm:$0xf]
        %v9597 = vld [vmem:[%s9581 + $0x3c] sm:$0xf]
        %v9598 = vld [vmem:[%s9581 + $0x40] sm:$0xf]
        %v9599 = vld [vmem:[%s9581 + $0x44] sm:$0xf]
        %v9600 = vld [vmem:[%s9581 + $0x48] sm:$0xf]
        %v9601 = vld [vmem:[%s9581 + $0x4c] sm:$0xf]
        %v9602 = vld [vmem:[%s9581 + $0x50] sm:$0xf]
        %v9603 = vld [vmem:[%s9581 + $0x54] sm:$0xf]
        %v9604 = vld [vmem:[%s9581 + $0x58] sm:$0xf]
        %v9605 = vld [vmem:[%s9581 + $0x5c] sm:$0xf]
        %v9606 = vld [vmem:[%s9581 + $0x60] sm:$0xf]
        %v9607 = vld [vmem:[%s9581 + $0x64] sm:$0xf]
        %v9608 = vld [vmem:[%s9581 + $0x68] sm:$0xf]
        %v9609 = vld [vmem:[%s9581 + $0x6c] sm:$0xf]
        %v9610 = vld [vmem:[%s9581 + $0x70] sm:$0xf]
        %v9611 = vld [vmem:[%s9581 + $0x74] sm:$0xf]
        %v9612 = vld [vmem:[%s9581 + $0x78] sm:$0xf]
        %v9613 = vld [vmem:[%s9581 + $0x7c] sm:$0xf]
        %v9614 = vld [vmem:[%s9581 + $0x80] sm:$0xf]
        %v9615 = vld [vmem:[%s9581 + $0x84] sm:$0xf]
        %v9616 = vld [vmem:[%s9581 + $0x88] sm:$0xf]
        %v9617 = vld [vmem:[%s9581 + $0x8c] sm:$0xf]
        %v9618 = vld [vmem:[%s9581 + $0x90] sm:$0xf]
        %v9619 = vld [vmem:[%s9581 + $0x94] sm:$0xf]
        %v9620 = vld [vmem:[%s9581 + $0x98] sm:$0xf]
        %v9621 = vld [vmem:[%s9581 + $0x9c] sm:$0xf]
        %v9622 = vld [vmem:[%s9581 + $0xa0] sm:$0xf]
        %v9623 = vld [vmem:[%s9581 + $0xa4] sm:$0xf]
        %v9624 = vld [vmem:[%s9581 + $0xa8] sm:$0xf]
        %v9625 = vld [vmem:[%s9581 + $0xac] sm:$0xf]
        %v9626 = vld [vmem:[%s9581 + $0xb0] sm:$0xf]
        %v9627 = vld [vmem:[%s9581 + $0xb4] sm:$0xf]
        %v9628 = vld [vmem:[%s9581 + $0xb8] sm:$0xf]
        %v9629 = vld [vmem:[%s9581 + $0xbc] sm:$0xf]
        %v9630 = vld [vmem:[%s9581 + $0xc0] sm:$0xf]
        %v9631 = vld [vmem:[%s9581 + $0xc4] sm:$0xf]
        %v9632 = vld [vmem:[%s9581 + $0xc8] sm:$0xf]
        %v9633 = vld [vmem:[%s9581 + $0xcc] sm:$0xf]
        %v9634 = vld [vmem:[%s9581 + $0xd0] sm:$0xf]
        %v9635 = vld [vmem:[%s9581 + $0xd4] sm:$0xf]
        %v9636 = vld [vmem:[%s9581 + $0xd8] sm:$0xf]
        %v9637 = vld [vmem:[%s9581 + $0xdc] sm:$0xf]
        %v9638 = vld [vmem:[%s9581 + $0xe0] sm:$0xf]
        %v9639 = vld [vmem:[%s9581 + $0xe4] sm:$0xf]
        %v9640 = vld [vmem:[%s9581 + $0xe8] sm:$0xf]
        %v9641 = vld [vmem:[%s9581 + $0xec] sm:$0xf]
        %v9642 = vld [vmem:[%s9581 + $0xf0] sm:$0xf]
        %v9643 = vld [vmem:[%s9581 + $0xf4] sm:$0xf]
        %v9644 = vld [vmem:[%s9581 + $0xf8] sm:$0xf]
        %v9645 = vld [vmem:[%s9581 + $0xfc] sm:$0xf]
        %v9646 = vld [vmem:[%s9581 + $0x100] sm:$0xf]
        %v9647 = vld [vmem:[%s9581 + $0x104] sm:$0xf]
        %v9648 = vld [vmem:[%s9581 + $0x108] sm:$0xf]
        %v9649 = vld [vmem:[%s9581 + $0x10c] sm:$0xf]
        %v9650 = vld [vmem:[%s9581 + $0x110] sm:$0xf]
        %v9651 = vld [vmem:[%s9581 + $0x114] sm:$0xf]
        %v9652 = vld [vmem:[%s9581 + $0x118] sm:$0xf]
        %v9653 = vld [vmem:[%s9581 + $0x11c] sm:$0xf]
        %v9654 = vld [vmem:[%s9581 + $0x120] sm:$0xf]
        %v9655 = vld [vmem:[%s9581 + $0x124] sm:$0xf]
        %v9656 = vld [vmem:[%s9581 + $0x128] sm:$0xf]
        %v9657 = vld [vmem:[%s9581 + $0x12c] sm:$0xf]
        %v9658 = vld [vmem:[%s9581 + $0x130] sm:$0xf]
        %v9659 = vld [vmem:[%s9581 + $0x134] sm:$0xf]
        %v9660 = vld [vmem:[%s9581 + $0x138] sm:$0xf]
        %v9661 = vld [vmem:[%s9581 + $0x13c] sm:$0xf]
        %v9662 = vld [vmem:[%s9581 + $0x140] sm:$0xf]
        %v9663 = vld [vmem:[%s9581 + $0x144] sm:$0xf]
        %v9664 = vld [vmem:[%s9581 + $0x148] sm:$0xf]
        %v9665 = vld [vmem:[%s9581 + $0x14c] sm:$0xf]
        %v9666 = vld [vmem:[%s9581 + $0x150] sm:$0xf]
        %v9667 = vld [vmem:[%s9581 + $0x154] sm:$0xf]
        %v9668 = vld [vmem:[%s9581 + $0x158] sm:$0xf]
        %v9669 = vld [vmem:[%s9581 + $0x15c] sm:$0xf]
        %v9670 = vld [vmem:[%s9581 + $0x160] sm:$0xf]
        %v9671 = vld [vmem:[%s9581 + $0x164] sm:$0xf]
        %v9672 = vld [vmem:[%s9581 + $0x168] sm:$0xf]
        %v9673 = vld [vmem:[%s9581 + $0x16c] sm:$0xf]
        %v9674 = vld [vmem:[%s9581 + $0x170] sm:$0xf]
        %v9675 = vld [vmem:[%s9581 + $0x174] sm:$0xf]
        %v9676 = vld [vmem:[%s9581 + $0x178] sm:$0xf]
        %v9677 = vld [vmem:[%s9581 + $0x17c] sm:$0xf]
        %v9678 = vld [vmem:[%s9581 + $0x180] sm:$0xf]
        %v9679 = vld [vmem:[%s9581 + $0x184] sm:$0xf]
        %v9680 = vld [vmem:[%s9581 + $0x188] sm:$0xf]
        %v9681 = vld [vmem:[%s9581 + $0x18c] sm:$0xf]
        %v9682 = vld [vmem:[%s9581 + $0x190] sm:$0xf]
        %v9683 = vld [vmem:[%s9581 + $0x194] sm:$0xf]
        %v9684 = vld [vmem:[%s9581 + $0x198] sm:$0xf]
        %v9685 = vld [vmem:[%s9581 + $0x19c] sm:$0xf]
        %v9686 = vld [vmem:[%s9581 + $0x1a0] sm:$0xf]
        %v9687 = vld [vmem:[%s9581 + $0x1a4] sm:$0xf]
        %v9688 = vld [vmem:[%s9581 + $0x1a8] sm:$0xf]
        %v9689 = vld [vmem:[%s9581 + $0x1ac] sm:$0xf]
        %v9690 = vld [vmem:[%s9581 + $0x1b0] sm:$0xf]
        %v9691 = vld [vmem:[%s9581 + $0x1b4] sm:$0xf]
        %v9692 = vld [vmem:[%s9581 + $0x1b8] sm:$0xf]
        %v9693 = vld [vmem:[%s9581 + $0x1bc] sm:$0xf]
        %v9694 = vld [vmem:[%s9581 + $0x1c0] sm:$0xf]
        %v9695 = vld [vmem:[%s9581 + $0x1c4] sm:$0xf]
        %v9696 = vld [vmem:[%s9581 + $0x1c8] sm:$0xf]
        %v9697 = vld [vmem:[%s9581 + $0x1cc] sm:$0xf]
        %v9698 = vld [vmem:[%s9581 + $0x1d0] sm:$0xf]
        %v9699 = vld [vmem:[%s9581 + $0x1d4] sm:$0xf]
        %v9700 = vld [vmem:[%s9581 + $0x1d8] sm:$0xf]
        %v9701 = vld [vmem:[%s9581 + $0x1dc] sm:$0xf]
        %v9702 = vld [vmem:[%s9581 + $0x1e0] sm:$0xf]
        %v9703 = vld [vmem:[%s9581 + $0x1e4] sm:$0xf]
        %v9704 = vld [vmem:[%s9581 + $0x1e8] sm:$0xf]
        %v9705 = vld [vmem:[%s9581 + $0x1ec] sm:$0xf]
        %v9706 = vld [vmem:[%s9581 + $0x1f0] sm:$0xf]
        %v9707 = vld [vmem:[%s9581 + $0x1f4] sm:$0xf]
        %v9708 = vld [vmem:[%s9581 + $0x1f8] sm:$0xf]
        %v9709 = vld [vmem:[%s9581 + $0x1fc] sm:$0xf]
        %v9710 = vld [vmem:[%s9581 + $0x200] sm:$0xf]
        %v9711 = vld [vmem:[%s9581 + $0x204] sm:$0xf]
        %v9712 = vld [vmem:[%s9581 + $0x208] sm:$0xf]
        %v9713 = vld [vmem:[%s9581 + $0x20c] sm:$0xf]
        %v9714 = vld [vmem:[%s9581 + $0x210] sm:$0xf]
        %v9715 = vld [vmem:[%s9581 + $0x214] sm:$0xf]
        %v9716 = vld [vmem:[%s9581 + $0x218] sm:$0xf]
        %v9717 = vld [vmem:[%s9581 + $0x21c] sm:$0xf]
        %v9718 = vld [vmem:[%s9581 + $0x220] sm:$0xf]
        %v9719 = vld [vmem:[%s9581 + $0x224] sm:$0xf]
        %v9720 = vld [vmem:[%s9581 + $0x228] sm:$0xf]
        %v9721 = vld [vmem:[%s9581 + $0x22c] sm:$0xf]
        %v9722 = vld [vmem:[%s9581 + $0x230] sm:$0xf]
        %v9723 = vld [vmem:[%s9581 + $0x234] sm:$0xf]
        %v9724 = vld [vmem:[%s9581 + $0x238] sm:$0xf]
        %v9725 = vld [vmem:[%s9581 + $0x23c] sm:$0xf]
        %v9726 = vld [vmem:[%s3 + $0x5] sm:$0x1]
        %v9727 = vlaneseq
        %v9728 = vshrl.u32 %v9727, 7
        %v9729 = vsub.s32 0, %v9728
        %v9730 = vrot.slane %v9726, %v9729
        %v9875 = vunpack.c.l.b16 %v9582
        %v9876 = vunpack.c.l.b16 %v9583
        %v9877 = vunpack.c.l.b16 %v9584
        %v9878 = vunpack.c.l.b16 %v9585
        %v9879 = vunpack.c.l.b16 %v9586
        %v9880 = vunpack.c.l.b16 %v9587
        %v9881 = vunpack.c.l.b16 %v9588
        %v9882 = vunpack.c.l.b16 %v9589
        %v9883 = vunpack.c.l.b16 %v9590
        %v9884 = vunpack.c.l.b16 %v9591
        %v9885 = vunpack.c.l.b16 %v9592
        %v9886 = vunpack.c.l.b16 %v9593
        %v9887 = vunpack.c.l.b16 %v9594
        %v9888 = vunpack.c.l.b16 %v9595
        %v9889 = vunpack.c.l.b16 %v9596
        %v9890 = vunpack.c.l.b16 %v9597
        %v9891 = vunpack.c.l.b16 %v9598
        %v9892 = vunpack.c.l.b16 %v9599
        %v9893 = vunpack.c.l.b16 %v9600
        %v9894 = vunpack.c.l.b16 %v9601
        %v9895 = vunpack.c.l.b16 %v9602
        %v9896 = vunpack.c.l.b16 %v9603
        %v9897 = vunpack.c.l.b16 %v9604
        %v9898 = vunpack.c.l.b16 %v9605
        %v9899 = vunpack.c.l.b16 %v9606
        %v9900 = vunpack.c.l.b16 %v9607
        %v9901 = vunpack.c.l.b16 %v9608
        %v9902 = vunpack.c.l.b16 %v9609
        %v9903 = vunpack.c.l.b16 %v9610
        %v9904 = vunpack.c.l.b16 %v9611
        %v9905 = vunpack.c.l.b16 %v9612
        %v9906 = vunpack.c.l.b16 %v9613
        %v9907 = vunpack.c.l.b16 %v9614
        %v9908 = vunpack.c.l.b16 %v9615
        %v9909 = vunpack.c.l.b16 %v9616
        %v9910 = vunpack.c.l.b16 %v9617
        %v9911 = vunpack.c.l.b16 %v9618
        %v9912 = vunpack.c.l.b16 %v9619
        %v9913 = vunpack.c.l.b16 %v9620
        %v9914 = vunpack.c.l.b16 %v9621
        %v9915 = vunpack.c.l.b16 %v9622
        %v9916 = vunpack.c.l.b16 %v9623
        %v9917 = vunpack.c.l.b16 %v9624
        %v9918 = vunpack.c.l.b16 %v9625
        %v9919 = vunpack.c.l.b16 %v9626
        %v9920 = vunpack.c.l.b16 %v9627
        %v9921 = vunpack.c.l.b16 %v9628
        %v9922 = vunpack.c.l.b16 %v9629
        %v9923 = vunpack.c.l.b16 %v9630
        %v9924 = vunpack.c.l.b16 %v9631
        %v9925 = vunpack.c.l.b16 %v9632
        %v9926 = vunpack.c.l.b16 %v9633
        %v9927 = vunpack.c.l.b16 %v9634
        %v9928 = vunpack.c.l.b16 %v9635
        %v9929 = vunpack.c.l.b16 %v9636
        %v9930 = vunpack.c.l.b16 %v9637
        %v9931 = vunpack.c.l.b16 %v9638
        %v9932 = vunpack.c.l.b16 %v9639
        %v9933 = vunpack.c.l.b16 %v9640
        %v9934 = vunpack.c.l.b16 %v9641
        %v9935 = vunpack.c.l.b16 %v9642
        %v9936 = vunpack.c.l.b16 %v9643
        %v9937 = vunpack.c.l.b16 %v9644
        %v9938 = vunpack.c.l.b16 %v9645
        %v9939 = vunpack.c.l.b16 %v9646
        %v9940 = vunpack.c.l.b16 %v9647
        %v9941 = vunpack.c.l.b16 %v9648
        %v9942 = vunpack.c.l.b16 %v9649
        %v9943 = vunpack.c.l.b16 %v9650
        %v9944 = vunpack.c.l.b16 %v9651
        %v9945 = vunpack.c.l.b16 %v9652
        %v9946 = vunpack.c.l.b16 %v9653
        %v9947 = vunpack.c.l.b16 %v9654
        %v9948 = vunpack.c.l.b16 %v9655
        %v9949 = vunpack.c.l.b16 %v9656
        %v9950 = vunpack.c.l.b16 %v9657
        %v9951 = vunpack.c.l.b16 %v9658
        %v9952 = vunpack.c.l.b16 %v9659
        %v9953 = vunpack.c.l.b16 %v9660
        %v9954 = vunpack.c.l.b16 %v9661
        %v9955 = vunpack.c.l.b16 %v9662
        %v9956 = vunpack.c.l.b16 %v9663
        %v9957 = vunpack.c.l.b16 %v9664
        %v9958 = vunpack.c.l.b16 %v9665
        %v9959 = vunpack.c.l.b16 %v9666
        %v9960 = vunpack.c.l.b16 %v9667
        %v9961 = vunpack.c.l.b16 %v9668
        %v9962 = vunpack.c.l.b16 %v9669
        %v9963 = vunpack.c.l.b16 %v9670
        %v9964 = vunpack.c.l.b16 %v9671
        %v9965 = vunpack.c.l.b16 %v9672
        %v9966 = vunpack.c.l.b16 %v9673
        %v9967 = vunpack.c.l.b16 %v9674
        %v9968 = vunpack.c.l.b16 %v9675
        %v9969 = vunpack.c.l.b16 %v9676
        %v9970 = vunpack.c.l.b16 %v9677
        %v9971 = vunpack.c.l.b16 %v9678
        %v9972 = vunpack.c.l.b16 %v9679
        %v9973 = vunpack.c.l.b16 %v9680
        %v9974 = vunpack.c.l.b16 %v9681
        %v9975 = vunpack.c.l.b16 %v9682
        %v9976 = vunpack.c.l.b16 %v9683
        %v9977 = vunpack.c.l.b16 %v9684
        %v9978 = vunpack.c.l.b16 %v9685
        %v9979 = vunpack.c.l.b16 %v9686
        %v9980 = vunpack.c.l.b16 %v9687
        %v9981 = vunpack.c.l.b16 %v9688
        %v9982 = vunpack.c.l.b16 %v9689
        %v9983 = vunpack.c.l.b16 %v9690
        %v9984 = vunpack.c.l.b16 %v9691
        %v9985 = vunpack.c.l.b16 %v9692
        %v9986 = vunpack.c.l.b16 %v9693
        %v9987 = vunpack.c.l.b16 %v9694
        %v9988 = vunpack.c.l.b16 %v9695
        %v9989 = vunpack.c.l.b16 %v9696
        %v9990 = vunpack.c.l.b16 %v9697
        %v9991 = vunpack.c.l.b16 %v9698
        %v9992 = vunpack.c.l.b16 %v9699
        %v9993 = vunpack.c.l.b16 %v9700
        %v9994 = vunpack.c.l.b16 %v9701
        %v9995 = vunpack.c.l.b16 %v9702
        %v9996 = vunpack.c.l.b16 %v9703
        %v9997 = vunpack.c.l.b16 %v9704
        %v9998 = vunpack.c.l.b16 %v9705
        %v9999 = vunpack.c.l.b16 %v9706
        %v10000 = vunpack.c.l.b16 %v9707
        %v10001 = vunpack.c.l.b16 %v9708
        %v10002 = vunpack.c.l.b16 %v9709
        %v10003 = vunpack.c.l.b16 %v9710
        %v10004 = vunpack.c.l.b16 %v9711
        %v10005 = vunpack.c.l.b16 %v9712
        %v10006 = vunpack.c.l.b16 %v9713
        %v10007 = vunpack.c.l.b16 %v9714
        %v10008 = vunpack.c.l.b16 %v9715
        %v10009 = vunpack.c.l.b16 %v9716
        %v10010 = vunpack.c.l.b16 %v9717
        %v10011 = vunpack.c.l.b16 %v9718
        %v10012 = vunpack.c.l.b16 %v9719
        %v10013 = vunpack.c.l.b16 %v9720
        %v10014 = vunpack.c.l.b16 %v9721
        %v10015 = vunpack.c.l.b16 %v9722
        %v10016 = vunpack.c.l.b16 %v9723
        %v10017 = vunpack.c.l.b16 %v9724
        %v10018 = vunpack.c.l.b16 %v9725
        %v10019 = vpack.c.b16 %v9876, %v9875
        %v10020 = vpack.c.b16 %v9878, %v9877
        %v10021 = vpack.c.b16 %v9880, %v9879
        %v10022 = vpack.c.b16 %v9882, %v9881
        %v10023 = vpack.c.b16 %v9884, %v9883
        %v10024 = vpack.c.b16 %v9886, %v9885
        %v10025 = vpack.c.b16 %v9888, %v9887
        %v10026 = vpack.c.b16 %v9890, %v9889
        %v10027 = vpack.c.b16 %v9892, %v9891
        %v10028 = vpack.c.b16 %v9894, %v9893
        %v10029 = vpack.c.b16 %v9896, %v9895
        %v10030 = vpack.c.b16 %v9898, %v9897
        %v10031 = vpack.c.b16 %v9900, %v9899
        %v10032 = vpack.c.b16 %v9902, %v9901
        %v10033 = vpack.c.b16 %v9904, %v9903
        %v10034 = vpack.c.b16 %v9906, %v9905
        %v10035 = vpack.c.b16 %v9908, %v9907
        %v10036 = vpack.c.b16 %v9910, %v9909
        %v10037 = vpack.c.b16 %v9912, %v9911
        %v10038 = vpack.c.b16 %v9914, %v9913
        %v10039 = vpack.c.b16 %v9916, %v9915
        %v10040 = vpack.c.b16 %v9918, %v9917
        %v10041 = vpack.c.b16 %v9920, %v9919
        %v10042 = vpack.c.b16 %v9922, %v9921
        %v10043 = vpack.c.b16 %v9924, %v9923
        %v10044 = vpack.c.b16 %v9926, %v9925
        %v10045 = vpack.c.b16 %v9928, %v9927
        %v10046 = vpack.c.b16 %v9930, %v9929
        %v10047 = vpack.c.b16 %v9932, %v9931
        %v10048 = vpack.c.b16 %v9934, %v9933
        %v10049 = vpack.c.b16 %v9936, %v9935
        %v10050 = vpack.c.b16 %v9938, %v9937
        %v10051 = vpack.c.b16 %v9940, %v9939
        %v10052 = vpack.c.b16 %v9942, %v9941
        %v10053 = vpack.c.b16 %v9944, %v9943
        %v10054 = vpack.c.b16 %v9946, %v9945
        %v10055 = vpack.c.b16 %v9948, %v9947
        %v10056 = vpack.c.b16 %v9950, %v9949
        %v10057 = vpack.c.b16 %v9952, %v9951
        %v10058 = vpack.c.b16 %v9954, %v9953
        %v10059 = vpack.c.b16 %v9956, %v9955
        %v10060 = vpack.c.b16 %v9958, %v9957
        %v10061 = vpack.c.b16 %v9960, %v9959
        %v10062 = vpack.c.b16 %v9962, %v9961
        %v10063 = vpack.c.b16 %v9964, %v9963
        %v10064 = vpack.c.b16 %v9966, %v9965
        %v10065 = vpack.c.b16 %v9968, %v9967
        %v10066 = vpack.c.b16 %v9970, %v9969
        %v10067 = vpack.c.b16 %v9972, %v9971
        %v10068 = vpack.c.b16 %v9974, %v9973
        %v10069 = vpack.c.b16 %v9976, %v9975
        %v10070 = vpack.c.b16 %v9978, %v9977
        %v10071 = vpack.c.b16 %v9980, %v9979
        %v10072 = vpack.c.b16 %v9982, %v9981
        %v10073 = vpack.c.b16 %v9984, %v9983
        %v10074 = vpack.c.b16 %v9986, %v9985
        %v10075 = vpack.c.b16 %v9988, %v9987
        %v10076 = vpack.c.b16 %v9990, %v9989
        %v10077 = vpack.c.b16 %v9992, %v9991
        %v10078 = vpack.c.b16 %v9994, %v9993
        %v10079 = vpack.c.b16 %v9996, %v9995
        %v10080 = vpack.c.b16 %v9998, %v9997
        %v10081 = vpack.c.b16 %v10000, %v9999
        %v10082 = vpack.c.b16 %v10002, %v10001
        %v10083 = vpack.c.b16 %v10004, %v10003
        %v10084 = vpack.c.b16 %v10006, %v10005
        %v10085 = vpack.c.b16 %v10008, %v10007
        %v10086 = vpack.c.b16 %v10010, %v10009
        %v10087 = vpack.c.b16 %v10012, %v10011
        %v10088 = vpack.c.b16 %v10014, %v10013
        %v10089 = vpack.c.b16 %v10016, %v10015
        %v10090 = vpack.c.b16 %v10018, %v10017
        %10163 = vmatprep.subr.bf16.mxu0 0
        %10164 = vmatpush1.bf16.msra.mxu0 %v10019
        %10165 = vmatprep.subr.bf16.mxu0 0
        %10166 = vmatpush1.bf16.msra.mxu0 %v10020
        %10167 = vmatprep.subr.bf16.mxu0 0
        %10168 = vmatpush1.bf16.msra.mxu0 %v10021
        %10169 = vmatprep.subr.bf16.mxu0 0
        %10170 = vmatpush1.bf16.msra.mxu0 %v10022
        %10171 = vmatprep.subr.bf16.mxu0 0
        %10172 = vmatpush1.bf16.msra.mxu0 %v10023
        %10173 = vmatprep.subr.bf16.mxu0 0
        %10174 = vmatpush1.bf16.msra.mxu0 %v10024
        %10175 = vmatprep.subr.bf16.mxu0 0
        %10176 = vmatpush1.bf16.msra.mxu0 %v10025
        %10177 = vmatprep.subr.bf16.mxu0 0
        %10178 = vmatpush1.bf16.msra.mxu0 %v10026
        %10179 = vmatprep.subr.bf16.mxu0 0
        %10180 = vmatpush1.bf16.msra.mxu0 %v10027
        %10181 = vmatprep.subr.bf16.mxu0 0
        %10182 = vmatpush1.bf16.msra.mxu0 %v10028
        %10183 = vmatprep.subr.bf16.mxu0 0
        %10184 = vmatpush1.bf16.msra.mxu0 %v10029
        %10185 = vmatprep.subr.bf16.mxu0 0
        %10186 = vmatpush1.bf16.msra.mxu0 %v10030
        %10187 = vmatprep.subr.bf16.mxu0 0
        %10188 = vmatpush1.bf16.msra.mxu0 %v10031
        %10189 = vmatprep.subr.bf16.mxu0 0
        %10190 = vmatpush1.bf16.msra.mxu0 %v10032
        %10191 = vmatprep.subr.bf16.mxu0 0
        %10192 = vmatpush1.bf16.msra.mxu0 %v10033
        %10193 = vmatprep.subr.bf16.mxu0 0
        %10194 = vmatpush1.bf16.msra.mxu0 %v10034
        %10195 = vmatprep.mubr.bf16.mxu0 %v9197
        %10196 = vmatmul.mubr.bf16.gmra.mrb[0].mxu0 %v9149
        %v10197 = vpop.f32.mrb[0].mxu0
        %v10198 = vadd.f32 %v9730, %v10197
        %v10199 = vpop.f32.mrb[0].mxu0
        %v10200 = vpop.f32.mrb[0].mxu0
        %v10201 = vadd.f32 %v9730, %v10200
        %v10202 = vpop.f32.mrb[0].mxu0
        %10203 = vmatprep.mubr.bf16.mxu0 %v9198
        %10204 = vmatmul.mubr.bf16.gmra.mrb[0].mxu0 %v9150
        %v10205 = vpop.f32.mrb[0].mxu0
        %v10206 = vadd.f32 %v9730, %v10205
        %v10207 = vpop.f32.mrb[0].mxu0
        %v10208 = vpop.f32.mrb[0].mxu0
        %v10209 = vadd.f32 %v9730, %v10208
        %v10210 = vpop.f32.mrb[0].mxu0
        %10211 = vmatprep.mubr.bf16.mxu0 %v9199
        %10212 = vmatmul.mubr.bf16.gmra.mrb[0].mxu0 %v9151
        %v10213 = vpop.f32.mrb[0].mxu0
        %v10214 = vadd.f32 %v9730, %v10213
        %v10215 = vpop.f32.mrb[0].mxu0
        %v10216 = vpop.f32.mrb[0].mxu0
        %v10217 = vadd.f32 %v9730, %v10216
        %v10218 = vpop.f32.mrb[0].mxu0
        %10219 = vmatprep.mubr.bf16.mxu0 %v9200
        %10220 = vmatmul.mubr.bf16.gmra.mrb[0].mxu0 %v9152
        %v10221 = vpop.f32.mrb[0].mxu0
        %v10222 = vadd.f32 %v9730, %v10221
        %v10223 = vpop.f32.mrb[0].mxu0
        %v10224 = vpop.f32.mrb[0].mxu0
        %v10225 = vadd.f32 %v9730, %v10224
        %v10226 = vpop.f32.mrb[0].mxu0
        %10227 = vmatprep.mubr.bf16.mxu0 %v9201
        %10228 = vmatmul.mubr.bf16.gmra.mrb[0].mxu0 %v9153
        %v10229 = vpop.f32.mrb[0].mxu0
        %v10230 = vadd.f32 %v9730, %v10229
        %v10231 = vpop.f32.mrb[0].mxu0
        %v10232 = vpop.f32.mrb[0].mxu0
        %v10233 = vadd.f32 %v9730, %v10232
        %v10234 = vpop.f32.mrb[0].mxu0
        %10235 = vmatprep.mubr.bf16.mxu0 %v9202
        %10236 = vmatmul.mubr.bf16.gmra.mrb[0].mxu0 %v9154
        %v10237 = vpop.f32.mrb[0].mxu0
        %v10238 = vadd.f32 %v9730, %v10237
        %v10239 = vpop.f32.mrb[0].mxu0
        %v10240 = vpop.f32.mrb[0].mxu0
        %v10241 = vadd.f32 %v9730, %v10240
        %v10242 = vpop.f32.mrb[0].mxu0
        %10243 = vmatprep.mubr.bf16.mxu0 %v9203
        %10244 = vmatmul.mubr.bf16.gmra.mrb[0].mxu0 %v9155
        %v10245 = vpop.f32.mrb[0].mxu0
        %v10246 = vadd.f32 %v9730, %v10245
        %v10247 = vpop.f32.mrb[0].mxu0
        %v10248 = vpop.f32.mrb[0].mxu0
        %v10249 = vadd.f32 %v9730, %v10248
        %v10250 = vpop.f32.mrb[0].mxu0
        %10251 = vmatprep.mubr.bf16.mxu0 %v9204
        %10252 = vmatmul.mubr.bf16.gmra.mrb[0].mxu0 %v9156
        %v10253 = vpop.f32.mrb[0].mxu0
        %v10254 = vadd.f32 %v9730, %v10253
        %v10255 = vpop.f32.mrb[0].mxu0
        %v10256 = vpop.f32.mrb[0].mxu0
        %v10257 = vadd.f32 %v9730, %v10256
        %v10258 = vpop.f32.mrb[0].mxu0
        %10259 = vmatprep.mubr.bf16.mxu0 %v9205
        %10260 = vmatmul.mubr.bf16.gmra.mrb[0].mxu0 %v9157
        %v10261 = vpop.f32.mrb[0].mxu0
        %v10262 = vadd.f32 %v9730, %v10261
        %v10263 = vpop.f32.mrb[0].mxu0
        %v10264 = vpop.f32.mrb[0].mxu0
        %v10265 = vadd.f32 %v9730, %v10264
        %v10266 = vpop.f32.mrb[0].mxu0
        %10267 = vmatprep.mubr.bf16.mxu0 %v9206
        %10268 = vmatmul.mubr.bf16.gmra.mrb[0].mxu0 %v9158
        %v10269 = vpop.f32.mrb[0].mxu0
        %v10270 = vadd.f32 %v9730, %v10269
        %v10271 = vpop.f32.mrb[0].mxu0
        %v10272 = vpop.f32.mrb[0].mxu0
        %v10273 = vadd.f32 %v9730, %v10272
        %v10274 = vpop.f32.mrb[0].mxu0
        %10275 = vmatprep.mubr.bf16.mxu0 %v9207
        %10276 = vmatmul.mubr.bf16.gmra.mrb[0].mxu0 %v9159
        %v10277 = vpop.f32.mrb[0].mxu0
        %v10278 = vadd.f32 %v9730, %v10277
        %v10279 = vpop.f32.mrb[0].mxu0
        %v10280 = vpop.f32.mrb[0].mxu0
        %v10281 = vadd.f32 %v9730, %v10280
        %v10282 = vpop.f32.mrb[0].mxu0
        %10283 = vmatprep.mubr.bf16.mxu0 %v9208
        %10284 = vmatmul.mubr.bf16.gmra.mrb[0].mxu0 %v9160
        %v10285 = vpop.f32.mrb[0].mxu0
        %v10286 = vadd.f32 %v9730, %v10285
        %v10287 = vpop.f32.mrb[0].mxu0
        %v10288 = vpop.f32.mrb[0].mxu0
        %v10289 = vadd.f32 %v9730, %v10288
        %v10290 = vpop.f32.mrb[0].mxu0
        %10291 = vmatprep.mubr.bf16.mxu0 %v9209
        %10292 = vmatmul.mubr.bf16.gmra.mrb[0].mxu0 %v9161
        %v10293 = vpop.f32.mrb[0].mxu0
        %v10294 = vadd.f32 %v9730, %v10293
        %v10295 = vpop.f32.mrb[0].mxu0
        %v10296 = vpop.f32.mrb[0].mxu0
        %v10297 = vadd.f32 %v9730, %v10296
        %v10298 = vpop.f32.mrb[0].mxu0
        %10299 = vmatprep.mubr.bf16.mxu0 %v9210
        %10300 = vmatmul.mubr.bf16.gmra.mrb[0].mxu0 %v9162
        %v10301 = vpop.f32.mrb[0].mxu0
        %v10302 = vadd.f32 %v9730, %v10301
        %v10303 = vpop.f32.mrb[0].mxu0
        %v10304 = vpop.f32.mrb[0].mxu0
        %v10305 = vadd.f32 %v9730, %v10304
        %v10306 = vpop.f32.mrb[0].mxu0
        %10307 = vmatprep.mubr.bf16.mxu0 %v9211
        %10308 = vmatmul.mubr.bf16.gmra.mrb[0].mxu0 %v9163
        %v10309 = vpop.f32.mrb[0].mxu0
        %v10310 = vadd.f32 %v9730, %v10309
        %v10311 = vpop.f32.mrb[0].mxu0
        %v10312 = vpop.f32.mrb[0].mxu0
        %v10313 = vadd.f32 %v9730, %v10312
        %v10314 = vpop.f32.mrb[0].mxu0
        %10315 = vmatprep.mubr.bf16.mxu0 %v9212
        %10316 = vmatmul.mubr.bf16.gmra.mrb[0].mxu0 %v9164
        %v10317 = vpop.f32.mrb[0].mxu0
        %v10318 = vadd.f32 %v9730, %v10317
        %v10319 = vpop.f32.mrb[0].mxu0
        %v10320 = vpop.f32.mrb[0].mxu0
        %v10321 = vadd.f32 %v9730, %v10320
        %v10322 = vpop.f32.mrb[0].mxu0
        %10323 = vdwg.mxu0
        %10324 = vmatprep.subr.bf16.mxu0 0
        %10325 = vmatpush1.bf16.msra.mxu0 %v10035
        %10326 = vmatprep.subr.bf16.mxu0 0
        %10327 = vmatpush1.bf16.msra.mxu0 %v10036
        %10328 = vmatprep.subr.bf16.mxu0 0
        %10329 = vmatpush1.bf16.msra.mxu0 %v10037
        %10330 = vmatprep.subr.bf16.mxu0 0
        %10331 = vmatpush1.bf16.msra.mxu0 %v10038
        %10332 = vmatprep.subr.bf16.mxu0 0
        %10333 = vmatpush1.bf16.msra.mxu0 %v10039
        %10334 = vmatprep.subr.bf16.mxu0 0
        %10335 = vmatpush1.bf16.msra.mxu0 %v10040
        %10336 = vmatprep.subr.bf16.mxu0 0
        %10337 = vmatpush1.bf16.msra.mxu0 %v10041
        %10338 = vmatprep.subr.bf16.mxu0 0
        %10339 = vmatpush1.bf16.msra.mxu0 %v10042
        %10340 = vmatprep.subr.bf16.mxu0 0
        %10341 = vmatpush1.bf16.msra.mxu0 %v10043
        %10342 = vmatprep.subr.bf16.mxu0 0
        %10343 = vmatpush1.bf16.msra.mxu0 %v10044
        %10344 = vmatprep.subr.bf16.mxu0 0
        %10345 = vmatpush1.bf16.msra.mxu0 %v10045
        %10346 = vmatprep.subr.bf16.mxu0 0
        %10347 = vmatpush1.bf16.msra.mxu0 %v10046
        %10348 = vmatprep.subr.bf16.mxu0 0
        %10349 = vmatpush1.bf16.msra.mxu0 %v10047
        %10350 = vmatprep.subr.bf16.mxu0 0
        %10351 = vmatpush1.bf16.msra.mxu0 %v10048
        %10352 = vmatprep.subr.bf16.mxu0 0
        %10353 = vmatpush1.bf16.msra.mxu0 %v10049
        %10354 = vmatprep.subr.bf16.mxu0 0
        %10355 = vmatpush1.bf16.msra.mxu0 %v10050
        %10356 = vmatprep.mubr.bf16.mxu0 %v9357
        %10357 = vmatmul.mubr.bf16.gmra.mrb[0].mxu0 %v9309
        %v10358 = vpop.f32.mrb[0].mxu0
        %v10359 = vadd.f32 %v10198, %v10358
        %v10360 = vpop.f32.mrb[0].mxu0
        %v10361 = vpop.f32.mrb[0].mxu0
        %v10362 = vadd.f32 %v10201, %v10361
        %v10363 = vpop.f32.mrb[0].mxu0
        %10364 = vmatprep.mubr.bf16.mxu0 %v9358
        %10365 = vmatmul.mubr.bf16.gmra.mrb[0].mxu0 %v9310
        %v10366 = vpop.f32.mrb[0].mxu0
        %v10367 = vadd.f32 %v10206, %v10366
        %v10368 = vpop.f32.mrb[0].mxu0
        %v10369 = vpop.f32.mrb[0].mxu0
        %v10370 = vadd.f32 %v10209, %v10369
        %v10371 = vpop.f32.mrb[0].mxu0
        %10372 = vmatprep.mubr.bf16.mxu0 %v9359
        %10373 = vmatmul.mubr.bf16.gmra.mrb[0].mxu0 %v9311
        %v10374 = vpop.f32.mrb[0].mxu0
        %v10375 = vadd.f32 %v10214, %v10374
        %v10376 = vpop.f32.mrb[0].mxu0
        %v10377 = vpop.f32.mrb[0].mxu0
        %v10378 = vadd.f32 %v10217, %v10377
        %v10379 = vpop.f32.mrb[0].mxu0
        %10380 = vmatprep.mubr.bf16.mxu0 %v9360
        %10381 = vmatmul.mubr.bf16.gmra.mrb[0].mxu0 %v9312
        %v10382 = vpop.f32.mrb[0].mxu0
        %v10383 = vadd.f32 %v10222, %v10382
        %v10384 = vpop.f32.mrb[0].mxu0
        %v10385 = vpop.f32.mrb[0].mxu0
        %v10386 = vadd.f32 %v10225, %v10385
        %v10387 = vpop.f32.mrb[0].mxu0
        %10388 = vmatprep.mubr.bf16.mxu0 %v9361
        %10389 = vmatmul.mubr.bf16.gmra.mrb[0].mxu0 %v9313
        %v10390 = vpop.f32.mrb[0].mxu0
        %v10391 = vadd.f32 %v10230, %v10390
        %v10392 = vpop.f32.mrb[0].mxu0
        %v10393 = vpop.f32.mrb[0].mxu0
        %v10394 = vadd.f32 %v10233, %v10393
        %v10395 = vpop.f32.mrb[0].mxu0
        %10396 = vmatprep.mubr.bf16.mxu0 %v9362
        %10397 = vmatmul.mubr.bf16.gmra.mrb[0].mxu0 %v9314
        %v10398 = vpop.f32.mrb[0].mxu0
        %v10399 = vadd.f32 %v10238, %v10398
        %v10400 = vpop.f32.mrb[0].mxu0
        %v10401 = vpop.f32.mrb[0].mxu0
        %v10402 = vadd.f32 %v10241, %v10401
        %v10403 = vpop.f32.mrb[0].mxu0
        %10404 = vmatprep.mubr.bf16.mxu0 %v9363
        %10405 = vmatmul.mubr.bf16.gmra.mrb[0].mxu0 %v9315
        %v10406 = vpop.f32.mrb[0].mxu0
        %v10407 = vadd.f32 %v10246, %v10406
        %v10408 = vpop.f32.mrb[0].mxu0
        %v10409 = vpop.f32.mrb[0].mxu0
        %v10410 = vadd.f32 %v10249, %v10409
        %v10411 = vpop.f32.mrb[0].mxu0
        %10412 = vmatprep.mubr.bf16.mxu0 %v9364
        %10413 = vmatmul.mubr.bf16.gmra.mrb[0].mxu0 %v9316
        %v10414 = vpop.f32.mrb[0].mxu0
        %v10415 = vadd.f32 %v10254, %v10414
        %v10416 = vpop.f32.mrb[0].mxu0
        %v10417 = vpop.f32.mrb[0].mxu0
        %v10418 = vadd.f32 %v10257, %v10417
        %v10419 = vpop.f32.mrb[0].mxu0
        %10420 = vmatprep.mubr.bf16.mxu0 %v9365
        %10421 = vmatmul.mubr.bf16.gmra.mrb[0].mxu0 %v9317
        %v10422 = vpop.f32.mrb[0].mxu0
        %v10423 = vadd.f32 %v10262, %v10422
        %v10424 = vpop.f32.mrb[0].mxu0
        %v10425 = vpop.f32.mrb[0].mxu0
        %v10426 = vadd.f32 %v10265, %v10425
        %v10427 = vpop.f32.mrb[0].mxu0
        %10428 = vmatprep.mubr.bf16.mxu0 %v9366
        %10429 = vmatmul.mubr.bf16.gmra.mrb[0].mxu0 %v9318
        %v10430 = vpop.f32.mrb[0].mxu0
        %v10431 = vadd.f32 %v10270, %v10430
        %v10432 = vpop.f32.mrb[0].mxu0
        %v10433 = vpop.f32.mrb[0].mxu0
        %v10434 = vadd.f32 %v10273, %v10433
        %v10435 = vpop.f32.mrb[0].mxu0
        %10436 = vmatprep.mubr.bf16.mxu0 %v9367
        %10437 = vmatmul.mubr.bf16.gmra.mrb[0].mxu0 %v9319
        %v10438 = vpop.f32.mrb[0].mxu0
        %v10439 = vadd.f32 %v10278, %v10438
        %v10440 = vpop.f32.mrb[0].mxu0
        %v10441 = vpop.f32.mrb[0].mxu0
        %v10442 = vadd.f32 %v10281, %v10441
        %v10443 = vpop.f32.mrb[0].mxu0
        %10444 = vmatprep.mubr.bf16.mxu0 %v9368
        %10445 = vmatmul.mubr.bf16.gmra.mrb[0].mxu0 %v9320
        %v10446 = vpop.f32.mrb[0].mxu0
        %v10447 = vadd.f32 %v10286, %v10446
        %v10448 = vpop.f32.mrb[0].mxu0
        %v10449 = vpop.f32.mrb[0].mxu0
        %v10450 = vadd.f32 %v10289, %v10449
        %v10451 = vpop.f32.mrb[0].mxu0
        %10452 = vmatprep.mubr.bf16.mxu0 %v9369
        %10453 = vmatmul.mubr.bf16.gmra.mrb[0].mxu0 %v9321
        %v10454 = vpop.f32.mrb[0].mxu0
        %v10455 = vadd.f32 %v10294, %v10454
        %v10456 = vpop.f32.mrb[0].mxu0
        %v10457 = vpop.f32.mrb[0].mxu0
        %v10458 = vadd.f32 %v10297, %v10457
        %v10459 = vpop.f32.mrb[0].mxu0
        %10460 = vmatprep.mubr.bf16.mxu0 %v9370
        %10461 = vmatmul.mubr.bf16.gmra.mrb[0].mxu0 %v9322
        %v10462 = vpop.f32.mrb[0].mxu0
        %v10463 = vadd.f32 %v10302, %v10462
        %v10464 = vpop.f32.mrb[0].mxu0
        %v10465 = vpop.f32.mrb[0].mxu0
        %v10466 = vadd.f32 %v10305, %v10465
        %v10467 = vpop.f32.mrb[0].mxu0
        %10468 = vmatprep.mubr.bf16.mxu0 %v9371
        %10469 = vmatmul.mubr.bf16.gmra.mrb[0].mxu0 %v9323
        %v10470 = vpop.f32.mrb[0].mxu0
        %v10471 = vadd.f32 %v10310, %v10470
        %v10472 = vpop.f32.mrb[0].mxu0
        %v10473 = vpop.f32.mrb[0].mxu0
        %v10474 = vadd.f32 %v10313, %v10473
        %v10475 = vpop.f32.mrb[0].mxu0
        %10476 = vmatprep.mubr.bf16.mxu0 %v9372
        %10477 = vmatmul.mubr.bf16.gmra.mrb[0].mxu0 %v9324
        %v10478 = vpop.f32.mrb[0].mxu0
        %v10479 = vadd.f32 %v10318, %v10478
        %v10480 = vpop.f32.mrb[0].mxu0
        %v10481 = vpop.f32.mrb[0].mxu0
        %v10482 = vadd.f32 %v10321, %v10481
        %v10483 = vpop.f32.mrb[0].mxu0
        %10484 = vdwg.mxu0
        %10485 = vmatprep.subr.bf16.mxu0 0
        %10486 = vmatpush1.bf16.msra.mxu0 %v10051
        %10487 = vmatprep.subr.bf16.mxu0 0
        %10488 = vmatpush1.bf16.msra.mxu0 %v10052
        %10489 = vmatprep.subr.bf16.mxu0 0
        %10490 = vmatpush1.bf16.msra.mxu0 %v10053
        %10491 = vmatprep.subr.bf16.mxu0 0
        %10492 = vmatpush1.bf16.msra.mxu0 %v10054
        %10493 = vmatprep.subr.bf16.mxu0 0
        %10494 = vmatpush1.bf16.msra.mxu0 %v10055
        %10495 = vmatprep.subr.bf16.mxu0 0
        %10496 = vmatpush1.bf16.msra.mxu0 %v10056
        %10497 = vmatprep.subr.bf16.mxu0 0
        %10498 = vmatpush1.bf16.msra.mxu0 %v10057
        %10499 = vmatprep.subr.bf16.mxu0 0
        %10500 = vmatpush1.bf16.msra.mxu0 %v10058
        %10501 = vmatprep.subr.bf16.mxu0 0
        %10502 = vmatpush1.bf16.msra.mxu0 %v10059
        %10503 = vmatprep.subr.bf16.mxu0 0
        %10504 = vmatpush1.bf16.msra.mxu0 %v10060
        %10505 = vmatprep.subr.bf16.mxu0 0
        %10506 = vmatpush1.bf16.msra.mxu0 %v10061
        %10507 = vmatprep.subr.bf16.mxu0 0
        %10508 = vmatpush1.bf16.msra.mxu0 %v10062
        %10509 = vmatprep.subr.bf16.mxu0 0
        %10510 = vmatpush1.bf16.msra.mxu0 %v10063
        %10511 = vmatprep.subr.bf16.mxu0 0
        %10512 = vmatpush1.bf16.msra.mxu0 %v10064
        %10513 = vmatprep.subr.bf16.mxu0 0
        %10514 = vmatpush1.bf16.msra.mxu0 %v10065
        %10515 = vmatprep.subr.bf16.mxu0 0
        %10516 = vmatpush1.bf16.msra.mxu0 %v10066
        %10517 = vmatprep.mubr.bf16.mxu0 %v9421
        %10518 = vmatmul.mubr.bf16.gmra.mrb[0].mxu0 %v9373
        %v10519 = vpop.f32.mrb[0].mxu0
        %v10520 = vadd.f32 %v10359, %v10519
        %v10521 = vpop.f32.mrb[0].mxu0
        %v10522 = vpop.f32.mrb[0].mxu0
        %v10523 = vadd.f32 %v10362, %v10522
        %v10524 = vpop.f32.mrb[0].mxu0
        %10525 = vmatprep.mubr.bf16.mxu0 %v9422
        %10526 = vmatmul.mubr.bf16.gmra.mrb[0].mxu0 %v9374
        %v10527 = vpop.f32.mrb[0].mxu0
        %v10528 = vadd.f32 %v10367, %v10527
        %v10529 = vpop.f32.mrb[0].mxu0
        %v10530 = vpop.f32.mrb[0].mxu0
        %v10531 = vadd.f32 %v10370, %v10530
        %v10532 = vpop.f32.mrb[0].mxu0
        %10533 = vmatprep.mubr.bf16.mxu0 %v9423
        %10534 = vmatmul.mubr.bf16.gmra.mrb[0].mxu0 %v9375
        %v10535 = vpop.f32.mrb[0].mxu0
        %v10536 = vadd.f32 %v10375, %v10535
        %v10537 = vpop.f32.mrb[0].mxu0
        %v10538 = vpop.f32.mrb[0].mxu0
        %v10539 = vadd.f32 %v10378, %v10538
        %v10540 = vpop.f32.mrb[0].mxu0
        %10541 = vmatprep.mubr.bf16.mxu0 %v9424
        %10542 = vmatmul.mubr.bf16.gmra.mrb[0].mxu0 %v9376
        %v10543 = vpop.f32.mrb[0].mxu0
        %v10544 = vadd.f32 %v10383, %v10543
        %v10545 = vpop.f32.mrb[0].mxu0
        %v10546 = vpop.f32.mrb[0].mxu0
        %v10547 = vadd.f32 %v10386, %v10546
        %v10548 = vpop.f32.mrb[0].mxu0
        %10549 = vmatprep.mubr.bf16.mxu0 %v9425
        %10550 = vmatmul.mubr.bf16.gmra.mrb[0].mxu0 %v9377
        %v10551 = vpop.f32.mrb[0].mxu0
        %v10552 = vadd.f32 %v10391, %v10551
        %v10553 = vpop.f32.mrb[0].mxu0
        %v10554 = vpop.f32.mrb[0].mxu0
        %v10555 = vadd.f32 %v10394, %v10554
        %v10556 = vpop.f32.mrb[0].mxu0
        %10557 = vmatprep.mubr.bf16.mxu0 %v9426
        %10558 = vmatmul.mubr.bf16.gmra.mrb[0].mxu0 %v9378
        %v10559 = vpop.f32.mrb[0].mxu0
        %v10560 = vadd.f32 %v10399, %v10559
        %v10561 = vpop.f32.mrb[0].mxu0
        %v10562 = vpop.f32.mrb[0].mxu0
        %v10563 = vadd.f32 %v10402, %v10562
        %v10564 = vpop.f32.mrb[0].mxu0
        %10565 = vmatprep.mubr.bf16.mxu0 %v9427
        %10566 = vmatmul.mubr.bf16.gmra.mrb[0].mxu0 %v9379
        %v10567 = vpop.f32.mrb[0].mxu0
        %v10568 = vadd.f32 %v10407, %v10567
        %v10569 = vpop.f32.mrb[0].mxu0
        %v10570 = vpop.f32.mrb[0].mxu0
        %v10571 = vadd.f32 %v10410, %v10570
        %v10572 = vpop.f32.mrb[0].mxu0
        %10573 = vmatprep.mubr.bf16.mxu0 %v9428
        %10574 = vmatmul.mubr.bf16.gmra.mrb[0].mxu0 %v9380
        %v10575 = vpop.f32.mrb[0].mxu0
        %v10576 = vadd.f32 %v10415, %v10575
        %v10577 = vpop.f32.mrb[0].mxu0
        %v10578 = vpop.f32.mrb[0].mxu0
        %v10579 = vadd.f32 %v10418, %v10578
        %v10580 = vpop.f32.mrb[0].mxu0
        %10581 = vmatprep.mubr.bf16.mxu0 %v9429
        %10582 = vmatmul.mubr.bf16.gmra.mrb[0].mxu0 %v9381
        %v10583 = vpop.f32.mrb[0].mxu0
        %v10584 = vadd.f32 %v10423, %v10583
        %v10585 = vpop.f32.mrb[0].mxu0
        %v10586 = vpop.f32.mrb[0].mxu0
        %v10587 = vadd.f32 %v10426, %v10586
        %v10588 = vpop.f32.mrb[0].mxu0
        %10589 = vmatprep.mubr.bf16.mxu0 %v9430
        %10590 = vmatmul.mubr.bf16.gmra.mrb[0].mxu0 %v9382
        %v10591 = vpop.f32.mrb[0].mxu0
        %v10592 = vadd.f32 %v10431, %v10591
        %v10593 = vpop.f32.mrb[0].mxu0
        %v10594 = vpop.f32.mrb[0].mxu0
        %v10595 = vadd.f32 %v10434, %v10594
        %v10596 = vpop.f32.mrb[0].mxu0
        %10597 = vmatprep.mubr.bf16.mxu0 %v9431
        %10598 = vmatmul.mubr.bf16.gmra.mrb[0].mxu0 %v9383
        %v10599 = vpop.f32.mrb[0].mxu0
        %v10600 = vadd.f32 %v10439, %v10599
        %v10601 = vpop.f32.mrb[0].mxu0
        %v10602 = vpop.f32.mrb[0].mxu0
        %v10603 = vadd.f32 %v10442, %v10602
        %v10604 = vpop.f32.mrb[0].mxu0
        %10605 = vmatprep.mubr.bf16.mxu0 %v9432
        %10606 = vmatmul.mubr.bf16.gmra.mrb[0].mxu0 %v9384
        %v10607 = vpop.f32.mrb[0].mxu0
        %v10608 = vadd.f32 %v10447, %v10607
        %v10609 = vpop.f32.mrb[0].mxu0
        %v10610 = vpop.f32.mrb[0].mxu0
        %v10611 = vadd.f32 %v10450, %v10610
        %v10612 = vpop.f32.mrb[0].mxu0
        %10613 = vmatprep.mubr.bf16.mxu0 %v9433
        %10614 = vmatmul.mubr.bf16.gmra.mrb[0].mxu0 %v9385
        %v10615 = vpop.f32.mrb[0].mxu0
        %v10616 = vadd.f32 %v10455, %v10615
        %v10617 = vpop.f32.mrb[0].mxu0
        %v10618 = vpop.f32.mrb[0].mxu0
        %v10619 = vadd.f32 %v10458, %v10618
        %v10620 = vpop.f32.mrb[0].mxu0
        %10621 = vmatprep.mubr.bf16.mxu0 %v9434
        %10622 = vmatmul.mubr.bf16.gmra.mrb[0].mxu0 %v9386
        %v10623 = vpop.f32.mrb[0].mxu0
        %v10624 = vadd.f32 %v10463, %v10623
        %v10625 = vpop.f32.mrb[0].mxu0
        %v10626 = vpop.f32.mrb[0].mxu0
        %v10627 = vadd.f32 %v10466, %v10626
        %v10628 = vpop.f32.mrb[0].mxu0
        %10629 = vmatprep.mubr.bf16.mxu0 %v9435
        %10630 = vmatmul.mubr.bf16.gmra.mrb[0].mxu0 %v9387
        %v10631 = vpop.f32.mrb[0].mxu0
        %v10632 = vadd.f32 %v10471, %v10631
        %v10633 = vpop.f32.mrb[0].mxu0
        %v10634 = vpop.f32.mrb[0].mxu0
        %v10635 = vadd.f32 %v10474, %v10634
        %v10636 = vpop.f32.mrb[0].mxu0
        %10637 = vmatprep.mubr.bf16.mxu0 %v9436
        %10638 = vmatmul.mubr.bf16.gmra.mrb[0].mxu0 %v9388
        %v10639 = vpop.f32.mrb[0].mxu0
        %v10640 = vadd.f32 %v10479, %v10639
        %v10641 = vpop.f32.mrb[0].mxu0
        %v10642 = vpop.f32.mrb[0].mxu0
        %v10643 = vadd.f32 %v10482, %v10642
        %v10644 = vpop.f32.mrb[0].mxu0
        %10645 = vdwg.mxu0
        %10646 = vmatprep.subr.bf16.mxu0 0
        %10647 = vmatpush1.bf16.msra.mxu0 %v10067
        %10648 = vmatprep.subr.bf16.mxu0 0
        %10649 = vmatpush1.bf16.msra.mxu0 %v10068
        %10650 = vmatprep.subr.bf16.mxu0 0
        %10651 = vmatpush1.bf16.msra.mxu0 %v10069
        %10652 = vmatprep.subr.bf16.mxu0 0
        %10653 = vmatpush1.bf16.msra.mxu0 %v10070
        %10654 = vmatprep.subr.bf16.mxu0 0
        %10655 = vmatpush1.bf16.msra.mxu0 %v10071
        %10656 = vmatprep.subr.bf16.mxu0 0
        %10657 = vmatpush1.bf16.msra.mxu0 %v10072
        %10658 = vmatprep.subr.bf16.mxu0 0
        %10659 = vmatpush1.bf16.msra.mxu0 %v10073
        %10660 = vmatprep.subr.bf16.mxu0 0
        %10661 = vmatpush1.bf16.msra.mxu0 %v10074
        %10662 = vmatprep.subr.bf16.mxu0 0
        %10663 = vmatpush1.bf16.msra.mxu0 %v10075
        %10664 = vmatprep.subr.bf16.mxu0 0
        %10665 = vmatpush1.bf16.msra.mxu0 %v10076
        %10666 = vmatprep.subr.bf16.mxu0 0
        %10667 = vmatpush1.bf16.msra.mxu0 %v10077
        %10668 = vmatprep.subr.bf16.mxu0 0
        %10669 = vmatpush1.bf16.msra.mxu0 %v10078
        %10670 = vmatprep.subr.bf16.mxu0 0
        %10671 = vmatpush1.bf16.msra.mxu0 %v10079
        %10672 = vmatprep.subr.bf16.mxu0 0
        %10673 = vmatpush1.bf16.msra.mxu0 %v10080
        %10674 = vmatprep.subr.bf16.mxu0 0
        %10675 = vmatpush1.bf16.msra.mxu0 %v10081
        %10676 = vmatprep.subr.bf16.mxu0 0
        %10677 = vmatpush1.bf16.msra.mxu0 %v10082
        %10678 = vmatprep.mubr.bf16.mxu0 %v9517
        %10679 = vmatmul.mubr.bf16.gmra.mrb[0].mxu0 %v9469
        %v10680 = vpop.f32.mrb[0].mxu0
        %v10681 = vadd.f32 %v10520, %v10680
        %v10682 = vpop.f32.mrb[0].mxu0
        %v10683 = vpop.f32.mrb[0].mxu0
        %v10684 = vadd.f32 %v10523, %v10683
        %v10685 = vpop.f32.mrb[0].mxu0
        %10686 = vmatprep.mubr.bf16.mxu0 %v9518
        %10687 = vmatmul.mubr.bf16.gmra.mrb[0].mxu0 %v9470
        %v10688 = vpop.f32.mrb[0].mxu0
        %v10689 = vadd.f32 %v10528, %v10688
        %v10690 = vpop.f32.mrb[0].mxu0
        %v10691 = vpop.f32.mrb[0].mxu0
        %v10692 = vadd.f32 %v10531, %v10691
        %v10693 = vpop.f32.mrb[0].mxu0
        %10694 = vmatprep.mubr.bf16.mxu0 %v9519
        %10695 = vmatmul.mubr.bf16.gmra.mrb[0].mxu0 %v9471
        %v10696 = vpop.f32.mrb[0].mxu0
        %v10697 = vadd.f32 %v10536, %v10696
        %v10698 = vpop.f32.mrb[0].mxu0
        %v10699 = vpop.f32.mrb[0].mxu0
        %v10700 = vadd.f32 %v10539, %v10699
        %v10701 = vpop.f32.mrb[0].mxu0
        %10702 = vmatprep.mubr.bf16.mxu0 %v9520
        %10703 = vmatmul.mubr.bf16.gmra.mrb[0].mxu0 %v9472
        %v10704 = vpop.f32.mrb[0].mxu0
        %v10705 = vadd.f32 %v10544, %v10704
        %v10706 = vpop.f32.mrb[0].mxu0
        %v10707 = vpop.f32.mrb[0].mxu0
        %v10708 = vadd.f32 %v10547, %v10707
        %v10709 = vpop.f32.mrb[0].mxu0
        %10710 = vmatprep.mubr.bf16.mxu0 %v9521
        %10711 = vmatmul.mubr.bf16.gmra.mrb[0].mxu0 %v9473
        %v10712 = vpop.f32.mrb[0].mxu0
        %v10713 = vadd.f32 %v10552, %v10712
        %v10714 = vpop.f32.mrb[0].mxu0
        %v10715 = vpop.f32.mrb[0].mxu0
        %v10716 = vadd.f32 %v10555, %v10715
        %v10717 = vpop.f32.mrb[0].mxu0
        %10718 = vmatprep.mubr.bf16.mxu0 %v9522
        %10719 = vmatmul.mubr.bf16.gmra.mrb[0].mxu0 %v9474
        %v10720 = vpop.f32.mrb[0].mxu0
        %v10721 = vadd.f32 %v10560, %v10720
        %v10722 = vpop.f32.mrb[0].mxu0
        %v10723 = vpop.f32.mrb[0].mxu0
        %v10724 = vadd.f32 %v10563, %v10723
        %v10725 = vpop.f32.mrb[0].mxu0
        %10726 = vmatprep.mubr.bf16.mxu0 %v9523
        %10727 = vmatmul.mubr.bf16.gmra.mrb[0].mxu0 %v9475
        %v10728 = vpop.f32.mrb[0].mxu0
        %v10729 = vadd.f32 %v10568, %v10728
        %v10730 = vpop.f32.mrb[0].mxu0
        %v10731 = vpop.f32.mrb[0].mxu0
        %v10732 = vadd.f32 %v10571, %v10731
        %v10733 = vpop.f32.mrb[0].mxu0
        %10734 = vmatprep.mubr.bf16.mxu0 %v9524
        %10735 = vmatmul.mubr.bf16.gmra.mrb[0].mxu0 %v9476
        %v10736 = vpop.f32.mrb[0].mxu0
        %v10737 = vadd.f32 %v10576, %v10736
        %v10738 = vpop.f32.mrb[0].mxu0
        %v10739 = vpop.f32.mrb[0].mxu0
        %v10740 = vadd.f32 %v10579, %v10739
        %v10741 = vpop.f32.mrb[0].mxu0
        %10742 = vmatprep.mubr.bf16.mxu0 %v9525
        %10743 = vmatmul.mubr.bf16.gmra.mrb[0].mxu0 %v9477
        %v10744 = vpop.f32.mrb[0].mxu0
        %v10745 = vadd.f32 %v10584, %v10744
        %v10746 = vpop.f32.mrb[0].mxu0
        %v10747 = vpop.f32.mrb[0].mxu0
        %v10748 = vadd.f32 %v10587, %v10747
        %v10749 = vpop.f32.mrb[0].mxu0
        %10750 = vmatprep.mubr.bf16.mxu0 %v9526
        %10751 = vmatmul.mubr.bf16.gmra.mrb[0].mxu0 %v9478
        %v10752 = vpop.f32.mrb[0].mxu0
        %v10753 = vadd.f32 %v10592, %v10752
        %v10754 = vpop.f32.mrb[0].mxu0
        %v10755 = vpop.f32.mrb[0].mxu0
        %v10756 = vadd.f32 %v10595, %v10755
        %v10757 = vpop.f32.mrb[0].mxu0
        %10758 = vmatprep.mubr.bf16.mxu0 %v9527
        %10759 = vmatmul.mubr.bf16.gmra.mrb[0].mxu0 %v9479
        %v10760 = vpop.f32.mrb[0].mxu0
        %v10761 = vadd.f32 %v10600, %v10760
        %v10762 = vpop.f32.mrb[0].mxu0
        %v10763 = vpop.f32.mrb[0].mxu0
        %v10764 = vadd.f32 %v10603, %v10763
        %v10765 = vpop.f32.mrb[0].mxu0
        %10766 = vmatprep.mubr.bf16.mxu0 %v9528
        %10767 = vmatmul.mubr.bf16.gmra.mrb[0].mxu0 %v9480
        %v10768 = vpop.f32.mrb[0].mxu0
        %v10769 = vadd.f32 %v10608, %v10768
        %v10770 = vpop.f32.mrb[0].mxu0
        %v10771 = vpop.f32.mrb[0].mxu0
        %v10772 = vadd.f32 %v10611, %v10771
        %v10773 = vpop.f32.mrb[0].mxu0
        %10774 = vmatprep.mubr.bf16.mxu0 %v9529
        %10775 = vmatmul.mubr.bf16.gmra.mrb[0].mxu0 %v9481
        %v10776 = vpop.f32.mrb[0].mxu0
        %v10777 = vadd.f32 %v10616, %v10776
        %v10778 = vpop.f32.mrb[0].mxu0
        %v10779 = vpop.f32.mrb[0].mxu0
        %v10780 = vadd.f32 %v10619, %v10779
        %v10781 = vpop.f32.mrb[0].mxu0
        %10782 = vmatprep.mubr.bf16.mxu0 %v9530
        %10783 = vmatmul.mubr.bf16.gmra.mrb[0].mxu0 %v9482
        %v10784 = vpop.f32.mrb[0].mxu0
        %v10785 = vadd.f32 %v10624, %v10784
        %v10786 = vpop.f32.mrb[0].mxu0
        %v10787 = vpop.f32.mrb[0].mxu0
        %v10788 = vadd.f32 %v10627, %v10787
        %v10789 = vpop.f32.mrb[0].mxu0
        %10790 = vmatprep.mubr.bf16.mxu0 %v9531
        %10791 = vmatmul.mubr.bf16.gmra.mrb[0].mxu0 %v9483
        %v10792 = vpop.f32.mrb[0].mxu0
        %v10793 = vadd.f32 %v10632, %v10792
        %v10794 = vpop.f32.mrb[0].mxu0
        %v10795 = vpop.f32.mrb[0].mxu0
        %v10796 = vadd.f32 %v10635, %v10795
        %v10797 = vpop.f32.mrb[0].mxu0
        %10798 = vmatprep.mubr.bf16.mxu0 %v9532
        %10799 = vmatmul.mubr.bf16.gmra.mrb[0].mxu0 %v9484
        %v10800 = vpop.f32.mrb[0].mxu0
        %v10801 = vadd.f32 %v10640, %v10800
        %v10802 = vpop.f32.mrb[0].mxu0
        %v10803 = vpop.f32.mrb[0].mxu0
        %v10804 = vadd.f32 %v10643, %v10803
        %v10805 = vpop.f32.mrb[0].mxu0
        %10806 = vdwg.mxu0
        %10807 = vmatprep.subr.bf16.mxu0 0
        %10808 = vmatpush1.bf16.msra.mxu0 %v10083
        %10809 = vmatprep.subr.bf16.mxu0 0
        %10810 = vmatpush1.bf16.msra.mxu0 %v10084
        %10811 = vmatprep.subr.bf16.mxu0 0
        %10812 = vmatpush1.bf16.msra.mxu0 %v10085
        %10813 = vmatprep.subr.bf16.mxu0 0
        %10814 = vmatpush1.bf16.msra.mxu0 %v10086
        %10815 = vmatprep.subr.bf16.mxu0 0
        %10816 = vmatpush1.bf16.msra.mxu0 %v10087
        %10817 = vmatprep.subr.bf16.mxu0 0
        %10818 = vmatpush1.bf16.msra.mxu0 %v10088
        %10819 = vmatprep.subr.bf16.mxu0 0
        %10820 = vmatpush1.bf16.msra.mxu0 %v10089
        %10821 = vmatprep.subr.bf16.mxu0 0
        %10822 = vmatpush1.bf16.msra.mxu0 %v10090
        %10823 = vmatprep.subr.bf16.mxu0 0
        %10824 = vmatpush1.bf16.msra.mxu0 0
        %10825 = vmatprep.subr.bf16.mxu0 0
        %10826 = vmatpush1.bf16.msra.mxu0 0
        %10827 = vmatprep.subr.bf16.mxu0 0
        %10828 = vmatpush1.bf16.msra.mxu0 0
        %10829 = vmatprep.subr.bf16.mxu0 0
        %10830 = vmatpush1.bf16.msra.mxu0 0
        %10831 = vmatprep.subr.bf16.mxu0 0
        %10832 = vmatpush1.bf16.msra.mxu0 0
        %10833 = vmatprep.subr.bf16.mxu0 0
        %10834 = vmatpush1.bf16.msra.mxu0 0
        %10835 = vmatprep.subr.bf16.mxu0 0
        %10836 = vmatpush1.bf16.msra.mxu0 0
        %10837 = vmatprep.subr.bf16.mxu0 0
        %10838 = vmatpush1.bf16.msra.mxu0 0
        %10839 = vmatprep.mubr.bf16.mxu0 0
        %10840 = vmatmul.mubr.bf16.gmra.mrb[0].mxu0 %v9565
        %v10841 = vpop.f32.mrb[0].mxu0
        %v10842 = vadd.f32 %v10681, %v10841
        %v10843 = vpop.f32.mrb[0].mxu0
        %v10844 = vpop.f32.mrb[0].mxu0
        %v10845 = vadd.f32 %v10684, %v10844
        %v10846 = vpop.f32.mrb[0].mxu0
        %10847 = vmatprep.mubr.bf16.mxu0 0
        %10848 = vmatmul.mubr.bf16.gmra.mrb[0].mxu0 %v9566
        %v10849 = vpop.f32.mrb[0].mxu0
        %v10850 = vadd.f32 %v10689, %v10849
        %v10851 = vpop.f32.mrb[0].mxu0
        %v10852 = vpop.f32.mrb[0].mxu0
        %v10853 = vadd.f32 %v10692, %v10852
        %v10854 = vpop.f32.mrb[0].mxu0
        %10855 = vmatprep.mubr.bf16.mxu0 0
        %10856 = vmatmul.mubr.bf16.gmra.mrb[0].mxu0 %v9567
        %v10857 = vpop.f32.mrb[0].mxu0
        %v10858 = vadd.f32 %v10697, %v10857
        %v10859 = vpop.f32.mrb[0].mxu0
        %v10860 = vpop.f32.mrb[0].mxu0
        %v10861 = vadd.f32 %v10700, %v10860
        %v10862 = vpop.f32.mrb[0].mxu0
        %10863 = vmatprep.mubr.bf16.mxu0 0
        %10864 = vmatmul.mubr.bf16.gmra.mrb[0].mxu0 %v9568
        %v10865 = vpop.f32.mrb[0].mxu0
        %v10866 = vadd.f32 %v10705, %v10865
        %v10867 = vpop.f32.mrb[0].mxu0
        %v10868 = vpop.f32.mrb[0].mxu0
        %v10869 = vadd.f32 %v10708, %v10868
        %v10870 = vpop.f32.mrb[0].mxu0
        %10871 = vmatprep.mubr.bf16.mxu0 0
        %10872 = vmatmul.mubr.bf16.gmra.mrb[0].mxu0 %v9569
        %v10873 = vpop.f32.mrb[0].mxu0
        %v10874 = vadd.f32 %v10713, %v10873
        %v10875 = vpop.f32.mrb[0].mxu0
        %v10876 = vpop.f32.mrb[0].mxu0
        %v10877 = vadd.f32 %v10716, %v10876
        %v10878 = vpop.f32.mrb[0].mxu0
        %10879 = vmatprep.mubr.bf16.mxu0 0
        %10880 = vmatmul.mubr.bf16.gmra.mrb[0].mxu0 %v9570
        %v10881 = vpop.f32.mrb[0].mxu0
        %v10882 = vadd.f32 %v10721, %v10881
        %v10883 = vpop.f32.mrb[0].mxu0
        %v10884 = vpop.f32.mrb[0].mxu0
        %v10885 = vadd.f32 %v10724, %v10884
        %v10886 = vpop.f32.mrb[0].mxu0
        %10887 = vmatprep.mubr.bf16.mxu0 0
        %10888 = vmatmul.mubr.bf16.gmra.mrb[0].mxu0 %v9571
        %v10889 = vpop.f32.mrb[0].mxu0
        %v10890 = vadd.f32 %v10729, %v10889
        %v10891 = vpop.f32.mrb[0].mxu0
        %v10892 = vpop.f32.mrb[0].mxu0
        %v10893 = vadd.f32 %v10732, %v10892
        %v10894 = vpop.f32.mrb[0].mxu0
        %10895 = vmatprep.mubr.bf16.mxu0 0
        %10896 = vmatmul.mubr.bf16.gmra.mrb[0].mxu0 %v9572
        %v10897 = vpop.f32.mrb[0].mxu0
        %v10898 = vadd.f32 %v10737, %v10897
        %v10899 = vpop.f32.mrb[0].mxu0
        %v10900 = vpop.f32.mrb[0].mxu0
        %v10901 = vadd.f32 %v10740, %v10900
        %v10902 = vpop.f32.mrb[0].mxu0
        %10903 = vmatprep.mubr.bf16.mxu0 0
        %10904 = vmatmul.mubr.bf16.gmra.mrb[0].mxu0 %v9573
        %v10905 = vpop.f32.mrb[0].mxu0
        %v10906 = vadd.f32 %v10745, %v10905
        %v10907 = vpop.f32.mrb[0].mxu0
        %v10908 = vpop.f32.mrb[0].mxu0
        %v10909 = vadd.f32 %v10748, %v10908
        %v10910 = vpop.f32.mrb[0].mxu0
        %10911 = vmatprep.mubr.bf16.mxu0 0
        %10912 = vmatmul.mubr.bf16.gmra.mrb[0].mxu0 %v9574
        %v10913 = vpop.f32.mrb[0].mxu0
        %v10914 = vadd.f32 %v10753, %v10913
        %v10915 = vpop.f32.mrb[0].mxu0
        %v10916 = vpop.f32.mrb[0].mxu0
        %v10917 = vadd.f32 %v10756, %v10916
        %v10918 = vpop.f32.mrb[0].mxu0
        %10919 = vmatprep.mubr.bf16.mxu0 0
        %10920 = vmatmul.mubr.bf16.gmra.mrb[0].mxu0 %v9575
        %v10921 = vpop.f32.mrb[0].mxu0
        %v10922 = vadd.f32 %v10761, %v10921
        %v10923 = vpop.f32.mrb[0].mxu0
        %v10924 = vpop.f32.mrb[0].mxu0
        %v10925 = vadd.f32 %v10764, %v10924
        %v10926 = vpop.f32.mrb[0].mxu0
        %10927 = vmatprep.mubr.bf16.mxu0 0
        %10928 = vmatmul.mubr.bf16.gmra.mrb[0].mxu0 %v9576
        %v10929 = vpop.f32.mrb[0].mxu0
        %v10930 = vadd.f32 %v10769, %v10929
        %v10931 = vpop.f32.mrb[0].mxu0
        %v10932 = vpop.f32.mrb[0].mxu0
        %v10933 = vadd.f32 %v10772, %v10932
        %v10934 = vpop.f32.mrb[0].mxu0
        %10935 = vmatprep.mubr.bf16.mxu0 0
        %10936 = vmatmul.mubr.bf16.gmra.mrb[0].mxu0 %v9577
        %v10937 = vpop.f32.mrb[0].mxu0
        %v10938 = vadd.f32 %v10777, %v10937
        %v10939 = vpop.f32.mrb[0].mxu0
        %v10940 = vpop.f32.mrb[0].mxu0
        %v10941 = vadd.f32 %v10780, %v10940
        %v10942 = vpop.f32.mrb[0].mxu0
        %10943 = vmatprep.mubr.bf16.mxu0 0
        %10944 = vmatmul.mubr.bf16.gmra.mrb[0].mxu0 %v9578
        %v10945 = vpop.f32.mrb[0].mxu0
        %v10946 = vadd.f32 %v10785, %v10945
        %v10947 = vpop.f32.mrb[0].mxu0
        %v10948 = vpop.f32.mrb[0].mxu0
        %v10949 = vadd.f32 %v10788, %v10948
        %v10950 = vpop.f32.mrb[0].mxu0
        %10951 = vmatprep.mubr.bf16.mxu0 0
        %10952 = vmatmul.mubr.bf16.gmra.mrb[0].mxu0 %v9579
        %v10953 = vpop.f32.mrb[0].mxu0
        %v10954 = vadd.f32 %v10793, %v10953
        %v10955 = vpop.f32.mrb[0].mxu0
        %v10956 = vpop.f32.mrb[0].mxu0
        %v10957 = vadd.f32 %v10796, %v10956
        %v10958 = vpop.f32.mrb[0].mxu0
        %10959 = vmatprep.mubr.bf16.mxu0 0
        %10960 = vmatmul.mubr.bf16.gmra.mrb[0].mxu0 %v9580
        %v10961 = vpop.f32.mrb[0].mxu0
        %v10962 = vadd.f32 %v10801, %v10961
        %v10963 = vpop.f32.mrb[0].mxu0
        %v10964 = vpop.f32.mrb[0].mxu0
        %v10965 = vadd.f32 %v10804, %v10964
        %v10966 = vpop.f32.mrb[0].mxu0
        %10967 = vdwg.mxu0
        %10968 = vst [vmem:[%s217] sm:$0xff] %v10842
        %10969 = vst [vmem:[%s217 + $0x8] sm:$0xff] %v10845
        %10970 = vst [vmem:[%s217 + $0x10] sm:$0xff] %v10850
        %10971 = vst [vmem:[%s217 + $0x18] sm:$0xff] %v10853
        %10972 = vst [vmem:[%s217 + $0x20] sm:$0xff] %v10858
        %10973 = vst [vmem:[%s217 + $0x28] sm:$0xff] %v10861
        %10974 = vst [vmem:[%s217 + $0x30] sm:$0xff] %v10866
        %10975 = vst [vmem:[%s217 + $0x38] sm:$0xff] %v10869
        %10976 = vst [vmem:[%s217 + $0x40] sm:$0xff] %v10874
        %10977 = vst [vmem:[%s217 + $0x48] sm:$0xff] %v10877
        %10978 = vst [vmem:[%s217 + $0x50] sm:$0xff] %v10882
        %10979 = vst [vmem:[%s217 + $0x58] sm:$0xff] %v10885
        %10980 = vst [vmem:[%s217 + $0x60] sm:$0xff] %v10890
        %10981 = vst [vmem:[%s217 + $0x68] sm:$0xff] %v10893
        %10982 = vst [vmem:[%s217 + $0x70] sm:$0xff] %v10898
        %10983 = vst [vmem:[%s217 + $0x78] sm:$0xff] %v10901
        %10984 = vst [vmem:[%s217 + $0x80] sm:$0xff] %v10906
        %10985 = vst [vmem:[%s217 + $0x88] sm:$0xff] %v10909
        %10986 = vst [vmem:[%s217 + $0x90] sm:$0xff] %v10914
        %10987 = vst [vmem:[%s217 + $0x98] sm:$0xff] %v10917
        %10988 = vst [vmem:[%s217 + $0xa0] sm:$0xff] %v10922
        %10989 = vst [vmem:[%s217 + $0xa8] sm:$0xff] %v10925
        %10990 = vst [vmem:[%s217 + $0xb0] sm:$0xff] %v10930
        %10991 = vst [vmem:[%s217 + $0xb8] sm:$0xff] %v10933
        %10992 = vst [vmem:[%s217 + $0xc0] sm:$0xff] %v10938
        %10993 = vst [vmem:[%s217 + $0xc8] sm:$0xff] %v10941
        %10994 = vst [vmem:[%s217 + $0xd0] sm:$0xff] %v10946
        %10995 = vst [vmem:[%s217 + $0xd8] sm:$0xff] %v10949
        %10996 = vst [vmem:[%s217 + $0xe0] sm:$0xff] %v10954
        %10997 = vst [vmem:[%s217 + $0xe8] sm:$0xff] %v10957
        %10998 = vst [vmem:[%s217 + $0xf0] sm:$0xff] %v10962
        %10999 = vst [vmem:[%s217 + $0xf8] sm:$0xff] %v10965
        %s11000 = sand.u32 %s137, 1
        %s11001 = scalar_lea.sflag [#allocation3], %s11000
        %s11002 = sand.u32 %s137, 1
        %s11003 = smul.addr %s11002, 256
        %s11004 = scalar_lea.vmem [#allocation2], %s11003
        // Predicated region
        $region41: #{encoder_forward.1} parent=39 // pred_check
          %p11005 = pneg %p147
        $region42: #{encoder_forward.1} parent=39 // pred_check_branch
          %11007 = sbr.rel (%p11005) target = $region44
        $region43: #{encoder_forward.1} parent=39 // pred_region
          %s11009 = ssub.s32 4096, 4096
          %11010 = vsyncadd %s11001, %s11009
          %s11011 = smul.addr %s19, 32
          %s11012 = smul.addr %s11011, 128
          %s11013 = scalar_lea.hbm %s5, %s11012
          %s11014 = sshll.u32 %s11004, 4
          %s11015 = int_to_ptr.vmem [resolvable:$true] %s11014
          %11020 = dma.vmem_to_hbm [thread:$0]  %s11015, 4096, %s11013, %s11001, 128, 128, 8
        $region44: #{encoder_forward.1} parent=39 // pred_fallthru
          _
      $region40: #{encoder_forward.1} parent=5 // pred_fallthru
        _
      %p11021 = scmp.le.s32.totalorder 2, %s14
      // Predicated region
      $region45: #{encoder_forward.1} parent=5 // pred_check
        %p11022 = pneg %p11021
      $region46: #{encoder_forward.1} parent=5 // pred_check_branch
        %11024 = sbr.rel (%p11022) target = $region48
      $region47: #{encoder_forward.1} parent=5 // pred_region
        %s11025 = ssub.s32 %s14, 2
        // Predicated region
        $region49: #{encoder_forward.1} parent=47 // pred_check
          %p11026 = pneg %p153
        $region50: #{encoder_forward.1} parent=47 // pred_check_branch
          %11028 = sbr.rel (%p11026) target = $region52
        $region51: #{encoder_forward.1} parent=47 // pred_region
          %s11029 = sand.u32 %s138, 1
          %s11030 = scalar_lea.sflag [#allocation3], %s11029
          %s11031 = sand.u32 %s138, 1
          %s11032 = smul.addr %s11031, 256
          %s11033 = scalar_lea.vmem [#allocation2], %s11032
          %11034 = dma.done %s11030, 4096
        $region52: #{encoder_forward.1} parent=47 // pred_fallthru
          _
      $region48: #{encoder_forward.1} parent=5 // pred_fallthru
        _
    $region6: #{encoder_forward.1} parent=1 // loop_footer
      %s18 = sadd.s32 1, %s14
    $region7: #{encoder_forward.1} parent=1 // loop_footer_branch
      %13 = sbr.rel target = $region3
    $region8: #{encoder_forward.1} parent=1 // loop_exit
      _
    %11035 = vsyncpa [#allocation3], 1
    %s11036 = scalar_lea.sflag [#allocation3], 1
    %11037 = vsyncpa %s11036, 1

</llo_original>
